<compile_context>
chip_gen: v7x
topology: tpu7x:2x2x1
jax: 0.10.0
libtpu: 0.0.40
codegen_flags: <defaults>
</compile_context>

<pallas_src>
import functools

import jax
import jax.numpy as jnp
from jax import lax
from jax.experimental import pallas as pl
from jax.experimental.pallas import tpu as pltpu


# ----------------------------- Pallas kernels -----------------------------

def _fused_block12_kernel(p1_ref, w1_ref, s1_ref, w2_ref, s2_ref, o_ref, *, H, W):
    """Whole Block1 + Block2 for ONE image.

    p1_ref: (H*W, 9)      bf16 im2col patches of conv1 (3x3, s1, p1), Cin=1
    w1_ref: (9, C1)       bf16 conv1 weight with BN(eval) scale folded in
    s1_ref: (1, C1)       f32  folded shift: beta + (conv_bias - mean) * scale
    w2_ref: (9, C1, C2)   bf16 conv2 weight, tap-major, BN scale folded in
    s2_ref: (1, C2)       f32  folded conv2 shift
    o_ref:  (O2h*O2w, C2) bf16 Block2 output (row p = i*O2w + j, channels on lanes)
    """
    C1 = w1_ref.shape[1]
    C2 = w2_ref.shape[2]
    O2h = H // 2 + 1
    O2w = W // 2 + 1
    f32 = jnp.float32

    # ---- Conv1 (3x3, s1, p1) as one MXU matmul + folded BN(eval) + ReLU ----
    a1 = jnp.dot(p1_ref[...], w1_ref[...], preferred_element_type=f32)      # (H*W, C1)
    a1 = jnp.maximum(a1 + s1_ref[...], 0.0).reshape(H, W, C1)

    # ---- AvgPool2d(2, s=1, p=1, count_include_pad) fused with conv2's zero padding ----
    # padded[r, s] = zero-padded pooled activation (conv2 input), shape (H+3, W+3, C1):
    #   padded[r, s] = 0.25*(a1[r-2,s-2] + a1[r-2,s-1] + a1[r-1,s-2] + a1[r-1,s-1])
    zr = jnp.zeros((2, W, C1), f32)
    rows = jnp.concatenate([zr, a1, zr], axis=0)                            # (H+4, W, C1)
    v = rows[0:H + 3] + rows[1:H + 4]                                       # vertical pair sums
    zc = jnp.zeros((H + 3, 2, C1), f32)
    vc = jnp.concatenate([zc, v, zc], axis=1)                               # (H+3, W+4, C1)
    padded = 0.25 * (vc[:, 0:W + 3, :] + vc[:, 1:W + 4, :])                 # one shifted add

    # ---- Conv2 (3x3, s=2, p=1) as 9 accumulated (O2h*O2w, C1) @ (C1, C2) MXU matmuls ----
    acc = jnp.zeros((O2h * O2w, C2), f32)
    for dw in range(3):
        # column subsample (static picks): cols[r, j, :] = padded[r, 2j+dw, :]
        cols = jnp.stack([padded[:, 2 * j + dw, :] for j in range(O2w)], axis=1)
        for dh in range(3):
            # row subsample (outer-dim picks) -> tap slab, already in (i*O2w + j) row order
            slab = jnp.concatenate([cols[2 * i + dh] for i in range(O2h)], axis=0)
            lhs = slab.astype(w2_ref.dtype)                                 # (O2h*O2w, C1) bf16
            acc = acc + jnp.dot(lhs, w2_ref[dh * 3 + dw],
                                preferred_element_type=f32)
    o_ref[...] = jnp.maximum(acc + s2_ref[...], 0.0).astype(o_ref.dtype)


def _fc_kernel(x_ref, w_ref, o_ref):
    """Bias-free Linear.  Weight stays in its lane-dense (n_classes, K) orientation
    -> NT contraction (avoids a (K, 10) minor-dim tile that would lane-pad 12.8x)."""
    o_ref[...] = lax.dot_general(
        x_ref[...], w_ref[...],
        dimension_numbers=(((1,), (1,)), ((), ())),
        preferred_element_type=jnp.float32)


# ----------------------------- pallas_call wrappers -----------------------------

def fused_block12(patches1, w1, s1, w2, s2, *, H, W):
    """patches1: (N, H*W, 9) bf16 -> Block2 activation (N, O2h*O2w, C2) bf16."""
    assert H % 2 == 0 and W % 2 == 0
    N = patches1.shape[0]
    C1 = w1.shape[1]
    C2 = w2.shape[2]
    O2h, O2w = H // 2 + 1, W // 2 + 1
    return pl.pallas_call(
        functools.partial(_fused_block12_kernel, H=H, W=W),
        out_shape=jax.ShapeDtypeStruct((N, O2h * O2w, C2), jnp.bfloat16),
        grid=(N,),
        in_specs=[
            pl.BlockSpec((None, H * W, 9), lambda n: (n, 0, 0)),
            pl.BlockSpec((9, C1), lambda n: (0, 0)),
            pl.BlockSpec((1, C1), lambda n: (0, 0)),
            pl.BlockSpec((9, C1, C2), lambda n: (0, 0, 0)),
            pl.BlockSpec((1, C2), lambda n: (0, 0)),
        ],
        out_specs=pl.BlockSpec((None, O2h * O2w, C2), lambda n: (n, 0, 0)),
        compiler_params=pltpu.CompilerParams(
            dimension_semantics=("parallel",)),
    )(patches1, w1, s1, w2, s2)


def fc_matmul(x, w):
    """x: (N, K) bf16, w: (n_classes, K) bf16 -> (N, n_classes) f32."""
    N, K = x.shape
    ncls = w.shape[0]
    return pl.pallas_call(
        _fc_kernel,
        out_shape=jax.ShapeDtypeStruct((N, ncls), jnp.float32),
        grid=(1,),
        in_specs=[
            pl.BlockSpec((N, K), lambda i: (0, 0)),
            pl.BlockSpec((ncls, K), lambda i: (0, 0)),
        ],
        out_specs=pl.BlockSpec((N, ncls), lambda i: (0, 0)),
    )(x, w)


# ------------------------------- param prep (runs ONCE) -------------------------------

def _fold_conv_bn(w_torch, conv_b, bn):
    """Fold eval-mode BatchNorm (and the conv bias) into the conv weight / shift."""
    gamma, beta, rmean, rvar, eps = bn
    Cout, Cin, KH, KW = w_torch.shape
    scale = gamma / jnp.sqrt(rvar + eps)
    shift = beta + (conv_b - rmean) * scale
    w2d = jnp.transpose(w_torch, (2, 3, 1, 0)).reshape(KH * KW * Cin, Cout) * scale[None, :]
    return w2d, shift[None, :]


def prepare_params(params):
    """One-time weight preparation (hoisted out of the per-call forward)."""
    b1, b2 = params["block1"], params["block2"]
    w1, s1 = _fold_conv_bn(b1["w"], b1["b"], b1["bn"])       # (9, n1), (1, n1)
    w2, s2 = _fold_conv_bn(b2["w"], b2["b"], b2["bn"])       # (9*n1, n2), (1, n2)
    n1, n2 = w1.shape[1], w2.shape[1]
    fc_w = params["fc_w"]                                    # (ncls, n2*P), torch (c,h,w) order
    ncls = fc_w.shape[0]
    P = fc_w.shape[1] // n2
    wfc = fc_w.reshape(ncls, n2, P).transpose(0, 2, 1).reshape(ncls, P * n2)   # (h,w,c) order
    return dict(
        w1=w1.astype(jnp.bfloat16),
        s1=s1.astype(jnp.float32),
        w2=w2.reshape(9, n1, n2).astype(jnp.bfloat16),       # tap-major (dh*3+dw, cin, cout)
        s2=s2.astype(jnp.float32),
        wfc=wfc.astype(jnp.bfloat16),
    )


# ------------------------------- forward (jitted) -------------------------------

def _conv1_patches(x_nhwc):
    """(N, H, W, 1) -> (N, H*W, 9) im2col for conv1 (3x3, s1, p1)."""
    N, H, W, _ = x_nhwc.shape
    xp = jnp.pad(x_nhwc[..., 0], ((0, 0), (1, 1), (1, 1)))
    cols = [xp[:, i:i + H, j:j + W] for i in range(3) for j in range(3)]
    return jnp.stack(cols, axis=-1).reshape(N, H * W, 9)


def cnn_2layer_fc_forward(prepped, x_nchw):
    x = jnp.transpose(x_nchw, (0, 2, 3, 1)).astype(jnp.float32)   # NCHW -> NHWC
    N, H, W, _ = x.shape
    patches1 = _conv1_patches(x).astype(jnp.bfloat16)             # tiny, K=9 unpadded
    a2 = fused_block12(patches1, prepped["w1"], prepped["s1"],
                       prepped["w2"], prepped["s2"], H=H, W=W)    # (N, 81, n2) bf16
    xf = a2.reshape(N, -1)                                        # contiguous (h, w, c) flatten
    return fc_matmul(xf, prepped["wfc"])                          # (N, ncls) f32


# ------------------------------ model / params / reference ------------------------------

def init_params(key, *, n_classes, n1, n2, fc_spatial):
    def conv_block(k, cin, cout):
        ks = jax.random.split(k, 6)
        return dict(
            w=0.1 * jax.random.normal(ks[0], (cout, cin, 3, 3), jnp.float32),
            b=0.1 * jax.random.normal(ks[1], (cout,), jnp.float32),
            bn=(1.0 + 0.1 * jax.random.normal(ks[2], (cout,), jnp.float32),   # gamma
                0.1 * jax.random.normal(ks[3], (cout,), jnp.float32),          # beta
                0.1 * jax.random.normal(ks[4], (cout,), jnp.float32),          # running_mean
                1.0 + 0.1 * jax.random.uniform(ks[5], (cout,), jnp.float32),   # running_var
                1e-5),
        )

    k1, k2, k3 = jax.random.split(key, 3)
    return dict(
        block1=conv_block(k1, 1, n1),
        block2=conv_block(k2, n1, n2),
        fc_w=0.02 * jax.random.normal(k3, (n_classes, fc_spatial * n2), jnp.float32),
    )


def torch_reference(params, x_nchw):
    """Plain-XLA eval-mode reference mirroring the PyTorch module."""
    def bn_apply(y, bn):
        g, be, m, v, eps = bn
        return (y - m[None, :, None, None]) / jnp.sqrt(v[None, :, None, None] + eps) \
            * g[None, :, None, None] + be[None, :, None, None]

    b1, b2 = params["block1"], params["block2"]
    dn = ("NCHW", "OIHW", "NCHW")
    y = lax.conv_general_dilated(x_nchw, b1["w"], (1, 1), ((1, 1), (1, 1)),
                                 dimension_numbers=dn) + b1["b"][None, :, None, None]
    y = jnp.maximum(bn_apply(y, b1["bn"]), 0.0)
    yp = jnp.pad(y, ((0, 0), (0, 0), (1, 1), (1, 1)))
    y = lax.reduce_window(yp, 0.0, lax.add, (1, 1, 2, 2), (1, 1, 1, 1), "VALID") / 4.0
    y2 = lax.conv_general_dilated(y, b2["w"], (2, 2), ((1, 1), (1, 1)),
                                  dimension_numbers=dn) + b2["b"][None, :, None, None]
    y2 = jnp.maximum(bn_apply(y2, b2["bn"]), 0.0)
    return y2.reshape(y2.shape[0], -1) @ params["fc_w"].T


if __name__ == "__main__":
    key = jax.random.PRNGKey(0)
    kp, kx = jax.random.split(key)

    # Module-default channel counts (n1=128, n2=256 -> lane-dense), small input:
    # batch=2, 1x16x16.  Shape trace: 16x16 -conv1(s1,p1)-> 16x16 -pool(2,s1,p1)-> 17x17
    # -conv2(s2,p1)-> 9x9  => fc spatial = 81, fc_in = 81 * n2.
    n_classes, n1, n2 = 10, 128, 256
    params = init_params(kp, n_classes=n_classes, n1=n1, n2=n2, fc_spatial=81)
    prepped = prepare_params(params)            # weight prep runs ONCE, outside the forward
    x = jax.random.normal(kx, (2, 1, 16, 16), jnp.float32)   # NCHW, like PyTorch

    fwd = jax.jit(cnn_2layer_fc_forward)
    out = fwd(prepped, x)
    jax.block_until_ready(out)

    assert out.shape == (2, n_classes), out.shape
    assert bool(jnp.all(jnp.isfinite(out)))
    ref = torch_reference(params, x)
    max_err = float(jnp.max(jnp.abs(out - ref)))
    assert max_err < 0.3, f"mismatch vs reference: max|diff|={max_err}"
    print("KERNEL_OK")
</pallas_src>

<mosaic_0001>
module attributes {stable_mosaic.version = 11 : i64} {
  func.func @_fused_block12_kernel(%arg0: i32, %arg1: memref<1x256x9xbf16, #tpu.memory_space<vmem>>, %arg2: memref<9x128xbf16, #tpu.memory_space<vmem>>, %arg3: memref<1x128xf32, #tpu.memory_space<vmem>>, %arg4: memref<9x128x256xbf16, #tpu.memory_space<vmem>>, %arg5: memref<1x256xf32, #tpu.memory_space<vmem>>, %arg6: memref<1x81x256xbf16, #tpu.memory_space<vmem>>) attributes {dimension_semantics = [#tpu.dimension_semantics<parallel>], iteration_bounds = array<i64: 2>, scalar_prefetch = 0 : i64, scratch_operands = 0 : i64, tpu.core_type = #tpu.core_type<tc>, window_params = [{transform_indices = @transform_0, window_bounds = array<i64: 1, 256, 9>}, {pipeline_mode = #tpu.pipeline_mode<synchronous>, transform_indices = @transform_1, window_bounds = array<i64: 9, 128>}, {pipeline_mode = #tpu.pipeline_mode<synchronous>, transform_indices = @transform_2, window_bounds = array<i64: 1, 128>}, {pipeline_mode = #tpu.pipeline_mode<synchronous>, transform_indices = @transform_3, window_bounds = array<i64: 9, 128, 256>}, {pipeline_mode = #tpu.pipeline_mode<synchronous>, transform_indices = @transform_4, window_bounds = array<i64: 1, 256>}, {transform_indices = @transform_5, window_bounds = array<i64: 1, 81, 256>}]} {
    %c0 = arith.constant 0 : index
    %c0_0 = arith.constant 0 : index
    %c0_1 = arith.constant 0 : index
    %0 = vector.load %arg1[%c0, %c0_0, %c0_1] : memref<1x256x9xbf16, #tpu.memory_space<vmem>>, vector<1x256x9xbf16>
    %1 = vector.shape_cast %0 : vector<1x256x9xbf16> to vector<256x9xbf16>
    %c0_2 = arith.constant 0 : index
    %c0_3 = arith.constant 0 : index
    %2 = vector.load %arg2[%c0_2, %c0_3] : memref<9x128xbf16, #tpu.memory_space<vmem>>, vector<9x128xbf16>
    %cst = arith.constant dense<0.000000e+00> : vector<256x128xf32>
    %3 = tpu.matmul %1, %2, %cst {dimension_numbers = #tpu.dot_dimension_numbers<[1], [0], [0], [1], [0, 0, 1, 1], [], []>} : vector<256x9xbf16>, vector<9x128xbf16>, vector<256x128xf32> -> vector<256x128xf32>
    %c0_4 = arith.constant 0 : index
    %c0_5 = arith.constant 0 : index
    %4 = vector.load %arg3[%c0_4, %c0_5] : memref<1x128xf32, #tpu.memory_space<vmem>>, vector<1x128xf32>
    %5 = vector.broadcast %4 : vector<1x128xf32> to vector<256x128xf32>
    %6 = arith.addf %3, %5 : vector<256x128xf32>
    %cst_6 = arith.constant 0.000000e+00 : f32
    %7 = vector.broadcast %cst_6 : f32 to vector<256x128xf32>
    %8 = arith.maximumf %6, %7 : vector<256x128xf32>
    %9 = vector.shape_cast %8 : vector<256x128xf32> to vector<16x16x128xf32>
    %cst_7 = arith.constant 0.000000e+00 : f32
    %10 = vector.broadcast %cst_7 : f32 to vector<2x16x128xf32>
    %11 = tpu.concatenate %10, %9, %10 in 0 : vector<2x16x128xf32>, vector<16x16x128xf32>, vector<2x16x128xf32> -> vector<20x16x128xf32>
    %12 = vector.extract_strided_slice %11 {offsets = [0, 0, 0], sizes = [19, 16, 128], strides = [1, 1, 1]} : vector<20x16x128xf32> to vector<19x16x128xf32>
    %13 = vector.extract_strided_slice %11 {offsets = [1, 0, 0], sizes = [19, 16, 128], strides = [1, 1, 1]} : vector<20x16x128xf32> to vector<19x16x128xf32>
    %14 = arith.addf %12, %13 : vector<19x16x128xf32>
    %cst_8 = arith.constant 0.000000e+00 : f32
    %15 = vector.broadcast %cst_8 : f32 to vector<19x2x128xf32>
    %16 = tpu.concatenate %15, %14, %15 in 1 : vector<19x2x128xf32>, vector<19x16x128xf32>, vector<19x2x128xf32> -> vector<19x20x128xf32>
    %17 = vector.extract_strided_slice %16 {offsets = [0, 0, 0], sizes = [19, 19, 128], strides = [1, 1, 1]} : vector<19x20x128xf32> to vector<19x19x128xf32>
    %18 = vector.extract_strided_slice %16 {offsets = [0, 1, 0], sizes = [19, 19, 128], strides = [1, 1, 1]} : vector<19x20x128xf32> to vector<19x19x128xf32>
    %19 = arith.addf %17, %18 : vector<19x19x128xf32>
    %cst_9 = arith.constant 2.500000e-01 : f32
    %20 = vector.broadcast %cst_9 : f32 to vector<19x19x128xf32>
    %21 = arith.mulf %20, %19 : vector<19x19x128xf32>
    %cst_10 = arith.constant 0.000000e+00 : f32
    %22 = vector.broadcast %cst_10 : f32 to vector<81x256xf32>
    %23 = vector.extract_strided_slice %21 {offsets = [0, 0, 0], sizes = [19, 1, 128], strides = [1, 1, 1]} : vector<19x19x128xf32> to vector<19x1x128xf32>
    %24 = vector.shape_cast %23 : vector<19x1x128xf32> to vector<19x128xf32>
    %25 = vector.extract_strided_slice %21 {offsets = [0, 2, 0], sizes = [19, 1, 128], strides = [1, 1, 1]} : vector<19x19x128xf32> to vector<19x1x128xf32>
    %26 = vector.shape_cast %25 : vector<19x1x128xf32> to vector<19x128xf32>
    %27 = vector.extract_strided_slice %21 {offsets = [0, 4, 0], sizes = [19, 1, 128], strides = [1, 1, 1]} : vector<19x19x128xf32> to vector<19x1x128xf32>
    %28 = vector.shape_cast %27 : vector<19x1x128xf32> to vector<19x128xf32>
    %29 = vector.extract_strided_slice %21 {offsets = [0, 6, 0], sizes = [19, 1, 128], strides = [1, 1, 1]} : vector<19x19x128xf32> to vector<19x1x128xf32>
    %30 = vector.shape_cast %29 : vector<19x1x128xf32> to vector<19x128xf32>
    %31 = vector.extract_strided_slice %21 {offsets = [0, 8, 0], sizes = [19, 1, 128], strides = [1, 1, 1]} : vector<19x19x128xf32> to vector<19x1x128xf32>
    %32 = vector.shape_cast %31 : vector<19x1x128xf32> to vector<19x128xf32>
    %33 = vector.extract_strided_slice %21 {offsets = [0, 10, 0], sizes = [19, 1, 128], strides = [1, 1, 1]} : vector<19x19x128xf32> to vector<19x1x128xf32>
    %34 = vector.shape_cast %33 : vector<19x1x128xf32> to vector<19x128xf32>
    %35 = vector.extract_strided_slice %21 {offsets = [0, 12, 0], sizes = [19, 1, 128], strides = [1, 1, 1]} : vector<19x19x128xf32> to vector<19x1x128xf32>
    %36 = vector.shape_cast %35 : vector<19x1x128xf32> to vector<19x128xf32>
    %37 = vector.extract_strided_slice %21 {offsets = [0, 14, 0], sizes = [19, 1, 128], strides = [1, 1, 1]} : vector<19x19x128xf32> to vector<19x1x128xf32>
    %38 = vector.shape_cast %37 : vector<19x1x128xf32> to vector<19x128xf32>
    %39 = vector.extract_strided_slice %21 {offsets = [0, 16, 0], sizes = [19, 1, 128], strides = [1, 1, 1]} : vector<19x19x128xf32> to vector<19x1x128xf32>
    %40 = vector.shape_cast %39 : vector<19x1x128xf32> to vector<19x128xf32>
    %41 = vector.shape_cast %24 : vector<19x128xf32> to vector<19x1x128xf32>
    %42 = vector.shape_cast %26 : vector<19x128xf32> to vector<19x1x128xf32>
    %43 = vector.shape_cast %28 : vector<19x128xf32> to vector<19x1x128xf32>
    %44 = vector.shape_cast %30 : vector<19x128xf32> to vector<19x1x128xf32>
    %45 = vector.shape_cast %32 : vector<19x128xf32> to vector<19x1x128xf32>
    %46 = vector.shape_cast %34 : vector<19x128xf32> to vector<19x1x128xf32>
    %47 = vector.shape_cast %36 : vector<19x128xf32> to vector<19x1x128xf32>
    %48 = vector.shape_cast %38 : vector<19x128xf32> to vector<19x1x128xf32>
    %49 = vector.shape_cast %40 : vector<19x128xf32> to vector<19x1x128xf32>
    %50 = tpu.concatenate %41, %42, %43, %44, %45, %46, %47, %48, %49 in 1 : vector<19x1x128xf32>, vector<19x1x128xf32>, vector<19x1x128xf32>, vector<19x1x128xf32>, vector<19x1x128xf32>, vector<19x1x128xf32>, vector<19x1x128xf32>, vector<19x1x128xf32>, vector<19x1x128xf32> -> vector<19x9x128xf32>
    %51 = vector.extract_strided_slice %50 {offsets = [0, 0, 0], sizes = [1, 9, 128], strides = [1, 1, 1]} : vector<19x9x128xf32> to vector<1x9x128xf32>
    %52 = vector.shape_cast %51 : vector<1x9x128xf32> to vector<9x128xf32>
    %53 = vector.extract_strided_slice %50 {offsets = [2, 0, 0], sizes = [1, 9, 128], strides = [1, 1, 1]} : vector<19x9x128xf32> to vector<1x9x128xf32>
    %54 = vector.shape_cast %53 : vector<1x9x128xf32> to vector<9x128xf32>
    %55 = vector.extract_strided_slice %50 {offsets = [4, 0, 0], sizes = [1, 9, 128], strides = [1, 1, 1]} : vector<19x9x128xf32> to vector<1x9x128xf32>
    %56 = vector.shape_cast %55 : vector<1x9x128xf32> to vector<9x128xf32>
    %57 = vector.extract_strided_slice %50 {offsets = [6, 0, 0], sizes = [1, 9, 128], strides = [1, 1, 1]} : vector<19x9x128xf32> to vector<1x9x128xf32>
    %58 = vector.shape_cast %57 : vector<1x9x128xf32> to vector<9x128xf32>
    %59 = vector.extract_strided_slice %50 {offsets = [8, 0, 0], sizes = [1, 9, 128], strides = [1, 1, 1]} : vector<19x9x128xf32> to vector<1x9x128xf32>
    %60 = vector.shape_cast %59 : vector<1x9x128xf32> to vector<9x128xf32>
    %61 = vector.extract_strided_slice %50 {offsets = [10, 0, 0], sizes = [1, 9, 128], strides = [1, 1, 1]} : vector<19x9x128xf32> to vector<1x9x128xf32>
    %62 = vector.shape_cast %61 : vector<1x9x128xf32> to vector<9x128xf32>
    %63 = vector.extract_strided_slice %50 {offsets = [12, 0, 0], sizes = [1, 9, 128], strides = [1, 1, 1]} : vector<19x9x128xf32> to vector<1x9x128xf32>
    %64 = vector.shape_cast %63 : vector<1x9x128xf32> to vector<9x128xf32>
    %65 = vector.extract_strided_slice %50 {offsets = [14, 0, 0], sizes = [1, 9, 128], strides = [1, 1, 1]} : vector<19x9x128xf32> to vector<1x9x128xf32>
    %66 = vector.shape_cast %65 : vector<1x9x128xf32> to vector<9x128xf32>
    %67 = vector.extract_strided_slice %50 {offsets = [16, 0, 0], sizes = [1, 9, 128], strides = [1, 1, 1]} : vector<19x9x128xf32> to vector<1x9x128xf32>
    %68 = vector.shape_cast %67 : vector<1x9x128xf32> to vector<9x128xf32>
    %69 = tpu.concatenate %52, %54, %56, %58, %60, %62, %64, %66, %68 in 0 : vector<9x128xf32>, vector<9x128xf32>, vector<9x128xf32>, vector<9x128xf32>, vector<9x128xf32>, vector<9x128xf32>, vector<9x128xf32>, vector<9x128xf32>, vector<9x128xf32> -> vector<81x128xf32>
    %70 = arith.truncf %69 : vector<81x128xf32> to vector<81x128xbf16>
    %c0_11 = arith.constant 0 : index
    %c0_12 = arith.constant 0 : index
    %c0_13 = arith.constant 0 : index
    %71 = vector.load %arg4[%c0_11, %c0_12, %c0_13] : memref<9x128x256xbf16, #tpu.memory_space<vmem>>, vector<1x128x256xbf16>
    %72 = vector.shape_cast %71 : vector<1x128x256xbf16> to vector<128x256xbf16>
    %cst_14 = arith.constant dense<0.000000e+00> : vector<81x256xf32>
    %73 = tpu.matmul %70, %72, %cst_14 {dimension_numbers = #tpu.dot_dimension_numbers<[1], [0], [0], [1], [0, 0, 1, 1], [], []>} : vector<81x128xbf16>, vector<128x256xbf16>, vector<81x256xf32> -> vector<81x256xf32>
    %74 = arith.addf %22, %73 : vector<81x256xf32>
    %75 = vector.extract_strided_slice %50 {offsets = [1, 0, 0], sizes = [1, 9, 128], strides = [1, 1, 1]} : vector<19x9x128xf32> to vector<1x9x128xf32>
    %76 = vector.shape_cast %75 : vector<1x9x128xf32> to vector<9x128xf32>
    %77 = vector.extract_strided_slice %50 {offsets = [3, 0, 0], sizes = [1, 9, 128], strides = [1, 1, 1]} : vector<19x9x128xf32> to vector<1x9x128xf32>
    %78 = vector.shape_cast %77 : vector<1x9x128xf32> to vector<9x128xf32>
    %79 = vector.extract_strided_slice %50 {offsets = [5, 0, 0], sizes = [1, 9, 128], strides = [1, 1, 1]} : vector<19x9x128xf32> to vector<1x9x128xf32>
    %80 = vector.shape_cast %79 : vector<1x9x128xf32> to vector<9x128xf32>
    %81 = vector.extract_strided_slice %50 {offsets = [7, 0, 0], sizes = [1, 9, 128], strides = [1, 1, 1]} : vector<19x9x128xf32> to vector<1x9x128xf32>
    %82 = vector.shape_cast %81 : vector<1x9x128xf32> to vector<9x128xf32>
    %83 = vector.extract_strided_slice %50 {offsets = [9, 0, 0], sizes = [1, 9, 128], strides = [1, 1, 1]} : vector<19x9x128xf32> to vector<1x9x128xf32>
    %84 = vector.shape_cast %83 : vector<1x9x128xf32> to vector<9x128xf32>
    %85 = vector.extract_strided_slice %50 {offsets = [11, 0, 0], sizes = [1, 9, 128], strides = [1, 1, 1]} : vector<19x9x128xf32> to vector<1x9x128xf32>
    %86 = vector.shape_cast %85 : vector<1x9x128xf32> to vector<9x128xf32>
    %87 = vector.extract_strided_slice %50 {offsets = [13, 0, 0], sizes = [1, 9, 128], strides = [1, 1, 1]} : vector<19x9x128xf32> to vector<1x9x128xf32>
    %88 = vector.shape_cast %87 : vector<1x9x128xf32> to vector<9x128xf32>
    %89 = vector.extract_strided_slice %50 {offsets = [15, 0, 0], sizes = [1, 9, 128], strides = [1, 1, 1]} : vector<19x9x128xf32> to vector<1x9x128xf32>
    %90 = vector.shape_cast %89 : vector<1x9x128xf32> to vector<9x128xf32>
    %91 = vector.extract_strided_slice %50 {offsets = [17, 0, 0], sizes = [1, 9, 128], strides = [1, 1, 1]} : vector<19x9x128xf32> to vector<1x9x128xf32>
    %92 = vector.shape_cast %91 : vector<1x9x128xf32> to vector<9x128xf32>
    %93 = tpu.concatenate %76, %78, %80, %82, %84, %86, %88, %90, %92 in 0 : vector<9x128xf32>, vector<9x128xf32>, vector<9x128xf32>, vector<9x128xf32>, vector<9x128xf32>, vector<9x128xf32>, vector<9x128xf32>, vector<9x128xf32>, vector<9x128xf32> -> vector<81x128xf32>
    %94 = arith.truncf %93 : vector<81x128xf32> to vector<81x128xbf16>
    %c3 = arith.constant 3 : index
    %c0_15 = arith.constant 0 : index
    %c0_16 = arith.constant 0 : index
    %95 = vector.load %arg4[%c3, %c0_15, %c0_16] : memref<9x128x256xbf16, #tpu.memory_space<vmem>>, vector<1x128x256xbf16>
    %96 = vector.shape_cast %95 : vector<1x128x256xbf16> to vector<128x256xbf16>
    %cst_17 = arith.constant dense<0.000000e+00> : vector<81x256xf32>
    %97 = tpu.matmul %94, %96, %cst_17 {dimension_numbers = #tpu.dot_dimension_numbers<[1], [0], [0], [1], [0, 0, 1, 1], [], []>} : vector<81x128xbf16>, vector<128x256xbf16>, vector<81x256xf32> -> vector<81x256xf32>
    %98 = arith.addf %74, %97 : vector<81x256xf32>
    %99 = vector.extract_strided_slice %50 {offsets = [2, 0, 0], sizes = [1, 9, 128], strides = [1, 1, 1]} : vector<19x9x128xf32> to vector<1x9x128xf32>
    %100 = vector.shape_cast %99 : vector<1x9x128xf32> to vector<9x128xf32>
    %101 = vector.extract_strided_slice %50 {offsets = [4, 0, 0], sizes = [1, 9, 128], strides = [1, 1, 1]} : vector<19x9x128xf32> to vector<1x9x128xf32>
    %102 = vector.shape_cast %101 : vector<1x9x128xf32> to vector<9x128xf32>
    %103 = vector.extract_strided_slice %50 {offsets = [6, 0, 0], sizes = [1, 9, 128], strides = [1, 1, 1]} : vector<19x9x128xf32> to vector<1x9x128xf32>
    %104 = vector.shape_cast %103 : vector<1x9x128xf32> to vector<9x128xf32>
    %105 = vector.extract_strided_slice %50 {offsets = [8, 0, 0], sizes = [1, 9, 128], strides = [1, 1, 1]} : vector<19x9x128xf32> to vector<1x9x128xf32>
    %106 = vector.shape_cast %105 : vector<1x9x128xf32> to vector<9x128xf32>
    %107 = vector.extract_strided_slice %50 {offsets = [10, 0, 0], sizes = [1, 9, 128], strides = [1, 1, 1]} : vector<19x9x128xf32> to vector<1x9x128xf32>
    %108 = vector.shape_cast %107 : vector<1x9x128xf32> to vector<9x128xf32>
    %109 = vector.extract_strided_slice %50 {offsets = [12, 0, 0], sizes = [1, 9, 128], strides = [1, 1, 1]} : vector<19x9x128xf32> to vector<1x9x128xf32>
    %110 = vector.shape_cast %109 : vector<1x9x128xf32> to vector<9x128xf32>
    %111 = vector.extract_strided_slice %50 {offsets = [14, 0, 0], sizes = [1, 9, 128], strides = [1, 1, 1]} : vector<19x9x128xf32> to vector<1x9x128xf32>
    %112 = vector.shape_cast %111 : vector<1x9x128xf32> to vector<9x128xf32>
    %113 = vector.extract_strided_slice %50 {offsets = [16, 0, 0], sizes = [1, 9, 128], strides = [1, 1, 1]} : vector<19x9x128xf32> to vector<1x9x128xf32>
    %114 = vector.shape_cast %113 : vector<1x9x128xf32> to vector<9x128xf32>
    %115 = vector.extract_strided_slice %50 {offsets = [18, 0, 0], sizes = [1, 9, 128], strides = [1, 1, 1]} : vector<19x9x128xf32> to vector<1x9x128xf32>
    %116 = vector.shape_cast %115 : vector<1x9x128xf32> to vector<9x128xf32>
    %117 = tpu.concatenate %100, %102, %104, %106, %108, %110, %112, %114, %116 in 0 : vector<9x128xf32>, vector<9x128xf32>, vector<9x128xf32>, vector<9x128xf32>, vector<9x128xf32>, vector<9x128xf32>, vector<9x128xf32>, vector<9x128xf32>, vector<9x128xf32> -> vector<81x128xf32>
    %118 = arith.truncf %117 : vector<81x128xf32> to vector<81x128xbf16>
    %c6 = arith.constant 6 : index
    %c0_18 = arith.constant 0 : index
    %c0_19 = arith.constant 0 : index
    %119 = vector.load %arg4[%c6, %c0_18, %c0_19] : memref<9x128x256xbf16, #tpu.memory_space<vmem>>, vector<1x128x256xbf16>
    %120 = vector.shape_cast %119 : vector<1x128x256xbf16> to vector<128x256xbf16>
    %cst_20 = arith.constant dense<0.000000e+00> : vector<81x256xf32>
    %121 = tpu.matmul %118, %120, %cst_20 {dimension_numbers = #tpu.dot_dimension_numbers<[1], [0], [0], [1], [0, 0, 1, 1], [], []>} : vector<81x128xbf16>, vector<128x256xbf16>, vector<81x256xf32> -> vector<81x256xf32>
    %122 = arith.addf %98, %121 : vector<81x256xf32>
    %123 = vector.extract_strided_slice %21 {offsets = [0, 1, 0], sizes = [19, 1, 128], strides = [1, 1, 1]} : vector<19x19x128xf32> to vector<19x1x128xf32>
    %124 = vector.shape_cast %123 : vector<19x1x128xf32> to vector<19x128xf32>
    %125 = vector.extract_strided_slice %21 {offsets = [0, 3, 0], sizes = [19, 1, 128], strides = [1, 1, 1]} : vector<19x19x128xf32> to vector<19x1x128xf32>
    %126 = vector.shape_cast %125 : vector<19x1x128xf32> to vector<19x128xf32>
    %127 = vector.extract_strided_slice %21 {offsets = [0, 5, 0], sizes = [19, 1, 128], strides = [1, 1, 1]} : vector<19x19x128xf32> to vector<19x1x128xf32>
    %128 = vector.shape_cast %127 : vector<19x1x128xf32> to vector<19x128xf32>
    %129 = vector.extract_strided_slice %21 {offsets = [0, 7, 0], sizes = [19, 1, 128], strides = [1, 1, 1]} : vector<19x19x128xf32> to vector<19x1x128xf32>
    %130 = vector.shape_cast %129 : vector<19x1x128xf32> to vector<19x128xf32>
    %131 = vector.extract_strided_slice %21 {offsets = [0, 9, 0], sizes = [19, 1, 128], strides = [1, 1, 1]} : vector<19x19x128xf32> to vector<19x1x128xf32>
    %132 = vector.shape_cast %131 : vector<19x1x128xf32> to vector<19x128xf32>
    %133 = vector.extract_strided_slice %21 {offsets = [0, 11, 0], sizes = [19, 1, 128], strides = [1, 1, 1]} : vector<19x19x128xf32> to vector<19x1x128xf32>
    %134 = vector.shape_cast %133 : vector<19x1x128xf32> to vector<19x128xf32>
    %135 = vector.extract_strided_slice %21 {offsets = [0, 13, 0], sizes = [19, 1, 128], strides = [1, 1, 1]} : vector<19x19x128xf32> to vector<19x1x128xf32>
    %136 = vector.shape_cast %135 : vector<19x1x128xf32> to vector<19x128xf32>
    %137 = vector.extract_strided_slice %21 {offsets = [0, 15, 0], sizes = [19, 1, 128], strides = [1, 1, 1]} : vector<19x19x128xf32> to vector<19x1x128xf32>
    %138 = vector.shape_cast %137 : vector<19x1x128xf32> to vector<19x128xf32>
    %139 = vector.extract_strided_slice %21 {offsets = [0, 17, 0], sizes = [19, 1, 128], strides = [1, 1, 1]} : vector<19x19x128xf32> to vector<19x1x128xf32>
    %140 = vector.shape_cast %139 : vector<19x1x128xf32> to vector<19x128xf32>
    %141 = vector.shape_cast %124 : vector<19x128xf32> to vector<19x1x128xf32>
    %142 = vector.shape_cast %126 : vector<19x128xf32> to vector<19x1x128xf32>
    %143 = vector.shape_cast %128 : vector<19x128xf32> to vector<19x1x128xf32>
    %144 = vector.shape_cast %130 : vector<19x128xf32> to vector<19x1x128xf32>
    %145 = vector.shape_cast %132 : vector<19x128xf32> to vector<19x1x128xf32>
    %146 = vector.shape_cast %134 : vector<19x128xf32> to vector<19x1x128xf32>
    %147 = vector.shape_cast %136 : vector<19x128xf32> to vector<19x1x128xf32>
    %148 = vector.shape_cast %138 : vector<19x128xf32> to vector<19x1x128xf32>
    %149 = vector.shape_cast %140 : vector<19x128xf32> to vector<19x1x128xf32>
    %150 = tpu.concatenate %141, %142, %143, %144, %145, %146, %147, %148, %149 in 1 : vector<19x1x128xf32>, vector<19x1x128xf32>, vector<19x1x128xf32>, vector<19x1x128xf32>, vector<19x1x128xf32>, vector<19x1x128xf32>, vector<19x1x128xf32>, vector<19x1x128xf32>, vector<19x1x128xf32> -> vector<19x9x128xf32>
    %151 = vector.extract_strided_slice %150 {offsets = [0, 0, 0], sizes = [1, 9, 128], strides = [1, 1, 1]} : vector<19x9x128xf32> to vector<1x9x128xf32>
    %152 = vector.shape_cast %151 : vector<1x9x128xf32> to vector<9x128xf32>
    %153 = vector.extract_strided_slice %150 {offsets = [2, 0, 0], sizes = [1, 9, 128], strides = [1, 1, 1]} : vector<19x9x128xf32> to vector<1x9x128xf32>
    %154 = vector.shape_cast %153 : vector<1x9x128xf32> to vector<9x128xf32>
    %155 = vector.extract_strided_slice %150 {offsets = [4, 0, 0], sizes = [1, 9, 128], strides = [1, 1, 1]} : vector<19x9x128xf32> to vector<1x9x128xf32>
    %156 = vector.shape_cast %155 : vector<1x9x128xf32> to vector<9x128xf32>
    %157 = vector.extract_strided_slice %150 {offsets = [6, 0, 0], sizes = [1, 9, 128], strides = [1, 1, 1]} : vector<19x9x128xf32> to vector<1x9x128xf32>
    %158 = vector.shape_cast %157 : vector<1x9x128xf32> to vector<9x128xf32>
    %159 = vector.extract_strided_slice %150 {offsets = [8, 0, 0], sizes = [1, 9, 128], strides = [1, 1, 1]} : vector<19x9x128xf32> to vector<1x9x128xf32>
    %160 = vector.shape_cast %159 : vector<1x9x128xf32> to vector<9x128xf32>
    %161 = vector.extract_strided_slice %150 {offsets = [10, 0, 0], sizes = [1, 9, 128], strides = [1, 1, 1]} : vector<19x9x128xf32> to vector<1x9x128xf32>
    %162 = vector.shape_cast %161 : vector<1x9x128xf32> to vector<9x128xf32>
    %163 = vector.extract_strided_slice %150 {offsets = [12, 0, 0], sizes = [1, 9, 128], strides = [1, 1, 1]} : vector<19x9x128xf32> to vector<1x9x128xf32>
    %164 = vector.shape_cast %163 : vector<1x9x128xf32> to vector<9x128xf32>
    %165 = vector.extract_strided_slice %150 {offsets = [14, 0, 0], sizes = [1, 9, 128], strides = [1, 1, 1]} : vector<19x9x128xf32> to vector<1x9x128xf32>
    %166 = vector.shape_cast %165 : vector<1x9x128xf32> to vector<9x128xf32>
    %167 = vector.extract_strided_slice %150 {offsets = [16, 0, 0], sizes = [1, 9, 128], strides = [1, 1, 1]} : vector<19x9x128xf32> to vector<1x9x128xf32>
    %168 = vector.shape_cast %167 : vector<1x9x128xf32> to vector<9x128xf32>
    %169 = tpu.concatenate %152, %154, %156, %158, %160, %162, %164, %166, %168 in 0 : vector<9x128xf32>, vector<9x128xf32>, vector<9x128xf32>, vector<9x128xf32>, vector<9x128xf32>, vector<9x128xf32>, vector<9x128xf32>, vector<9x128xf32>, vector<9x128xf32> -> vector<81x128xf32>
    %170 = arith.truncf %169 : vector<81x128xf32> to vector<81x128xbf16>
    %c1 = arith.constant 1 : index
    %c0_21 = arith.constant 0 : index
    %c0_22 = arith.constant 0 : index
    %171 = vector.load %arg4[%c1, %c0_21, %c0_22] : memref<9x128x256xbf16, #tpu.memory_space<vmem>>, vector<1x128x256xbf16>
    %172 = vector.shape_cast %171 : vector<1x128x256xbf16> to vector<128x256xbf16>
    %cst_23 = arith.constant dense<0.000000e+00> : vector<81x256xf32>
    %173 = tpu.matmul %170, %172, %cst_23 {dimension_numbers = #tpu.dot_dimension_numbers<[1], [0], [0], [1], [0, 0, 1, 1], [], []>} : vector<81x128xbf16>, vector<128x256xbf16>, vector<81x256xf32> -> vector<81x256xf32>
    %174 = arith.addf %122, %173 : vector<81x256xf32>
    %175 = vector.extract_strided_slice %150 {offsets = [1, 0, 0], sizes = [1, 9, 128], strides = [1, 1, 1]} : vector<19x9x128xf32> to vector<1x9x128xf32>
    %176 = vector.shape_cast %175 : vector<1x9x128xf32> to vector<9x128xf32>
    %177 = vector.extract_strided_slice %150 {offsets = [3, 0, 0], sizes = [1, 9, 128], strides = [1, 1, 1]} : vector<19x9x128xf32> to vector<1x9x128xf32>
    %178 = vector.shape_cast %177 : vector<1x9x128xf32> to vector<9x128xf32>
    %179 = vector.extract_strided_slice %150 {offsets = [5, 0, 0], sizes = [1, 9, 128], strides = [1, 1, 1]} : vector<19x9x128xf32> to vector<1x9x128xf32>
    %180 = vector.shape_cast %179 : vector<1x9x128xf32> to vector<9x128xf32>
    %181 = vector.extract_strided_slice %150 {offsets = [7, 0, 0], sizes = [1, 9, 128], strides = [1, 1, 1]} : vector<19x9x128xf32> to vector<1x9x128xf32>
    %182 = vector.shape_cast %181 : vector<1x9x128xf32> to vector<9x128xf32>
    %183 = vector.extract_strided_slice %150 {offsets = [9, 0, 0], sizes = [1, 9, 128], strides = [1, 1, 1]} : vector<19x9x128xf32> to vector<1x9x128xf32>
    %184 = vector.shape_cast %183 : vector<1x9x128xf32> to vector<9x128xf32>
    %185 = vector.extract_strided_slice %150 {offsets = [11, 0, 0], sizes = [1, 9, 128], strides = [1, 1, 1]} : vector<19x9x128xf32> to vector<1x9x128xf32>
    %186 = vector.shape_cast %185 : vector<1x9x128xf32> to vector<9x128xf32>
    %187 = vector.extract_strided_slice %150 {offsets = [13, 0, 0], sizes = [1, 9, 128], strides = [1, 1, 1]} : vector<19x9x128xf32> to vector<1x9x128xf32>
    %188 = vector.shape_cast %187 : vector<1x9x128xf32> to vector<9x128xf32>
    %189 = vector.extract_strided_slice %150 {offsets = [15, 0, 0], sizes = [1, 9, 128], strides = [1, 1, 1]} : vector<19x9x128xf32> to vector<1x9x128xf32>
    %190 = vector.shape_cast %189 : vector<1x9x128xf32> to vector<9x128xf32>
    %191 = vector.extract_strided_slice %150 {offsets = [17, 0, 0], sizes = [1, 9, 128], strides = [1, 1, 1]} : vector<19x9x128xf32> to vector<1x9x128xf32>
    %192 = vector.shape_cast %191 : vector<1x9x128xf32> to vector<9x128xf32>
    %193 = tpu.concatenate %176, %178, %180, %182, %184, %186, %188, %190, %192 in 0 : vector<9x128xf32>, vector<9x128xf32>, vector<9x128xf32>, vector<9x128xf32>, vector<9x128xf32>, vector<9x128xf32>, vector<9x128xf32>, vector<9x128xf32>, vector<9x128xf32> -> vector<81x128xf32>
    %194 = arith.truncf %193 : vector<81x128xf32> to vector<81x128xbf16>
    %c4 = arith.constant 4 : index
    %c0_24 = arith.constant 0 : index
    %c0_25 = arith.constant 0 : index
    %195 = vector.load %arg4[%c4, %c0_24, %c0_25] : memref<9x128x256xbf16, #tpu.memory_space<vmem>>, vector<1x128x256xbf16>
    %196 = vector.shape_cast %195 : vector<1x128x256xbf16> to vector<128x256xbf16>
    %cst_26 = arith.constant dense<0.000000e+00> : vector<81x256xf32>
    %197 = tpu.matmul %194, %196, %cst_26 {dimension_numbers = #tpu.dot_dimension_numbers<[1], [0], [0], [1], [0, 0, 1, 1], [], []>} : vector<81x128xbf16>, vector<128x256xbf16>, vector<81x256xf32> -> vector<81x256xf32>
    %198 = arith.addf %174, %197 : vector<81x256xf32>
    %199 = vector.extract_strided_slice %150 {offsets = [2, 0, 0], sizes = [1, 9, 128], strides = [1, 1, 1]} : vector<19x9x128xf32> to vector<1x9x128xf32>
    %200 = vector.shape_cast %199 : vector<1x9x128xf32> to vector<9x128xf32>
    %201 = vector.extract_strided_slice %150 {offsets = [4, 0, 0], sizes = [1, 9, 128], strides = [1, 1, 1]} : vector<19x9x128xf32> to vector<1x9x128xf32>
    %202 = vector.shape_cast %201 : vector<1x9x128xf32> to vector<9x128xf32>
    %203 = vector.extract_strided_slice %150 {offsets = [6, 0, 0], sizes = [1, 9, 128], strides = [1, 1, 1]} : vector<19x9x128xf32> to vector<1x9x128xf32>
    %204 = vector.shape_cast %203 : vector<1x9x128xf32> to vector<9x128xf32>
    %205 = vector.extract_strided_slice %150 {offsets = [8, 0, 0], sizes = [1, 9, 128], strides = [1, 1, 1]} : vector<19x9x128xf32> to vector<1x9x128xf32>
    %206 = vector.shape_cast %205 : vector<1x9x128xf32> to vector<9x128xf32>
    %207 = vector.extract_strided_slice %150 {offsets = [10, 0, 0], sizes = [1, 9, 128], strides = [1, 1, 1]} : vector<19x9x128xf32> to vector<1x9x128xf32>
    %208 = vector.shape_cast %207 : vector<1x9x128xf32> to vector<9x128xf32>
    %209 = vector.extract_strided_slice %150 {offsets = [12, 0, 0], sizes = [1, 9, 128], strides = [1, 1, 1]} : vector<19x9x128xf32> to vector<1x9x128xf32>
    %210 = vector.shape_cast %209 : vector<1x9x128xf32> to vector<9x128xf32>
    %211 = vector.extract_strided_slice %150 {offsets = [14, 0, 0], sizes = [1, 9, 128], strides = [1, 1, 1]} : vector<19x9x128xf32> to vector<1x9x128xf32>
    %212 = vector.shape_cast %211 : vector<1x9x128xf32> to vector<9x128xf32>
    %213 = vector.extract_strided_slice %150 {offsets = [16, 0, 0], sizes = [1, 9, 128], strides = [1, 1, 1]} : vector<19x9x128xf32> to vector<1x9x128xf32>
    %214 = vector.shape_cast %213 : vector<1x9x128xf32> to vector<9x128xf32>
    %215 = vector.extract_strided_slice %150 {offsets = [18, 0, 0], sizes = [1, 9, 128], strides = [1, 1, 1]} : vector<19x9x128xf32> to vector<1x9x128xf32>
    %216 = vector.shape_cast %215 : vector<1x9x128xf32> to vector<9x128xf32>
    %217 = tpu.concatenate %200, %202, %204, %206, %208, %210, %212, %214, %216 in 0 : vector<9x128xf32>, vector<9x128xf32>, vector<9x128xf32>, vector<9x128xf32>, vector<9x128xf32>, vector<9x128xf32>, vector<9x128xf32>, vector<9x128xf32>, vector<9x128xf32> -> vector<81x128xf32>
    %218 = arith.truncf %217 : vector<81x128xf32> to vector<81x128xbf16>
    %c7 = arith.constant 7 : index
    %c0_27 = arith.constant 0 : index
    %c0_28 = arith.constant 0 : index
    %219 = vector.load %arg4[%c7, %c0_27, %c0_28] : memref<9x128x256xbf16, #tpu.memory_space<vmem>>, vector<1x128x256xbf16>
    %220 = vector.shape_cast %219 : vector<1x128x256xbf16> to vector<128x256xbf16>
    %cst_29 = arith.constant dense<0.000000e+00> : vector<81x256xf32>
    %221 = tpu.matmul %218, %220, %cst_29 {dimension_numbers = #tpu.dot_dimension_numbers<[1], [0], [0], [1], [0, 0, 1, 1], [], []>} : vector<81x128xbf16>, vector<128x256xbf16>, vector<81x256xf32> -> vector<81x256xf32>
    %222 = arith.addf %198, %221 : vector<81x256xf32>
    %223 = vector.extract_strided_slice %21 {offsets = [0, 2, 0], sizes = [19, 1, 128], strides = [1, 1, 1]} : vector<19x19x128xf32> to vector<19x1x128xf32>
    %224 = vector.shape_cast %223 : vector<19x1x128xf32> to vector<19x128xf32>
    %225 = vector.extract_strided_slice %21 {offsets = [0, 4, 0], sizes = [19, 1, 128], strides = [1, 1, 1]} : vector<19x19x128xf32> to vector<19x1x128xf32>
    %226 = vector.shape_cast %225 : vector<19x1x128xf32> to vector<19x128xf32>
    %227 = vector.extract_strided_slice %21 {offsets = [0, 6, 0], sizes = [19, 1, 128], strides = [1, 1, 1]} : vector<19x19x128xf32> to vector<19x1x128xf32>
    %228 = vector.shape_cast %227 : vector<19x1x128xf32> to vector<19x128xf32>
    %229 = vector.extract_strided_slice %21 {offsets = [0, 8, 0], sizes = [19, 1, 128], strides = [1, 1, 1]} : vector<19x19x128xf32> to vector<19x1x128xf32>
    %230 = vector.shape_cast %229 : vector<19x1x128xf32> to vector<19x128xf32>
    %231 = vector.extract_strided_slice %21 {offsets = [0, 10, 0], sizes = [19, 1, 128], strides = [1, 1, 1]} : vector<19x19x128xf32> to vector<19x1x128xf32>
    %232 = vector.shape_cast %231 : vector<19x1x128xf32> to vector<19x128xf32>
    %233 = vector.extract_strided_slice %21 {offsets = [0, 12, 0], sizes = [19, 1, 128], strides = [1, 1, 1]} : vector<19x19x128xf32> to vector<19x1x128xf32>
    %234 = vector.shape_cast %233 : vector<19x1x128xf32> to vector<19x128xf32>
    %235 = vector.extract_strided_slice %21 {offsets = [0, 14, 0], sizes = [19, 1, 128], strides = [1, 1, 1]} : vector<19x19x128xf32> to vector<19x1x128xf32>
    %236 = vector.shape_cast %235 : vector<19x1x128xf32> to vector<19x128xf32>
    %237 = vector.extract_strided_slice %21 {offsets = [0, 16, 0], sizes = [19, 1, 128], strides = [1, 1, 1]} : vector<19x19x128xf32> to vector<19x1x128xf32>
    %238 = vector.shape_cast %237 : vector<19x1x128xf32> to vector<19x128xf32>
    %239 = vector.extract_strided_slice %21 {offsets = [0, 18, 0], sizes = [19, 1, 128], strides = [1, 1, 1]} : vector<19x19x128xf32> to vector<19x1x128xf32>
    %240 = vector.shape_cast %239 : vector<19x1x128xf32> to vector<19x128xf32>
    %241 = vector.shape_cast %224 : vector<19x128xf32> to vector<19x1x128xf32>
    %242 = vector.shape_cast %226 : vector<19x128xf32> to vector<19x1x128xf32>
    %243 = vector.shape_cast %228 : vector<19x128xf32> to vector<19x1x128xf32>
    %244 = vector.shape_cast %230 : vector<19x128xf32> to vector<19x1x128xf32>
    %245 = vector.shape_cast %232 : vector<19x128xf32> to vector<19x1x128xf32>
    %246 = vector.shape_cast %234 : vector<19x128xf32> to vector<19x1x128xf32>
    %247 = vector.shape_cast %236 : vector<19x128xf32> to vector<19x1x128xf32>
    %248 = vector.shape_cast %238 : vector<19x128xf32> to vector<19x1x128xf32>
    %249 = vector.shape_cast %240 : vector<19x128xf32> to vector<19x1x128xf32>
    %250 = tpu.concatenate %241, %242, %243, %244, %245, %246, %247, %248, %249 in 1 : vector<19x1x128xf32>, vector<19x1x128xf32>, vector<19x1x128xf32>, vector<19x1x128xf32>, vector<19x1x128xf32>, vector<19x1x128xf32>, vector<19x1x128xf32>, vector<19x1x128xf32>, vector<19x1x128xf32> -> vector<19x9x128xf32>
    %251 = vector.extract_strided_slice %250 {offsets = [0, 0, 0], sizes = [1, 9, 128], strides = [1, 1, 1]} : vector<19x9x128xf32> to vector<1x9x128xf32>
    %252 = vector.shape_cast %251 : vector<1x9x128xf32> to vector<9x128xf32>
    %253 = vector.extract_strided_slice %250 {offsets = [2, 0, 0], sizes = [1, 9, 128], strides = [1, 1, 1]} : vector<19x9x128xf32> to vector<1x9x128xf32>
    %254 = vector.shape_cast %253 : vector<1x9x128xf32> to vector<9x128xf32>
    %255 = vector.extract_strided_slice %250 {offsets = [4, 0, 0], sizes = [1, 9, 128], strides = [1, 1, 1]} : vector<19x9x128xf32> to vector<1x9x128xf32>
    %256 = vector.shape_cast %255 : vector<1x9x128xf32> to vector<9x128xf32>
    %257 = vector.extract_strided_slice %250 {offsets = [6, 0, 0], sizes = [1, 9, 128], strides = [1, 1, 1]} : vector<19x9x128xf32> to vector<1x9x128xf32>
    %258 = vector.shape_cast %257 : vector<1x9x128xf32> to vector<9x128xf32>
    %259 = vector.extract_strided_slice %250 {offsets = [8, 0, 0], sizes = [1, 9, 128], strides = [1, 1, 1]} : vector<19x9x128xf32> to vector<1x9x128xf32>
    %260 = vector.shape_cast %259 : vector<1x9x128xf32> to vector<9x128xf32>
    %261 = vector.extract_strided_slice %250 {offsets = [10, 0, 0], sizes = [1, 9, 128], strides = [1, 1, 1]} : vector<19x9x128xf32> to vector<1x9x128xf32>
    %262 = vector.shape_cast %261 : vector<1x9x128xf32> to vector<9x128xf32>
    %263 = vector.extract_strided_slice %250 {offsets = [12, 0, 0], sizes = [1, 9, 128], strides = [1, 1, 1]} : vector<19x9x128xf32> to vector<1x9x128xf32>
    %264 = vector.shape_cast %263 : vector<1x9x128xf32> to vector<9x128xf32>
    %265 = vector.extract_strided_slice %250 {offsets = [14, 0, 0], sizes = [1, 9, 128], strides = [1, 1, 1]} : vector<19x9x128xf32> to vector<1x9x128xf32>
    %266 = vector.shape_cast %265 : vector<1x9x128xf32> to vector<9x128xf32>
    %267 = vector.extract_strided_slice %250 {offsets = [16, 0, 0], sizes = [1, 9, 128], strides = [1, 1, 1]} : vector<19x9x128xf32> to vector<1x9x128xf32>
    %268 = vector.shape_cast %267 : vector<1x9x128xf32> to vector<9x128xf32>
    %269 = tpu.concatenate %252, %254, %256, %258, %260, %262, %264, %266, %268 in 0 : vector<9x128xf32>, vector<9x128xf32>, vector<9x128xf32>, vector<9x128xf32>, vector<9x128xf32>, vector<9x128xf32>, vector<9x128xf32>, vector<9x128xf32>, vector<9x128xf32> -> vector<81x128xf32>
    %270 = arith.truncf %269 : vector<81x128xf32> to vector<81x128xbf16>
    %c2 = arith.constant 2 : index
    %c0_30 = arith.constant 0 : index
    %c0_31 = arith.constant 0 : index
    %271 = vector.load %arg4[%c2, %c0_30, %c0_31] : memref<9x128x256xbf16, #tpu.memory_space<vmem>>, vector<1x128x256xbf16>
    %272 = vector.shape_cast %271 : vector<1x128x256xbf16> to vector<128x256xbf16>
    %cst_32 = arith.constant dense<0.000000e+00> : vector<81x256xf32>
    %273 = tpu.matmul %270, %272, %cst_32 {dimension_numbers = #tpu.dot_dimension_numbers<[1], [0], [0], [1], [0, 0, 1, 1], [], []>} : vector<81x128xbf16>, vector<128x256xbf16>, vector<81x256xf32> -> vector<81x256xf32>
    %274 = arith.addf %222, %273 : vector<81x256xf32>
    %275 = vector.extract_strided_slice %250 {offsets = [1, 0, 0], sizes = [1, 9, 128], strides = [1, 1, 1]} : vector<19x9x128xf32> to vector<1x9x128xf32>
    %276 = vector.shape_cast %275 : vector<1x9x128xf32> to vector<9x128xf32>
    %277 = vector.extract_strided_slice %250 {offsets = [3, 0, 0], sizes = [1, 9, 128], strides = [1, 1, 1]} : vector<19x9x128xf32> to vector<1x9x128xf32>
    %278 = vector.shape_cast %277 : vector<1x9x128xf32> to vector<9x128xf32>
    %279 = vector.extract_strided_slice %250 {offsets = [5, 0, 0], sizes = [1, 9, 128], strides = [1, 1, 1]} : vector<19x9x128xf32> to vector<1x9x128xf32>
    %280 = vector.shape_cast %279 : vector<1x9x128xf32> to vector<9x128xf32>
    %281 = vector.extract_strided_slice %250 {offsets = [7, 0, 0], sizes = [1, 9, 128], strides = [1, 1, 1]} : vector<19x9x128xf32> to vector<1x9x128xf32>
    %282 = vector.shape_cast %281 : vector<1x9x128xf32> to vector<9x128xf32>
    %283 = vector.extract_strided_slice %250 {offsets = [9, 0, 0], sizes = [1, 9, 128], strides = [1, 1, 1]} : vector<19x9x128xf32> to vector<1x9x128xf32>
    %284 = vector.shape_cast %283 : vector<1x9x128xf32> to vector<9x128xf32>
    %285 = vector.extract_strided_slice %250 {offsets = [11, 0, 0], sizes = [1, 9, 128], strides = [1, 1, 1]} : vector<19x9x128xf32> to vector<1x9x128xf32>
    %286 = vector.shape_cast %285 : vector<1x9x128xf32> to vector<9x128xf32>
    %287 = vector.extract_strided_slice %250 {offsets = [13, 0, 0], sizes = [1, 9, 128], strides = [1, 1, 1]} : vector<19x9x128xf32> to vector<1x9x128xf32>
    %288 = vector.shape_cast %287 : vector<1x9x128xf32> to vector<9x128xf32>
    %289 = vector.extract_strided_slice %250 {offsets = [15, 0, 0], sizes = [1, 9, 128], strides = [1, 1, 1]} : vector<19x9x128xf32> to vector<1x9x128xf32>
    %290 = vector.shape_cast %289 : vector<1x9x128xf32> to vector<9x128xf32>
    %291 = vector.extract_strided_slice %250 {offsets = [17, 0, 0], sizes = [1, 9, 128], strides = [1, 1, 1]} : vector<19x9x128xf32> to vector<1x9x128xf32>
    %292 = vector.shape_cast %291 : vector<1x9x128xf32> to vector<9x128xf32>
    %293 = tpu.concatenate %276, %278, %280, %282, %284, %286, %288, %290, %292 in 0 : vector<9x128xf32>, vector<9x128xf32>, vector<9x128xf32>, vector<9x128xf32>, vector<9x128xf32>, vector<9x128xf32>, vector<9x128xf32>, vector<9x128xf32>, vector<9x128xf32> -> vector<81x128xf32>
    %294 = arith.truncf %293 : vector<81x128xf32> to vector<81x128xbf16>
    %c5 = arith.constant 5 : index
    %c0_33 = arith.constant 0 : index
    %c0_34 = arith.constant 0 : index
    %295 = vector.load %arg4[%c5, %c0_33, %c0_34] : memref<9x128x256xbf16, #tpu.memory_space<vmem>>, vector<1x128x256xbf16>
    %296 = vector.shape_cast %295 : vector<1x128x256xbf16> to vector<128x256xbf16>
    %cst_35 = arith.constant dense<0.000000e+00> : vector<81x256xf32>
    %297 = tpu.matmul %294, %296, %cst_35 {dimension_numbers = #tpu.dot_dimension_numbers<[1], [0], [0], [1], [0, 0, 1, 1], [], []>} : vector<81x128xbf16>, vector<128x256xbf16>, vector<81x256xf32> -> vector<81x256xf32>
    %298 = arith.addf %274, %297 : vector<81x256xf32>
    %299 = vector.extract_strided_slice %250 {offsets = [2, 0, 0], sizes = [1, 9, 128], strides = [1, 1, 1]} : vector<19x9x128xf32> to vector<1x9x128xf32>
    %300 = vector.shape_cast %299 : vector<1x9x128xf32> to vector<9x128xf32>
    %301 = vector.extract_strided_slice %250 {offsets = [4, 0, 0], sizes = [1, 9, 128], strides = [1, 1, 1]} : vector<19x9x128xf32> to vector<1x9x128xf32>
    %302 = vector.shape_cast %301 : vector<1x9x128xf32> to vector<9x128xf32>
    %303 = vector.extract_strided_slice %250 {offsets = [6, 0, 0], sizes = [1, 9, 128], strides = [1, 1, 1]} : vector<19x9x128xf32> to vector<1x9x128xf32>
    %304 = vector.shape_cast %303 : vector<1x9x128xf32> to vector<9x128xf32>
    %305 = vector.extract_strided_slice %250 {offsets = [8, 0, 0], sizes = [1, 9, 128], strides = [1, 1, 1]} : vector<19x9x128xf32> to vector<1x9x128xf32>
    %306 = vector.shape_cast %305 : vector<1x9x128xf32> to vector<9x128xf32>
    %307 = vector.extract_strided_slice %250 {offsets = [10, 0, 0], sizes = [1, 9, 128], strides = [1, 1, 1]} : vector<19x9x128xf32> to vector<1x9x128xf32>
    %308 = vector.shape_cast %307 : vector<1x9x128xf32> to vector<9x128xf32>
    %309 = vector.extract_strided_slice %250 {offsets = [12, 0, 0], sizes = [1, 9, 128], strides = [1, 1, 1]} : vector<19x9x128xf32> to vector<1x9x128xf32>
    %310 = vector.shape_cast %309 : vector<1x9x128xf32> to vector<9x128xf32>
    %311 = vector.extract_strided_slice %250 {offsets = [14, 0, 0], sizes = [1, 9, 128], strides = [1, 1, 1]} : vector<19x9x128xf32> to vector<1x9x128xf32>
    %312 = vector.shape_cast %311 : vector<1x9x128xf32> to vector<9x128xf32>
    %313 = vector.extract_strided_slice %250 {offsets = [16, 0, 0], sizes = [1, 9, 128], strides = [1, 1, 1]} : vector<19x9x128xf32> to vector<1x9x128xf32>
    %314 = vector.shape_cast %313 : vector<1x9x128xf32> to vector<9x128xf32>
    %315 = vector.extract_strided_slice %250 {offsets = [18, 0, 0], sizes = [1, 9, 128], strides = [1, 1, 1]} : vector<19x9x128xf32> to vector<1x9x128xf32>
    %316 = vector.shape_cast %315 : vector<1x9x128xf32> to vector<9x128xf32>
    %317 = tpu.concatenate %300, %302, %304, %306, %308, %310, %312, %314, %316 in 0 : vector<9x128xf32>, vector<9x128xf32>, vector<9x128xf32>, vector<9x128xf32>, vector<9x128xf32>, vector<9x128xf32>, vector<9x128xf32>, vector<9x128xf32>, vector<9x128xf32> -> vector<81x128xf32>
    %318 = arith.truncf %317 : vector<81x128xf32> to vector<81x128xbf16>
    %c8 = arith.constant 8 : index
    %c0_36 = arith.constant 0 : index
    %c0_37 = arith.constant 0 : index
    %319 = vector.load %arg4[%c8, %c0_36, %c0_37] : memref<9x128x256xbf16, #tpu.memory_space<vmem>>, vector<1x128x256xbf16>
    %320 = vector.shape_cast %319 : vector<1x128x256xbf16> to vector<128x256xbf16>
    %cst_38 = arith.constant dense<0.000000e+00> : vector<81x256xf32>
    %321 = tpu.matmul %318, %320, %cst_38 {dimension_numbers = #tpu.dot_dimension_numbers<[1], [0], [0], [1], [0, 0, 1, 1], [], []>} : vector<81x128xbf16>, vector<128x256xbf16>, vector<81x256xf32> -> vector<81x256xf32>
    %322 = arith.addf %298, %321 : vector<81x256xf32>
    %c0_39 = arith.constant 0 : index
    %c0_40 = arith.constant 0 : index
    %323 = vector.load %arg5[%c0_39, %c0_40] : memref<1x256xf32, #tpu.memory_space<vmem>>, vector<1x256xf32>
    %324 = vector.broadcast %323 : vector<1x256xf32> to vector<81x256xf32>
    %325 = arith.addf %322, %324 : vector<81x256xf32>
    %cst_41 = arith.constant 0.000000e+00 : f32
    %326 = vector.broadcast %cst_41 : f32 to vector<81x256xf32>
    %327 = arith.maximumf %325, %326 : vector<81x256xf32>
    %328 = arith.truncf %327 : vector<81x256xf32> to vector<81x256xbf16>
    %c0_42 = arith.constant 0 : index
    %c0_43 = arith.constant 0 : index
    %c0_44 = arith.constant 0 : index
    %329 = vector.load %arg6[%c0_42, %c0_43, %c0_44] : memref<1x81x256xbf16, #tpu.memory_space<vmem>>, vector<1x81x256xbf16>
    %330 = vector.shape_cast %329 : vector<1x81x256xbf16> to vector<81x256xbf16>
    %331 = vector.shape_cast %328 : vector<81x256xbf16> to vector<1x81x256xbf16>
    tpu.vector_store %arg6[%c0_42, %c0_43, %c0_44], %331 {strides = array<i32>} : memref<1x81x256xbf16, #tpu.memory_space<vmem>>, vector<1x81x256xbf16>,
    return
  }
  func.func @transform_0(%arg0: i32) -> (i32, i32, i32) {
    %c0_i32 = arith.constant 0 : i32
    %c0_i32_0 = arith.constant 0 : i32
    %c0_i32_1 = arith.constant 0 : i32
    return %arg0, %c0_i32, %c0_i32_0 : i32, i32, i32
  }
  func.func @transform_1(%arg0: i32) -> (i32, i32) {
    %c0_i32 = arith.constant 0 : i32
    %c0_i32_0 = arith.constant 0 : i32
    %c0_i32_1 = arith.constant 0 : i32
    return %c0_i32, %c0_i32_0 : i32, i32
  }
  func.func @transform_2(%arg0: i32) -> (i32, i32) {
    %c0_i32 = arith.constant 0 : i32
    %c0_i32_0 = arith.constant 0 : i32
    %c0_i32_1 = arith.constant 0 : i32
    return %c0_i32, %c0_i32_0 : i32, i32
  }
  func.func @transform_3(%arg0: i32) -> (i32, i32, i32) {
    %c0_i32 = arith.constant 0 : i32
    %c0_i32_0 = arith.constant 0 : i32
    %c0_i32_1 = arith.constant 0 : i32
    %c0_i32_2 = arith.constant 0 : i32
    return %c0_i32, %c0_i32_0, %c0_i32_1 : i32, i32, i32
  }
  func.func @transform_4(%arg0: i32) -> (i32, i32) {
    %c0_i32 = arith.constant 0 : i32
    %c0_i32_0 = arith.constant 0 : i32
    %c0_i32_1 = arith.constant 0 : i32
    return %c0_i32, %c0_i32_0 : i32, i32
  }
  func.func @transform_5(%arg0: i32) -> (i32, i32, i32) {
    %c0_i32 = arith.constant 0 : i32
    %c0_i32_0 = arith.constant 0 : i32
    %c0_i32_1 = arith.constant 0 : i32
    return %arg0, %c0_i32, %c0_i32_0 : i32, i32, i32
  }
}

module attributes {stable_mosaic.version = 11 : i64} {
  func.func @_fc_kernel(%arg0: i32, %arg1: memref<2x20736xbf16, #tpu.memory_space<vmem>>, %arg2: memref<10x20736xbf16, #tpu.memory_space<vmem>>, %arg3: memref<2x10xf32, #tpu.memory_space<vmem>>) attributes {dimension_semantics = [#tpu.dimension_semantics<arbitrary>], iteration_bounds = array<i64: 1>, scalar_prefetch = 0 : i64, scratch_operands = 0 : i64, tpu.core_type = #tpu.core_type<tc>, window_params = [{pipeline_mode = #tpu.pipeline_mode<synchronous>, transform_indices = @transform_0, window_bounds = array<i64: 2, 20736>}, {pipeline_mode = #tpu.pipeline_mode<synchronous>, transform_indices = @transform_1, window_bounds = array<i64: 10, 20736>}, {pipeline_mode = #tpu.pipeline_mode<synchronous>, transform_indices = @transform_2, window_bounds = array<i64: 2, 10>}]} {
    %c0 = arith.constant 0 : index
    %c0_0 = arith.constant 0 : index
    %0 = vector.load %arg1[%c0, %c0_0] : memref<2x20736xbf16, #tpu.memory_space<vmem>>, vector<2x20736xbf16>
    %c0_1 = arith.constant 0 : index
    %c0_2 = arith.constant 0 : index
    %1 = vector.load %arg2[%c0_1, %c0_2] : memref<10x20736xbf16, #tpu.memory_space<vmem>>, vector<10x20736xbf16>
    %cst = arith.constant dense<0.000000e+00> : vector<2x10xf32>
    %2 = tpu.matmul %0, %1, %cst {dimension_numbers = #tpu.dot_dimension_numbers<[1], [1], [0], [0], [0, 0, 1, 0], [], []>} : vector<2x20736xbf16>, vector<10x20736xbf16>, vector<2x10xf32> -> vector<2x10xf32>
    %c0_3 = arith.constant 0 : index
    %c0_4 = arith.constant 0 : index
    %3 = vector.load %arg3[%c0_3, %c0_4] : memref<2x10xf32, #tpu.memory_space<vmem>>, vector<2x10xf32>
    tpu.vector_store %arg3[%c0_3, %c0_4], %2 {strides = array<i32>} : memref<2x10xf32, #tpu.memory_space<vmem>>, vector<2x10xf32>,
    return
  }
  func.func @transform_0(%arg0: i32) -> (i32, i32) {
    %c0_i32 = arith.constant 0 : i32
    %c0_i32_0 = arith.constant 0 : i32
    %c0_i32_1 = arith.constant 0 : i32
    return %c0_i32, %c0_i32_0 : i32, i32
  }
  func.func @transform_1(%arg0: i32) -> (i32, i32) {
    %c0_i32 = arith.constant 0 : i32
    %c0_i32_0 = arith.constant 0 : i32
    %c0_i32_1 = arith.constant 0 : i32
    return %c0_i32, %c0_i32_0 : i32, i32
  }
  func.func @transform_2(%arg0: i32) -> (i32, i32) {
    %c0_i32 = arith.constant 0 : i32
    %c0_i32_0 = arith.constant 0 : i32
    %c0_i32_1 = arith.constant 0 : i32
    return %c0_i32, %c0_i32_0 : i32, i32
  }
}

</mosaic_0001>

<llo_original>
// kernel: cnn_2layer_fc_forward.3
$region0: #{cnn_2layer_fc_forward.3}
  #allocation0 [shape = 'u32[]', space=smem, size = 0x4, offset = 0x4, fixed_abs, tag = 'smem constant byte address 0x4 - core index']
  #allocation1 [shape = 'u32[144,128]{1,0:T(1,128)}', space=vmem, size = 0x12000, scoped, tag = 'internal scratch']
  %s0 = inlined_call_operand.vmem [shape: bf16[2,20736], index: 0, kind: input, shape index: {}]
  %s1 = inlined_call_operand.vmem [shape: bf16[10,20736], index: 1, kind: input, shape index: {}]
  %s2 = inlined_call_operand.hbm [shape: f32[2,10], index: 2, kind: output, shape index: {}]
  %s3 = sld [smem:[#allocation0]]
  $region18: #{cnn_2layer_fc_forward.3} parent=0
    _
  %s5 = ssub.s32 1, %s3
  %s6 = scalar_select 0, %s5, %s3
  $region1: #{cnn_2layer_fc_forward.3} parent=0
    #allocation2 [shape = 'u8[1024]{0}', space=vmem, size = 0x400, scoped, tag = 'output window, operand 0, single buffered']
    #allocation3 [shape = 's32[1]{0}', space=sflag, size = 0x4, scoped, tag = 'scoped memory for cnn_2layer_fc_forward.3']
    %7 = vsyncpa [#allocation3], 0
    // Predicated region
    $region2: #{cnn_2layer_fc_forward.3} parent=1 // pred_check
      _
    $region3: #{cnn_2layer_fc_forward.3} parent=1 // pred_check_branch
      %9 = sbr.rel (0) target = $region5
    $region4: #{cnn_2layer_fc_forward.3} parent=1 // pred_region
      _
    $region5: #{cnn_2layer_fc_forward.3} parent=1 // pred_fallthru
      _
    // Predicated region
    $region6: #{cnn_2layer_fc_forward.3} parent=1 // pred_check
      _
    $region7: #{cnn_2layer_fc_forward.3} parent=1 // pred_check_branch
      %11 = sbr.rel (0) target = $region9
    $region8: #{cnn_2layer_fc_forward.3} parent=1 // pred_region
      _
    $region9: #{cnn_2layer_fc_forward.3} parent=1 // pred_fallthru
      _
    %v13 = vld [vmem:[%s0] sm:$0xff]
    %v14 = vld [vmem:[%s0 + $0x8] sm:$0xff]
    %v15 = vld [vmem:[%s0 + $0x10] sm:$0xff]
    %v16 = vld [vmem:[%s0 + $0x18] sm:$0xff]
    %v17 = vld [vmem:[%s0 + $0x20] sm:$0xff]
    %v18 = vld [vmem:[%s0 + $0x28] sm:$0xff]
    %v19 = vld [vmem:[%s0 + $0x30] sm:$0xff]
    %v20 = vld [vmem:[%s0 + $0x38] sm:$0xff]
    %v21 = vld [vmem:[%s0 + $0x40] sm:$0xff]
    %v22 = vld [vmem:[%s0 + $0x48] sm:$0xff]
    %v23 = vld [vmem:[%s0 + $0x50] sm:$0xff]
    %v24 = vld [vmem:[%s0 + $0x58] sm:$0xff]
    %v25 = vld [vmem:[%s0 + $0x60] sm:$0xff]
    %v26 = vld [vmem:[%s0 + $0x68] sm:$0xff]
    %v27 = vld [vmem:[%s0 + $0x70] sm:$0xff]
    %v28 = vld [vmem:[%s0 + $0x78] sm:$0xff]
    %v29 = vld [vmem:[%s0 + $0x80] sm:$0xff]
    %v30 = vld [vmem:[%s0 + $0x88] sm:$0xff]
    %v31 = vld [vmem:[%s0 + $0x90] sm:$0xff]
    %v32 = vld [vmem:[%s0 + $0x98] sm:$0xff]
    %v33 = vld [vmem:[%s0 + $0xa0] sm:$0x3]
    %v34 = vld [vmem:[%s1] sm:$0xff]
    %v35 = vld [vmem:[%s1 + $0x8] sm:$0xff]
    %v36 = vld [vmem:[%s1 + $0x10] sm:$0xff]
    %v37 = vld [vmem:[%s1 + $0x18] sm:$0xff]
    %v38 = vld [vmem:[%s1 + $0x20] sm:$0xff]
    %v39 = vld [vmem:[%s1 + $0x28] sm:$0xff]
    %v40 = vld [vmem:[%s1 + $0x30] sm:$0xff]
    %v41 = vld [vmem:[%s1 + $0x38] sm:$0xff]
    %v42 = vld [vmem:[%s1 + $0x40] sm:$0xff]
    %v43 = vld [vmem:[%s1 + $0x48] sm:$0xff]
    %v44 = vld [vmem:[%s1 + $0x50] sm:$0xff]
    %v45 = vld [vmem:[%s1 + $0x58] sm:$0xff]
    %v46 = vld [vmem:[%s1 + $0x60] sm:$0xff]
    %v47 = vld [vmem:[%s1 + $0x68] sm:$0xff]
    %v48 = vld [vmem:[%s1 + $0x70] sm:$0xff]
    %v49 = vld [vmem:[%s1 + $0x78] sm:$0xff]
    %v50 = vld [vmem:[%s1 + $0x80] sm:$0xff]
    %v51 = vld [vmem:[%s1 + $0x88] sm:$0xff]
    %v52 = vld [vmem:[%s1 + $0x90] sm:$0xff]
    %v53 = vld [vmem:[%s1 + $0x98] sm:$0xff]
    %v54 = vld [vmem:[%s1 + $0xa0] sm:$0xff]
    %v55 = vld [vmem:[%s1 + $0xa8] sm:$0xff]
    %v56 = vld [vmem:[%s1 + $0xb0] sm:$0xff]
    %v57 = vld [vmem:[%s1 + $0xb8] sm:$0xff]
    %v58 = vld [vmem:[%s1 + $0xc0] sm:$0xff]
    %v59 = vld [vmem:[%s1 + $0xc8] sm:$0xff]
    %v60 = vld [vmem:[%s1 + $0xd0] sm:$0xff]
    %v61 = vld [vmem:[%s1 + $0xd8] sm:$0xff]
    %v62 = vld [vmem:[%s1 + $0xe0] sm:$0xff]
    %v63 = vld [vmem:[%s1 + $0xe8] sm:$0xff]
    %v64 = vld [vmem:[%s1 + $0xf0] sm:$0xff]
    %v65 = vld [vmem:[%s1 + $0xf8] sm:$0xff]
    %v66 = vld [vmem:[%s1 + $0x100] sm:$0xff]
    %v67 = vld [vmem:[%s1 + $0x108] sm:$0xff]
    %v68 = vld [vmem:[%s1 + $0x110] sm:$0xff]
    %v69 = vld [vmem:[%s1 + $0x118] sm:$0xff]
    %v70 = vld [vmem:[%s1 + $0x120] sm:$0xff]
    %v71 = vld [vmem:[%s1 + $0x128] sm:$0xff]
    %v72 = vld [vmem:[%s1 + $0x130] sm:$0xff]
    %v73 = vld [vmem:[%s1 + $0x138] sm:$0xff]
    %v74 = vld [vmem:[%s1 + $0x140] sm:$0xff]
    %v75 = vld [vmem:[%s1 + $0x148] sm:$0xff]
    %v76 = vld [vmem:[%s1 + $0x150] sm:$0xff]
    %v77 = vld [vmem:[%s1 + $0x158] sm:$0xff]
    %v78 = vld [vmem:[%s1 + $0x160] sm:$0xff]
    %v79 = vld [vmem:[%s1 + $0x168] sm:$0xff]
    %v80 = vld [vmem:[%s1 + $0x170] sm:$0xff]
    %v81 = vld [vmem:[%s1 + $0x178] sm:$0xff]
    %v82 = vld [vmem:[%s1 + $0x180] sm:$0xff]
    %v83 = vld [vmem:[%s1 + $0x188] sm:$0xff]
    %v84 = vld [vmem:[%s1 + $0x190] sm:$0xff]
    %v85 = vld [vmem:[%s1 + $0x198] sm:$0xff]
    %v86 = vld [vmem:[%s1 + $0x1a0] sm:$0xff]
    %v87 = vld [vmem:[%s1 + $0x1a8] sm:$0xff]
    %v88 = vld [vmem:[%s1 + $0x1b0] sm:$0xff]
    %v89 = vld [vmem:[%s1 + $0x1b8] sm:$0xff]
    %v90 = vld [vmem:[%s1 + $0x1c0] sm:$0xff]
    %v91 = vld [vmem:[%s1 + $0x1c8] sm:$0xff]
    %v92 = vld [vmem:[%s1 + $0x1d0] sm:$0xff]
    %v93 = vld [vmem:[%s1 + $0x1d8] sm:$0xff]
    %v94 = vld [vmem:[%s1 + $0x1e0] sm:$0xff]
    %v95 = vld [vmem:[%s1 + $0x1e8] sm:$0xff]
    %v96 = vld [vmem:[%s1 + $0x1f0] sm:$0xff]
    %v97 = vld [vmem:[%s1 + $0x1f8] sm:$0xff]
    %v98 = vld [vmem:[%s1 + $0x200] sm:$0xff]
    %v99 = vld [vmem:[%s1 + $0x208] sm:$0xff]
    %v100 = vld [vmem:[%s1 + $0x210] sm:$0xff]
    %v101 = vld [vmem:[%s1 + $0x218] sm:$0xff]
    %v102 = vld [vmem:[%s1 + $0x220] sm:$0xff]
    %v103 = vld [vmem:[%s1 + $0x228] sm:$0xff]
    %v104 = vld [vmem:[%s1 + $0x230] sm:$0xff]
    %v105 = vld [vmem:[%s1 + $0x238] sm:$0xff]
    %v106 = vld [vmem:[%s1 + $0x240] sm:$0xff]
    %v107 = vld [vmem:[%s1 + $0x248] sm:$0xff]
    %v108 = vld [vmem:[%s1 + $0x250] sm:$0xff]
    %v109 = vld [vmem:[%s1 + $0x258] sm:$0xff]
    %v110 = vld [vmem:[%s1 + $0x260] sm:$0xff]
    %v111 = vld [vmem:[%s1 + $0x268] sm:$0xff]
    %v112 = vld [vmem:[%s1 + $0x270] sm:$0xff]
    %v113 = vld [vmem:[%s1 + $0x278] sm:$0xff]
    %v114 = vld [vmem:[%s1 + $0x280] sm:$0xff]
    %v115 = vld [vmem:[%s1 + $0x288] sm:$0x11]
    %v116 = vld [vmem:[%s1 + $0x290] sm:$0x11]
    %v117 = vld [vmem:[%s1 + $0x298] sm:$0x11]
    %v118 = vld [vmem:[%s1 + $0x2a0] sm:$0x11]
    %v119 = vld [vmem:[%s1 + $0x2a8] sm:$0x11]
    %v120 = vld [vmem:[%s1 + $0x2b0] sm:$0x11]
    %v121 = vld [vmem:[%s1 + $0x2b8] sm:$0x11]
    %v122 = vld [vmem:[%s1 + $0x2c0] sm:$0x11]
    %v123 = vld [vmem:[%s1 + $0x2c8] sm:$0x11]
    %v124 = vld [vmem:[%s1 + $0x2d0] sm:$0x11]
    %v125 = vld [vmem:[%s1 + $0x2d8] sm:$0x11]
    %v126 = vld [vmem:[%s1 + $0x2e0] sm:$0x11]
    %v127 = vld [vmem:[%s1 + $0x2e8] sm:$0x11]
    %v128 = vld [vmem:[%s1 + $0x2f0] sm:$0x11]
    %v129 = vld [vmem:[%s1 + $0x2f8] sm:$0x11]
    %v130 = vld [vmem:[%s1 + $0x300] sm:$0x11]
    %v131 = vld [vmem:[%s1 + $0x308] sm:$0x11]
    %v132 = vld [vmem:[%s1 + $0x310] sm:$0x11]
    %v133 = vld [vmem:[%s1 + $0x318] sm:$0x11]
    %v134 = vld [vmem:[%s1 + $0x320] sm:$0x11]
    %v135 = vld [vmem:[%s1 + $0x328] sm:$0x11]
    %v136 = vld [vmem:[%s1 + $0x330] sm:$0x11]
    %v137 = vld [vmem:[%s1 + $0x338] sm:$0x11]
    %v138 = vld [vmem:[%s1 + $0x340] sm:$0x11]
    %v139 = vld [vmem:[%s1 + $0x348] sm:$0x11]
    %v140 = vld [vmem:[%s1 + $0x350] sm:$0x11]
    %v141 = vld [vmem:[%s1 + $0x358] sm:$0x11]
    %v142 = vld [vmem:[%s1 + $0x360] sm:$0x11]
    %v143 = vld [vmem:[%s1 + $0x368] sm:$0x11]
    %v144 = vld [vmem:[%s1 + $0x370] sm:$0x11]
    %v145 = vld [vmem:[%s1 + $0x378] sm:$0x11]
    %v146 = vld [vmem:[%s1 + $0x380] sm:$0x11]
    %v147 = vld [vmem:[%s1 + $0x388] sm:$0x11]
    %v148 = vld [vmem:[%s1 + $0x390] sm:$0x11]
    %v149 = vld [vmem:[%s1 + $0x398] sm:$0x11]
    %v150 = vld [vmem:[%s1 + $0x3a0] sm:$0x11]
    %v151 = vld [vmem:[%s1 + $0x3a8] sm:$0x11]
    %v152 = vld [vmem:[%s1 + $0x3b0] sm:$0x11]
    %v153 = vld [vmem:[%s1 + $0x3b8] sm:$0x11]
    %v154 = vld [vmem:[%s1 + $0x3c0] sm:$0x11]
    %v155 = vld [vmem:[%s1 + $0x3c8] sm:$0x11]
    %v156 = vld [vmem:[%s1 + $0x3d0] sm:$0x11]
    %v157 = vld [vmem:[%s1 + $0x3d8] sm:$0x11]
    %v158 = vld [vmem:[%s1 + $0x3e0] sm:$0x11]
    %v159 = vld [vmem:[%s1 + $0x3e8] sm:$0x11]
    %v160 = vld [vmem:[%s1 + $0x3f0] sm:$0x11]
    %v161 = vld [vmem:[%s1 + $0x3f8] sm:$0x11]
    %v162 = vld [vmem:[%s1 + $0x400] sm:$0x11]
    %v163 = vld [vmem:[%s1 + $0x408] sm:$0x11]
    %v164 = vld [vmem:[%s1 + $0x410] sm:$0x11]
    %v165 = vld [vmem:[%s1 + $0x418] sm:$0x11]
    %v166 = vld [vmem:[%s1 + $0x420] sm:$0x11]
    %v167 = vld [vmem:[%s1 + $0x428] sm:$0x11]
    %v168 = vld [vmem:[%s1 + $0x430] sm:$0x11]
    %v169 = vld [vmem:[%s1 + $0x438] sm:$0x11]
    %v170 = vld [vmem:[%s1 + $0x440] sm:$0x11]
    %v171 = vld [vmem:[%s1 + $0x448] sm:$0x11]
    %v172 = vld [vmem:[%s1 + $0x450] sm:$0x11]
    %v173 = vld [vmem:[%s1 + $0x458] sm:$0x11]
    %v174 = vld [vmem:[%s1 + $0x460] sm:$0x11]
    %v175 = vld [vmem:[%s1 + $0x468] sm:$0x11]
    %v176 = vld [vmem:[%s1 + $0x470] sm:$0x11]
    %v177 = vld [vmem:[%s1 + $0x478] sm:$0x11]
    %v178 = vld [vmem:[%s1 + $0x480] sm:$0x11]
    %v179 = vld [vmem:[%s1 + $0x488] sm:$0x11]
    %v180 = vld [vmem:[%s1 + $0x490] sm:$0x11]
    %v181 = vld [vmem:[%s1 + $0x498] sm:$0x11]
    %v182 = vld [vmem:[%s1 + $0x4a0] sm:$0x11]
    %v183 = vld [vmem:[%s1 + $0x4a8] sm:$0x11]
    %v184 = vld [vmem:[%s1 + $0x4b0] sm:$0x11]
    %v185 = vld [vmem:[%s1 + $0x4b8] sm:$0x11]
    %v186 = vld [vmem:[%s1 + $0x4c0] sm:$0x11]
    %v187 = vld [vmem:[%s1 + $0x4c8] sm:$0x11]
    %v188 = vld [vmem:[%s1 + $0x4d0] sm:$0x11]
    %v189 = vld [vmem:[%s1 + $0x4d8] sm:$0x11]
    %v190 = vld [vmem:[%s1 + $0x4e0] sm:$0x11]
    %v191 = vld [vmem:[%s1 + $0x4e8] sm:$0x11]
    %v192 = vld [vmem:[%s1 + $0x4f0] sm:$0x11]
    %v193 = vld [vmem:[%s1 + $0x4f8] sm:$0x11]
    %v194 = vld [vmem:[%s1 + $0x500] sm:$0x11]
    %v195 = vld [vmem:[%s1 + $0x508] sm:$0x11]
    %v217 = vcombine.high %v13, %v13
    %v219 = vunpack.c.l.s4 1966171168
    %v220 = vunpack.c.0.s8 %v219
    %v221 = vlaneseq
    %v222 = vshrl.u32 %v221, 7
    %v223 = vsub.s32 %v220, %v222
    %v224 = vrot.slane %v13, %v223
    %v226 = vunpack.c.l.s4 1966171168
    %v227 = vunpack.c.0.s8 %v226
    %v228 = vlaneseq
    %v229 = vshrl.u32 %v228, 7
    %v230 = vsub.s32 %v227, %v229
    %v231 = vrot.slane %v217, %v230
    %v232 = vcombine.high %v224, %v224
    %v233 = vcombine.high %v231, %v231
    %v235 = vunpack.c.l.s4 1966171168
    %v236 = vunpack.c.0.s8 %v235
    %v237 = vlaneseq
    %v238 = vshrl.u32 %v237, 7
    %v239 = vsub.s32 %v236, %v238
    %v240 = vrot.slane %v224, %v239
    %v242 = vunpack.c.l.s4 1966171168
    %v243 = vunpack.c.0.s8 %v242
    %v244 = vlaneseq
    %v245 = vshrl.u32 %v244, 7
    %v246 = vsub.s32 %v243, %v245
    %v247 = vrot.slane %v231, %v246
    %v249 = vunpack.c.l.s4 1966171168
    %v250 = vunpack.c.0.s8 %v249
    %v251 = vlaneseq
    %v252 = vshrl.u32 %v251, 7
    %v253 = vsub.s32 %v250, %v252
    %v254 = vrot.slane %v232, %v253
    %v256 = vunpack.c.l.s4 1966171168
    %v257 = vunpack.c.0.s8 %v256
    %v258 = vlaneseq
    %v259 = vshrl.u32 %v258, 7
    %v260 = vsub.s32 %v257, %v259
    %v261 = vrot.slane %v233, %v260
    %v262 = vcombine.high %v240, %v240
    %v263 = vcombine.high %v247, %v247
    %v264 = vcombine.high %v254, %v254
    %v265 = vcombine.high %v261, %v261
    %v266 = vcombine.high %v14, %v14
    %v268 = vunpack.c.l.s4 1966171168
    %v269 = vunpack.c.0.s8 %v268
    %v270 = vlaneseq
    %v271 = vshrl.u32 %v270, 7
    %v272 = vsub.s32 %v269, %v271
    %v273 = vrot.slane %v14, %v272
    %v275 = vunpack.c.l.s4 1966171168
    %v276 = vunpack.c.0.s8 %v275
    %v277 = vlaneseq
    %v278 = vshrl.u32 %v277, 7
    %v279 = vsub.s32 %v276, %v278
    %v280 = vrot.slane %v266, %v279
    %v281 = vcombine.high %v273, %v273
    %v282 = vcombine.high %v280, %v280
    %v284 = vunpack.c.l.s4 1966171168
    %v285 = vunpack.c.0.s8 %v284
    %v286 = vlaneseq
    %v287 = vshrl.u32 %v286, 7
    %v288 = vsub.s32 %v285, %v287
    %v289 = vrot.slane %v273, %v288
    %v291 = vunpack.c.l.s4 1966171168
    %v292 = vunpack.c.0.s8 %v291
    %v293 = vlaneseq
    %v294 = vshrl.u32 %v293, 7
    %v295 = vsub.s32 %v292, %v294
    %v296 = vrot.slane %v280, %v295
    %v298 = vunpack.c.l.s4 1966171168
    %v299 = vunpack.c.0.s8 %v298
    %v300 = vlaneseq
    %v301 = vshrl.u32 %v300, 7
    %v302 = vsub.s32 %v299, %v301
    %v303 = vrot.slane %v281, %v302
    %v305 = vunpack.c.l.s4 1966171168
    %v306 = vunpack.c.0.s8 %v305
    %v307 = vlaneseq
    %v308 = vshrl.u32 %v307, 7
    %v309 = vsub.s32 %v306, %v308
    %v310 = vrot.slane %v282, %v309
    %v311 = vcombine.high %v289, %v289
    %v312 = vcombine.high %v296, %v296
    %v313 = vcombine.high %v303, %v303
    %v314 = vcombine.high %v310, %v310
    %v315 = vcombine.high %v15, %v15
    %v317 = vunpack.c.l.s4 1966171168
    %v318 = vunpack.c.0.s8 %v317
    %v319 = vlaneseq
    %v320 = vshrl.u32 %v319, 7
    %v321 = vsub.s32 %v318, %v320
    %v322 = vrot.slane %v15, %v321
    %v324 = vunpack.c.l.s4 1966171168
    %v325 = vunpack.c.0.s8 %v324
    %v326 = vlaneseq
    %v327 = vshrl.u32 %v326, 7
    %v328 = vsub.s32 %v325, %v327
    %v329 = vrot.slane %v315, %v328
    %v330 = vcombine.high %v322, %v322
    %v331 = vcombine.high %v329, %v329
    %v333 = vunpack.c.l.s4 1966171168
    %v334 = vunpack.c.0.s8 %v333
    %v335 = vlaneseq
    %v336 = vshrl.u32 %v335, 7
    %v337 = vsub.s32 %v334, %v336
    %v338 = vrot.slane %v322, %v337
    %v340 = vunpack.c.l.s4 1966171168
    %v341 = vunpack.c.0.s8 %v340
    %v342 = vlaneseq
    %v343 = vshrl.u32 %v342, 7
    %v344 = vsub.s32 %v341, %v343
    %v345 = vrot.slane %v329, %v344
    %v347 = vunpack.c.l.s4 1966171168
    %v348 = vunpack.c.0.s8 %v347
    %v349 = vlaneseq
    %v350 = vshrl.u32 %v349, 7
    %v351 = vsub.s32 %v348, %v350
    %v352 = vrot.slane %v330, %v351
    %v354 = vunpack.c.l.s4 1966171168
    %v355 = vunpack.c.0.s8 %v354
    %v356 = vlaneseq
    %v357 = vshrl.u32 %v356, 7
    %v358 = vsub.s32 %v355, %v357
    %v359 = vrot.slane %v331, %v358
    %v360 = vcombine.high %v338, %v338
    %v361 = vcombine.high %v345, %v345
    %v362 = vcombine.high %v352, %v352
    %v363 = vcombine.high %v359, %v359
    %v364 = vcombine.high %v16, %v16
    %v366 = vunpack.c.l.s4 1966171168
    %v367 = vunpack.c.0.s8 %v366
    %v368 = vlaneseq
    %v369 = vshrl.u32 %v368, 7
    %v370 = vsub.s32 %v367, %v369
    %v371 = vrot.slane %v16, %v370
    %v373 = vunpack.c.l.s4 1966171168
    %v374 = vunpack.c.0.s8 %v373
    %v375 = vlaneseq
    %v376 = vshrl.u32 %v375, 7
    %v377 = vsub.s32 %v374, %v376
    %v378 = vrot.slane %v364, %v377
    %v379 = vcombine.high %v371, %v371
    %v380 = vcombine.high %v378, %v378
    %v382 = vunpack.c.l.s4 1966171168
    %v383 = vunpack.c.0.s8 %v382
    %v384 = vlaneseq
    %v385 = vshrl.u32 %v384, 7
    %v386 = vsub.s32 %v383, %v385
    %v387 = vrot.slane %v371, %v386
    %v389 = vunpack.c.l.s4 1966171168
    %v390 = vunpack.c.0.s8 %v389
    %v391 = vlaneseq
    %v392 = vshrl.u32 %v391, 7
    %v393 = vsub.s32 %v390, %v392
    %v394 = vrot.slane %v378, %v393
    %v396 = vunpack.c.l.s4 1966171168
    %v397 = vunpack.c.0.s8 %v396
    %v398 = vlaneseq
    %v399 = vshrl.u32 %v398, 7
    %v400 = vsub.s32 %v397, %v399
    %v401 = vrot.slane %v379, %v400
    %v403 = vunpack.c.l.s4 1966171168
    %v404 = vunpack.c.0.s8 %v403
    %v405 = vlaneseq
    %v406 = vshrl.u32 %v405, 7
    %v407 = vsub.s32 %v404, %v406
    %v408 = vrot.slane %v380, %v407
    %v409 = vcombine.high %v387, %v387
    %v410 = vcombine.high %v394, %v394
    %v411 = vcombine.high %v401, %v401
    %v412 = vcombine.high %v408, %v408
    %v413 = vcombine.high %v17, %v17
    %v415 = vunpack.c.l.s4 1966171168
    %v416 = vunpack.c.0.s8 %v415
    %v417 = vlaneseq
    %v418 = vshrl.u32 %v417, 7
    %v419 = vsub.s32 %v416, %v418
    %v420 = vrot.slane %v17, %v419
    %v422 = vunpack.c.l.s4 1966171168
    %v423 = vunpack.c.0.s8 %v422
    %v424 = vlaneseq
    %v425 = vshrl.u32 %v424, 7
    %v426 = vsub.s32 %v423, %v425
    %v427 = vrot.slane %v413, %v426
    %v428 = vcombine.high %v420, %v420
    %v429 = vcombine.high %v427, %v427
    %v431 = vunpack.c.l.s4 1966171168
    %v432 = vunpack.c.0.s8 %v431
    %v433 = vlaneseq
    %v434 = vshrl.u32 %v433, 7
    %v435 = vsub.s32 %v432, %v434
    %v436 = vrot.slane %v420, %v435
    %v438 = vunpack.c.l.s4 1966171168
    %v439 = vunpack.c.0.s8 %v438
    %v440 = vlaneseq
    %v441 = vshrl.u32 %v440, 7
    %v442 = vsub.s32 %v439, %v441
    %v443 = vrot.slane %v427, %v442
    %v445 = vunpack.c.l.s4 1966171168
    %v446 = vunpack.c.0.s8 %v445
    %v447 = vlaneseq
    %v448 = vshrl.u32 %v447, 7
    %v449 = vsub.s32 %v446, %v448
    %v450 = vrot.slane %v428, %v449
    %v452 = vunpack.c.l.s4 1966171168
    %v453 = vunpack.c.0.s8 %v452
    %v454 = vlaneseq
    %v455 = vshrl.u32 %v454, 7
    %v456 = vsub.s32 %v453, %v455
    %v457 = vrot.slane %v429, %v456
    %v458 = vcombine.high %v436, %v436
    %v459 = vcombine.high %v443, %v443
    %v460 = vcombine.high %v450, %v450
    %v461 = vcombine.high %v457, %v457
    %v462 = vcombine.high %v18, %v18
    %v464 = vunpack.c.l.s4 1966171168
    %v465 = vunpack.c.0.s8 %v464
    %v466 = vlaneseq
    %v467 = vshrl.u32 %v466, 7
    %v468 = vsub.s32 %v465, %v467
    %v469 = vrot.slane %v18, %v468
    %v471 = vunpack.c.l.s4 1966171168
    %v472 = vunpack.c.0.s8 %v471
    %v473 = vlaneseq
    %v474 = vshrl.u32 %v473, 7
    %v475 = vsub.s32 %v472, %v474
    %v476 = vrot.slane %v462, %v475
    %v477 = vcombine.high %v469, %v469
    %v478 = vcombine.high %v476, %v476
    %v480 = vunpack.c.l.s4 1966171168
    %v481 = vunpack.c.0.s8 %v480
    %v482 = vlaneseq
    %v483 = vshrl.u32 %v482, 7
    %v484 = vsub.s32 %v481, %v483
    %v485 = vrot.slane %v469, %v484
    %v487 = vunpack.c.l.s4 1966171168
    %v488 = vunpack.c.0.s8 %v487
    %v489 = vlaneseq
    %v490 = vshrl.u32 %v489, 7
    %v491 = vsub.s32 %v488, %v490
    %v492 = vrot.slane %v476, %v491
    %v494 = vunpack.c.l.s4 1966171168
    %v495 = vunpack.c.0.s8 %v494
    %v496 = vlaneseq
    %v497 = vshrl.u32 %v496, 7
    %v498 = vsub.s32 %v495, %v497
    %v499 = vrot.slane %v477, %v498
    %v501 = vunpack.c.l.s4 1966171168
    %v502 = vunpack.c.0.s8 %v501
    %v503 = vlaneseq
    %v504 = vshrl.u32 %v503, 7
    %v505 = vsub.s32 %v502, %v504
    %v506 = vrot.slane %v478, %v505
    %v507 = vcombine.high %v485, %v485
    %v508 = vcombine.high %v492, %v492
    %v509 = vcombine.high %v499, %v499
    %v510 = vcombine.high %v506, %v506
    %v511 = vcombine.high %v19, %v19
    %v513 = vunpack.c.l.s4 1966171168
    %v514 = vunpack.c.0.s8 %v513
    %v515 = vlaneseq
    %v516 = vshrl.u32 %v515, 7
    %v517 = vsub.s32 %v514, %v516
    %v518 = vrot.slane %v19, %v517
    %v520 = vunpack.c.l.s4 1966171168
    %v521 = vunpack.c.0.s8 %v520
    %v522 = vlaneseq
    %v523 = vshrl.u32 %v522, 7
    %v524 = vsub.s32 %v521, %v523
    %v525 = vrot.slane %v511, %v524
    %v526 = vcombine.high %v518, %v518
    %v527 = vcombine.high %v525, %v525
    %v529 = vunpack.c.l.s4 1966171168
    %v530 = vunpack.c.0.s8 %v529
    %v531 = vlaneseq
    %v532 = vshrl.u32 %v531, 7
    %v533 = vsub.s32 %v530, %v532
    %v534 = vrot.slane %v518, %v533
    %v536 = vunpack.c.l.s4 1966171168
    %v537 = vunpack.c.0.s8 %v536
    %v538 = vlaneseq
    %v539 = vshrl.u32 %v538, 7
    %v540 = vsub.s32 %v537, %v539
    %v541 = vrot.slane %v525, %v540
    %v543 = vunpack.c.l.s4 1966171168
    %v544 = vunpack.c.0.s8 %v543
    %v545 = vlaneseq
    %v546 = vshrl.u32 %v545, 7
    %v547 = vsub.s32 %v544, %v546
    %v548 = vrot.slane %v526, %v547
    %v550 = vunpack.c.l.s4 1966171168
    %v551 = vunpack.c.0.s8 %v550
    %v552 = vlaneseq
    %v553 = vshrl.u32 %v552, 7
    %v554 = vsub.s32 %v551, %v553
    %v555 = vrot.slane %v527, %v554
    %v556 = vcombine.high %v534, %v534
    %v557 = vcombine.high %v541, %v541
    %v558 = vcombine.high %v548, %v548
    %v559 = vcombine.high %v555, %v555
    %v560 = vcombine.high %v20, %v20
    %v562 = vunpack.c.l.s4 1966171168
    %v563 = vunpack.c.0.s8 %v562
    %v564 = vlaneseq
    %v565 = vshrl.u32 %v564, 7
    %v566 = vsub.s32 %v563, %v565
    %v567 = vrot.slane %v20, %v566
    %v569 = vunpack.c.l.s4 1966171168
    %v570 = vunpack.c.0.s8 %v569
    %v571 = vlaneseq
    %v572 = vshrl.u32 %v571, 7
    %v573 = vsub.s32 %v570, %v572
    %v574 = vrot.slane %v560, %v573
    %v575 = vcombine.high %v567, %v567
    %v576 = vcombine.high %v574, %v574
    %v578 = vunpack.c.l.s4 1966171168
    %v579 = vunpack.c.0.s8 %v578
    %v580 = vlaneseq
    %v581 = vshrl.u32 %v580, 7
    %v582 = vsub.s32 %v579, %v581
    %v583 = vrot.slane %v567, %v582
    %v585 = vunpack.c.l.s4 1966171168
    %v586 = vunpack.c.0.s8 %v585
    %v587 = vlaneseq
    %v588 = vshrl.u32 %v587, 7
    %v589 = vsub.s32 %v586, %v588
    %v590 = vrot.slane %v574, %v589
    %v592 = vunpack.c.l.s4 1966171168
    %v593 = vunpack.c.0.s8 %v592
    %v594 = vlaneseq
    %v595 = vshrl.u32 %v594, 7
    %v596 = vsub.s32 %v593, %v595
    %v597 = vrot.slane %v575, %v596
    %v599 = vunpack.c.l.s4 1966171168
    %v600 = vunpack.c.0.s8 %v599
    %v601 = vlaneseq
    %v602 = vshrl.u32 %v601, 7
    %v603 = vsub.s32 %v600, %v602
    %v604 = vrot.slane %v576, %v603
    %v605 = vcombine.high %v583, %v583
    %v606 = vcombine.high %v590, %v590
    %v607 = vcombine.high %v597, %v597
    %v608 = vcombine.high %v604, %v604
    %v609 = vcombine.high %v21, %v21
    %v611 = vunpack.c.l.s4 1966171168
    %v612 = vunpack.c.0.s8 %v611
    %v613 = vlaneseq
    %v614 = vshrl.u32 %v613, 7
    %v615 = vsub.s32 %v612, %v614
    %v616 = vrot.slane %v21, %v615
    %v618 = vunpack.c.l.s4 1966171168
    %v619 = vunpack.c.0.s8 %v618
    %v620 = vlaneseq
    %v621 = vshrl.u32 %v620, 7
    %v622 = vsub.s32 %v619, %v621
    %v623 = vrot.slane %v609, %v622
    %v624 = vcombine.high %v616, %v616
    %v625 = vcombine.high %v623, %v623
    %v627 = vunpack.c.l.s4 1966171168
    %v628 = vunpack.c.0.s8 %v627
    %v629 = vlaneseq
    %v630 = vshrl.u32 %v629, 7
    %v631 = vsub.s32 %v628, %v630
    %v632 = vrot.slane %v616, %v631
    %v634 = vunpack.c.l.s4 1966171168
    %v635 = vunpack.c.0.s8 %v634
    %v636 = vlaneseq
    %v637 = vshrl.u32 %v636, 7
    %v638 = vsub.s32 %v635, %v637
    %v639 = vrot.slane %v623, %v638
    %v641 = vunpack.c.l.s4 1966171168
    %v642 = vunpack.c.0.s8 %v641
    %v643 = vlaneseq
    %v644 = vshrl.u32 %v643, 7
    %v645 = vsub.s32 %v642, %v644
    %v646 = vrot.slane %v624, %v645
    %v648 = vunpack.c.l.s4 1966171168
    %v649 = vunpack.c.0.s8 %v648
    %v650 = vlaneseq
    %v651 = vshrl.u32 %v650, 7
    %v652 = vsub.s32 %v649, %v651
    %v653 = vrot.slane %v625, %v652
    %v654 = vcombine.high %v632, %v632
    %v655 = vcombine.high %v639, %v639
    %v656 = vcombine.high %v646, %v646
    %v657 = vcombine.high %v653, %v653
    %v658 = vcombine.high %v22, %v22
    %v660 = vunpack.c.l.s4 1966171168
    %v661 = vunpack.c.0.s8 %v660
    %v662 = vlaneseq
    %v663 = vshrl.u32 %v662, 7
    %v664 = vsub.s32 %v661, %v663
    %v665 = vrot.slane %v22, %v664
    %v667 = vunpack.c.l.s4 1966171168
    %v668 = vunpack.c.0.s8 %v667
    %v669 = vlaneseq
    %v670 = vshrl.u32 %v669, 7
    %v671 = vsub.s32 %v668, %v670
    %v672 = vrot.slane %v658, %v671
    %v673 = vcombine.high %v665, %v665
    %v674 = vcombine.high %v672, %v672
    %v676 = vunpack.c.l.s4 1966171168
    %v677 = vunpack.c.0.s8 %v676
    %v678 = vlaneseq
    %v679 = vshrl.u32 %v678, 7
    %v680 = vsub.s32 %v677, %v679
    %v681 = vrot.slane %v665, %v680
    %v683 = vunpack.c.l.s4 1966171168
    %v684 = vunpack.c.0.s8 %v683
    %v685 = vlaneseq
    %v686 = vshrl.u32 %v685, 7
    %v687 = vsub.s32 %v684, %v686
    %v688 = vrot.slane %v672, %v687
    %v690 = vunpack.c.l.s4 1966171168
    %v691 = vunpack.c.0.s8 %v690
    %v692 = vlaneseq
    %v693 = vshrl.u32 %v692, 7
    %v694 = vsub.s32 %v691, %v693
    %v695 = vrot.slane %v673, %v694
    %v697 = vunpack.c.l.s4 1966171168
    %v698 = vunpack.c.0.s8 %v697
    %v699 = vlaneseq
    %v700 = vshrl.u32 %v699, 7
    %v701 = vsub.s32 %v698, %v700
    %v702 = vrot.slane %v674, %v701
    %v703 = vcombine.high %v681, %v681
    %v704 = vcombine.high %v688, %v688
    %v705 = vcombine.high %v695, %v695
    %v706 = vcombine.high %v702, %v702
    %v707 = vcombine.high %v23, %v23
    %v709 = vunpack.c.l.s4 1966171168
    %v710 = vunpack.c.0.s8 %v709
    %v711 = vlaneseq
    %v712 = vshrl.u32 %v711, 7
    %v713 = vsub.s32 %v710, %v712
    %v714 = vrot.slane %v23, %v713
    %v716 = vunpack.c.l.s4 1966171168
    %v717 = vunpack.c.0.s8 %v716
    %v718 = vlaneseq
    %v719 = vshrl.u32 %v718, 7
    %v720 = vsub.s32 %v717, %v719
    %v721 = vrot.slane %v707, %v720
    %v722 = vcombine.high %v714, %v714
    %v723 = vcombine.high %v721, %v721
    %v725 = vunpack.c.l.s4 1966171168
    %v726 = vunpack.c.0.s8 %v725
    %v727 = vlaneseq
    %v728 = vshrl.u32 %v727, 7
    %v729 = vsub.s32 %v726, %v728
    %v730 = vrot.slane %v714, %v729
    %v732 = vunpack.c.l.s4 1966171168
    %v733 = vunpack.c.0.s8 %v732
    %v734 = vlaneseq
    %v735 = vshrl.u32 %v734, 7
    %v736 = vsub.s32 %v733, %v735
    %v737 = vrot.slane %v721, %v736
    %v739 = vunpack.c.l.s4 1966171168
    %v740 = vunpack.c.0.s8 %v739
    %v741 = vlaneseq
    %v742 = vshrl.u32 %v741, 7
    %v743 = vsub.s32 %v740, %v742
    %v744 = vrot.slane %v722, %v743
    %v746 = vunpack.c.l.s4 1966171168
    %v747 = vunpack.c.0.s8 %v746
    %v748 = vlaneseq
    %v749 = vshrl.u32 %v748, 7
    %v750 = vsub.s32 %v747, %v749
    %v751 = vrot.slane %v723, %v750
    %v752 = vcombine.high %v730, %v730
    %v753 = vcombine.high %v737, %v737
    %v754 = vcombine.high %v744, %v744
    %v755 = vcombine.high %v751, %v751
    %v756 = vcombine.high %v24, %v24
    %v758 = vunpack.c.l.s4 1966171168
    %v759 = vunpack.c.0.s8 %v758
    %v760 = vlaneseq
    %v761 = vshrl.u32 %v760, 7
    %v762 = vsub.s32 %v759, %v761
    %v763 = vrot.slane %v24, %v762
    %v765 = vunpack.c.l.s4 1966171168
    %v766 = vunpack.c.0.s8 %v765
    %v767 = vlaneseq
    %v768 = vshrl.u32 %v767, 7
    %v769 = vsub.s32 %v766, %v768
    %v770 = vrot.slane %v756, %v769
    %v771 = vcombine.high %v763, %v763
    %v772 = vcombine.high %v770, %v770
    %v774 = vunpack.c.l.s4 1966171168
    %v775 = vunpack.c.0.s8 %v774
    %v776 = vlaneseq
    %v777 = vshrl.u32 %v776, 7
    %v778 = vsub.s32 %v775, %v777
    %v779 = vrot.slane %v763, %v778
    %v781 = vunpack.c.l.s4 1966171168
    %v782 = vunpack.c.0.s8 %v781
    %v783 = vlaneseq
    %v784 = vshrl.u32 %v783, 7
    %v785 = vsub.s32 %v782, %v784
    %v786 = vrot.slane %v770, %v785
    %v788 = vunpack.c.l.s4 1966171168
    %v789 = vunpack.c.0.s8 %v788
    %v790 = vlaneseq
    %v791 = vshrl.u32 %v790, 7
    %v792 = vsub.s32 %v789, %v791
    %v793 = vrot.slane %v771, %v792
    %v795 = vunpack.c.l.s4 1966171168
    %v796 = vunpack.c.0.s8 %v795
    %v797 = vlaneseq
    %v798 = vshrl.u32 %v797, 7
    %v799 = vsub.s32 %v796, %v798
    %v800 = vrot.slane %v772, %v799
    %v801 = vcombine.high %v779, %v779
    %v802 = vcombine.high %v786, %v786
    %v803 = vcombine.high %v793, %v793
    %v804 = vcombine.high %v800, %v800
    %v805 = vcombine.high %v25, %v25
    %v807 = vunpack.c.l.s4 1966171168
    %v808 = vunpack.c.0.s8 %v807
    %v809 = vlaneseq
    %v810 = vshrl.u32 %v809, 7
    %v811 = vsub.s32 %v808, %v810
    %v812 = vrot.slane %v25, %v811
    %v814 = vunpack.c.l.s4 1966171168
    %v815 = vunpack.c.0.s8 %v814
    %v816 = vlaneseq
    %v817 = vshrl.u32 %v816, 7
    %v818 = vsub.s32 %v815, %v817
    %v819 = vrot.slane %v805, %v818
    %v820 = vcombine.high %v812, %v812
    %v821 = vcombine.high %v819, %v819
    %v823 = vunpack.c.l.s4 1966171168
    %v824 = vunpack.c.0.s8 %v823
    %v825 = vlaneseq
    %v826 = vshrl.u32 %v825, 7
    %v827 = vsub.s32 %v824, %v826
    %v828 = vrot.slane %v812, %v827
    %v830 = vunpack.c.l.s4 1966171168
    %v831 = vunpack.c.0.s8 %v830
    %v832 = vlaneseq
    %v833 = vshrl.u32 %v832, 7
    %v834 = vsub.s32 %v831, %v833
    %v835 = vrot.slane %v819, %v834
    %v837 = vunpack.c.l.s4 1966171168
    %v838 = vunpack.c.0.s8 %v837
    %v839 = vlaneseq
    %v840 = vshrl.u32 %v839, 7
    %v841 = vsub.s32 %v838, %v840
    %v842 = vrot.slane %v820, %v841
    %v844 = vunpack.c.l.s4 1966171168
    %v845 = vunpack.c.0.s8 %v844
    %v846 = vlaneseq
    %v847 = vshrl.u32 %v846, 7
    %v848 = vsub.s32 %v845, %v847
    %v849 = vrot.slane %v821, %v848
    %v850 = vcombine.high %v828, %v828
    %v851 = vcombine.high %v835, %v835
    %v852 = vcombine.high %v842, %v842
    %v853 = vcombine.high %v849, %v849
    %v854 = vcombine.high %v26, %v26
    %v856 = vunpack.c.l.s4 1966171168
    %v857 = vunpack.c.0.s8 %v856
    %v858 = vlaneseq
    %v859 = vshrl.u32 %v858, 7
    %v860 = vsub.s32 %v857, %v859
    %v861 = vrot.slane %v26, %v860
    %v863 = vunpack.c.l.s4 1966171168
    %v864 = vunpack.c.0.s8 %v863
    %v865 = vlaneseq
    %v866 = vshrl.u32 %v865, 7
    %v867 = vsub.s32 %v864, %v866
    %v868 = vrot.slane %v854, %v867
    %v869 = vcombine.high %v861, %v861
    %v870 = vcombine.high %v868, %v868
    %v872 = vunpack.c.l.s4 1966171168
    %v873 = vunpack.c.0.s8 %v872
    %v874 = vlaneseq
    %v875 = vshrl.u32 %v874, 7
    %v876 = vsub.s32 %v873, %v875
    %v877 = vrot.slane %v861, %v876
    %v879 = vunpack.c.l.s4 1966171168
    %v880 = vunpack.c.0.s8 %v879
    %v881 = vlaneseq
    %v882 = vshrl.u32 %v881, 7
    %v883 = vsub.s32 %v880, %v882
    %v884 = vrot.slane %v868, %v883
    %v886 = vunpack.c.l.s4 1966171168
    %v887 = vunpack.c.0.s8 %v886
    %v888 = vlaneseq
    %v889 = vshrl.u32 %v888, 7
    %v890 = vsub.s32 %v887, %v889
    %v891 = vrot.slane %v869, %v890
    %v893 = vunpack.c.l.s4 1966171168
    %v894 = vunpack.c.0.s8 %v893
    %v895 = vlaneseq
    %v896 = vshrl.u32 %v895, 7
    %v897 = vsub.s32 %v894, %v896
    %v898 = vrot.slane %v870, %v897
    %v899 = vcombine.high %v877, %v877
    %v900 = vcombine.high %v884, %v884
    %v901 = vcombine.high %v891, %v891
    %v902 = vcombine.high %v898, %v898
    %v903 = vcombine.high %v27, %v27
    %v905 = vunpack.c.l.s4 1966171168
    %v906 = vunpack.c.0.s8 %v905
    %v907 = vlaneseq
    %v908 = vshrl.u32 %v907, 7
    %v909 = vsub.s32 %v906, %v908
    %v910 = vrot.slane %v27, %v909
    %v912 = vunpack.c.l.s4 1966171168
    %v913 = vunpack.c.0.s8 %v912
    %v914 = vlaneseq
    %v915 = vshrl.u32 %v914, 7
    %v916 = vsub.s32 %v913, %v915
    %v917 = vrot.slane %v903, %v916
    %v918 = vcombine.high %v910, %v910
    %v919 = vcombine.high %v917, %v917
    %v921 = vunpack.c.l.s4 1966171168
    %v922 = vunpack.c.0.s8 %v921
    %v923 = vlaneseq
    %v924 = vshrl.u32 %v923, 7
    %v925 = vsub.s32 %v922, %v924
    %v926 = vrot.slane %v910, %v925
    %v928 = vunpack.c.l.s4 1966171168
    %v929 = vunpack.c.0.s8 %v928
    %v930 = vlaneseq
    %v931 = vshrl.u32 %v930, 7
    %v932 = vsub.s32 %v929, %v931
    %v933 = vrot.slane %v917, %v932
    %v935 = vunpack.c.l.s4 1966171168
    %v936 = vunpack.c.0.s8 %v935
    %v937 = vlaneseq
    %v938 = vshrl.u32 %v937, 7
    %v939 = vsub.s32 %v936, %v938
    %v940 = vrot.slane %v918, %v939
    %v942 = vunpack.c.l.s4 1966171168
    %v943 = vunpack.c.0.s8 %v942
    %v944 = vlaneseq
    %v945 = vshrl.u32 %v944, 7
    %v946 = vsub.s32 %v943, %v945
    %v947 = vrot.slane %v919, %v946
    %v948 = vcombine.high %v926, %v926
    %v949 = vcombine.high %v933, %v933
    %v950 = vcombine.high %v940, %v940
    %v951 = vcombine.high %v947, %v947
    %v952 = vcombine.high %v28, %v28
    %v954 = vunpack.c.l.s4 1966171168
    %v955 = vunpack.c.0.s8 %v954
    %v956 = vlaneseq
    %v957 = vshrl.u32 %v956, 7
    %v958 = vsub.s32 %v955, %v957
    %v959 = vrot.slane %v28, %v958
    %v961 = vunpack.c.l.s4 1966171168
    %v962 = vunpack.c.0.s8 %v961
    %v963 = vlaneseq
    %v964 = vshrl.u32 %v963, 7
    %v965 = vsub.s32 %v962, %v964
    %v966 = vrot.slane %v952, %v965
    %v967 = vcombine.high %v959, %v959
    %v968 = vcombine.high %v966, %v966
    %v970 = vunpack.c.l.s4 1966171168
    %v971 = vunpack.c.0.s8 %v970
    %v972 = vlaneseq
    %v973 = vshrl.u32 %v972, 7
    %v974 = vsub.s32 %v971, %v973
    %v975 = vrot.slane %v959, %v974
    %v977 = vunpack.c.l.s4 1966171168
    %v978 = vunpack.c.0.s8 %v977
    %v979 = vlaneseq
    %v980 = vshrl.u32 %v979, 7
    %v981 = vsub.s32 %v978, %v980
    %v982 = vrot.slane %v966, %v981
    %v984 = vunpack.c.l.s4 1966171168
    %v985 = vunpack.c.0.s8 %v984
    %v986 = vlaneseq
    %v987 = vshrl.u32 %v986, 7
    %v988 = vsub.s32 %v985, %v987
    %v989 = vrot.slane %v967, %v988
    %v991 = vunpack.c.l.s4 1966171168
    %v992 = vunpack.c.0.s8 %v991
    %v993 = vlaneseq
    %v994 = vshrl.u32 %v993, 7
    %v995 = vsub.s32 %v992, %v994
    %v996 = vrot.slane %v968, %v995
    %v997 = vcombine.high %v975, %v975
    %v998 = vcombine.high %v982, %v982
    %v999 = vcombine.high %v989, %v989
    %v1000 = vcombine.high %v996, %v996
    %v1001 = vcombine.high %v29, %v29
    %v1003 = vunpack.c.l.s4 1966171168
    %v1004 = vunpack.c.0.s8 %v1003
    %v1005 = vlaneseq
    %v1006 = vshrl.u32 %v1005, 7
    %v1007 = vsub.s32 %v1004, %v1006
    %v1008 = vrot.slane %v29, %v1007
    %v1010 = vunpack.c.l.s4 1966171168
    %v1011 = vunpack.c.0.s8 %v1010
    %v1012 = vlaneseq
    %v1013 = vshrl.u32 %v1012, 7
    %v1014 = vsub.s32 %v1011, %v1013
    %v1015 = vrot.slane %v1001, %v1014
    %v1016 = vcombine.high %v1008, %v1008
    %v1017 = vcombine.high %v1015, %v1015
    %v1019 = vunpack.c.l.s4 1966171168
    %v1020 = vunpack.c.0.s8 %v1019
    %v1021 = vlaneseq
    %v1022 = vshrl.u32 %v1021, 7
    %v1023 = vsub.s32 %v1020, %v1022
    %v1024 = vrot.slane %v1008, %v1023
    %v1026 = vunpack.c.l.s4 1966171168
    %v1027 = vunpack.c.0.s8 %v1026
    %v1028 = vlaneseq
    %v1029 = vshrl.u32 %v1028, 7
    %v1030 = vsub.s32 %v1027, %v1029
    %v1031 = vrot.slane %v1015, %v1030
    %v1033 = vunpack.c.l.s4 1966171168
    %v1034 = vunpack.c.0.s8 %v1033
    %v1035 = vlaneseq
    %v1036 = vshrl.u32 %v1035, 7
    %v1037 = vsub.s32 %v1034, %v1036
    %v1038 = vrot.slane %v1016, %v1037
    %v1040 = vunpack.c.l.s4 1966171168
    %v1041 = vunpack.c.0.s8 %v1040
    %v1042 = vlaneseq
    %v1043 = vshrl.u32 %v1042, 7
    %v1044 = vsub.s32 %v1041, %v1043
    %v1045 = vrot.slane %v1017, %v1044
    %v1046 = vcombine.high %v1024, %v1024
    %v1047 = vcombine.high %v1031, %v1031
    %v1048 = vcombine.high %v1038, %v1038
    %v1049 = vcombine.high %v1045, %v1045
    %v1050 = vcombine.high %v30, %v30
    %v1052 = vunpack.c.l.s4 1966171168
    %v1053 = vunpack.c.0.s8 %v1052
    %v1054 = vlaneseq
    %v1055 = vshrl.u32 %v1054, 7
    %v1056 = vsub.s32 %v1053, %v1055
    %v1057 = vrot.slane %v30, %v1056
    %v1059 = vunpack.c.l.s4 1966171168
    %v1060 = vunpack.c.0.s8 %v1059
    %v1061 = vlaneseq
    %v1062 = vshrl.u32 %v1061, 7
    %v1063 = vsub.s32 %v1060, %v1062
    %v1064 = vrot.slane %v1050, %v1063
    %v1065 = vcombine.high %v1057, %v1057
    %v1066 = vcombine.high %v1064, %v1064
    %v1068 = vunpack.c.l.s4 1966171168
    %v1069 = vunpack.c.0.s8 %v1068
    %v1070 = vlaneseq
    %v1071 = vshrl.u32 %v1070, 7
    %v1072 = vsub.s32 %v1069, %v1071
    %v1073 = vrot.slane %v1057, %v1072
    %v1075 = vunpack.c.l.s4 1966171168
    %v1076 = vunpack.c.0.s8 %v1075
    %v1077 = vlaneseq
    %v1078 = vshrl.u32 %v1077, 7
    %v1079 = vsub.s32 %v1076, %v1078
    %v1080 = vrot.slane %v1064, %v1079
    %v1082 = vunpack.c.l.s4 1966171168
    %v1083 = vunpack.c.0.s8 %v1082
    %v1084 = vlaneseq
    %v1085 = vshrl.u32 %v1084, 7
    %v1086 = vsub.s32 %v1083, %v1085
    %v1087 = vrot.slane %v1065, %v1086
    %v1089 = vunpack.c.l.s4 1966171168
    %v1090 = vunpack.c.0.s8 %v1089
    %v1091 = vlaneseq
    %v1092 = vshrl.u32 %v1091, 7
    %v1093 = vsub.s32 %v1090, %v1092
    %v1094 = vrot.slane %v1066, %v1093
    %v1095 = vcombine.high %v1073, %v1073
    %v1096 = vcombine.high %v1080, %v1080
    %v1097 = vcombine.high %v1087, %v1087
    %v1098 = vcombine.high %v1094, %v1094
    %v1099 = vcombine.high %v31, %v31
    %v1101 = vunpack.c.l.s4 1966171168
    %v1102 = vunpack.c.0.s8 %v1101
    %v1103 = vlaneseq
    %v1104 = vshrl.u32 %v1103, 7
    %v1105 = vsub.s32 %v1102, %v1104
    %v1106 = vrot.slane %v31, %v1105
    %v1108 = vunpack.c.l.s4 1966171168
    %v1109 = vunpack.c.0.s8 %v1108
    %v1110 = vlaneseq
    %v1111 = vshrl.u32 %v1110, 7
    %v1112 = vsub.s32 %v1109, %v1111
    %v1113 = vrot.slane %v1099, %v1112
    %v1114 = vcombine.high %v1106, %v1106
    %v1115 = vcombine.high %v1113, %v1113
    %v1117 = vunpack.c.l.s4 1966171168
    %v1118 = vunpack.c.0.s8 %v1117
    %v1119 = vlaneseq
    %v1120 = vshrl.u32 %v1119, 7
    %v1121 = vsub.s32 %v1118, %v1120
    %v1122 = vrot.slane %v1106, %v1121
    %v1124 = vunpack.c.l.s4 1966171168
    %v1125 = vunpack.c.0.s8 %v1124
    %v1126 = vlaneseq
    %v1127 = vshrl.u32 %v1126, 7
    %v1128 = vsub.s32 %v1125, %v1127
    %v1129 = vrot.slane %v1113, %v1128
    %v1131 = vunpack.c.l.s4 1966171168
    %v1132 = vunpack.c.0.s8 %v1131
    %v1133 = vlaneseq
    %v1134 = vshrl.u32 %v1133, 7
    %v1135 = vsub.s32 %v1132, %v1134
    %v1136 = vrot.slane %v1114, %v1135
    %v1138 = vunpack.c.l.s4 1966171168
    %v1139 = vunpack.c.0.s8 %v1138
    %v1140 = vlaneseq
    %v1141 = vshrl.u32 %v1140, 7
    %v1142 = vsub.s32 %v1139, %v1141
    %v1143 = vrot.slane %v1115, %v1142
    %v1144 = vcombine.high %v1122, %v1122
    %v1145 = vcombine.high %v1129, %v1129
    %v1146 = vcombine.high %v1136, %v1136
    %v1147 = vcombine.high %v1143, %v1143
    %v1148 = vcombine.high %v32, %v32
    %v1150 = vunpack.c.l.s4 1966171168
    %v1151 = vunpack.c.0.s8 %v1150
    %v1152 = vlaneseq
    %v1153 = vshrl.u32 %v1152, 7
    %v1154 = vsub.s32 %v1151, %v1153
    %v1155 = vrot.slane %v32, %v1154
    %v1157 = vunpack.c.l.s4 1966171168
    %v1158 = vunpack.c.0.s8 %v1157
    %v1159 = vlaneseq
    %v1160 = vshrl.u32 %v1159, 7
    %v1161 = vsub.s32 %v1158, %v1160
    %v1162 = vrot.slane %v1148, %v1161
    %v1163 = vcombine.high %v1155, %v1155
    %v1164 = vcombine.high %v1162, %v1162
    %v1166 = vunpack.c.l.s4 1966171168
    %v1167 = vunpack.c.0.s8 %v1166
    %v1168 = vlaneseq
    %v1169 = vshrl.u32 %v1168, 7
    %v1170 = vsub.s32 %v1167, %v1169
    %v1171 = vrot.slane %v1155, %v1170
    %v1173 = vunpack.c.l.s4 1966171168
    %v1174 = vunpack.c.0.s8 %v1173
    %v1175 = vlaneseq
    %v1176 = vshrl.u32 %v1175, 7
    %v1177 = vsub.s32 %v1174, %v1176
    %v1178 = vrot.slane %v1162, %v1177
    %v1180 = vunpack.c.l.s4 1966171168
    %v1181 = vunpack.c.0.s8 %v1180
    %v1182 = vlaneseq
    %v1183 = vshrl.u32 %v1182, 7
    %v1184 = vsub.s32 %v1181, %v1183
    %v1185 = vrot.slane %v1163, %v1184
    %v1187 = vunpack.c.l.s4 1966171168
    %v1188 = vunpack.c.0.s8 %v1187
    %v1189 = vlaneseq
    %v1190 = vshrl.u32 %v1189, 7
    %v1191 = vsub.s32 %v1188, %v1190
    %v1192 = vrot.slane %v1164, %v1191
    %v1193 = vcombine.high %v1171, %v1171
    %v1194 = vcombine.high %v1178, %v1178
    %v1195 = vcombine.high %v1185, %v1185
    %v1196 = vcombine.high %v1192, %v1192
    %v1198 = vunpack.c.l.s4 1966171168
    %v1199 = vunpack.c.0.s8 %v1198
    %v1200 = vlaneseq
    %v1201 = vshrl.u32 %v1200, 7
    %v1202 = vsub.s32 %v1199, %v1201
    %v1203 = vrot.slane %v33, %v1202
    %v1204 = vcombine.high %v1203, %v1203
    %v1206 = vunpack.c.l.s4 1966171168
    %v1207 = vunpack.c.0.s8 %v1206
    %v1208 = vlaneseq
    %v1209 = vshrl.u32 %v1208, 7
    %v1210 = vsub.s32 %v1207, %v1209
    %v1211 = vrot.slane %v1203, %v1210
    %v1213 = vunpack.c.l.s4 1966171168
    %v1214 = vunpack.c.0.s8 %v1213
    %v1215 = vlaneseq
    %v1216 = vshrl.u32 %v1215, 7
    %v1217 = vsub.s32 %v1214, %v1216
    %v1218 = vrot.slane %v1204, %v1217
    %v1543 = vunpack.c.l.b16 %v34
    %v1544 = vunpack.c.h.b16 %v34
    %v1545 = vunpack.c.l.b16 %v35
    %v1546 = vunpack.c.h.b16 %v35
    %v1547 = vunpack.c.l.b16 %v36
    %v1548 = vunpack.c.h.b16 %v36
    %v1549 = vunpack.c.l.b16 %v37
    %v1550 = vunpack.c.h.b16 %v37
    %v1551 = vunpack.c.l.b16 %v38
    %v1552 = vunpack.c.h.b16 %v38
    %v1553 = vunpack.c.l.b16 %v39
    %v1554 = vunpack.c.h.b16 %v39
    %v1555 = vunpack.c.l.b16 %v40
    %v1556 = vunpack.c.h.b16 %v40
    %v1557 = vunpack.c.l.b16 %v41
    %v1558 = vunpack.c.h.b16 %v41
    %v1559 = vunpack.c.l.b16 %v42
    %v1560 = vunpack.c.h.b16 %v42
    %v1561 = vunpack.c.l.b16 %v43
    %v1562 = vunpack.c.h.b16 %v43
    %v1563 = vunpack.c.l.b16 %v44
    %v1564 = vunpack.c.h.b16 %v44
    %v1565 = vunpack.c.l.b16 %v45
    %v1566 = vunpack.c.h.b16 %v45
    %v1567 = vunpack.c.l.b16 %v46
    %v1568 = vunpack.c.h.b16 %v46
    %v1569 = vunpack.c.l.b16 %v47
    %v1570 = vunpack.c.h.b16 %v47
    %v1571 = vunpack.c.l.b16 %v48
    %v1572 = vunpack.c.h.b16 %v48
    %v1573 = vunpack.c.l.b16 %v49
    %v1574 = vunpack.c.h.b16 %v49
    %v1575 = vunpack.c.l.b16 %v50
    %v1576 = vunpack.c.h.b16 %v50
    %v1577 = vunpack.c.l.b16 %v51
    %v1578 = vunpack.c.h.b16 %v51
    %v1579 = vunpack.c.l.b16 %v52
    %v1580 = vunpack.c.h.b16 %v52
    %v1581 = vunpack.c.l.b16 %v53
    %v1582 = vunpack.c.h.b16 %v53
    %v1583 = vunpack.c.l.b16 %v54
    %v1584 = vunpack.c.h.b16 %v54
    %v1585 = vunpack.c.l.b16 %v55
    %v1586 = vunpack.c.h.b16 %v55
    %v1587 = vunpack.c.l.b16 %v56
    %v1588 = vunpack.c.h.b16 %v56
    %v1589 = vunpack.c.l.b16 %v57
    %v1590 = vunpack.c.h.b16 %v57
    %v1591 = vunpack.c.l.b16 %v58
    %v1592 = vunpack.c.h.b16 %v58
    %v1593 = vunpack.c.l.b16 %v59
    %v1594 = vunpack.c.h.b16 %v59
    %v1595 = vunpack.c.l.b16 %v60
    %v1596 = vunpack.c.h.b16 %v60
    %v1597 = vunpack.c.l.b16 %v61
    %v1598 = vunpack.c.h.b16 %v61
    %v1599 = vunpack.c.l.b16 %v62
    %v1600 = vunpack.c.h.b16 %v62
    %v1601 = vunpack.c.l.b16 %v63
    %v1602 = vunpack.c.h.b16 %v63
    %v1603 = vunpack.c.l.b16 %v64
    %v1604 = vunpack.c.h.b16 %v64
    %v1605 = vunpack.c.l.b16 %v65
    %v1606 = vunpack.c.h.b16 %v65
    %v1607 = vunpack.c.l.b16 %v66
    %v1608 = vunpack.c.h.b16 %v66
    %v1609 = vunpack.c.l.b16 %v67
    %v1610 = vunpack.c.h.b16 %v67
    %v1611 = vunpack.c.l.b16 %v68
    %v1612 = vunpack.c.h.b16 %v68
    %v1613 = vunpack.c.l.b16 %v69
    %v1614 = vunpack.c.h.b16 %v69
    %v1615 = vunpack.c.l.b16 %v70
    %v1616 = vunpack.c.h.b16 %v70
    %v1617 = vunpack.c.l.b16 %v71
    %v1618 = vunpack.c.h.b16 %v71
    %v1619 = vunpack.c.l.b16 %v72
    %v1620 = vunpack.c.h.b16 %v72
    %v1621 = vunpack.c.l.b16 %v73
    %v1622 = vunpack.c.h.b16 %v73
    %v1623 = vunpack.c.l.b16 %v74
    %v1624 = vunpack.c.h.b16 %v74
    %v1625 = vunpack.c.l.b16 %v75
    %v1626 = vunpack.c.h.b16 %v75
    %v1627 = vunpack.c.l.b16 %v76
    %v1628 = vunpack.c.h.b16 %v76
    %v1629 = vunpack.c.l.b16 %v77
    %v1630 = vunpack.c.h.b16 %v77
    %v1631 = vunpack.c.l.b16 %v78
    %v1632 = vunpack.c.h.b16 %v78
    %v1633 = vunpack.c.l.b16 %v79
    %v1634 = vunpack.c.h.b16 %v79
    %v1635 = vunpack.c.l.b16 %v80
    %v1636 = vunpack.c.h.b16 %v80
    %v1637 = vunpack.c.l.b16 %v81
    %v1638 = vunpack.c.h.b16 %v81
    %v1639 = vunpack.c.l.b16 %v82
    %v1640 = vunpack.c.h.b16 %v82
    %v1641 = vunpack.c.l.b16 %v83
    %v1642 = vunpack.c.h.b16 %v83
    %v1643 = vunpack.c.l.b16 %v84
    %v1644 = vunpack.c.h.b16 %v84
    %v1645 = vunpack.c.l.b16 %v85
    %v1646 = vunpack.c.h.b16 %v85
    %v1647 = vunpack.c.l.b16 %v86
    %v1648 = vunpack.c.h.b16 %v86
    %v1649 = vunpack.c.l.b16 %v87
    %v1650 = vunpack.c.h.b16 %v87
    %v1651 = vunpack.c.l.b16 %v88
    %v1652 = vunpack.c.h.b16 %v88
    %v1653 = vunpack.c.l.b16 %v89
    %v1654 = vunpack.c.h.b16 %v89
    %v1655 = vunpack.c.l.b16 %v90
    %v1656 = vunpack.c.h.b16 %v90
    %v1657 = vunpack.c.l.b16 %v91
    %v1658 = vunpack.c.h.b16 %v91
    %v1659 = vunpack.c.l.b16 %v92
    %v1660 = vunpack.c.h.b16 %v92
    %v1661 = vunpack.c.l.b16 %v93
    %v1662 = vunpack.c.h.b16 %v93
    %v1663 = vunpack.c.l.b16 %v94
    %v1664 = vunpack.c.h.b16 %v94
    %v1665 = vunpack.c.l.b16 %v95
    %v1666 = vunpack.c.h.b16 %v95
    %v1667 = vunpack.c.l.b16 %v96
    %v1668 = vunpack.c.h.b16 %v96
    %v1669 = vunpack.c.l.b16 %v97
    %v1670 = vunpack.c.h.b16 %v97
    %v1671 = vunpack.c.l.b16 %v98
    %v1672 = vunpack.c.h.b16 %v98
    %v1673 = vunpack.c.l.b16 %v99
    %v1674 = vunpack.c.h.b16 %v99
    %v1675 = vunpack.c.l.b16 %v100
    %v1676 = vunpack.c.h.b16 %v100
    %v1677 = vunpack.c.l.b16 %v101
    %v1678 = vunpack.c.h.b16 %v101
    %v1679 = vunpack.c.l.b16 %v102
    %v1680 = vunpack.c.h.b16 %v102
    %v1681 = vunpack.c.l.b16 %v103
    %v1682 = vunpack.c.h.b16 %v103
    %v1683 = vunpack.c.l.b16 %v104
    %v1684 = vunpack.c.h.b16 %v104
    %v1685 = vunpack.c.l.b16 %v105
    %v1686 = vunpack.c.h.b16 %v105
    %v1687 = vunpack.c.l.b16 %v106
    %v1688 = vunpack.c.h.b16 %v106
    %v1689 = vunpack.c.l.b16 %v107
    %v1690 = vunpack.c.h.b16 %v107
    %v1691 = vunpack.c.l.b16 %v108
    %v1692 = vunpack.c.h.b16 %v108
    %v1693 = vunpack.c.l.b16 %v109
    %v1694 = vunpack.c.h.b16 %v109
    %v1695 = vunpack.c.l.b16 %v110
    %v1696 = vunpack.c.h.b16 %v110
    %v1697 = vunpack.c.l.b16 %v111
    %v1698 = vunpack.c.h.b16 %v111
    %v1699 = vunpack.c.l.b16 %v112
    %v1700 = vunpack.c.h.b16 %v112
    %v1701 = vunpack.c.l.b16 %v113
    %v1702 = vunpack.c.h.b16 %v113
    %v1703 = vunpack.c.l.b16 %v114
    %v1704 = vunpack.c.h.b16 %v114
    %v1705 = vunpack.c.l.b16 %v115
    %v1706 = vunpack.c.h.b16 %v115
    %v1707 = vunpack.c.l.b16 %v116
    %v1708 = vunpack.c.h.b16 %v116
    %v1709 = vunpack.c.l.b16 %v117
    %v1710 = vunpack.c.h.b16 %v117
    %v1711 = vunpack.c.l.b16 %v118
    %v1712 = vunpack.c.h.b16 %v118
    %v1713 = vunpack.c.l.b16 %v119
    %v1714 = vunpack.c.h.b16 %v119
    %v1715 = vunpack.c.l.b16 %v120
    %v1716 = vunpack.c.h.b16 %v120
    %v1717 = vunpack.c.l.b16 %v121
    %v1718 = vunpack.c.h.b16 %v121
    %v1719 = vunpack.c.l.b16 %v122
    %v1720 = vunpack.c.h.b16 %v122
    %v1721 = vunpack.c.l.b16 %v123
    %v1722 = vunpack.c.h.b16 %v123
    %v1723 = vunpack.c.l.b16 %v124
    %v1724 = vunpack.c.h.b16 %v124
    %v1725 = vunpack.c.l.b16 %v125
    %v1726 = vunpack.c.h.b16 %v125
    %v1727 = vunpack.c.l.b16 %v126
    %v1728 = vunpack.c.h.b16 %v126
    %v1729 = vunpack.c.l.b16 %v127
    %v1730 = vunpack.c.h.b16 %v127
    %v1731 = vunpack.c.l.b16 %v128
    %v1732 = vunpack.c.h.b16 %v128
    %v1733 = vunpack.c.l.b16 %v129
    %v1734 = vunpack.c.h.b16 %v129
    %v1735 = vunpack.c.l.b16 %v130
    %v1736 = vunpack.c.h.b16 %v130
    %v1737 = vunpack.c.l.b16 %v131
    %v1738 = vunpack.c.h.b16 %v131
    %v1739 = vunpack.c.l.b16 %v132
    %v1740 = vunpack.c.h.b16 %v132
    %v1741 = vunpack.c.l.b16 %v133
    %v1742 = vunpack.c.h.b16 %v133
    %v1743 = vunpack.c.l.b16 %v134
    %v1744 = vunpack.c.h.b16 %v134
    %v1745 = vunpack.c.l.b16 %v135
    %v1746 = vunpack.c.h.b16 %v135
    %v1747 = vunpack.c.l.b16 %v136
    %v1748 = vunpack.c.h.b16 %v136
    %v1749 = vunpack.c.l.b16 %v137
    %v1750 = vunpack.c.h.b16 %v137
    %v1751 = vunpack.c.l.b16 %v138
    %v1752 = vunpack.c.h.b16 %v138
    %v1753 = vunpack.c.l.b16 %v139
    %v1754 = vunpack.c.h.b16 %v139
    %v1755 = vunpack.c.l.b16 %v140
    %v1756 = vunpack.c.h.b16 %v140
    %v1757 = vunpack.c.l.b16 %v141
    %v1758 = vunpack.c.h.b16 %v141
    %v1759 = vunpack.c.l.b16 %v142
    %v1760 = vunpack.c.h.b16 %v142
    %v1761 = vunpack.c.l.b16 %v143
    %v1762 = vunpack.c.h.b16 %v143
    %v1763 = vunpack.c.l.b16 %v144
    %v1764 = vunpack.c.h.b16 %v144
    %v1765 = vunpack.c.l.b16 %v145
    %v1766 = vunpack.c.h.b16 %v145
    %v1767 = vunpack.c.l.b16 %v146
    %v1768 = vunpack.c.h.b16 %v146
    %v1769 = vunpack.c.l.b16 %v147
    %v1770 = vunpack.c.h.b16 %v147
    %v1771 = vunpack.c.l.b16 %v148
    %v1772 = vunpack.c.h.b16 %v148
    %v1773 = vunpack.c.l.b16 %v149
    %v1774 = vunpack.c.h.b16 %v149
    %v1775 = vunpack.c.l.b16 %v150
    %v1776 = vunpack.c.h.b16 %v150
    %v1777 = vunpack.c.l.b16 %v151
    %v1778 = vunpack.c.h.b16 %v151
    %v1779 = vunpack.c.l.b16 %v152
    %v1780 = vunpack.c.h.b16 %v152
    %v1781 = vunpack.c.l.b16 %v153
    %v1782 = vunpack.c.h.b16 %v153
    %v1783 = vunpack.c.l.b16 %v154
    %v1784 = vunpack.c.h.b16 %v154
    %v1785 = vunpack.c.l.b16 %v155
    %v1786 = vunpack.c.h.b16 %v155
    %v1787 = vunpack.c.l.b16 %v156
    %v1788 = vunpack.c.h.b16 %v156
    %v1789 = vunpack.c.l.b16 %v157
    %v1790 = vunpack.c.h.b16 %v157
    %v1791 = vunpack.c.l.b16 %v158
    %v1792 = vunpack.c.h.b16 %v158
    %v1793 = vunpack.c.l.b16 %v159
    %v1794 = vunpack.c.h.b16 %v159
    %v1795 = vunpack.c.l.b16 %v160
    %v1796 = vunpack.c.h.b16 %v160
    %v1797 = vunpack.c.l.b16 %v161
    %v1798 = vunpack.c.h.b16 %v161
    %v1799 = vunpack.c.l.b16 %v162
    %v1800 = vunpack.c.h.b16 %v162
    %v1801 = vunpack.c.l.b16 %v163
    %v1802 = vunpack.c.h.b16 %v163
    %v1803 = vunpack.c.l.b16 %v164
    %v1804 = vunpack.c.h.b16 %v164
    %v1805 = vunpack.c.l.b16 %v165
    %v1806 = vunpack.c.h.b16 %v165
    %v1807 = vunpack.c.l.b16 %v166
    %v1808 = vunpack.c.h.b16 %v166
    %v1809 = vunpack.c.l.b16 %v167
    %v1810 = vunpack.c.h.b16 %v167
    %v1811 = vunpack.c.l.b16 %v168
    %v1812 = vunpack.c.h.b16 %v168
    %v1813 = vunpack.c.l.b16 %v169
    %v1814 = vunpack.c.h.b16 %v169
    %v1815 = vunpack.c.l.b16 %v170
    %v1816 = vunpack.c.h.b16 %v170
    %v1817 = vunpack.c.l.b16 %v171
    %v1818 = vunpack.c.h.b16 %v171
    %v1819 = vunpack.c.l.b16 %v172
    %v1820 = vunpack.c.h.b16 %v172
    %v1821 = vunpack.c.l.b16 %v173
    %v1822 = vunpack.c.h.b16 %v173
    %v1823 = vunpack.c.l.b16 %v174
    %v1824 = vunpack.c.h.b16 %v174
    %v1825 = vunpack.c.l.b16 %v175
    %v1826 = vunpack.c.h.b16 %v175
    %v1827 = vunpack.c.l.b16 %v176
    %v1828 = vunpack.c.h.b16 %v176
    %v1829 = vunpack.c.l.b16 %v177
    %v1830 = vunpack.c.h.b16 %v177
    %v1831 = vunpack.c.l.b16 %v178
    %v1832 = vunpack.c.h.b16 %v178
    %v1833 = vunpack.c.l.b16 %v179
    %v1834 = vunpack.c.h.b16 %v179
    %v1835 = vunpack.c.l.b16 %v180
    %v1836 = vunpack.c.h.b16 %v180
    %v1837 = vunpack.c.l.b16 %v181
    %v1838 = vunpack.c.h.b16 %v181
    %v1839 = vunpack.c.l.b16 %v182
    %v1840 = vunpack.c.h.b16 %v182
    %v1841 = vunpack.c.l.b16 %v183
    %v1842 = vunpack.c.h.b16 %v183
    %v1843 = vunpack.c.l.b16 %v184
    %v1844 = vunpack.c.h.b16 %v184
    %v1845 = vunpack.c.l.b16 %v185
    %v1846 = vunpack.c.h.b16 %v185
    %v1847 = vunpack.c.l.b16 %v186
    %v1848 = vunpack.c.h.b16 %v186
    %v1849 = vunpack.c.l.b16 %v187
    %v1850 = vunpack.c.h.b16 %v187
    %v1851 = vunpack.c.l.b16 %v188
    %v1852 = vunpack.c.h.b16 %v188
    %v1853 = vunpack.c.l.b16 %v189
    %v1854 = vunpack.c.h.b16 %v189
    %v1855 = vunpack.c.l.b16 %v190
    %v1856 = vunpack.c.h.b16 %v190
    %v1857 = vunpack.c.l.b16 %v191
    %v1858 = vunpack.c.h.b16 %v191
    %v1859 = vunpack.c.l.b16 %v192
    %v1860 = vunpack.c.h.b16 %v192
    %v1861 = vunpack.c.l.b16 %v193
    %v1862 = vunpack.c.h.b16 %v193
    %v1863 = vunpack.c.l.b16 %v194
    %v1864 = vunpack.c.h.b16 %v194
    %v1865 = vunpack.c.l.b16 %v195
    %v1866 = vunpack.c.h.b16 %v195
    %v1867 = vpack.c.b16 %v1705, %v1543
    %v1868 = vpack.c.b16 %v1706, %v1544
    %v1869 = vpack.c.b16 %v1707, %v1545
    %v1870 = vpack.c.b16 %v1708, %v1546
    %v1871 = vpack.c.b16 %v1709, %v1547
    %v1872 = vpack.c.b16 %v1710, %v1548
    %v1873 = vpack.c.b16 %v1711, %v1549
    %v1874 = vpack.c.b16 %v1712, %v1550
    %v1875 = vpack.c.b16 %v1713, %v1551
    %v1876 = vpack.c.b16 %v1714, %v1552
    %v1877 = vpack.c.b16 %v1715, %v1553
    %v1878 = vpack.c.b16 %v1716, %v1554
    %v1879 = vpack.c.b16 %v1717, %v1555
    %v1880 = vpack.c.b16 %v1718, %v1556
    %v1881 = vpack.c.b16 %v1719, %v1557
    %v1882 = vpack.c.b16 %v1720, %v1558
    %v1883 = vpack.c.b16 %v1721, %v1559
    %v1884 = vpack.c.b16 %v1722, %v1560
    %v1885 = vpack.c.b16 %v1723, %v1561
    %v1886 = vpack.c.b16 %v1724, %v1562
    %v1887 = vpack.c.b16 %v1725, %v1563
    %v1888 = vpack.c.b16 %v1726, %v1564
    %v1889 = vpack.c.b16 %v1727, %v1565
    %v1890 = vpack.c.b16 %v1728, %v1566
    %v1891 = vpack.c.b16 %v1729, %v1567
    %v1892 = vpack.c.b16 %v1730, %v1568
    %v1893 = vpack.c.b16 %v1731, %v1569
    %v1894 = vpack.c.b16 %v1732, %v1570
    %v1895 = vpack.c.b16 %v1733, %v1571
    %v1896 = vpack.c.b16 %v1734, %v1572
    %v1897 = vpack.c.b16 %v1735, %v1573
    %v1898 = vpack.c.b16 %v1736, %v1574
    %v1899 = vpack.c.b16 %v1737, %v1575
    %v1900 = vpack.c.b16 %v1738, %v1576
    %v1901 = vpack.c.b16 %v1739, %v1577
    %v1902 = vpack.c.b16 %v1740, %v1578
    %v1903 = vpack.c.b16 %v1741, %v1579
    %v1904 = vpack.c.b16 %v1742, %v1580
    %v1905 = vpack.c.b16 %v1743, %v1581
    %v1906 = vpack.c.b16 %v1744, %v1582
    %v1907 = vpack.c.b16 %v1745, %v1583
    %v1908 = vpack.c.b16 %v1746, %v1584
    %v1909 = vpack.c.b16 %v1747, %v1585
    %v1910 = vpack.c.b16 %v1748, %v1586
    %v1911 = vpack.c.b16 %v1749, %v1587
    %v1912 = vpack.c.b16 %v1750, %v1588
    %v1913 = vpack.c.b16 %v1751, %v1589
    %v1914 = vpack.c.b16 %v1752, %v1590
    %v1915 = vpack.c.b16 %v1753, %v1591
    %v1916 = vpack.c.b16 %v1754, %v1592
    %v1917 = vpack.c.b16 %v1755, %v1593
    %v1918 = vpack.c.b16 %v1756, %v1594
    %v1919 = vpack.c.b16 %v1757, %v1595
    %v1920 = vpack.c.b16 %v1758, %v1596
    %v1921 = vpack.c.b16 %v1759, %v1597
    %v1922 = vpack.c.b16 %v1760, %v1598
    %v1923 = vpack.c.b16 %v1761, %v1599
    %v1924 = vpack.c.b16 %v1762, %v1600
    %v1925 = vpack.c.b16 %v1763, %v1601
    %v1926 = vpack.c.b16 %v1764, %v1602
    %v1927 = vpack.c.b16 %v1765, %v1603
    %v1928 = vpack.c.b16 %v1766, %v1604
    %v1929 = vpack.c.b16 %v1767, %v1605
    %v1930 = vpack.c.b16 %v1768, %v1606
    %v1931 = vpack.c.b16 %v1769, %v1607
    %v1932 = vpack.c.b16 %v1770, %v1608
    %v1933 = vpack.c.b16 %v1771, %v1609
    %v1934 = vpack.c.b16 %v1772, %v1610
    %v1935 = vpack.c.b16 %v1773, %v1611
    %v1936 = vpack.c.b16 %v1774, %v1612
    %v1937 = vpack.c.b16 %v1775, %v1613
    %v1938 = vpack.c.b16 %v1776, %v1614
    %v1939 = vpack.c.b16 %v1777, %v1615
    %v1940 = vpack.c.b16 %v1778, %v1616
    %v1941 = vpack.c.b16 %v1779, %v1617
    %v1942 = vpack.c.b16 %v1780, %v1618
    %v1943 = vpack.c.b16 %v1781, %v1619
    %v1944 = vpack.c.b16 %v1782, %v1620
    %v1945 = vpack.c.b16 %v1783, %v1621
    %v1946 = vpack.c.b16 %v1784, %v1622
    %v1947 = vpack.c.b16 %v1785, %v1623
    %v1948 = vpack.c.b16 %v1786, %v1624
    %v1949 = vpack.c.b16 %v1787, %v1625
    %v1950 = vpack.c.b16 %v1788, %v1626
    %v1951 = vpack.c.b16 %v1789, %v1627
    %v1952 = vpack.c.b16 %v1790, %v1628
    %v1953 = vpack.c.b16 %v1791, %v1629
    %v1954 = vpack.c.b16 %v1792, %v1630
    %v1955 = vpack.c.b16 %v1793, %v1631
    %v1956 = vpack.c.b16 %v1794, %v1632
    %v1957 = vpack.c.b16 %v1795, %v1633
    %v1958 = vpack.c.b16 %v1796, %v1634
    %v1959 = vpack.c.b16 %v1797, %v1635
    %v1960 = vpack.c.b16 %v1798, %v1636
    %v1961 = vpack.c.b16 %v1799, %v1637
    %v1962 = vpack.c.b16 %v1800, %v1638
    %v1963 = vpack.c.b16 %v1801, %v1639
    %v1964 = vpack.c.b16 %v1802, %v1640
    %v1965 = vpack.c.b16 %v1803, %v1641
    %v1966 = vpack.c.b16 %v1804, %v1642
    %v1967 = vpack.c.b16 %v1805, %v1643
    %v1968 = vpack.c.b16 %v1806, %v1644
    %v1969 = vpack.c.b16 %v1807, %v1645
    %v1970 = vpack.c.b16 %v1808, %v1646
    %v1971 = vpack.c.b16 %v1809, %v1647
    %v1972 = vpack.c.b16 %v1810, %v1648
    %v1973 = vpack.c.b16 %v1811, %v1649
    %v1974 = vpack.c.b16 %v1812, %v1650
    %v1975 = vpack.c.b16 %v1813, %v1651
    %v1976 = vpack.c.b16 %v1814, %v1652
    %v1977 = vpack.c.b16 %v1815, %v1653
    %v1978 = vpack.c.b16 %v1816, %v1654
    %v1979 = vpack.c.b16 %v1817, %v1655
    %v1980 = vpack.c.b16 %v1818, %v1656
    %v1981 = vpack.c.b16 %v1819, %v1657
    %v1982 = vpack.c.b16 %v1820, %v1658
    %v1983 = vpack.c.b16 %v1821, %v1659
    %v1984 = vpack.c.b16 %v1822, %v1660
    %v1985 = vpack.c.b16 %v1823, %v1661
    %v1986 = vpack.c.b16 %v1824, %v1662
    %v1987 = vpack.c.b16 %v1825, %v1663
    %v1988 = vpack.c.b16 %v1826, %v1664
    %v1989 = vpack.c.b16 %v1827, %v1665
    %v1990 = vpack.c.b16 %v1828, %v1666
    %v1991 = vpack.c.b16 %v1829, %v1667
    %v1992 = vpack.c.b16 %v1830, %v1668
    %v1993 = vpack.c.b16 %v1831, %v1669
    %v1994 = vpack.c.b16 %v1832, %v1670
    %v1995 = vpack.c.b16 %v1833, %v1671
    %v1996 = vpack.c.b16 %v1834, %v1672
    %v1997 = vpack.c.b16 %v1835, %v1673
    %v1998 = vpack.c.b16 %v1836, %v1674
    %v1999 = vpack.c.b16 %v1837, %v1675
    %v2000 = vpack.c.b16 %v1838, %v1676
    %v2001 = vpack.c.b16 %v1839, %v1677
    %v2002 = vpack.c.b16 %v1840, %v1678
    %v2003 = vpack.c.b16 %v1841, %v1679
    %v2004 = vpack.c.b16 %v1842, %v1680
    %v2005 = vpack.c.b16 %v1843, %v1681
    %v2006 = vpack.c.b16 %v1844, %v1682
    %v2007 = vpack.c.b16 %v1845, %v1683
    %v2008 = vpack.c.b16 %v1846, %v1684
    %v2009 = vpack.c.b16 %v1847, %v1685
    %v2010 = vpack.c.b16 %v1848, %v1686
    %v2011 = vpack.c.b16 %v1849, %v1687
    %v2012 = vpack.c.b16 %v1850, %v1688
    %v2013 = vpack.c.b16 %v1851, %v1689
    %v2014 = vpack.c.b16 %v1852, %v1690
    %v2015 = vpack.c.b16 %v1853, %v1691
    %v2016 = vpack.c.b16 %v1854, %v1692
    %v2017 = vpack.c.b16 %v1855, %v1693
    %v2018 = vpack.c.b16 %v1856, %v1694
    %v2019 = vpack.c.b16 %v1857, %v1695
    %v2020 = vpack.c.b16 %v1858, %v1696
    %v2021 = vpack.c.b16 %v1859, %v1697
    %v2022 = vpack.c.b16 %v1860, %v1698
    %v2023 = vpack.c.b16 %v1861, %v1699
    %v2024 = vpack.c.b16 %v1862, %v1700
    %v2025 = vpack.c.b16 %v1863, %v1701
    %v2026 = vpack.c.b16 %v1864, %v1702
    %v2027 = vpack.c.b16 %v1865, %v1703
    %v2028 = vpack.c.b16 %v1866, %v1704
    %2191 = vmatprep.subr.bf16.mxu0 %v1868
    %2192 = vmatpush1.bf16.xpose.msra.mxu0 %v1867
    %2193 = vmatprep.subr.bf16.mxu0 0
    %2194 = vmatpush1.bf16.xpose.msra.mxu0 0
    %2195 = vmatprep.subr.bf16.mxu0 0
    %2196 = vmatpush1.bf16.xpose.msra.mxu0 0
    %2197 = vmatprep.subr.bf16.mxu0 0
    %2198 = vmatpush1.bf16.xpose.msra.mxu0 0
    %2199 = vmatprep.subr.bf16.mxu0 0
    %2200 = vmatpush1.bf16.xpose.msra.mxu0 0
    %2201 = vmatprep.subr.bf16.mxu0 0
    %2202 = vmatpush1.bf16.xpose.msra.mxu0 0
    %2203 = vmatprep.subr.bf16.mxu0 0
    %2204 = vmatpush1.bf16.xpose.msra.mxu0 0
    %2205 = vmatprep.subr.bf16.mxu0 0
    %2206 = vmatpush1.bf16.xpose.msra.mxu0 0
    %2207 = vmatprep.subr.bf16.mxu0 0
    %2208 = vmatpush1.bf16.xpose.msra.mxu0 0
    %2209 = vmatprep.subr.bf16.mxu0 0
    %2210 = vmatpush1.bf16.xpose.msra.mxu0 0
    %2211 = vmatprep.subr.bf16.mxu0 0
    %2212 = vmatpush1.bf16.xpose.msra.mxu0 0
    %2213 = vmatprep.subr.bf16.mxu0 0
    %2214 = vmatpush1.bf16.xpose.msra.mxu0 0
    %2215 = vmatprep.subr.bf16.mxu0 0
    %2216 = vmatpush1.bf16.xpose.msra.mxu0 0
    %2217 = vmatprep.subr.bf16.mxu0 0
    %2218 = vmatpush1.bf16.xpose.msra.mxu0 0
    %2219 = vmatprep.subr.bf16.mxu0 0
    %2220 = vmatpush1.bf16.xpose.msra.mxu0 0
    %2221 = vmatprep.subr.bf16.mxu0 0
    %2222 = vmatpush1.bf16.xpose.msra.mxu0 0
    %2223 = vmatprep.mubr.bf16.mxu0 %v254
    %2224 = vmatmul.mubr.bf16.gmra.mrb[0].mxu0 %v240
    %v2225 = vpop.f32.mrb[0].mxu0
    %v2226 = vadd.f32 0.0, %v2225
    %v2227 = vpop.f32.mrb[0].mxu0
    %v2228 = vpop.f32.mrb[0].mxu0
    %v2229 = vpop.f32.mrb[0].mxu0
    %2230 = vdwg.mxu0
    %2231 = vmatprep.subr.bf16.mxu0 %v1870
    %2232 = vmatpush1.bf16.xpose.msra.mxu0 %v1869
    %2233 = vmatprep.subr.bf16.mxu0 0
    %2234 = vmatpush1.bf16.xpose.msra.mxu0 0
    %2235 = vmatprep.subr.bf16.mxu0 0
    %2236 = vmatpush1.bf16.xpose.msra.mxu0 0
    %2237 = vmatprep.subr.bf16.mxu0 0
    %2238 = vmatpush1.bf16.xpose.msra.mxu0 0
    %2239 = vmatprep.subr.bf16.mxu0 0
    %2240 = vmatpush1.bf16.xpose.msra.mxu0 0
    %2241 = vmatprep.subr.bf16.mxu0 0
    %2242 = vmatpush1.bf16.xpose.msra.mxu0 0
    %2243 = vmatprep.subr.bf16.mxu0 0
    %2244 = vmatpush1.bf16.xpose.msra.mxu0 0
    %2245 = vmatprep.subr.bf16.mxu0 0
    %2246 = vmatpush1.bf16.xpose.msra.mxu0 0
    %2247 = vmatprep.subr.bf16.mxu0 0
    %2248 = vmatpush1.bf16.xpose.msra.mxu0 0
    %2249 = vmatprep.subr.bf16.mxu0 0
    %2250 = vmatpush1.bf16.xpose.msra.mxu0 0
    %2251 = vmatprep.subr.bf16.mxu0 0
    %2252 = vmatpush1.bf16.xpose.msra.mxu0 0
    %2253 = vmatprep.subr.bf16.mxu0 0
    %2254 = vmatpush1.bf16.xpose.msra.mxu0 0
    %2255 = vmatprep.subr.bf16.mxu0 0
    %2256 = vmatpush1.bf16.xpose.msra.mxu0 0
    %2257 = vmatprep.subr.bf16.mxu0 0
    %2258 = vmatpush1.bf16.xpose.msra.mxu0 0
    %2259 = vmatprep.subr.bf16.mxu0 0
    %2260 = vmatpush1.bf16.xpose.msra.mxu0 0
    %2261 = vmatprep.subr.bf16.mxu0 0
    %2262 = vmatpush1.bf16.xpose.msra.mxu0 0
    %2263 = vmatprep.mubr.bf16.mxu0 %v264
    %2264 = vmatmul.mubr.bf16.gmra.mrb[0].mxu0 %v262
    %v2265 = vpop.f32.mrb[0].mxu0
    %v2266 = vadd.f32 %v2226, %v2265
    %v2267 = vpop.f32.mrb[0].mxu0
    %v2268 = vpop.f32.mrb[0].mxu0
    %v2269 = vpop.f32.mrb[0].mxu0
    %2270 = vdwg.mxu0
    %2271 = vmatprep.subr.bf16.mxu0 %v1872
    %2272 = vmatpush1.bf16.xpose.msra.mxu0 %v1871
    %2273 = vmatprep.subr.bf16.mxu0 0
    %2274 = vmatpush1.bf16.xpose.msra.mxu0 0
    %2275 = vmatprep.subr.bf16.mxu0 0
    %2276 = vmatpush1.bf16.xpose.msra.mxu0 0
    %2277 = vmatprep.subr.bf16.mxu0 0
    %2278 = vmatpush1.bf16.xpose.msra.mxu0 0
    %2279 = vmatprep.subr.bf16.mxu0 0
    %2280 = vmatpush1.bf16.xpose.msra.mxu0 0
    %2281 = vmatprep.subr.bf16.mxu0 0
    %2282 = vmatpush1.bf16.xpose.msra.mxu0 0
    %2283 = vmatprep.subr.bf16.mxu0 0
    %2284 = vmatpush1.bf16.xpose.msra.mxu0 0
    %2285 = vmatprep.subr.bf16.mxu0 0
    %2286 = vmatpush1.bf16.xpose.msra.mxu0 0
    %2287 = vmatprep.subr.bf16.mxu0 0
    %2288 = vmatpush1.bf16.xpose.msra.mxu0 0
    %2289 = vmatprep.subr.bf16.mxu0 0
    %2290 = vmatpush1.bf16.xpose.msra.mxu0 0
    %2291 = vmatprep.subr.bf16.mxu0 0
    %2292 = vmatpush1.bf16.xpose.msra.mxu0 0
    %2293 = vmatprep.subr.bf16.mxu0 0
    %2294 = vmatpush1.bf16.xpose.msra.mxu0 0
    %2295 = vmatprep.subr.bf16.mxu0 0
    %2296 = vmatpush1.bf16.xpose.msra.mxu0 0
    %2297 = vmatprep.subr.bf16.mxu0 0
    %2298 = vmatpush1.bf16.xpose.msra.mxu0 0
    %2299 = vmatprep.subr.bf16.mxu0 0
    %2300 = vmatpush1.bf16.xpose.msra.mxu0 0
    %2301 = vmatprep.subr.bf16.mxu0 0
    %2302 = vmatpush1.bf16.xpose.msra.mxu0 0
    %2303 = vmatprep.mubr.bf16.mxu0 %v261
    %2304 = vmatmul.mubr.bf16.gmra.mrb[0].mxu0 %v247
    %v2305 = vpop.f32.mrb[0].mxu0
    %v2306 = vadd.f32 %v2266, %v2305
    %v2307 = vpop.f32.mrb[0].mxu0
    %v2308 = vpop.f32.mrb[0].mxu0
    %v2309 = vpop.f32.mrb[0].mxu0
    %2310 = vdwg.mxu0
    %2311 = vmatprep.subr.bf16.mxu0 %v1874
    %2312 = vmatpush1.bf16.xpose.msra.mxu0 %v1873
    %2313 = vmatprep.subr.bf16.mxu0 0
    %2314 = vmatpush1.bf16.xpose.msra.mxu0 0
    %2315 = vmatprep.subr.bf16.mxu0 0
    %2316 = vmatpush1.bf16.xpose.msra.mxu0 0
    %2317 = vmatprep.subr.bf16.mxu0 0
    %2318 = vmatpush1.bf16.xpose.msra.mxu0 0
    %2319 = vmatprep.subr.bf16.mxu0 0
    %2320 = vmatpush1.bf16.xpose.msra.mxu0 0
    %2321 = vmatprep.subr.bf16.mxu0 0
    %2322 = vmatpush1.bf16.xpose.msra.mxu0 0
    %2323 = vmatprep.subr.bf16.mxu0 0
    %2324 = vmatpush1.bf16.xpose.msra.mxu0 0
    %2325 = vmatprep.subr.bf16.mxu0 0
    %2326 = vmatpush1.bf16.xpose.msra.mxu0 0
    %2327 = vmatprep.subr.bf16.mxu0 0
    %2328 = vmatpush1.bf16.xpose.msra.mxu0 0
    %2329 = vmatprep.subr.bf16.mxu0 0
    %2330 = vmatpush1.bf16.xpose.msra.mxu0 0
    %2331 = vmatprep.subr.bf16.mxu0 0
    %2332 = vmatpush1.bf16.xpose.msra.mxu0 0
    %2333 = vmatprep.subr.bf16.mxu0 0
    %2334 = vmatpush1.bf16.xpose.msra.mxu0 0
    %2335 = vmatprep.subr.bf16.mxu0 0
    %2336 = vmatpush1.bf16.xpose.msra.mxu0 0
    %2337 = vmatprep.subr.bf16.mxu0 0
    %2338 = vmatpush1.bf16.xpose.msra.mxu0 0
    %2339 = vmatprep.subr.bf16.mxu0 0
    %2340 = vmatpush1.bf16.xpose.msra.mxu0 0
    %2341 = vmatprep.subr.bf16.mxu0 0
    %2342 = vmatpush1.bf16.xpose.msra.mxu0 0
    %2343 = vmatprep.mubr.bf16.mxu0 %v265
    %2344 = vmatmul.mubr.bf16.gmra.mrb[0].mxu0 %v263
    %v2345 = vpop.f32.mrb[0].mxu0
    %v2346 = vadd.f32 %v2306, %v2345
    %v2347 = vpop.f32.mrb[0].mxu0
    %v2348 = vpop.f32.mrb[0].mxu0
    %v2349 = vpop.f32.mrb[0].mxu0
    %2350 = vdwg.mxu0
    %2351 = vmatprep.subr.bf16.mxu0 %v1876
    %2352 = vmatpush1.bf16.xpose.msra.mxu0 %v1875
    %2353 = vmatprep.subr.bf16.mxu0 0
    %2354 = vmatpush1.bf16.xpose.msra.mxu0 0
    %2355 = vmatprep.subr.bf16.mxu0 0
    %2356 = vmatpush1.bf16.xpose.msra.mxu0 0
    %2357 = vmatprep.subr.bf16.mxu0 0
    %2358 = vmatpush1.bf16.xpose.msra.mxu0 0
    %2359 = vmatprep.subr.bf16.mxu0 0
    %2360 = vmatpush1.bf16.xpose.msra.mxu0 0
    %2361 = vmatprep.subr.bf16.mxu0 0
    %2362 = vmatpush1.bf16.xpose.msra.mxu0 0
    %2363 = vmatprep.subr.bf16.mxu0 0
    %2364 = vmatpush1.bf16.xpose.msra.mxu0 0
    %2365 = vmatprep.subr.bf16.mxu0 0
    %2366 = vmatpush1.bf16.xpose.msra.mxu0 0
    %2367 = vmatprep.subr.bf16.mxu0 0
    %2368 = vmatpush1.bf16.xpose.msra.mxu0 0
    %2369 = vmatprep.subr.bf16.mxu0 0
    %2370 = vmatpush1.bf16.xpose.msra.mxu0 0
    %2371 = vmatprep.subr.bf16.mxu0 0
    %2372 = vmatpush1.bf16.xpose.msra.mxu0 0
    %2373 = vmatprep.subr.bf16.mxu0 0
    %2374 = vmatpush1.bf16.xpose.msra.mxu0 0
    %2375 = vmatprep.subr.bf16.mxu0 0
    %2376 = vmatpush1.bf16.xpose.msra.mxu0 0
    %2377 = vmatprep.subr.bf16.mxu0 0
    %2378 = vmatpush1.bf16.xpose.msra.mxu0 0
    %2379 = vmatprep.subr.bf16.mxu0 0
    %2380 = vmatpush1.bf16.xpose.msra.mxu0 0
    %2381 = vmatprep.subr.bf16.mxu0 0
    %2382 = vmatpush1.bf16.xpose.msra.mxu0 0
    %2383 = vmatprep.mubr.bf16.mxu0 %v303
    %2384 = vmatmul.mubr.bf16.gmra.mrb[0].mxu0 %v289
    %v2385 = vpop.f32.mrb[0].mxu0
    %v2386 = vadd.f32 %v2346, %v2385
    %v2387 = vpop.f32.mrb[0].mxu0
    %v2388 = vpop.f32.mrb[0].mxu0
    %v2389 = vpop.f32.mrb[0].mxu0
    %2390 = vdwg.mxu0
    %2391 = vmatprep.subr.bf16.mxu0 %v1878
    %2392 = vmatpush1.bf16.xpose.msra.mxu0 %v1877
    %2393 = vmatprep.subr.bf16.mxu0 0
    %2394 = vmatpush1.bf16.xpose.msra.mxu0 0
    %2395 = vmatprep.subr.bf16.mxu0 0
    %2396 = vmatpush1.bf16.xpose.msra.mxu0 0
    %2397 = vmatprep.subr.bf16.mxu0 0
    %2398 = vmatpush1.bf16.xpose.msra.mxu0 0
    %2399 = vmatprep.subr.bf16.mxu0 0
    %2400 = vmatpush1.bf16.xpose.msra.mxu0 0
    %2401 = vmatprep.subr.bf16.mxu0 0
    %2402 = vmatpush1.bf16.xpose.msra.mxu0 0
    %2403 = vmatprep.subr.bf16.mxu0 0
    %2404 = vmatpush1.bf16.xpose.msra.mxu0 0
    %2405 = vmatprep.subr.bf16.mxu0 0
    %2406 = vmatpush1.bf16.xpose.msra.mxu0 0
    %2407 = vmatprep.subr.bf16.mxu0 0
    %2408 = vmatpush1.bf16.xpose.msra.mxu0 0
    %2409 = vmatprep.subr.bf16.mxu0 0
    %2410 = vmatpush1.bf16.xpose.msra.mxu0 0
    %2411 = vmatprep.subr.bf16.mxu0 0
    %2412 = vmatpush1.bf16.xpose.msra.mxu0 0
    %2413 = vmatprep.subr.bf16.mxu0 0
    %2414 = vmatpush1.bf16.xpose.msra.mxu0 0
    %2415 = vmatprep.subr.bf16.mxu0 0
    %2416 = vmatpush1.bf16.xpose.msra.mxu0 0
    %2417 = vmatprep.subr.bf16.mxu0 0
    %2418 = vmatpush1.bf16.xpose.msra.mxu0 0
    %2419 = vmatprep.subr.bf16.mxu0 0
    %2420 = vmatpush1.bf16.xpose.msra.mxu0 0
    %2421 = vmatprep.subr.bf16.mxu0 0
    %2422 = vmatpush1.bf16.xpose.msra.mxu0 0
    %2423 = vmatprep.mubr.bf16.mxu0 %v313
    %2424 = vmatmul.mubr.bf16.gmra.mrb[0].mxu0 %v311
    %v2425 = vpop.f32.mrb[0].mxu0
    %v2426 = vadd.f32 %v2386, %v2425
    %v2427 = vpop.f32.mrb[0].mxu0
    %v2428 = vpop.f32.mrb[0].mxu0
    %v2429 = vpop.f32.mrb[0].mxu0
    %2430 = vdwg.mxu0
    %2431 = vmatprep.subr.bf16.mxu0 %v1880
    %2432 = vmatpush1.bf16.xpose.msra.mxu0 %v1879
    %2433 = vmatprep.subr.bf16.mxu0 0
    %2434 = vmatpush1.bf16.xpose.msra.mxu0 0
    %2435 = vmatprep.subr.bf16.mxu0 0
    %2436 = vmatpush1.bf16.xpose.msra.mxu0 0
    %2437 = vmatprep.subr.bf16.mxu0 0
    %2438 = vmatpush1.bf16.xpose.msra.mxu0 0
    %2439 = vmatprep.subr.bf16.mxu0 0
    %2440 = vmatpush1.bf16.xpose.msra.mxu0 0
    %2441 = vmatprep.subr.bf16.mxu0 0
    %2442 = vmatpush1.bf16.xpose.msra.mxu0 0
    %2443 = vmatprep.subr.bf16.mxu0 0
    %2444 = vmatpush1.bf16.xpose.msra.mxu0 0
    %2445 = vmatprep.subr.bf16.mxu0 0
    %2446 = vmatpush1.bf16.xpose.msra.mxu0 0
    %2447 = vmatprep.subr.bf16.mxu0 0
    %2448 = vmatpush1.bf16.xpose.msra.mxu0 0
    %2449 = vmatprep.subr.bf16.mxu0 0
    %2450 = vmatpush1.bf16.xpose.msra.mxu0 0
    %2451 = vmatprep.subr.bf16.mxu0 0
    %2452 = vmatpush1.bf16.xpose.msra.mxu0 0
    %2453 = vmatprep.subr.bf16.mxu0 0
    %2454 = vmatpush1.bf16.xpose.msra.mxu0 0
    %2455 = vmatprep.subr.bf16.mxu0 0
    %2456 = vmatpush1.bf16.xpose.msra.mxu0 0
    %2457 = vmatprep.subr.bf16.mxu0 0
    %2458 = vmatpush1.bf16.xpose.msra.mxu0 0
    %2459 = vmatprep.subr.bf16.mxu0 0
    %2460 = vmatpush1.bf16.xpose.msra.mxu0 0
    %2461 = vmatprep.subr.bf16.mxu0 0
    %2462 = vmatpush1.bf16.xpose.msra.mxu0 0
    %2463 = vmatprep.mubr.bf16.mxu0 %v310
    %2464 = vmatmul.mubr.bf16.gmra.mrb[0].mxu0 %v296
    %v2465 = vpop.f32.mrb[0].mxu0
    %v2466 = vadd.f32 %v2426, %v2465
    %v2467 = vpop.f32.mrb[0].mxu0
    %v2468 = vpop.f32.mrb[0].mxu0
    %v2469 = vpop.f32.mrb[0].mxu0
    %2470 = vdwg.mxu0
    %2471 = vmatprep.subr.bf16.mxu0 %v1882
    %2472 = vmatpush1.bf16.xpose.msra.mxu0 %v1881
    %2473 = vmatprep.subr.bf16.mxu0 0
    %2474 = vmatpush1.bf16.xpose.msra.mxu0 0
    %2475 = vmatprep.subr.bf16.mxu0 0
    %2476 = vmatpush1.bf16.xpose.msra.mxu0 0
    %2477 = vmatprep.subr.bf16.mxu0 0
    %2478 = vmatpush1.bf16.xpose.msra.mxu0 0
    %2479 = vmatprep.subr.bf16.mxu0 0
    %2480 = vmatpush1.bf16.xpose.msra.mxu0 0
    %2481 = vmatprep.subr.bf16.mxu0 0
    %2482 = vmatpush1.bf16.xpose.msra.mxu0 0
    %2483 = vmatprep.subr.bf16.mxu0 0
    %2484 = vmatpush1.bf16.xpose.msra.mxu0 0
    %2485 = vmatprep.subr.bf16.mxu0 0
    %2486 = vmatpush1.bf16.xpose.msra.mxu0 0
    %2487 = vmatprep.subr.bf16.mxu0 0
    %2488 = vmatpush1.bf16.xpose.msra.mxu0 0
    %2489 = vmatprep.subr.bf16.mxu0 0
    %2490 = vmatpush1.bf16.xpose.msra.mxu0 0
    %2491 = vmatprep.subr.bf16.mxu0 0
    %2492 = vmatpush1.bf16.xpose.msra.mxu0 0
    %2493 = vmatprep.subr.bf16.mxu0 0
    %2494 = vmatpush1.bf16.xpose.msra.mxu0 0
    %2495 = vmatprep.subr.bf16.mxu0 0
    %2496 = vmatpush1.bf16.xpose.msra.mxu0 0
    %2497 = vmatprep.subr.bf16.mxu0 0
    %2498 = vmatpush1.bf16.xpose.msra.mxu0 0
    %2499 = vmatprep.subr.bf16.mxu0 0
    %2500 = vmatpush1.bf16.xpose.msra.mxu0 0
    %2501 = vmatprep.subr.bf16.mxu0 0
    %2502 = vmatpush1.bf16.xpose.msra.mxu0 0
    %2503 = vmatprep.mubr.bf16.mxu0 %v314
    %2504 = vmatmul.mubr.bf16.gmra.mrb[0].mxu0 %v312
    %v2505 = vpop.f32.mrb[0].mxu0
    %v2506 = vadd.f32 %v2466, %v2505
    %v2507 = vpop.f32.mrb[0].mxu0
    %v2508 = vpop.f32.mrb[0].mxu0
    %v2509 = vpop.f32.mrb[0].mxu0
    %2510 = vdwg.mxu0
    %2511 = vmatprep.subr.bf16.mxu0 %v1884
    %2512 = vmatpush1.bf16.xpose.msra.mxu0 %v1883
    %2513 = vmatprep.subr.bf16.mxu0 0
    %2514 = vmatpush1.bf16.xpose.msra.mxu0 0
    %2515 = vmatprep.subr.bf16.mxu0 0
    %2516 = vmatpush1.bf16.xpose.msra.mxu0 0
    %2517 = vmatprep.subr.bf16.mxu0 0
    %2518 = vmatpush1.bf16.xpose.msra.mxu0 0
    %2519 = vmatprep.subr.bf16.mxu0 0
    %2520 = vmatpush1.bf16.xpose.msra.mxu0 0
    %2521 = vmatprep.subr.bf16.mxu0 0
    %2522 = vmatpush1.bf16.xpose.msra.mxu0 0
    %2523 = vmatprep.subr.bf16.mxu0 0
    %2524 = vmatpush1.bf16.xpose.msra.mxu0 0
    %2525 = vmatprep.subr.bf16.mxu0 0
    %2526 = vmatpush1.bf16.xpose.msra.mxu0 0
    %2527 = vmatprep.subr.bf16.mxu0 0
    %2528 = vmatpush1.bf16.xpose.msra.mxu0 0
    %2529 = vmatprep.subr.bf16.mxu0 0
    %2530 = vmatpush1.bf16.xpose.msra.mxu0 0
    %2531 = vmatprep.subr.bf16.mxu0 0
    %2532 = vmatpush1.bf16.xpose.msra.mxu0 0
    %2533 = vmatprep.subr.bf16.mxu0 0
    %2534 = vmatpush1.bf16.xpose.msra.mxu0 0
    %2535 = vmatprep.subr.bf16.mxu0 0
    %2536 = vmatpush1.bf16.xpose.msra.mxu0 0
    %2537 = vmatprep.subr.bf16.mxu0 0
    %2538 = vmatpush1.bf16.xpose.msra.mxu0 0
    %2539 = vmatprep.subr.bf16.mxu0 0
    %2540 = vmatpush1.bf16.xpose.msra.mxu0 0
    %2541 = vmatprep.subr.bf16.mxu0 0
    %2542 = vmatpush1.bf16.xpose.msra.mxu0 0
    %2543 = vmatprep.mubr.bf16.mxu0 %v352
    %2544 = vmatmul.mubr.bf16.gmra.mrb[0].mxu0 %v338
    %v2545 = vpop.f32.mrb[0].mxu0
    %v2546 = vadd.f32 %v2506, %v2545
    %v2547 = vpop.f32.mrb[0].mxu0
    %v2548 = vpop.f32.mrb[0].mxu0
    %v2549 = vpop.f32.mrb[0].mxu0
    %2550 = vdwg.mxu0
    %2551 = vmatprep.subr.bf16.mxu0 %v1886
    %2552 = vmatpush1.bf16.xpose.msra.mxu0 %v1885
    %2553 = vmatprep.subr.bf16.mxu0 0
    %2554 = vmatpush1.bf16.xpose.msra.mxu0 0
    %2555 = vmatprep.subr.bf16.mxu0 0
    %2556 = vmatpush1.bf16.xpose.msra.mxu0 0
    %2557 = vmatprep.subr.bf16.mxu0 0
    %2558 = vmatpush1.bf16.xpose.msra.mxu0 0
    %2559 = vmatprep.subr.bf16.mxu0 0
    %2560 = vmatpush1.bf16.xpose.msra.mxu0 0
    %2561 = vmatprep.subr.bf16.mxu0 0
    %2562 = vmatpush1.bf16.xpose.msra.mxu0 0
    %2563 = vmatprep.subr.bf16.mxu0 0
    %2564 = vmatpush1.bf16.xpose.msra.mxu0 0
    %2565 = vmatprep.subr.bf16.mxu0 0
    %2566 = vmatpush1.bf16.xpose.msra.mxu0 0
    %2567 = vmatprep.subr.bf16.mxu0 0
    %2568 = vmatpush1.bf16.xpose.msra.mxu0 0
    %2569 = vmatprep.subr.bf16.mxu0 0
    %2570 = vmatpush1.bf16.xpose.msra.mxu0 0
    %2571 = vmatprep.subr.bf16.mxu0 0
    %2572 = vmatpush1.bf16.xpose.msra.mxu0 0
    %2573 = vmatprep.subr.bf16.mxu0 0
    %2574 = vmatpush1.bf16.xpose.msra.mxu0 0
    %2575 = vmatprep.subr.bf16.mxu0 0
    %2576 = vmatpush1.bf16.xpose.msra.mxu0 0
    %2577 = vmatprep.subr.bf16.mxu0 0
    %2578 = vmatpush1.bf16.xpose.msra.mxu0 0
    %2579 = vmatprep.subr.bf16.mxu0 0
    %2580 = vmatpush1.bf16.xpose.msra.mxu0 0
    %2581 = vmatprep.subr.bf16.mxu0 0
    %2582 = vmatpush1.bf16.xpose.msra.mxu0 0
    %2583 = vmatprep.mubr.bf16.mxu0 %v362
    %2584 = vmatmul.mubr.bf16.gmra.mrb[0].mxu0 %v360
    %v2585 = vpop.f32.mrb[0].mxu0
    %v2586 = vadd.f32 %v2546, %v2585
    %v2587 = vpop.f32.mrb[0].mxu0
    %v2588 = vpop.f32.mrb[0].mxu0
    %v2589 = vpop.f32.mrb[0].mxu0
    %2590 = vdwg.mxu0
    %2591 = vmatprep.subr.bf16.mxu0 %v1888
    %2592 = vmatpush1.bf16.xpose.msra.mxu0 %v1887
    %2593 = vmatprep.subr.bf16.mxu0 0
    %2594 = vmatpush1.bf16.xpose.msra.mxu0 0
    %2595 = vmatprep.subr.bf16.mxu0 0
    %2596 = vmatpush1.bf16.xpose.msra.mxu0 0
    %2597 = vmatprep.subr.bf16.mxu0 0
    %2598 = vmatpush1.bf16.xpose.msra.mxu0 0
    %2599 = vmatprep.subr.bf16.mxu0 0
    %2600 = vmatpush1.bf16.xpose.msra.mxu0 0
    %2601 = vmatprep.subr.bf16.mxu0 0
    %2602 = vmatpush1.bf16.xpose.msra.mxu0 0
    %2603 = vmatprep.subr.bf16.mxu0 0
    %2604 = vmatpush1.bf16.xpose.msra.mxu0 0
    %2605 = vmatprep.subr.bf16.mxu0 0
    %2606 = vmatpush1.bf16.xpose.msra.mxu0 0
    %2607 = vmatprep.subr.bf16.mxu0 0
    %2608 = vmatpush1.bf16.xpose.msra.mxu0 0
    %2609 = vmatprep.subr.bf16.mxu0 0
    %2610 = vmatpush1.bf16.xpose.msra.mxu0 0
    %2611 = vmatprep.subr.bf16.mxu0 0
    %2612 = vmatpush1.bf16.xpose.msra.mxu0 0
    %2613 = vmatprep.subr.bf16.mxu0 0
    %2614 = vmatpush1.bf16.xpose.msra.mxu0 0
    %2615 = vmatprep.subr.bf16.mxu0 0
    %2616 = vmatpush1.bf16.xpose.msra.mxu0 0
    %2617 = vmatprep.subr.bf16.mxu0 0
    %2618 = vmatpush1.bf16.xpose.msra.mxu0 0
    %2619 = vmatprep.subr.bf16.mxu0 0
    %2620 = vmatpush1.bf16.xpose.msra.mxu0 0
    %2621 = vmatprep.subr.bf16.mxu0 0
    %2622 = vmatpush1.bf16.xpose.msra.mxu0 0
    %2623 = vmatprep.mubr.bf16.mxu0 %v359
    %2624 = vmatmul.mubr.bf16.gmra.mrb[0].mxu0 %v345
    %v2625 = vpop.f32.mrb[0].mxu0
    %v2626 = vadd.f32 %v2586, %v2625
    %v2627 = vpop.f32.mrb[0].mxu0
    %v2628 = vpop.f32.mrb[0].mxu0
    %v2629 = vpop.f32.mrb[0].mxu0
    %2630 = vdwg.mxu0
    %2631 = vmatprep.subr.bf16.mxu0 %v1890
    %2632 = vmatpush1.bf16.xpose.msra.mxu0 %v1889
    %2633 = vmatprep.subr.bf16.mxu0 0
    %2634 = vmatpush1.bf16.xpose.msra.mxu0 0
    %2635 = vmatprep.subr.bf16.mxu0 0
    %2636 = vmatpush1.bf16.xpose.msra.mxu0 0
    %2637 = vmatprep.subr.bf16.mxu0 0
    %2638 = vmatpush1.bf16.xpose.msra.mxu0 0
    %2639 = vmatprep.subr.bf16.mxu0 0
    %2640 = vmatpush1.bf16.xpose.msra.mxu0 0
    %2641 = vmatprep.subr.bf16.mxu0 0
    %2642 = vmatpush1.bf16.xpose.msra.mxu0 0
    %2643 = vmatprep.subr.bf16.mxu0 0
    %2644 = vmatpush1.bf16.xpose.msra.mxu0 0
    %2645 = vmatprep.subr.bf16.mxu0 0
    %2646 = vmatpush1.bf16.xpose.msra.mxu0 0
    %2647 = vmatprep.subr.bf16.mxu0 0
    %2648 = vmatpush1.bf16.xpose.msra.mxu0 0
    %2649 = vmatprep.subr.bf16.mxu0 0
    %2650 = vmatpush1.bf16.xpose.msra.mxu0 0
    %2651 = vmatprep.subr.bf16.mxu0 0
    %2652 = vmatpush1.bf16.xpose.msra.mxu0 0
    %2653 = vmatprep.subr.bf16.mxu0 0
    %2654 = vmatpush1.bf16.xpose.msra.mxu0 0
    %2655 = vmatprep.subr.bf16.mxu0 0
    %2656 = vmatpush1.bf16.xpose.msra.mxu0 0
    %2657 = vmatprep.subr.bf16.mxu0 0
    %2658 = vmatpush1.bf16.xpose.msra.mxu0 0
    %2659 = vmatprep.subr.bf16.mxu0 0
    %2660 = vmatpush1.bf16.xpose.msra.mxu0 0
    %2661 = vmatprep.subr.bf16.mxu0 0
    %2662 = vmatpush1.bf16.xpose.msra.mxu0 0
    %2663 = vmatprep.mubr.bf16.mxu0 %v363
    %2664 = vmatmul.mubr.bf16.gmra.mrb[0].mxu0 %v361
    %v2665 = vpop.f32.mrb[0].mxu0
    %v2666 = vadd.f32 %v2626, %v2665
    %v2667 = vpop.f32.mrb[0].mxu0
    %v2668 = vpop.f32.mrb[0].mxu0
    %v2669 = vpop.f32.mrb[0].mxu0
    %2670 = vdwg.mxu0
    %2671 = vmatprep.subr.bf16.mxu0 %v1892
    %2672 = vmatpush1.bf16.xpose.msra.mxu0 %v1891
    %2673 = vmatprep.subr.bf16.mxu0 0
    %2674 = vmatpush1.bf16.xpose.msra.mxu0 0
    %2675 = vmatprep.subr.bf16.mxu0 0
    %2676 = vmatpush1.bf16.xpose.msra.mxu0 0
    %2677 = vmatprep.subr.bf16.mxu0 0
    %2678 = vmatpush1.bf16.xpose.msra.mxu0 0
    %2679 = vmatprep.subr.bf16.mxu0 0
    %2680 = vmatpush1.bf16.xpose.msra.mxu0 0
    %2681 = vmatprep.subr.bf16.mxu0 0
    %2682 = vmatpush1.bf16.xpose.msra.mxu0 0
    %2683 = vmatprep.subr.bf16.mxu0 0
    %2684 = vmatpush1.bf16.xpose.msra.mxu0 0
    %2685 = vmatprep.subr.bf16.mxu0 0
    %2686 = vmatpush1.bf16.xpose.msra.mxu0 0
    %2687 = vmatprep.subr.bf16.mxu0 0
    %2688 = vmatpush1.bf16.xpose.msra.mxu0 0
    %2689 = vmatprep.subr.bf16.mxu0 0
    %2690 = vmatpush1.bf16.xpose.msra.mxu0 0
    %2691 = vmatprep.subr.bf16.mxu0 0
    %2692 = vmatpush1.bf16.xpose.msra.mxu0 0
    %2693 = vmatprep.subr.bf16.mxu0 0
    %2694 = vmatpush1.bf16.xpose.msra.mxu0 0
    %2695 = vmatprep.subr.bf16.mxu0 0
    %2696 = vmatpush1.bf16.xpose.msra.mxu0 0
    %2697 = vmatprep.subr.bf16.mxu0 0
    %2698 = vmatpush1.bf16.xpose.msra.mxu0 0
    %2699 = vmatprep.subr.bf16.mxu0 0
    %2700 = vmatpush1.bf16.xpose.msra.mxu0 0
    %2701 = vmatprep.subr.bf16.mxu0 0
    %2702 = vmatpush1.bf16.xpose.msra.mxu0 0
    %2703 = vmatprep.mubr.bf16.mxu0 %v401
    %2704 = vmatmul.mubr.bf16.gmra.mrb[0].mxu0 %v387
    %v2705 = vpop.f32.mrb[0].mxu0
    %v2706 = vadd.f32 %v2666, %v2705
    %v2707 = vpop.f32.mrb[0].mxu0
    %v2708 = vpop.f32.mrb[0].mxu0
    %v2709 = vpop.f32.mrb[0].mxu0
    %2710 = vdwg.mxu0
    %2711 = vmatprep.subr.bf16.mxu0 %v1894
    %2712 = vmatpush1.bf16.xpose.msra.mxu0 %v1893
    %2713 = vmatprep.subr.bf16.mxu0 0
    %2714 = vmatpush1.bf16.xpose.msra.mxu0 0
    %2715 = vmatprep.subr.bf16.mxu0 0
    %2716 = vmatpush1.bf16.xpose.msra.mxu0 0
    %2717 = vmatprep.subr.bf16.mxu0 0
    %2718 = vmatpush1.bf16.xpose.msra.mxu0 0
    %2719 = vmatprep.subr.bf16.mxu0 0
    %2720 = vmatpush1.bf16.xpose.msra.mxu0 0
    %2721 = vmatprep.subr.bf16.mxu0 0
    %2722 = vmatpush1.bf16.xpose.msra.mxu0 0
    %2723 = vmatprep.subr.bf16.mxu0 0
    %2724 = vmatpush1.bf16.xpose.msra.mxu0 0
    %2725 = vmatprep.subr.bf16.mxu0 0
    %2726 = vmatpush1.bf16.xpose.msra.mxu0 0
    %2727 = vmatprep.subr.bf16.mxu0 0
    %2728 = vmatpush1.bf16.xpose.msra.mxu0 0
    %2729 = vmatprep.subr.bf16.mxu0 0
    %2730 = vmatpush1.bf16.xpose.msra.mxu0 0
    %2731 = vmatprep.subr.bf16.mxu0 0
    %2732 = vmatpush1.bf16.xpose.msra.mxu0 0
    %2733 = vmatprep.subr.bf16.mxu0 0
    %2734 = vmatpush1.bf16.xpose.msra.mxu0 0
    %2735 = vmatprep.subr.bf16.mxu0 0
    %2736 = vmatpush1.bf16.xpose.msra.mxu0 0
    %2737 = vmatprep.subr.bf16.mxu0 0
    %2738 = vmatpush1.bf16.xpose.msra.mxu0 0
    %2739 = vmatprep.subr.bf16.mxu0 0
    %2740 = vmatpush1.bf16.xpose.msra.mxu0 0
    %2741 = vmatprep.subr.bf16.mxu0 0
    %2742 = vmatpush1.bf16.xpose.msra.mxu0 0
    %2743 = vmatprep.mubr.bf16.mxu0 %v411
    %2744 = vmatmul.mubr.bf16.gmra.mrb[0].mxu0 %v409
    %v2745 = vpop.f32.mrb[0].mxu0
    %v2746 = vadd.f32 %v2706, %v2745
    %v2747 = vpop.f32.mrb[0].mxu0
    %v2748 = vpop.f32.mrb[0].mxu0
    %v2749 = vpop.f32.mrb[0].mxu0
    %2750 = vdwg.mxu0
    %2751 = vmatprep.subr.bf16.mxu0 %v1896
    %2752 = vmatpush1.bf16.xpose.msra.mxu0 %v1895
    %2753 = vmatprep.subr.bf16.mxu0 0
    %2754 = vmatpush1.bf16.xpose.msra.mxu0 0
    %2755 = vmatprep.subr.bf16.mxu0 0
    %2756 = vmatpush1.bf16.xpose.msra.mxu0 0
    %2757 = vmatprep.subr.bf16.mxu0 0
    %2758 = vmatpush1.bf16.xpose.msra.mxu0 0
    %2759 = vmatprep.subr.bf16.mxu0 0
    %2760 = vmatpush1.bf16.xpose.msra.mxu0 0
    %2761 = vmatprep.subr.bf16.mxu0 0
    %2762 = vmatpush1.bf16.xpose.msra.mxu0 0
    %2763 = vmatprep.subr.bf16.mxu0 0
    %2764 = vmatpush1.bf16.xpose.msra.mxu0 0
    %2765 = vmatprep.subr.bf16.mxu0 0
    %2766 = vmatpush1.bf16.xpose.msra.mxu0 0
    %2767 = vmatprep.subr.bf16.mxu0 0
    %2768 = vmatpush1.bf16.xpose.msra.mxu0 0
    %2769 = vmatprep.subr.bf16.mxu0 0
    %2770 = vmatpush1.bf16.xpose.msra.mxu0 0
    %2771 = vmatprep.subr.bf16.mxu0 0
    %2772 = vmatpush1.bf16.xpose.msra.mxu0 0
    %2773 = vmatprep.subr.bf16.mxu0 0
    %2774 = vmatpush1.bf16.xpose.msra.mxu0 0
    %2775 = vmatprep.subr.bf16.mxu0 0
    %2776 = vmatpush1.bf16.xpose.msra.mxu0 0
    %2777 = vmatprep.subr.bf16.mxu0 0
    %2778 = vmatpush1.bf16.xpose.msra.mxu0 0
    %2779 = vmatprep.subr.bf16.mxu0 0
    %2780 = vmatpush1.bf16.xpose.msra.mxu0 0
    %2781 = vmatprep.subr.bf16.mxu0 0
    %2782 = vmatpush1.bf16.xpose.msra.mxu0 0
    %2783 = vmatprep.mubr.bf16.mxu0 %v408
    %2784 = vmatmul.mubr.bf16.gmra.mrb[0].mxu0 %v394
    %v2785 = vpop.f32.mrb[0].mxu0
    %v2786 = vadd.f32 %v2746, %v2785
    %v2787 = vpop.f32.mrb[0].mxu0
    %v2788 = vpop.f32.mrb[0].mxu0
    %v2789 = vpop.f32.mrb[0].mxu0
    %2790 = vdwg.mxu0
    %2791 = vmatprep.subr.bf16.mxu0 %v1898
    %2792 = vmatpush1.bf16.xpose.msra.mxu0 %v1897
    %2793 = vmatprep.subr.bf16.mxu0 0
    %2794 = vmatpush1.bf16.xpose.msra.mxu0 0
    %2795 = vmatprep.subr.bf16.mxu0 0
    %2796 = vmatpush1.bf16.xpose.msra.mxu0 0
    %2797 = vmatprep.subr.bf16.mxu0 0
    %2798 = vmatpush1.bf16.xpose.msra.mxu0 0
    %2799 = vmatprep.subr.bf16.mxu0 0
    %2800 = vmatpush1.bf16.xpose.msra.mxu0 0
    %2801 = vmatprep.subr.bf16.mxu0 0
    %2802 = vmatpush1.bf16.xpose.msra.mxu0 0
    %2803 = vmatprep.subr.bf16.mxu0 0
    %2804 = vmatpush1.bf16.xpose.msra.mxu0 0
    %2805 = vmatprep.subr.bf16.mxu0 0
    %2806 = vmatpush1.bf16.xpose.msra.mxu0 0
    %2807 = vmatprep.subr.bf16.mxu0 0
    %2808 = vmatpush1.bf16.xpose.msra.mxu0 0
    %2809 = vmatprep.subr.bf16.mxu0 0
    %2810 = vmatpush1.bf16.xpose.msra.mxu0 0
    %2811 = vmatprep.subr.bf16.mxu0 0
    %2812 = vmatpush1.bf16.xpose.msra.mxu0 0
    %2813 = vmatprep.subr.bf16.mxu0 0
    %2814 = vmatpush1.bf16.xpose.msra.mxu0 0
    %2815 = vmatprep.subr.bf16.mxu0 0
    %2816 = vmatpush1.bf16.xpose.msra.mxu0 0
    %2817 = vmatprep.subr.bf16.mxu0 0
    %2818 = vmatpush1.bf16.xpose.msra.mxu0 0
    %2819 = vmatprep.subr.bf16.mxu0 0
    %2820 = vmatpush1.bf16.xpose.msra.mxu0 0
    %2821 = vmatprep.subr.bf16.mxu0 0
    %2822 = vmatpush1.bf16.xpose.msra.mxu0 0
    %2823 = vmatprep.mubr.bf16.mxu0 %v412
    %2824 = vmatmul.mubr.bf16.gmra.mrb[0].mxu0 %v410
    %v2825 = vpop.f32.mrb[0].mxu0
    %v2826 = vadd.f32 %v2786, %v2825
    %v2827 = vpop.f32.mrb[0].mxu0
    %v2828 = vpop.f32.mrb[0].mxu0
    %v2829 = vpop.f32.mrb[0].mxu0
    %2830 = vdwg.mxu0
    %2831 = vmatprep.subr.bf16.mxu0 %v1900
    %2832 = vmatpush1.bf16.xpose.msra.mxu0 %v1899
    %2833 = vmatprep.subr.bf16.mxu0 0
    %2834 = vmatpush1.bf16.xpose.msra.mxu0 0
    %2835 = vmatprep.subr.bf16.mxu0 0
    %2836 = vmatpush1.bf16.xpose.msra.mxu0 0
    %2837 = vmatprep.subr.bf16.mxu0 0
    %2838 = vmatpush1.bf16.xpose.msra.mxu0 0
    %2839 = vmatprep.subr.bf16.mxu0 0
    %2840 = vmatpush1.bf16.xpose.msra.mxu0 0
    %2841 = vmatprep.subr.bf16.mxu0 0
    %2842 = vmatpush1.bf16.xpose.msra.mxu0 0
    %2843 = vmatprep.subr.bf16.mxu0 0
    %2844 = vmatpush1.bf16.xpose.msra.mxu0 0
    %2845 = vmatprep.subr.bf16.mxu0 0
    %2846 = vmatpush1.bf16.xpose.msra.mxu0 0
    %2847 = vmatprep.subr.bf16.mxu0 0
    %2848 = vmatpush1.bf16.xpose.msra.mxu0 0
    %2849 = vmatprep.subr.bf16.mxu0 0
    %2850 = vmatpush1.bf16.xpose.msra.mxu0 0
    %2851 = vmatprep.subr.bf16.mxu0 0
    %2852 = vmatpush1.bf16.xpose.msra.mxu0 0
    %2853 = vmatprep.subr.bf16.mxu0 0
    %2854 = vmatpush1.bf16.xpose.msra.mxu0 0
    %2855 = vmatprep.subr.bf16.mxu0 0
    %2856 = vmatpush1.bf16.xpose.msra.mxu0 0
    %2857 = vmatprep.subr.bf16.mxu0 0
    %2858 = vmatpush1.bf16.xpose.msra.mxu0 0
    %2859 = vmatprep.subr.bf16.mxu0 0
    %2860 = vmatpush1.bf16.xpose.msra.mxu0 0
    %2861 = vmatprep.subr.bf16.mxu0 0
    %2862 = vmatpush1.bf16.xpose.msra.mxu0 0
    %2863 = vmatprep.mubr.bf16.mxu0 %v450
    %2864 = vmatmul.mubr.bf16.gmra.mrb[0].mxu0 %v436
    %v2865 = vpop.f32.mrb[0].mxu0
    %v2866 = vadd.f32 %v2826, %v2865
    %v2867 = vpop.f32.mrb[0].mxu0
    %v2868 = vpop.f32.mrb[0].mxu0
    %v2869 = vpop.f32.mrb[0].mxu0
    %2870 = vdwg.mxu0
    %2871 = vmatprep.subr.bf16.mxu0 %v1902
    %2872 = vmatpush1.bf16.xpose.msra.mxu0 %v1901
    %2873 = vmatprep.subr.bf16.mxu0 0
    %2874 = vmatpush1.bf16.xpose.msra.mxu0 0
    %2875 = vmatprep.subr.bf16.mxu0 0
    %2876 = vmatpush1.bf16.xpose.msra.mxu0 0
    %2877 = vmatprep.subr.bf16.mxu0 0
    %2878 = vmatpush1.bf16.xpose.msra.mxu0 0
    %2879 = vmatprep.subr.bf16.mxu0 0
    %2880 = vmatpush1.bf16.xpose.msra.mxu0 0
    %2881 = vmatprep.subr.bf16.mxu0 0
    %2882 = vmatpush1.bf16.xpose.msra.mxu0 0
    %2883 = vmatprep.subr.bf16.mxu0 0
    %2884 = vmatpush1.bf16.xpose.msra.mxu0 0
    %2885 = vmatprep.subr.bf16.mxu0 0
    %2886 = vmatpush1.bf16.xpose.msra.mxu0 0
    %2887 = vmatprep.subr.bf16.mxu0 0
    %2888 = vmatpush1.bf16.xpose.msra.mxu0 0
    %2889 = vmatprep.subr.bf16.mxu0 0
    %2890 = vmatpush1.bf16.xpose.msra.mxu0 0
    %2891 = vmatprep.subr.bf16.mxu0 0
    %2892 = vmatpush1.bf16.xpose.msra.mxu0 0
    %2893 = vmatprep.subr.bf16.mxu0 0
    %2894 = vmatpush1.bf16.xpose.msra.mxu0 0
    %2895 = vmatprep.subr.bf16.mxu0 0
    %2896 = vmatpush1.bf16.xpose.msra.mxu0 0
    %2897 = vmatprep.subr.bf16.mxu0 0
    %2898 = vmatpush1.bf16.xpose.msra.mxu0 0
    %2899 = vmatprep.subr.bf16.mxu0 0
    %2900 = vmatpush1.bf16.xpose.msra.mxu0 0
    %2901 = vmatprep.subr.bf16.mxu0 0
    %2902 = vmatpush1.bf16.xpose.msra.mxu0 0
    %2903 = vmatprep.mubr.bf16.mxu0 %v460
    %2904 = vmatmul.mubr.bf16.gmra.mrb[0].mxu0 %v458
    %v2905 = vpop.f32.mrb[0].mxu0
    %v2906 = vadd.f32 %v2866, %v2905
    %v2907 = vpop.f32.mrb[0].mxu0
    %v2908 = vpop.f32.mrb[0].mxu0
    %v2909 = vpop.f32.mrb[0].mxu0
    %2910 = vdwg.mxu0
    %2911 = vmatprep.subr.bf16.mxu0 %v1904
    %2912 = vmatpush1.bf16.xpose.msra.mxu0 %v1903
    %2913 = vmatprep.subr.bf16.mxu0 0
    %2914 = vmatpush1.bf16.xpose.msra.mxu0 0
    %2915 = vmatprep.subr.bf16.mxu0 0
    %2916 = vmatpush1.bf16.xpose.msra.mxu0 0
    %2917 = vmatprep.subr.bf16.mxu0 0
    %2918 = vmatpush1.bf16.xpose.msra.mxu0 0
    %2919 = vmatprep.subr.bf16.mxu0 0
    %2920 = vmatpush1.bf16.xpose.msra.mxu0 0
    %2921 = vmatprep.subr.bf16.mxu0 0
    %2922 = vmatpush1.bf16.xpose.msra.mxu0 0
    %2923 = vmatprep.subr.bf16.mxu0 0
    %2924 = vmatpush1.bf16.xpose.msra.mxu0 0
    %2925 = vmatprep.subr.bf16.mxu0 0
    %2926 = vmatpush1.bf16.xpose.msra.mxu0 0
    %2927 = vmatprep.subr.bf16.mxu0 0
    %2928 = vmatpush1.bf16.xpose.msra.mxu0 0
    %2929 = vmatprep.subr.bf16.mxu0 0
    %2930 = vmatpush1.bf16.xpose.msra.mxu0 0
    %2931 = vmatprep.subr.bf16.mxu0 0
    %2932 = vmatpush1.bf16.xpose.msra.mxu0 0
    %2933 = vmatprep.subr.bf16.mxu0 0
    %2934 = vmatpush1.bf16.xpose.msra.mxu0 0
    %2935 = vmatprep.subr.bf16.mxu0 0
    %2936 = vmatpush1.bf16.xpose.msra.mxu0 0
    %2937 = vmatprep.subr.bf16.mxu0 0
    %2938 = vmatpush1.bf16.xpose.msra.mxu0 0
    %2939 = vmatprep.subr.bf16.mxu0 0
    %2940 = vmatpush1.bf16.xpose.msra.mxu0 0
    %2941 = vmatprep.subr.bf16.mxu0 0
    %2942 = vmatpush1.bf16.xpose.msra.mxu0 0
    %2943 = vmatprep.mubr.bf16.mxu0 %v457
    %2944 = vmatmul.mubr.bf16.gmra.mrb[0].mxu0 %v443
    %v2945 = vpop.f32.mrb[0].mxu0
    %v2946 = vadd.f32 %v2906, %v2945
    %v2947 = vpop.f32.mrb[0].mxu0
    %v2948 = vpop.f32.mrb[0].mxu0
    %v2949 = vpop.f32.mrb[0].mxu0
    %2950 = vdwg.mxu0
    %2951 = vmatprep.subr.bf16.mxu0 %v1906
    %2952 = vmatpush1.bf16.xpose.msra.mxu0 %v1905
    %2953 = vmatprep.subr.bf16.mxu0 0
    %2954 = vmatpush1.bf16.xpose.msra.mxu0 0
    %2955 = vmatprep.subr.bf16.mxu0 0
    %2956 = vmatpush1.bf16.xpose.msra.mxu0 0
    %2957 = vmatprep.subr.bf16.mxu0 0
    %2958 = vmatpush1.bf16.xpose.msra.mxu0 0
    %2959 = vmatprep.subr.bf16.mxu0 0
    %2960 = vmatpush1.bf16.xpose.msra.mxu0 0
    %2961 = vmatprep.subr.bf16.mxu0 0
    %2962 = vmatpush1.bf16.xpose.msra.mxu0 0
    %2963 = vmatprep.subr.bf16.mxu0 0
    %2964 = vmatpush1.bf16.xpose.msra.mxu0 0
    %2965 = vmatprep.subr.bf16.mxu0 0
    %2966 = vmatpush1.bf16.xpose.msra.mxu0 0
    %2967 = vmatprep.subr.bf16.mxu0 0
    %2968 = vmatpush1.bf16.xpose.msra.mxu0 0
    %2969 = vmatprep.subr.bf16.mxu0 0
    %2970 = vmatpush1.bf16.xpose.msra.mxu0 0
    %2971 = vmatprep.subr.bf16.mxu0 0
    %2972 = vmatpush1.bf16.xpose.msra.mxu0 0
    %2973 = vmatprep.subr.bf16.mxu0 0
    %2974 = vmatpush1.bf16.xpose.msra.mxu0 0
    %2975 = vmatprep.subr.bf16.mxu0 0
    %2976 = vmatpush1.bf16.xpose.msra.mxu0 0
    %2977 = vmatprep.subr.bf16.mxu0 0
    %2978 = vmatpush1.bf16.xpose.msra.mxu0 0
    %2979 = vmatprep.subr.bf16.mxu0 0
    %2980 = vmatpush1.bf16.xpose.msra.mxu0 0
    %2981 = vmatprep.subr.bf16.mxu0 0
    %2982 = vmatpush1.bf16.xpose.msra.mxu0 0
    %2983 = vmatprep.mubr.bf16.mxu0 %v461
    %2984 = vmatmul.mubr.bf16.gmra.mrb[0].mxu0 %v459
    %v2985 = vpop.f32.mrb[0].mxu0
    %v2986 = vadd.f32 %v2946, %v2985
    %v2987 = vpop.f32.mrb[0].mxu0
    %v2988 = vpop.f32.mrb[0].mxu0
    %v2989 = vpop.f32.mrb[0].mxu0
    %2990 = vdwg.mxu0
    %2991 = vmatprep.subr.bf16.mxu0 %v1908
    %2992 = vmatpush1.bf16.xpose.msra.mxu0 %v1907
    %2993 = vmatprep.subr.bf16.mxu0 0
    %2994 = vmatpush1.bf16.xpose.msra.mxu0 0
    %2995 = vmatprep.subr.bf16.mxu0 0
    %2996 = vmatpush1.bf16.xpose.msra.mxu0 0
    %2997 = vmatprep.subr.bf16.mxu0 0
    %2998 = vmatpush1.bf16.xpose.msra.mxu0 0
    %2999 = vmatprep.subr.bf16.mxu0 0
    %3000 = vmatpush1.bf16.xpose.msra.mxu0 0
    %3001 = vmatprep.subr.bf16.mxu0 0
    %3002 = vmatpush1.bf16.xpose.msra.mxu0 0
    %3003 = vmatprep.subr.bf16.mxu0 0
    %3004 = vmatpush1.bf16.xpose.msra.mxu0 0
    %3005 = vmatprep.subr.bf16.mxu0 0
    %3006 = vmatpush1.bf16.xpose.msra.mxu0 0
    %3007 = vmatprep.subr.bf16.mxu0 0
    %3008 = vmatpush1.bf16.xpose.msra.mxu0 0
    %3009 = vmatprep.subr.bf16.mxu0 0
    %3010 = vmatpush1.bf16.xpose.msra.mxu0 0
    %3011 = vmatprep.subr.bf16.mxu0 0
    %3012 = vmatpush1.bf16.xpose.msra.mxu0 0
    %3013 = vmatprep.subr.bf16.mxu0 0
    %3014 = vmatpush1.bf16.xpose.msra.mxu0 0
    %3015 = vmatprep.subr.bf16.mxu0 0
    %3016 = vmatpush1.bf16.xpose.msra.mxu0 0
    %3017 = vmatprep.subr.bf16.mxu0 0
    %3018 = vmatpush1.bf16.xpose.msra.mxu0 0
    %3019 = vmatprep.subr.bf16.mxu0 0
    %3020 = vmatpush1.bf16.xpose.msra.mxu0 0
    %3021 = vmatprep.subr.bf16.mxu0 0
    %3022 = vmatpush1.bf16.xpose.msra.mxu0 0
    %3023 = vmatprep.mubr.bf16.mxu0 %v499
    %3024 = vmatmul.mubr.bf16.gmra.mrb[0].mxu0 %v485
    %v3025 = vpop.f32.mrb[0].mxu0
    %v3026 = vadd.f32 %v2986, %v3025
    %v3027 = vpop.f32.mrb[0].mxu0
    %v3028 = vpop.f32.mrb[0].mxu0
    %v3029 = vpop.f32.mrb[0].mxu0
    %3030 = vdwg.mxu0
    %3031 = vmatprep.subr.bf16.mxu0 %v1910
    %3032 = vmatpush1.bf16.xpose.msra.mxu0 %v1909
    %3033 = vmatprep.subr.bf16.mxu0 0
    %3034 = vmatpush1.bf16.xpose.msra.mxu0 0
    %3035 = vmatprep.subr.bf16.mxu0 0
    %3036 = vmatpush1.bf16.xpose.msra.mxu0 0
    %3037 = vmatprep.subr.bf16.mxu0 0
    %3038 = vmatpush1.bf16.xpose.msra.mxu0 0
    %3039 = vmatprep.subr.bf16.mxu0 0
    %3040 = vmatpush1.bf16.xpose.msra.mxu0 0
    %3041 = vmatprep.subr.bf16.mxu0 0
    %3042 = vmatpush1.bf16.xpose.msra.mxu0 0
    %3043 = vmatprep.subr.bf16.mxu0 0
    %3044 = vmatpush1.bf16.xpose.msra.mxu0 0
    %3045 = vmatprep.subr.bf16.mxu0 0
    %3046 = vmatpush1.bf16.xpose.msra.mxu0 0
    %3047 = vmatprep.subr.bf16.mxu0 0
    %3048 = vmatpush1.bf16.xpose.msra.mxu0 0
    %3049 = vmatprep.subr.bf16.mxu0 0
    %3050 = vmatpush1.bf16.xpose.msra.mxu0 0
    %3051 = vmatprep.subr.bf16.mxu0 0
    %3052 = vmatpush1.bf16.xpose.msra.mxu0 0
    %3053 = vmatprep.subr.bf16.mxu0 0
    %3054 = vmatpush1.bf16.xpose.msra.mxu0 0
    %3055 = vmatprep.subr.bf16.mxu0 0
    %3056 = vmatpush1.bf16.xpose.msra.mxu0 0
    %3057 = vmatprep.subr.bf16.mxu0 0
    %3058 = vmatpush1.bf16.xpose.msra.mxu0 0
    %3059 = vmatprep.subr.bf16.mxu0 0
    %3060 = vmatpush1.bf16.xpose.msra.mxu0 0
    %3061 = vmatprep.subr.bf16.mxu0 0
    %3062 = vmatpush1.bf16.xpose.msra.mxu0 0
    %3063 = vmatprep.mubr.bf16.mxu0 %v509
    %3064 = vmatmul.mubr.bf16.gmra.mrb[0].mxu0 %v507
    %v3065 = vpop.f32.mrb[0].mxu0
    %v3066 = vadd.f32 %v3026, %v3065
    %v3067 = vpop.f32.mrb[0].mxu0
    %v3068 = vpop.f32.mrb[0].mxu0
    %v3069 = vpop.f32.mrb[0].mxu0
    %3070 = vdwg.mxu0
    %3071 = vmatprep.subr.bf16.mxu0 %v1912
    %3072 = vmatpush1.bf16.xpose.msra.mxu0 %v1911
    %3073 = vmatprep.subr.bf16.mxu0 0
    %3074 = vmatpush1.bf16.xpose.msra.mxu0 0
    %3075 = vmatprep.subr.bf16.mxu0 0
    %3076 = vmatpush1.bf16.xpose.msra.mxu0 0
    %3077 = vmatprep.subr.bf16.mxu0 0
    %3078 = vmatpush1.bf16.xpose.msra.mxu0 0
    %3079 = vmatprep.subr.bf16.mxu0 0
    %3080 = vmatpush1.bf16.xpose.msra.mxu0 0
    %3081 = vmatprep.subr.bf16.mxu0 0
    %3082 = vmatpush1.bf16.xpose.msra.mxu0 0
    %3083 = vmatprep.subr.bf16.mxu0 0
    %3084 = vmatpush1.bf16.xpose.msra.mxu0 0
    %3085 = vmatprep.subr.bf16.mxu0 0
    %3086 = vmatpush1.bf16.xpose.msra.mxu0 0
    %3087 = vmatprep.subr.bf16.mxu0 0
    %3088 = vmatpush1.bf16.xpose.msra.mxu0 0
    %3089 = vmatprep.subr.bf16.mxu0 0
    %3090 = vmatpush1.bf16.xpose.msra.mxu0 0
    %3091 = vmatprep.subr.bf16.mxu0 0
    %3092 = vmatpush1.bf16.xpose.msra.mxu0 0
    %3093 = vmatprep.subr.bf16.mxu0 0
    %3094 = vmatpush1.bf16.xpose.msra.mxu0 0
    %3095 = vmatprep.subr.bf16.mxu0 0
    %3096 = vmatpush1.bf16.xpose.msra.mxu0 0
    %3097 = vmatprep.subr.bf16.mxu0 0
    %3098 = vmatpush1.bf16.xpose.msra.mxu0 0
    %3099 = vmatprep.subr.bf16.mxu0 0
    %3100 = vmatpush1.bf16.xpose.msra.mxu0 0
    %3101 = vmatprep.subr.bf16.mxu0 0
    %3102 = vmatpush1.bf16.xpose.msra.mxu0 0
    %3103 = vmatprep.mubr.bf16.mxu0 %v506
    %3104 = vmatmul.mubr.bf16.gmra.mrb[0].mxu0 %v492
    %v3105 = vpop.f32.mrb[0].mxu0
    %v3106 = vadd.f32 %v3066, %v3105
    %v3107 = vpop.f32.mrb[0].mxu0
    %v3108 = vpop.f32.mrb[0].mxu0
    %v3109 = vpop.f32.mrb[0].mxu0
    %3110 = vdwg.mxu0
    %3111 = vmatprep.subr.bf16.mxu0 %v1914
    %3112 = vmatpush1.bf16.xpose.msra.mxu0 %v1913
    %3113 = vmatprep.subr.bf16.mxu0 0
    %3114 = vmatpush1.bf16.xpose.msra.mxu0 0
    %3115 = vmatprep.subr.bf16.mxu0 0
    %3116 = vmatpush1.bf16.xpose.msra.mxu0 0
    %3117 = vmatprep.subr.bf16.mxu0 0
    %3118 = vmatpush1.bf16.xpose.msra.mxu0 0
    %3119 = vmatprep.subr.bf16.mxu0 0
    %3120 = vmatpush1.bf16.xpose.msra.mxu0 0
    %3121 = vmatprep.subr.bf16.mxu0 0
    %3122 = vmatpush1.bf16.xpose.msra.mxu0 0
    %3123 = vmatprep.subr.bf16.mxu0 0
    %3124 = vmatpush1.bf16.xpose.msra.mxu0 0
    %3125 = vmatprep.subr.bf16.mxu0 0
    %3126 = vmatpush1.bf16.xpose.msra.mxu0 0
    %3127 = vmatprep.subr.bf16.mxu0 0
    %3128 = vmatpush1.bf16.xpose.msra.mxu0 0
    %3129 = vmatprep.subr.bf16.mxu0 0
    %3130 = vmatpush1.bf16.xpose.msra.mxu0 0
    %3131 = vmatprep.subr.bf16.mxu0 0
    %3132 = vmatpush1.bf16.xpose.msra.mxu0 0
    %3133 = vmatprep.subr.bf16.mxu0 0
    %3134 = vmatpush1.bf16.xpose.msra.mxu0 0
    %3135 = vmatprep.subr.bf16.mxu0 0
    %3136 = vmatpush1.bf16.xpose.msra.mxu0 0
    %3137 = vmatprep.subr.bf16.mxu0 0
    %3138 = vmatpush1.bf16.xpose.msra.mxu0 0
    %3139 = vmatprep.subr.bf16.mxu0 0
    %3140 = vmatpush1.bf16.xpose.msra.mxu0 0
    %3141 = vmatprep.subr.bf16.mxu0 0
    %3142 = vmatpush1.bf16.xpose.msra.mxu0 0
    %3143 = vmatprep.mubr.bf16.mxu0 %v510
    %3144 = vmatmul.mubr.bf16.gmra.mrb[0].mxu0 %v508
    %v3145 = vpop.f32.mrb[0].mxu0
    %v3146 = vadd.f32 %v3106, %v3145
    %v3147 = vpop.f32.mrb[0].mxu0
    %v3148 = vpop.f32.mrb[0].mxu0
    %v3149 = vpop.f32.mrb[0].mxu0
    %3150 = vdwg.mxu0
    %3151 = vmatprep.subr.bf16.mxu0 %v1916
    %3152 = vmatpush1.bf16.xpose.msra.mxu0 %v1915
    %3153 = vmatprep.subr.bf16.mxu0 0
    %3154 = vmatpush1.bf16.xpose.msra.mxu0 0
    %3155 = vmatprep.subr.bf16.mxu0 0
    %3156 = vmatpush1.bf16.xpose.msra.mxu0 0
    %3157 = vmatprep.subr.bf16.mxu0 0
    %3158 = vmatpush1.bf16.xpose.msra.mxu0 0
    %3159 = vmatprep.subr.bf16.mxu0 0
    %3160 = vmatpush1.bf16.xpose.msra.mxu0 0
    %3161 = vmatprep.subr.bf16.mxu0 0
    %3162 = vmatpush1.bf16.xpose.msra.mxu0 0
    %3163 = vmatprep.subr.bf16.mxu0 0
    %3164 = vmatpush1.bf16.xpose.msra.mxu0 0
    %3165 = vmatprep.subr.bf16.mxu0 0
    %3166 = vmatpush1.bf16.xpose.msra.mxu0 0
    %3167 = vmatprep.subr.bf16.mxu0 0
    %3168 = vmatpush1.bf16.xpose.msra.mxu0 0
    %3169 = vmatprep.subr.bf16.mxu0 0
    %3170 = vmatpush1.bf16.xpose.msra.mxu0 0
    %3171 = vmatprep.subr.bf16.mxu0 0
    %3172 = vmatpush1.bf16.xpose.msra.mxu0 0
    %3173 = vmatprep.subr.bf16.mxu0 0
    %3174 = vmatpush1.bf16.xpose.msra.mxu0 0
    %3175 = vmatprep.subr.bf16.mxu0 0
    %3176 = vmatpush1.bf16.xpose.msra.mxu0 0
    %3177 = vmatprep.subr.bf16.mxu0 0
    %3178 = vmatpush1.bf16.xpose.msra.mxu0 0
    %3179 = vmatprep.subr.bf16.mxu0 0
    %3180 = vmatpush1.bf16.xpose.msra.mxu0 0
    %3181 = vmatprep.subr.bf16.mxu0 0
    %3182 = vmatpush1.bf16.xpose.msra.mxu0 0
    %3183 = vmatprep.mubr.bf16.mxu0 %v548
    %3184 = vmatmul.mubr.bf16.gmra.mrb[0].mxu0 %v534
    %v3185 = vpop.f32.mrb[0].mxu0
    %v3186 = vadd.f32 %v3146, %v3185
    %v3187 = vpop.f32.mrb[0].mxu0
    %v3188 = vpop.f32.mrb[0].mxu0
    %v3189 = vpop.f32.mrb[0].mxu0
    %3190 = vdwg.mxu0
    %3191 = vmatprep.subr.bf16.mxu0 %v1918
    %3192 = vmatpush1.bf16.xpose.msra.mxu0 %v1917
    %3193 = vmatprep.subr.bf16.mxu0 0
    %3194 = vmatpush1.bf16.xpose.msra.mxu0 0
    %3195 = vmatprep.subr.bf16.mxu0 0
    %3196 = vmatpush1.bf16.xpose.msra.mxu0 0
    %3197 = vmatprep.subr.bf16.mxu0 0
    %3198 = vmatpush1.bf16.xpose.msra.mxu0 0
    %3199 = vmatprep.subr.bf16.mxu0 0
    %3200 = vmatpush1.bf16.xpose.msra.mxu0 0
    %3201 = vmatprep.subr.bf16.mxu0 0
    %3202 = vmatpush1.bf16.xpose.msra.mxu0 0
    %3203 = vmatprep.subr.bf16.mxu0 0
    %3204 = vmatpush1.bf16.xpose.msra.mxu0 0
    %3205 = vmatprep.subr.bf16.mxu0 0
    %3206 = vmatpush1.bf16.xpose.msra.mxu0 0
    %3207 = vmatprep.subr.bf16.mxu0 0
    %3208 = vmatpush1.bf16.xpose.msra.mxu0 0
    %3209 = vmatprep.subr.bf16.mxu0 0
    %3210 = vmatpush1.bf16.xpose.msra.mxu0 0
    %3211 = vmatprep.subr.bf16.mxu0 0
    %3212 = vmatpush1.bf16.xpose.msra.mxu0 0
    %3213 = vmatprep.subr.bf16.mxu0 0
    %3214 = vmatpush1.bf16.xpose.msra.mxu0 0
    %3215 = vmatprep.subr.bf16.mxu0 0
    %3216 = vmatpush1.bf16.xpose.msra.mxu0 0
    %3217 = vmatprep.subr.bf16.mxu0 0
    %3218 = vmatpush1.bf16.xpose.msra.mxu0 0
    %3219 = vmatprep.subr.bf16.mxu0 0
    %3220 = vmatpush1.bf16.xpose.msra.mxu0 0
    %3221 = vmatprep.subr.bf16.mxu0 0
    %3222 = vmatpush1.bf16.xpose.msra.mxu0 0
    %3223 = vmatprep.mubr.bf16.mxu0 %v558
    %3224 = vmatmul.mubr.bf16.gmra.mrb[0].mxu0 %v556
    %v3225 = vpop.f32.mrb[0].mxu0
    %v3226 = vadd.f32 %v3186, %v3225
    %v3227 = vpop.f32.mrb[0].mxu0
    %v3228 = vpop.f32.mrb[0].mxu0
    %v3229 = vpop.f32.mrb[0].mxu0
    %3230 = vdwg.mxu0
    %3231 = vmatprep.subr.bf16.mxu0 %v1920
    %3232 = vmatpush1.bf16.xpose.msra.mxu0 %v1919
    %3233 = vmatprep.subr.bf16.mxu0 0
    %3234 = vmatpush1.bf16.xpose.msra.mxu0 0
    %3235 = vmatprep.subr.bf16.mxu0 0
    %3236 = vmatpush1.bf16.xpose.msra.mxu0 0
    %3237 = vmatprep.subr.bf16.mxu0 0
    %3238 = vmatpush1.bf16.xpose.msra.mxu0 0
    %3239 = vmatprep.subr.bf16.mxu0 0
    %3240 = vmatpush1.bf16.xpose.msra.mxu0 0
    %3241 = vmatprep.subr.bf16.mxu0 0
    %3242 = vmatpush1.bf16.xpose.msra.mxu0 0
    %3243 = vmatprep.subr.bf16.mxu0 0
    %3244 = vmatpush1.bf16.xpose.msra.mxu0 0
    %3245 = vmatprep.subr.bf16.mxu0 0
    %3246 = vmatpush1.bf16.xpose.msra.mxu0 0
    %3247 = vmatprep.subr.bf16.mxu0 0
    %3248 = vmatpush1.bf16.xpose.msra.mxu0 0
    %3249 = vmatprep.subr.bf16.mxu0 0
    %3250 = vmatpush1.bf16.xpose.msra.mxu0 0
    %3251 = vmatprep.subr.bf16.mxu0 0
    %3252 = vmatpush1.bf16.xpose.msra.mxu0 0
    %3253 = vmatprep.subr.bf16.mxu0 0
    %3254 = vmatpush1.bf16.xpose.msra.mxu0 0
    %3255 = vmatprep.subr.bf16.mxu0 0
    %3256 = vmatpush1.bf16.xpose.msra.mxu0 0
    %3257 = vmatprep.subr.bf16.mxu0 0
    %3258 = vmatpush1.bf16.xpose.msra.mxu0 0
    %3259 = vmatprep.subr.bf16.mxu0 0
    %3260 = vmatpush1.bf16.xpose.msra.mxu0 0
    %3261 = vmatprep.subr.bf16.mxu0 0
    %3262 = vmatpush1.bf16.xpose.msra.mxu0 0
    %3263 = vmatprep.mubr.bf16.mxu0 %v555
    %3264 = vmatmul.mubr.bf16.gmra.mrb[0].mxu0 %v541
    %v3265 = vpop.f32.mrb[0].mxu0
    %v3266 = vadd.f32 %v3226, %v3265
    %v3267 = vpop.f32.mrb[0].mxu0
    %v3268 = vpop.f32.mrb[0].mxu0
    %v3269 = vpop.f32.mrb[0].mxu0
    %3270 = vdwg.mxu0
    %3271 = vmatprep.subr.bf16.mxu0 %v1922
    %3272 = vmatpush1.bf16.xpose.msra.mxu0 %v1921
    %3273 = vmatprep.subr.bf16.mxu0 0
    %3274 = vmatpush1.bf16.xpose.msra.mxu0 0
    %3275 = vmatprep.subr.bf16.mxu0 0
    %3276 = vmatpush1.bf16.xpose.msra.mxu0 0
    %3277 = vmatprep.subr.bf16.mxu0 0
    %3278 = vmatpush1.bf16.xpose.msra.mxu0 0
    %3279 = vmatprep.subr.bf16.mxu0 0
    %3280 = vmatpush1.bf16.xpose.msra.mxu0 0
    %3281 = vmatprep.subr.bf16.mxu0 0
    %3282 = vmatpush1.bf16.xpose.msra.mxu0 0
    %3283 = vmatprep.subr.bf16.mxu0 0
    %3284 = vmatpush1.bf16.xpose.msra.mxu0 0
    %3285 = vmatprep.subr.bf16.mxu0 0
    %3286 = vmatpush1.bf16.xpose.msra.mxu0 0
    %3287 = vmatprep.subr.bf16.mxu0 0
    %3288 = vmatpush1.bf16.xpose.msra.mxu0 0
    %3289 = vmatprep.subr.bf16.mxu0 0
    %3290 = vmatpush1.bf16.xpose.msra.mxu0 0
    %3291 = vmatprep.subr.bf16.mxu0 0
    %3292 = vmatpush1.bf16.xpose.msra.mxu0 0
    %3293 = vmatprep.subr.bf16.mxu0 0
    %3294 = vmatpush1.bf16.xpose.msra.mxu0 0
    %3295 = vmatprep.subr.bf16.mxu0 0
    %3296 = vmatpush1.bf16.xpose.msra.mxu0 0
    %3297 = vmatprep.subr.bf16.mxu0 0
    %3298 = vmatpush1.bf16.xpose.msra.mxu0 0
    %3299 = vmatprep.subr.bf16.mxu0 0
    %3300 = vmatpush1.bf16.xpose.msra.mxu0 0
    %3301 = vmatprep.subr.bf16.mxu0 0
    %3302 = vmatpush1.bf16.xpose.msra.mxu0 0
    %3303 = vmatprep.mubr.bf16.mxu0 %v559
    %3304 = vmatmul.mubr.bf16.gmra.mrb[0].mxu0 %v557
    %v3305 = vpop.f32.mrb[0].mxu0
    %v3306 = vadd.f32 %v3266, %v3305
    %v3307 = vpop.f32.mrb[0].mxu0
    %v3308 = vpop.f32.mrb[0].mxu0
    %v3309 = vpop.f32.mrb[0].mxu0
    %3310 = vdwg.mxu0
    %3311 = vmatprep.subr.bf16.mxu0 %v1924
    %3312 = vmatpush1.bf16.xpose.msra.mxu0 %v1923
    %3313 = vmatprep.subr.bf16.mxu0 0
    %3314 = vmatpush1.bf16.xpose.msra.mxu0 0
    %3315 = vmatprep.subr.bf16.mxu0 0
    %3316 = vmatpush1.bf16.xpose.msra.mxu0 0
    %3317 = vmatprep.subr.bf16.mxu0 0
    %3318 = vmatpush1.bf16.xpose.msra.mxu0 0
    %3319 = vmatprep.subr.bf16.mxu0 0
    %3320 = vmatpush1.bf16.xpose.msra.mxu0 0
    %3321 = vmatprep.subr.bf16.mxu0 0
    %3322 = vmatpush1.bf16.xpose.msra.mxu0 0
    %3323 = vmatprep.subr.bf16.mxu0 0
    %3324 = vmatpush1.bf16.xpose.msra.mxu0 0
    %3325 = vmatprep.subr.bf16.mxu0 0
    %3326 = vmatpush1.bf16.xpose.msra.mxu0 0
    %3327 = vmatprep.subr.bf16.mxu0 0
    %3328 = vmatpush1.bf16.xpose.msra.mxu0 0
    %3329 = vmatprep.subr.bf16.mxu0 0
    %3330 = vmatpush1.bf16.xpose.msra.mxu0 0
    %3331 = vmatprep.subr.bf16.mxu0 0
    %3332 = vmatpush1.bf16.xpose.msra.mxu0 0
    %3333 = vmatprep.subr.bf16.mxu0 0
    %3334 = vmatpush1.bf16.xpose.msra.mxu0 0
    %3335 = vmatprep.subr.bf16.mxu0 0
    %3336 = vmatpush1.bf16.xpose.msra.mxu0 0
    %3337 = vmatprep.subr.bf16.mxu0 0
    %3338 = vmatpush1.bf16.xpose.msra.mxu0 0
    %3339 = vmatprep.subr.bf16.mxu0 0
    %3340 = vmatpush1.bf16.xpose.msra.mxu0 0
    %3341 = vmatprep.subr.bf16.mxu0 0
    %3342 = vmatpush1.bf16.xpose.msra.mxu0 0
    %3343 = vmatprep.mubr.bf16.mxu0 %v597
    %3344 = vmatmul.mubr.bf16.gmra.mrb[0].mxu0 %v583
    %v3345 = vpop.f32.mrb[0].mxu0
    %v3346 = vadd.f32 %v3306, %v3345
    %v3347 = vpop.f32.mrb[0].mxu0
    %v3348 = vpop.f32.mrb[0].mxu0
    %v3349 = vpop.f32.mrb[0].mxu0
    %3350 = vdwg.mxu0
    %3351 = vmatprep.subr.bf16.mxu0 %v1926
    %3352 = vmatpush1.bf16.xpose.msra.mxu0 %v1925
    %3353 = vmatprep.subr.bf16.mxu0 0
    %3354 = vmatpush1.bf16.xpose.msra.mxu0 0
    %3355 = vmatprep.subr.bf16.mxu0 0
    %3356 = vmatpush1.bf16.xpose.msra.mxu0 0
    %3357 = vmatprep.subr.bf16.mxu0 0
    %3358 = vmatpush1.bf16.xpose.msra.mxu0 0
    %3359 = vmatprep.subr.bf16.mxu0 0
    %3360 = vmatpush1.bf16.xpose.msra.mxu0 0
    %3361 = vmatprep.subr.bf16.mxu0 0
    %3362 = vmatpush1.bf16.xpose.msra.mxu0 0
    %3363 = vmatprep.subr.bf16.mxu0 0
    %3364 = vmatpush1.bf16.xpose.msra.mxu0 0
    %3365 = vmatprep.subr.bf16.mxu0 0
    %3366 = vmatpush1.bf16.xpose.msra.mxu0 0
    %3367 = vmatprep.subr.bf16.mxu0 0
    %3368 = vmatpush1.bf16.xpose.msra.mxu0 0
    %3369 = vmatprep.subr.bf16.mxu0 0
    %3370 = vmatpush1.bf16.xpose.msra.mxu0 0
    %3371 = vmatprep.subr.bf16.mxu0 0
    %3372 = vmatpush1.bf16.xpose.msra.mxu0 0
    %3373 = vmatprep.subr.bf16.mxu0 0
    %3374 = vmatpush1.bf16.xpose.msra.mxu0 0
    %3375 = vmatprep.subr.bf16.mxu0 0
    %3376 = vmatpush1.bf16.xpose.msra.mxu0 0
    %3377 = vmatprep.subr.bf16.mxu0 0
    %3378 = vmatpush1.bf16.xpose.msra.mxu0 0
    %3379 = vmatprep.subr.bf16.mxu0 0
    %3380 = vmatpush1.bf16.xpose.msra.mxu0 0
    %3381 = vmatprep.subr.bf16.mxu0 0
    %3382 = vmatpush1.bf16.xpose.msra.mxu0 0
    %3383 = vmatprep.mubr.bf16.mxu0 %v607
    %3384 = vmatmul.mubr.bf16.gmra.mrb[0].mxu0 %v605
    %v3385 = vpop.f32.mrb[0].mxu0
    %v3386 = vadd.f32 %v3346, %v3385
    %v3387 = vpop.f32.mrb[0].mxu0
    %v3388 = vpop.f32.mrb[0].mxu0
    %v3389 = vpop.f32.mrb[0].mxu0
    %3390 = vdwg.mxu0
    %3391 = vmatprep.subr.bf16.mxu0 %v1928
    %3392 = vmatpush1.bf16.xpose.msra.mxu0 %v1927
    %3393 = vmatprep.subr.bf16.mxu0 0
    %3394 = vmatpush1.bf16.xpose.msra.mxu0 0
    %3395 = vmatprep.subr.bf16.mxu0 0
    %3396 = vmatpush1.bf16.xpose.msra.mxu0 0
    %3397 = vmatprep.subr.bf16.mxu0 0
    %3398 = vmatpush1.bf16.xpose.msra.mxu0 0
    %3399 = vmatprep.subr.bf16.mxu0 0
    %3400 = vmatpush1.bf16.xpose.msra.mxu0 0
    %3401 = vmatprep.subr.bf16.mxu0 0
    %3402 = vmatpush1.bf16.xpose.msra.mxu0 0
    %3403 = vmatprep.subr.bf16.mxu0 0
    %3404 = vmatpush1.bf16.xpose.msra.mxu0 0
    %3405 = vmatprep.subr.bf16.mxu0 0
    %3406 = vmatpush1.bf16.xpose.msra.mxu0 0
    %3407 = vmatprep.subr.bf16.mxu0 0
    %3408 = vmatpush1.bf16.xpose.msra.mxu0 0
    %3409 = vmatprep.subr.bf16.mxu0 0
    %3410 = vmatpush1.bf16.xpose.msra.mxu0 0
    %3411 = vmatprep.subr.bf16.mxu0 0
    %3412 = vmatpush1.bf16.xpose.msra.mxu0 0
    %3413 = vmatprep.subr.bf16.mxu0 0
    %3414 = vmatpush1.bf16.xpose.msra.mxu0 0
    %3415 = vmatprep.subr.bf16.mxu0 0
    %3416 = vmatpush1.bf16.xpose.msra.mxu0 0
    %3417 = vmatprep.subr.bf16.mxu0 0
    %3418 = vmatpush1.bf16.xpose.msra.mxu0 0
    %3419 = vmatprep.subr.bf16.mxu0 0
    %3420 = vmatpush1.bf16.xpose.msra.mxu0 0
    %3421 = vmatprep.subr.bf16.mxu0 0
    %3422 = vmatpush1.bf16.xpose.msra.mxu0 0
    %3423 = vmatprep.mubr.bf16.mxu0 %v604
    %3424 = vmatmul.mubr.bf16.gmra.mrb[0].mxu0 %v590
    %v3425 = vpop.f32.mrb[0].mxu0
    %v3426 = vadd.f32 %v3386, %v3425
    %v3427 = vpop.f32.mrb[0].mxu0
    %v3428 = vpop.f32.mrb[0].mxu0
    %v3429 = vpop.f32.mrb[0].mxu0
    %3430 = vdwg.mxu0
    %3431 = vmatprep.subr.bf16.mxu0 %v1930
    %3432 = vmatpush1.bf16.xpose.msra.mxu0 %v1929
    %3433 = vmatprep.subr.bf16.mxu0 0
    %3434 = vmatpush1.bf16.xpose.msra.mxu0 0
    %3435 = vmatprep.subr.bf16.mxu0 0
    %3436 = vmatpush1.bf16.xpose.msra.mxu0 0
    %3437 = vmatprep.subr.bf16.mxu0 0
    %3438 = vmatpush1.bf16.xpose.msra.mxu0 0
    %3439 = vmatprep.subr.bf16.mxu0 0
    %3440 = vmatpush1.bf16.xpose.msra.mxu0 0
    %3441 = vmatprep.subr.bf16.mxu0 0
    %3442 = vmatpush1.bf16.xpose.msra.mxu0 0
    %3443 = vmatprep.subr.bf16.mxu0 0
    %3444 = vmatpush1.bf16.xpose.msra.mxu0 0
    %3445 = vmatprep.subr.bf16.mxu0 0
    %3446 = vmatpush1.bf16.xpose.msra.mxu0 0
    %3447 = vmatprep.subr.bf16.mxu0 0
    %3448 = vmatpush1.bf16.xpose.msra.mxu0 0
    %3449 = vmatprep.subr.bf16.mxu0 0
    %3450 = vmatpush1.bf16.xpose.msra.mxu0 0
    %3451 = vmatprep.subr.bf16.mxu0 0
    %3452 = vmatpush1.bf16.xpose.msra.mxu0 0
    %3453 = vmatprep.subr.bf16.mxu0 0
    %3454 = vmatpush1.bf16.xpose.msra.mxu0 0
    %3455 = vmatprep.subr.bf16.mxu0 0
    %3456 = vmatpush1.bf16.xpose.msra.mxu0 0
    %3457 = vmatprep.subr.bf16.mxu0 0
    %3458 = vmatpush1.bf16.xpose.msra.mxu0 0
    %3459 = vmatprep.subr.bf16.mxu0 0
    %3460 = vmatpush1.bf16.xpose.msra.mxu0 0
    %3461 = vmatprep.subr.bf16.mxu0 0
    %3462 = vmatpush1.bf16.xpose.msra.mxu0 0
    %3463 = vmatprep.mubr.bf16.mxu0 %v608
    %3464 = vmatmul.mubr.bf16.gmra.mrb[0].mxu0 %v606
    %v3465 = vpop.f32.mrb[0].mxu0
    %v3466 = vadd.f32 %v3426, %v3465
    %v3467 = vpop.f32.mrb[0].mxu0
    %v3468 = vpop.f32.mrb[0].mxu0
    %v3469 = vpop.f32.mrb[0].mxu0
    %3470 = vdwg.mxu0
    %3471 = vmatprep.subr.bf16.mxu0 %v1932
    %3472 = vmatpush1.bf16.xpose.msra.mxu0 %v1931
    %3473 = vmatprep.subr.bf16.mxu0 0
    %3474 = vmatpush1.bf16.xpose.msra.mxu0 0
    %3475 = vmatprep.subr.bf16.mxu0 0
    %3476 = vmatpush1.bf16.xpose.msra.mxu0 0
    %3477 = vmatprep.subr.bf16.mxu0 0
    %3478 = vmatpush1.bf16.xpose.msra.mxu0 0
    %3479 = vmatprep.subr.bf16.mxu0 0
    %3480 = vmatpush1.bf16.xpose.msra.mxu0 0
    %3481 = vmatprep.subr.bf16.mxu0 0
    %3482 = vmatpush1.bf16.xpose.msra.mxu0 0
    %3483 = vmatprep.subr.bf16.mxu0 0
    %3484 = vmatpush1.bf16.xpose.msra.mxu0 0
    %3485 = vmatprep.subr.bf16.mxu0 0
    %3486 = vmatpush1.bf16.xpose.msra.mxu0 0
    %3487 = vmatprep.subr.bf16.mxu0 0
    %3488 = vmatpush1.bf16.xpose.msra.mxu0 0
    %3489 = vmatprep.subr.bf16.mxu0 0
    %3490 = vmatpush1.bf16.xpose.msra.mxu0 0
    %3491 = vmatprep.subr.bf16.mxu0 0
    %3492 = vmatpush1.bf16.xpose.msra.mxu0 0
    %3493 = vmatprep.subr.bf16.mxu0 0
    %3494 = vmatpush1.bf16.xpose.msra.mxu0 0
    %3495 = vmatprep.subr.bf16.mxu0 0
    %3496 = vmatpush1.bf16.xpose.msra.mxu0 0
    %3497 = vmatprep.subr.bf16.mxu0 0
    %3498 = vmatpush1.bf16.xpose.msra.mxu0 0
    %3499 = vmatprep.subr.bf16.mxu0 0
    %3500 = vmatpush1.bf16.xpose.msra.mxu0 0
    %3501 = vmatprep.subr.bf16.mxu0 0
    %3502 = vmatpush1.bf16.xpose.msra.mxu0 0
    %3503 = vmatprep.mubr.bf16.mxu0 %v646
    %3504 = vmatmul.mubr.bf16.gmra.mrb[0].mxu0 %v632
    %v3505 = vpop.f32.mrb[0].mxu0
    %v3506 = vadd.f32 %v3466, %v3505
    %v3507 = vpop.f32.mrb[0].mxu0
    %v3508 = vpop.f32.mrb[0].mxu0
    %v3509 = vpop.f32.mrb[0].mxu0
    %3510 = vdwg.mxu0
    %3511 = vmatprep.subr.bf16.mxu0 %v1934
    %3512 = vmatpush1.bf16.xpose.msra.mxu0 %v1933
    %3513 = vmatprep.subr.bf16.mxu0 0
    %3514 = vmatpush1.bf16.xpose.msra.mxu0 0
    %3515 = vmatprep.subr.bf16.mxu0 0
    %3516 = vmatpush1.bf16.xpose.msra.mxu0 0
    %3517 = vmatprep.subr.bf16.mxu0 0
    %3518 = vmatpush1.bf16.xpose.msra.mxu0 0
    %3519 = vmatprep.subr.bf16.mxu0 0
    %3520 = vmatpush1.bf16.xpose.msra.mxu0 0
    %3521 = vmatprep.subr.bf16.mxu0 0
    %3522 = vmatpush1.bf16.xpose.msra.mxu0 0
    %3523 = vmatprep.subr.bf16.mxu0 0
    %3524 = vmatpush1.bf16.xpose.msra.mxu0 0
    %3525 = vmatprep.subr.bf16.mxu0 0
    %3526 = vmatpush1.bf16.xpose.msra.mxu0 0
    %3527 = vmatprep.subr.bf16.mxu0 0
    %3528 = vmatpush1.bf16.xpose.msra.mxu0 0
    %3529 = vmatprep.subr.bf16.mxu0 0
    %3530 = vmatpush1.bf16.xpose.msra.mxu0 0
    %3531 = vmatprep.subr.bf16.mxu0 0
    %3532 = vmatpush1.bf16.xpose.msra.mxu0 0
    %3533 = vmatprep.subr.bf16.mxu0 0
    %3534 = vmatpush1.bf16.xpose.msra.mxu0 0
    %3535 = vmatprep.subr.bf16.mxu0 0
    %3536 = vmatpush1.bf16.xpose.msra.mxu0 0
    %3537 = vmatprep.subr.bf16.mxu0 0
    %3538 = vmatpush1.bf16.xpose.msra.mxu0 0
    %3539 = vmatprep.subr.bf16.mxu0 0
    %3540 = vmatpush1.bf16.xpose.msra.mxu0 0
    %3541 = vmatprep.subr.bf16.mxu0 0
    %3542 = vmatpush1.bf16.xpose.msra.mxu0 0
    %3543 = vmatprep.mubr.bf16.mxu0 %v656
    %3544 = vmatmul.mubr.bf16.gmra.mrb[0].mxu0 %v654
    %v3545 = vpop.f32.mrb[0].mxu0
    %v3546 = vadd.f32 %v3506, %v3545
    %v3547 = vpop.f32.mrb[0].mxu0
    %v3548 = vpop.f32.mrb[0].mxu0
    %v3549 = vpop.f32.mrb[0].mxu0
    %3550 = vdwg.mxu0
    %3551 = vmatprep.subr.bf16.mxu0 %v1936
    %3552 = vmatpush1.bf16.xpose.msra.mxu0 %v1935
    %3553 = vmatprep.subr.bf16.mxu0 0
    %3554 = vmatpush1.bf16.xpose.msra.mxu0 0
    %3555 = vmatprep.subr.bf16.mxu0 0
    %3556 = vmatpush1.bf16.xpose.msra.mxu0 0
    %3557 = vmatprep.subr.bf16.mxu0 0
    %3558 = vmatpush1.bf16.xpose.msra.mxu0 0
    %3559 = vmatprep.subr.bf16.mxu0 0
    %3560 = vmatpush1.bf16.xpose.msra.mxu0 0
    %3561 = vmatprep.subr.bf16.mxu0 0
    %3562 = vmatpush1.bf16.xpose.msra.mxu0 0
    %3563 = vmatprep.subr.bf16.mxu0 0
    %3564 = vmatpush1.bf16.xpose.msra.mxu0 0
    %3565 = vmatprep.subr.bf16.mxu0 0
    %3566 = vmatpush1.bf16.xpose.msra.mxu0 0
    %3567 = vmatprep.subr.bf16.mxu0 0
    %3568 = vmatpush1.bf16.xpose.msra.mxu0 0
    %3569 = vmatprep.subr.bf16.mxu0 0
    %3570 = vmatpush1.bf16.xpose.msra.mxu0 0
    %3571 = vmatprep.subr.bf16.mxu0 0
    %3572 = vmatpush1.bf16.xpose.msra.mxu0 0
    %3573 = vmatprep.subr.bf16.mxu0 0
    %3574 = vmatpush1.bf16.xpose.msra.mxu0 0
    %3575 = vmatprep.subr.bf16.mxu0 0
    %3576 = vmatpush1.bf16.xpose.msra.mxu0 0
    %3577 = vmatprep.subr.bf16.mxu0 0
    %3578 = vmatpush1.bf16.xpose.msra.mxu0 0
    %3579 = vmatprep.subr.bf16.mxu0 0
    %3580 = vmatpush1.bf16.xpose.msra.mxu0 0
    %3581 = vmatprep.subr.bf16.mxu0 0
    %3582 = vmatpush1.bf16.xpose.msra.mxu0 0
    %3583 = vmatprep.mubr.bf16.mxu0 %v653
    %3584 = vmatmul.mubr.bf16.gmra.mrb[0].mxu0 %v639
    %v3585 = vpop.f32.mrb[0].mxu0
    %v3586 = vadd.f32 %v3546, %v3585
    %v3587 = vpop.f32.mrb[0].mxu0
    %v3588 = vpop.f32.mrb[0].mxu0
    %v3589 = vpop.f32.mrb[0].mxu0
    %3590 = vdwg.mxu0
    %3591 = vmatprep.subr.bf16.mxu0 %v1938
    %3592 = vmatpush1.bf16.xpose.msra.mxu0 %v1937
    %3593 = vmatprep.subr.bf16.mxu0 0
    %3594 = vmatpush1.bf16.xpose.msra.mxu0 0
    %3595 = vmatprep.subr.bf16.mxu0 0
    %3596 = vmatpush1.bf16.xpose.msra.mxu0 0
    %3597 = vmatprep.subr.bf16.mxu0 0
    %3598 = vmatpush1.bf16.xpose.msra.mxu0 0
    %3599 = vmatprep.subr.bf16.mxu0 0
    %3600 = vmatpush1.bf16.xpose.msra.mxu0 0
    %3601 = vmatprep.subr.bf16.mxu0 0
    %3602 = vmatpush1.bf16.xpose.msra.mxu0 0
    %3603 = vmatprep.subr.bf16.mxu0 0
    %3604 = vmatpush1.bf16.xpose.msra.mxu0 0
    %3605 = vmatprep.subr.bf16.mxu0 0
    %3606 = vmatpush1.bf16.xpose.msra.mxu0 0
    %3607 = vmatprep.subr.bf16.mxu0 0
    %3608 = vmatpush1.bf16.xpose.msra.mxu0 0
    %3609 = vmatprep.subr.bf16.mxu0 0
    %3610 = vmatpush1.bf16.xpose.msra.mxu0 0
    %3611 = vmatprep.subr.bf16.mxu0 0
    %3612 = vmatpush1.bf16.xpose.msra.mxu0 0
    %3613 = vmatprep.subr.bf16.mxu0 0
    %3614 = vmatpush1.bf16.xpose.msra.mxu0 0
    %3615 = vmatprep.subr.bf16.mxu0 0
    %3616 = vmatpush1.bf16.xpose.msra.mxu0 0
    %3617 = vmatprep.subr.bf16.mxu0 0
    %3618 = vmatpush1.bf16.xpose.msra.mxu0 0
    %3619 = vmatprep.subr.bf16.mxu0 0
    %3620 = vmatpush1.bf16.xpose.msra.mxu0 0
    %3621 = vmatprep.subr.bf16.mxu0 0
    %3622 = vmatpush1.bf16.xpose.msra.mxu0 0
    %3623 = vmatprep.mubr.bf16.mxu0 %v657
    %3624 = vmatmul.mubr.bf16.gmra.mrb[0].mxu0 %v655
    %v3625 = vpop.f32.mrb[0].mxu0
    %v3626 = vadd.f32 %v3586, %v3625
    %v3627 = vpop.f32.mrb[0].mxu0
    %v3628 = vpop.f32.mrb[0].mxu0
    %v3629 = vpop.f32.mrb[0].mxu0
    %3630 = vdwg.mxu0
    %3631 = vmatprep.subr.bf16.mxu0 %v1940
    %3632 = vmatpush1.bf16.xpose.msra.mxu0 %v1939
    %3633 = vmatprep.subr.bf16.mxu0 0
    %3634 = vmatpush1.bf16.xpose.msra.mxu0 0
    %3635 = vmatprep.subr.bf16.mxu0 0
    %3636 = vmatpush1.bf16.xpose.msra.mxu0 0
    %3637 = vmatprep.subr.bf16.mxu0 0
    %3638 = vmatpush1.bf16.xpose.msra.mxu0 0
    %3639 = vmatprep.subr.bf16.mxu0 0
    %3640 = vmatpush1.bf16.xpose.msra.mxu0 0
    %3641 = vmatprep.subr.bf16.mxu0 0
    %3642 = vmatpush1.bf16.xpose.msra.mxu0 0
    %3643 = vmatprep.subr.bf16.mxu0 0
    %3644 = vmatpush1.bf16.xpose.msra.mxu0 0
    %3645 = vmatprep.subr.bf16.mxu0 0
    %3646 = vmatpush1.bf16.xpose.msra.mxu0 0
    %3647 = vmatprep.subr.bf16.mxu0 0
    %3648 = vmatpush1.bf16.xpose.msra.mxu0 0
    %3649 = vmatprep.subr.bf16.mxu0 0
    %3650 = vmatpush1.bf16.xpose.msra.mxu0 0
    %3651 = vmatprep.subr.bf16.mxu0 0
    %3652 = vmatpush1.bf16.xpose.msra.mxu0 0
    %3653 = vmatprep.subr.bf16.mxu0 0
    %3654 = vmatpush1.bf16.xpose.msra.mxu0 0
    %3655 = vmatprep.subr.bf16.mxu0 0
    %3656 = vmatpush1.bf16.xpose.msra.mxu0 0
    %3657 = vmatprep.subr.bf16.mxu0 0
    %3658 = vmatpush1.bf16.xpose.msra.mxu0 0
    %3659 = vmatprep.subr.bf16.mxu0 0
    %3660 = vmatpush1.bf16.xpose.msra.mxu0 0
    %3661 = vmatprep.subr.bf16.mxu0 0
    %3662 = vmatpush1.bf16.xpose.msra.mxu0 0
    %3663 = vmatprep.mubr.bf16.mxu0 %v695
    %3664 = vmatmul.mubr.bf16.gmra.mrb[0].mxu0 %v681
    %v3665 = vpop.f32.mrb[0].mxu0
    %v3666 = vadd.f32 %v3626, %v3665
    %v3667 = vpop.f32.mrb[0].mxu0
    %v3668 = vpop.f32.mrb[0].mxu0
    %v3669 = vpop.f32.mrb[0].mxu0
    %3670 = vdwg.mxu0
    %3671 = vmatprep.subr.bf16.mxu0 %v1942
    %3672 = vmatpush1.bf16.xpose.msra.mxu0 %v1941
    %3673 = vmatprep.subr.bf16.mxu0 0
    %3674 = vmatpush1.bf16.xpose.msra.mxu0 0
    %3675 = vmatprep.subr.bf16.mxu0 0
    %3676 = vmatpush1.bf16.xpose.msra.mxu0 0
    %3677 = vmatprep.subr.bf16.mxu0 0
    %3678 = vmatpush1.bf16.xpose.msra.mxu0 0
    %3679 = vmatprep.subr.bf16.mxu0 0
    %3680 = vmatpush1.bf16.xpose.msra.mxu0 0
    %3681 = vmatprep.subr.bf16.mxu0 0
    %3682 = vmatpush1.bf16.xpose.msra.mxu0 0
    %3683 = vmatprep.subr.bf16.mxu0 0
    %3684 = vmatpush1.bf16.xpose.msra.mxu0 0
    %3685 = vmatprep.subr.bf16.mxu0 0
    %3686 = vmatpush1.bf16.xpose.msra.mxu0 0
    %3687 = vmatprep.subr.bf16.mxu0 0
    %3688 = vmatpush1.bf16.xpose.msra.mxu0 0
    %3689 = vmatprep.subr.bf16.mxu0 0
    %3690 = vmatpush1.bf16.xpose.msra.mxu0 0
    %3691 = vmatprep.subr.bf16.mxu0 0
    %3692 = vmatpush1.bf16.xpose.msra.mxu0 0
    %3693 = vmatprep.subr.bf16.mxu0 0
    %3694 = vmatpush1.bf16.xpose.msra.mxu0 0
    %3695 = vmatprep.subr.bf16.mxu0 0
    %3696 = vmatpush1.bf16.xpose.msra.mxu0 0
    %3697 = vmatprep.subr.bf16.mxu0 0
    %3698 = vmatpush1.bf16.xpose.msra.mxu0 0
    %3699 = vmatprep.subr.bf16.mxu0 0
    %3700 = vmatpush1.bf16.xpose.msra.mxu0 0
    %3701 = vmatprep.subr.bf16.mxu0 0
    %3702 = vmatpush1.bf16.xpose.msra.mxu0 0
    %3703 = vmatprep.mubr.bf16.mxu0 %v705
    %3704 = vmatmul.mubr.bf16.gmra.mrb[0].mxu0 %v703
    %v3705 = vpop.f32.mrb[0].mxu0
    %v3706 = vadd.f32 %v3666, %v3705
    %v3707 = vpop.f32.mrb[0].mxu0
    %v3708 = vpop.f32.mrb[0].mxu0
    %v3709 = vpop.f32.mrb[0].mxu0
    %3710 = vdwg.mxu0
    %3711 = vmatprep.subr.bf16.mxu0 %v1944
    %3712 = vmatpush1.bf16.xpose.msra.mxu0 %v1943
    %3713 = vmatprep.subr.bf16.mxu0 0
    %3714 = vmatpush1.bf16.xpose.msra.mxu0 0
    %3715 = vmatprep.subr.bf16.mxu0 0
    %3716 = vmatpush1.bf16.xpose.msra.mxu0 0
    %3717 = vmatprep.subr.bf16.mxu0 0
    %3718 = vmatpush1.bf16.xpose.msra.mxu0 0
    %3719 = vmatprep.subr.bf16.mxu0 0
    %3720 = vmatpush1.bf16.xpose.msra.mxu0 0
    %3721 = vmatprep.subr.bf16.mxu0 0
    %3722 = vmatpush1.bf16.xpose.msra.mxu0 0
    %3723 = vmatprep.subr.bf16.mxu0 0
    %3724 = vmatpush1.bf16.xpose.msra.mxu0 0
    %3725 = vmatprep.subr.bf16.mxu0 0
    %3726 = vmatpush1.bf16.xpose.msra.mxu0 0
    %3727 = vmatprep.subr.bf16.mxu0 0
    %3728 = vmatpush1.bf16.xpose.msra.mxu0 0
    %3729 = vmatprep.subr.bf16.mxu0 0
    %3730 = vmatpush1.bf16.xpose.msra.mxu0 0
    %3731 = vmatprep.subr.bf16.mxu0 0
    %3732 = vmatpush1.bf16.xpose.msra.mxu0 0
    %3733 = vmatprep.subr.bf16.mxu0 0
    %3734 = vmatpush1.bf16.xpose.msra.mxu0 0
    %3735 = vmatprep.subr.bf16.mxu0 0
    %3736 = vmatpush1.bf16.xpose.msra.mxu0 0
    %3737 = vmatprep.subr.bf16.mxu0 0
    %3738 = vmatpush1.bf16.xpose.msra.mxu0 0
    %3739 = vmatprep.subr.bf16.mxu0 0
    %3740 = vmatpush1.bf16.xpose.msra.mxu0 0
    %3741 = vmatprep.subr.bf16.mxu0 0
    %3742 = vmatpush1.bf16.xpose.msra.mxu0 0
    %3743 = vmatprep.mubr.bf16.mxu0 %v702
    %3744 = vmatmul.mubr.bf16.gmra.mrb[0].mxu0 %v688
    %v3745 = vpop.f32.mrb[0].mxu0
    %v3746 = vadd.f32 %v3706, %v3745
    %v3747 = vpop.f32.mrb[0].mxu0
    %v3748 = vpop.f32.mrb[0].mxu0
    %v3749 = vpop.f32.mrb[0].mxu0
    %3750 = vdwg.mxu0
    %3751 = vmatprep.subr.bf16.mxu0 %v1946
    %3752 = vmatpush1.bf16.xpose.msra.mxu0 %v1945
    %3753 = vmatprep.subr.bf16.mxu0 0
    %3754 = vmatpush1.bf16.xpose.msra.mxu0 0
    %3755 = vmatprep.subr.bf16.mxu0 0
    %3756 = vmatpush1.bf16.xpose.msra.mxu0 0
    %3757 = vmatprep.subr.bf16.mxu0 0
    %3758 = vmatpush1.bf16.xpose.msra.mxu0 0
    %3759 = vmatprep.subr.bf16.mxu0 0
    %3760 = vmatpush1.bf16.xpose.msra.mxu0 0
    %3761 = vmatprep.subr.bf16.mxu0 0
    %3762 = vmatpush1.bf16.xpose.msra.mxu0 0
    %3763 = vmatprep.subr.bf16.mxu0 0
    %3764 = vmatpush1.bf16.xpose.msra.mxu0 0
    %3765 = vmatprep.subr.bf16.mxu0 0
    %3766 = vmatpush1.bf16.xpose.msra.mxu0 0
    %3767 = vmatprep.subr.bf16.mxu0 0
    %3768 = vmatpush1.bf16.xpose.msra.mxu0 0
    %3769 = vmatprep.subr.bf16.mxu0 0
    %3770 = vmatpush1.bf16.xpose.msra.mxu0 0
    %3771 = vmatprep.subr.bf16.mxu0 0
    %3772 = vmatpush1.bf16.xpose.msra.mxu0 0
    %3773 = vmatprep.subr.bf16.mxu0 0
    %3774 = vmatpush1.bf16.xpose.msra.mxu0 0
    %3775 = vmatprep.subr.bf16.mxu0 0
    %3776 = vmatpush1.bf16.xpose.msra.mxu0 0
    %3777 = vmatprep.subr.bf16.mxu0 0
    %3778 = vmatpush1.bf16.xpose.msra.mxu0 0
    %3779 = vmatprep.subr.bf16.mxu0 0
    %3780 = vmatpush1.bf16.xpose.msra.mxu0 0
    %3781 = vmatprep.subr.bf16.mxu0 0
    %3782 = vmatpush1.bf16.xpose.msra.mxu0 0
    %3783 = vmatprep.mubr.bf16.mxu0 %v706
    %3784 = vmatmul.mubr.bf16.gmra.mrb[0].mxu0 %v704
    %v3785 = vpop.f32.mrb[0].mxu0
    %v3786 = vadd.f32 %v3746, %v3785
    %v3787 = vpop.f32.mrb[0].mxu0
    %v3788 = vpop.f32.mrb[0].mxu0
    %v3789 = vpop.f32.mrb[0].mxu0
    %3790 = vdwg.mxu0
    %3791 = vmatprep.subr.bf16.mxu0 %v1948
    %3792 = vmatpush1.bf16.xpose.msra.mxu0 %v1947
    %3793 = vmatprep.subr.bf16.mxu0 0
    %3794 = vmatpush1.bf16.xpose.msra.mxu0 0
    %3795 = vmatprep.subr.bf16.mxu0 0
    %3796 = vmatpush1.bf16.xpose.msra.mxu0 0
    %3797 = vmatprep.subr.bf16.mxu0 0
    %3798 = vmatpush1.bf16.xpose.msra.mxu0 0
    %3799 = vmatprep.subr.bf16.mxu0 0
    %3800 = vmatpush1.bf16.xpose.msra.mxu0 0
    %3801 = vmatprep.subr.bf16.mxu0 0
    %3802 = vmatpush1.bf16.xpose.msra.mxu0 0
    %3803 = vmatprep.subr.bf16.mxu0 0
    %3804 = vmatpush1.bf16.xpose.msra.mxu0 0
    %3805 = vmatprep.subr.bf16.mxu0 0
    %3806 = vmatpush1.bf16.xpose.msra.mxu0 0
    %3807 = vmatprep.subr.bf16.mxu0 0
    %3808 = vmatpush1.bf16.xpose.msra.mxu0 0
    %3809 = vmatprep.subr.bf16.mxu0 0
    %3810 = vmatpush1.bf16.xpose.msra.mxu0 0
    %3811 = vmatprep.subr.bf16.mxu0 0
    %3812 = vmatpush1.bf16.xpose.msra.mxu0 0
    %3813 = vmatprep.subr.bf16.mxu0 0
    %3814 = vmatpush1.bf16.xpose.msra.mxu0 0
    %3815 = vmatprep.subr.bf16.mxu0 0
    %3816 = vmatpush1.bf16.xpose.msra.mxu0 0
    %3817 = vmatprep.subr.bf16.mxu0 0
    %3818 = vmatpush1.bf16.xpose.msra.mxu0 0
    %3819 = vmatprep.subr.bf16.mxu0 0
    %3820 = vmatpush1.bf16.xpose.msra.mxu0 0
    %3821 = vmatprep.subr.bf16.mxu0 0
    %3822 = vmatpush1.bf16.xpose.msra.mxu0 0
    %3823 = vmatprep.mubr.bf16.mxu0 %v744
    %3824 = vmatmul.mubr.bf16.gmra.mrb[0].mxu0 %v730
    %v3825 = vpop.f32.mrb[0].mxu0
    %v3826 = vadd.f32 %v3786, %v3825
    %v3827 = vpop.f32.mrb[0].mxu0
    %v3828 = vpop.f32.mrb[0].mxu0
    %v3829 = vpop.f32.mrb[0].mxu0
    %3830 = vdwg.mxu0
    %3831 = vmatprep.subr.bf16.mxu0 %v1950
    %3832 = vmatpush1.bf16.xpose.msra.mxu0 %v1949
    %3833 = vmatprep.subr.bf16.mxu0 0
    %3834 = vmatpush1.bf16.xpose.msra.mxu0 0
    %3835 = vmatprep.subr.bf16.mxu0 0
    %3836 = vmatpush1.bf16.xpose.msra.mxu0 0
    %3837 = vmatprep.subr.bf16.mxu0 0
    %3838 = vmatpush1.bf16.xpose.msra.mxu0 0
    %3839 = vmatprep.subr.bf16.mxu0 0
    %3840 = vmatpush1.bf16.xpose.msra.mxu0 0
    %3841 = vmatprep.subr.bf16.mxu0 0
    %3842 = vmatpush1.bf16.xpose.msra.mxu0 0
    %3843 = vmatprep.subr.bf16.mxu0 0
    %3844 = vmatpush1.bf16.xpose.msra.mxu0 0
    %3845 = vmatprep.subr.bf16.mxu0 0
    %3846 = vmatpush1.bf16.xpose.msra.mxu0 0
    %3847 = vmatprep.subr.bf16.mxu0 0
    %3848 = vmatpush1.bf16.xpose.msra.mxu0 0
    %3849 = vmatprep.subr.bf16.mxu0 0
    %3850 = vmatpush1.bf16.xpose.msra.mxu0 0
    %3851 = vmatprep.subr.bf16.mxu0 0
    %3852 = vmatpush1.bf16.xpose.msra.mxu0 0
    %3853 = vmatprep.subr.bf16.mxu0 0
    %3854 = vmatpush1.bf16.xpose.msra.mxu0 0
    %3855 = vmatprep.subr.bf16.mxu0 0
    %3856 = vmatpush1.bf16.xpose.msra.mxu0 0
    %3857 = vmatprep.subr.bf16.mxu0 0
    %3858 = vmatpush1.bf16.xpose.msra.mxu0 0
    %3859 = vmatprep.subr.bf16.mxu0 0
    %3860 = vmatpush1.bf16.xpose.msra.mxu0 0
    %3861 = vmatprep.subr.bf16.mxu0 0
    %3862 = vmatpush1.bf16.xpose.msra.mxu0 0
    %3863 = vmatprep.mubr.bf16.mxu0 %v754
    %3864 = vmatmul.mubr.bf16.gmra.mrb[0].mxu0 %v752
    %v3865 = vpop.f32.mrb[0].mxu0
    %v3866 = vadd.f32 %v3826, %v3865
    %v3867 = vpop.f32.mrb[0].mxu0
    %v3868 = vpop.f32.mrb[0].mxu0
    %v3869 = vpop.f32.mrb[0].mxu0
    %3870 = vdwg.mxu0
    %3871 = vmatprep.subr.bf16.mxu0 %v1952
    %3872 = vmatpush1.bf16.xpose.msra.mxu0 %v1951
    %3873 = vmatprep.subr.bf16.mxu0 0
    %3874 = vmatpush1.bf16.xpose.msra.mxu0 0
    %3875 = vmatprep.subr.bf16.mxu0 0
    %3876 = vmatpush1.bf16.xpose.msra.mxu0 0
    %3877 = vmatprep.subr.bf16.mxu0 0
    %3878 = vmatpush1.bf16.xpose.msra.mxu0 0
    %3879 = vmatprep.subr.bf16.mxu0 0
    %3880 = vmatpush1.bf16.xpose.msra.mxu0 0
    %3881 = vmatprep.subr.bf16.mxu0 0
    %3882 = vmatpush1.bf16.xpose.msra.mxu0 0
    %3883 = vmatprep.subr.bf16.mxu0 0
    %3884 = vmatpush1.bf16.xpose.msra.mxu0 0
    %3885 = vmatprep.subr.bf16.mxu0 0
    %3886 = vmatpush1.bf16.xpose.msra.mxu0 0
    %3887 = vmatprep.subr.bf16.mxu0 0
    %3888 = vmatpush1.bf16.xpose.msra.mxu0 0
    %3889 = vmatprep.subr.bf16.mxu0 0
    %3890 = vmatpush1.bf16.xpose.msra.mxu0 0
    %3891 = vmatprep.subr.bf16.mxu0 0
    %3892 = vmatpush1.bf16.xpose.msra.mxu0 0
    %3893 = vmatprep.subr.bf16.mxu0 0
    %3894 = vmatpush1.bf16.xpose.msra.mxu0 0
    %3895 = vmatprep.subr.bf16.mxu0 0
    %3896 = vmatpush1.bf16.xpose.msra.mxu0 0
    %3897 = vmatprep.subr.bf16.mxu0 0
    %3898 = vmatpush1.bf16.xpose.msra.mxu0 0
    %3899 = vmatprep.subr.bf16.mxu0 0
    %3900 = vmatpush1.bf16.xpose.msra.mxu0 0
    %3901 = vmatprep.subr.bf16.mxu0 0
    %3902 = vmatpush1.bf16.xpose.msra.mxu0 0
    %3903 = vmatprep.mubr.bf16.mxu0 %v751
    %3904 = vmatmul.mubr.bf16.gmra.mrb[0].mxu0 %v737
    %v3905 = vpop.f32.mrb[0].mxu0
    %v3906 = vadd.f32 %v3866, %v3905
    %v3907 = vpop.f32.mrb[0].mxu0
    %v3908 = vpop.f32.mrb[0].mxu0
    %v3909 = vpop.f32.mrb[0].mxu0
    %3910 = vdwg.mxu0
    %3911 = vmatprep.subr.bf16.mxu0 %v1954
    %3912 = vmatpush1.bf16.xpose.msra.mxu0 %v1953
    %3913 = vmatprep.subr.bf16.mxu0 0
    %3914 = vmatpush1.bf16.xpose.msra.mxu0 0
    %3915 = vmatprep.subr.bf16.mxu0 0
    %3916 = vmatpush1.bf16.xpose.msra.mxu0 0
    %3917 = vmatprep.subr.bf16.mxu0 0
    %3918 = vmatpush1.bf16.xpose.msra.mxu0 0
    %3919 = vmatprep.subr.bf16.mxu0 0
    %3920 = vmatpush1.bf16.xpose.msra.mxu0 0
    %3921 = vmatprep.subr.bf16.mxu0 0
    %3922 = vmatpush1.bf16.xpose.msra.mxu0 0
    %3923 = vmatprep.subr.bf16.mxu0 0
    %3924 = vmatpush1.bf16.xpose.msra.mxu0 0
    %3925 = vmatprep.subr.bf16.mxu0 0
    %3926 = vmatpush1.bf16.xpose.msra.mxu0 0
    %3927 = vmatprep.subr.bf16.mxu0 0
    %3928 = vmatpush1.bf16.xpose.msra.mxu0 0
    %3929 = vmatprep.subr.bf16.mxu0 0
    %3930 = vmatpush1.bf16.xpose.msra.mxu0 0
    %3931 = vmatprep.subr.bf16.mxu0 0
    %3932 = vmatpush1.bf16.xpose.msra.mxu0 0
    %3933 = vmatprep.subr.bf16.mxu0 0
    %3934 = vmatpush1.bf16.xpose.msra.mxu0 0
    %3935 = vmatprep.subr.bf16.mxu0 0
    %3936 = vmatpush1.bf16.xpose.msra.mxu0 0
    %3937 = vmatprep.subr.bf16.mxu0 0
    %3938 = vmatpush1.bf16.xpose.msra.mxu0 0
    %3939 = vmatprep.subr.bf16.mxu0 0
    %3940 = vmatpush1.bf16.xpose.msra.mxu0 0
    %3941 = vmatprep.subr.bf16.mxu0 0
    %3942 = vmatpush1.bf16.xpose.msra.mxu0 0
    %3943 = vmatprep.mubr.bf16.mxu0 %v755
    %3944 = vmatmul.mubr.bf16.gmra.mrb[0].mxu0 %v753
    %v3945 = vpop.f32.mrb[0].mxu0
    %v3946 = vadd.f32 %v3906, %v3945
    %v3947 = vpop.f32.mrb[0].mxu0
    %v3948 = vpop.f32.mrb[0].mxu0
    %v3949 = vpop.f32.mrb[0].mxu0
    %3950 = vdwg.mxu0
    %3951 = vmatprep.subr.bf16.mxu0 %v1956
    %3952 = vmatpush1.bf16.xpose.msra.mxu0 %v1955
    %3953 = vmatprep.subr.bf16.mxu0 0
    %3954 = vmatpush1.bf16.xpose.msra.mxu0 0
    %3955 = vmatprep.subr.bf16.mxu0 0
    %3956 = vmatpush1.bf16.xpose.msra.mxu0 0
    %3957 = vmatprep.subr.bf16.mxu0 0
    %3958 = vmatpush1.bf16.xpose.msra.mxu0 0
    %3959 = vmatprep.subr.bf16.mxu0 0
    %3960 = vmatpush1.bf16.xpose.msra.mxu0 0
    %3961 = vmatprep.subr.bf16.mxu0 0
    %3962 = vmatpush1.bf16.xpose.msra.mxu0 0
    %3963 = vmatprep.subr.bf16.mxu0 0
    %3964 = vmatpush1.bf16.xpose.msra.mxu0 0
    %3965 = vmatprep.subr.bf16.mxu0 0
    %3966 = vmatpush1.bf16.xpose.msra.mxu0 0
    %3967 = vmatprep.subr.bf16.mxu0 0
    %3968 = vmatpush1.bf16.xpose.msra.mxu0 0
    %3969 = vmatprep.subr.bf16.mxu0 0
    %3970 = vmatpush1.bf16.xpose.msra.mxu0 0
    %3971 = vmatprep.subr.bf16.mxu0 0
    %3972 = vmatpush1.bf16.xpose.msra.mxu0 0
    %3973 = vmatprep.subr.bf16.mxu0 0
    %3974 = vmatpush1.bf16.xpose.msra.mxu0 0
    %3975 = vmatprep.subr.bf16.mxu0 0
    %3976 = vmatpush1.bf16.xpose.msra.mxu0 0
    %3977 = vmatprep.subr.bf16.mxu0 0
    %3978 = vmatpush1.bf16.xpose.msra.mxu0 0
    %3979 = vmatprep.subr.bf16.mxu0 0
    %3980 = vmatpush1.bf16.xpose.msra.mxu0 0
    %3981 = vmatprep.subr.bf16.mxu0 0
    %3982 = vmatpush1.bf16.xpose.msra.mxu0 0
    %3983 = vmatprep.mubr.bf16.mxu0 %v793
    %3984 = vmatmul.mubr.bf16.gmra.mrb[0].mxu0 %v779
    %v3985 = vpop.f32.mrb[0].mxu0
    %v3986 = vadd.f32 %v3946, %v3985
    %v3987 = vpop.f32.mrb[0].mxu0
    %v3988 = vpop.f32.mrb[0].mxu0
    %v3989 = vpop.f32.mrb[0].mxu0
    %3990 = vdwg.mxu0
    %3991 = vmatprep.subr.bf16.mxu0 %v1958
    %3992 = vmatpush1.bf16.xpose.msra.mxu0 %v1957
    %3993 = vmatprep.subr.bf16.mxu0 0
    %3994 = vmatpush1.bf16.xpose.msra.mxu0 0
    %3995 = vmatprep.subr.bf16.mxu0 0
    %3996 = vmatpush1.bf16.xpose.msra.mxu0 0
    %3997 = vmatprep.subr.bf16.mxu0 0
    %3998 = vmatpush1.bf16.xpose.msra.mxu0 0
    %3999 = vmatprep.subr.bf16.mxu0 0
    %4000 = vmatpush1.bf16.xpose.msra.mxu0 0
    %4001 = vmatprep.subr.bf16.mxu0 0
    %4002 = vmatpush1.bf16.xpose.msra.mxu0 0
    %4003 = vmatprep.subr.bf16.mxu0 0
    %4004 = vmatpush1.bf16.xpose.msra.mxu0 0
    %4005 = vmatprep.subr.bf16.mxu0 0
    %4006 = vmatpush1.bf16.xpose.msra.mxu0 0
    %4007 = vmatprep.subr.bf16.mxu0 0
    %4008 = vmatpush1.bf16.xpose.msra.mxu0 0
    %4009 = vmatprep.subr.bf16.mxu0 0
    %4010 = vmatpush1.bf16.xpose.msra.mxu0 0
    %4011 = vmatprep.subr.bf16.mxu0 0
    %4012 = vmatpush1.bf16.xpose.msra.mxu0 0
    %4013 = vmatprep.subr.bf16.mxu0 0
    %4014 = vmatpush1.bf16.xpose.msra.mxu0 0
    %4015 = vmatprep.subr.bf16.mxu0 0
    %4016 = vmatpush1.bf16.xpose.msra.mxu0 0
    %4017 = vmatprep.subr.bf16.mxu0 0
    %4018 = vmatpush1.bf16.xpose.msra.mxu0 0
    %4019 = vmatprep.subr.bf16.mxu0 0
    %4020 = vmatpush1.bf16.xpose.msra.mxu0 0
    %4021 = vmatprep.subr.bf16.mxu0 0
    %4022 = vmatpush1.bf16.xpose.msra.mxu0 0
    %4023 = vmatprep.mubr.bf16.mxu0 %v803
    %4024 = vmatmul.mubr.bf16.gmra.mrb[0].mxu0 %v801
    %v4025 = vpop.f32.mrb[0].mxu0
    %v4026 = vadd.f32 %v3986, %v4025
    %v4027 = vpop.f32.mrb[0].mxu0
    %v4028 = vpop.f32.mrb[0].mxu0
    %v4029 = vpop.f32.mrb[0].mxu0
    %4030 = vdwg.mxu0
    %4031 = vmatprep.subr.bf16.mxu0 %v1960
    %4032 = vmatpush1.bf16.xpose.msra.mxu0 %v1959
    %4033 = vmatprep.subr.bf16.mxu0 0
    %4034 = vmatpush1.bf16.xpose.msra.mxu0 0
    %4035 = vmatprep.subr.bf16.mxu0 0
    %4036 = vmatpush1.bf16.xpose.msra.mxu0 0
    %4037 = vmatprep.subr.bf16.mxu0 0
    %4038 = vmatpush1.bf16.xpose.msra.mxu0 0
    %4039 = vmatprep.subr.bf16.mxu0 0
    %4040 = vmatpush1.bf16.xpose.msra.mxu0 0
    %4041 = vmatprep.subr.bf16.mxu0 0
    %4042 = vmatpush1.bf16.xpose.msra.mxu0 0
    %4043 = vmatprep.subr.bf16.mxu0 0
    %4044 = vmatpush1.bf16.xpose.msra.mxu0 0
    %4045 = vmatprep.subr.bf16.mxu0 0
    %4046 = vmatpush1.bf16.xpose.msra.mxu0 0
    %4047 = vmatprep.subr.bf16.mxu0 0
    %4048 = vmatpush1.bf16.xpose.msra.mxu0 0
    %4049 = vmatprep.subr.bf16.mxu0 0
    %4050 = vmatpush1.bf16.xpose.msra.mxu0 0
    %4051 = vmatprep.subr.bf16.mxu0 0
    %4052 = vmatpush1.bf16.xpose.msra.mxu0 0
    %4053 = vmatprep.subr.bf16.mxu0 0
    %4054 = vmatpush1.bf16.xpose.msra.mxu0 0
    %4055 = vmatprep.subr.bf16.mxu0 0
    %4056 = vmatpush1.bf16.xpose.msra.mxu0 0
    %4057 = vmatprep.subr.bf16.mxu0 0
    %4058 = vmatpush1.bf16.xpose.msra.mxu0 0
    %4059 = vmatprep.subr.bf16.mxu0 0
    %4060 = vmatpush1.bf16.xpose.msra.mxu0 0
    %4061 = vmatprep.subr.bf16.mxu0 0
    %4062 = vmatpush1.bf16.xpose.msra.mxu0 0
    %4063 = vmatprep.mubr.bf16.mxu0 %v800
    %4064 = vmatmul.mubr.bf16.gmra.mrb[0].mxu0 %v786
    %v4065 = vpop.f32.mrb[0].mxu0
    %v4066 = vadd.f32 %v4026, %v4065
    %v4067 = vpop.f32.mrb[0].mxu0
    %v4068 = vpop.f32.mrb[0].mxu0
    %v4069 = vpop.f32.mrb[0].mxu0
    %4070 = vdwg.mxu0
    %4071 = vmatprep.subr.bf16.mxu0 %v1962
    %4072 = vmatpush1.bf16.xpose.msra.mxu0 %v1961
    %4073 = vmatprep.subr.bf16.mxu0 0
    %4074 = vmatpush1.bf16.xpose.msra.mxu0 0
    %4075 = vmatprep.subr.bf16.mxu0 0
    %4076 = vmatpush1.bf16.xpose.msra.mxu0 0
    %4077 = vmatprep.subr.bf16.mxu0 0
    %4078 = vmatpush1.bf16.xpose.msra.mxu0 0
    %4079 = vmatprep.subr.bf16.mxu0 0
    %4080 = vmatpush1.bf16.xpose.msra.mxu0 0
    %4081 = vmatprep.subr.bf16.mxu0 0
    %4082 = vmatpush1.bf16.xpose.msra.mxu0 0
    %4083 = vmatprep.subr.bf16.mxu0 0
    %4084 = vmatpush1.bf16.xpose.msra.mxu0 0
    %4085 = vmatprep.subr.bf16.mxu0 0
    %4086 = vmatpush1.bf16.xpose.msra.mxu0 0
    %4087 = vmatprep.subr.bf16.mxu0 0
    %4088 = vmatpush1.bf16.xpose.msra.mxu0 0
    %4089 = vmatprep.subr.bf16.mxu0 0
    %4090 = vmatpush1.bf16.xpose.msra.mxu0 0
    %4091 = vmatprep.subr.bf16.mxu0 0
    %4092 = vmatpush1.bf16.xpose.msra.mxu0 0
    %4093 = vmatprep.subr.bf16.mxu0 0
    %4094 = vmatpush1.bf16.xpose.msra.mxu0 0
    %4095 = vmatprep.subr.bf16.mxu0 0
    %4096 = vmatpush1.bf16.xpose.msra.mxu0 0
    %4097 = vmatprep.subr.bf16.mxu0 0
    %4098 = vmatpush1.bf16.xpose.msra.mxu0 0
    %4099 = vmatprep.subr.bf16.mxu0 0
    %4100 = vmatpush1.bf16.xpose.msra.mxu0 0
    %4101 = vmatprep.subr.bf16.mxu0 0
    %4102 = vmatpush1.bf16.xpose.msra.mxu0 0
    %4103 = vmatprep.mubr.bf16.mxu0 %v804
    %4104 = vmatmul.mubr.bf16.gmra.mrb[0].mxu0 %v802
    %v4105 = vpop.f32.mrb[0].mxu0
    %v4106 = vadd.f32 %v4066, %v4105
    %v4107 = vpop.f32.mrb[0].mxu0
    %v4108 = vpop.f32.mrb[0].mxu0
    %v4109 = vpop.f32.mrb[0].mxu0
    %4110 = vdwg.mxu0
    %4111 = vmatprep.subr.bf16.mxu0 %v1964
    %4112 = vmatpush1.bf16.xpose.msra.mxu0 %v1963
    %4113 = vmatprep.subr.bf16.mxu0 0
    %4114 = vmatpush1.bf16.xpose.msra.mxu0 0
    %4115 = vmatprep.subr.bf16.mxu0 0
    %4116 = vmatpush1.bf16.xpose.msra.mxu0 0
    %4117 = vmatprep.subr.bf16.mxu0 0
    %4118 = vmatpush1.bf16.xpose.msra.mxu0 0
    %4119 = vmatprep.subr.bf16.mxu0 0
    %4120 = vmatpush1.bf16.xpose.msra.mxu0 0
    %4121 = vmatprep.subr.bf16.mxu0 0
    %4122 = vmatpush1.bf16.xpose.msra.mxu0 0
    %4123 = vmatprep.subr.bf16.mxu0 0
    %4124 = vmatpush1.bf16.xpose.msra.mxu0 0
    %4125 = vmatprep.subr.bf16.mxu0 0
    %4126 = vmatpush1.bf16.xpose.msra.mxu0 0
    %4127 = vmatprep.subr.bf16.mxu0 0
    %4128 = vmatpush1.bf16.xpose.msra.mxu0 0
    %4129 = vmatprep.subr.bf16.mxu0 0
    %4130 = vmatpush1.bf16.xpose.msra.mxu0 0
    %4131 = vmatprep.subr.bf16.mxu0 0
    %4132 = vmatpush1.bf16.xpose.msra.mxu0 0
    %4133 = vmatprep.subr.bf16.mxu0 0
    %4134 = vmatpush1.bf16.xpose.msra.mxu0 0
    %4135 = vmatprep.subr.bf16.mxu0 0
    %4136 = vmatpush1.bf16.xpose.msra.mxu0 0
    %4137 = vmatprep.subr.bf16.mxu0 0
    %4138 = vmatpush1.bf16.xpose.msra.mxu0 0
    %4139 = vmatprep.subr.bf16.mxu0 0
    %4140 = vmatpush1.bf16.xpose.msra.mxu0 0
    %4141 = vmatprep.subr.bf16.mxu0 0
    %4142 = vmatpush1.bf16.xpose.msra.mxu0 0
    %4143 = vmatprep.mubr.bf16.mxu0 %v842
    %4144 = vmatmul.mubr.bf16.gmra.mrb[0].mxu0 %v828
    %v4145 = vpop.f32.mrb[0].mxu0
    %v4146 = vadd.f32 %v4106, %v4145
    %v4147 = vpop.f32.mrb[0].mxu0
    %v4148 = vpop.f32.mrb[0].mxu0
    %v4149 = vpop.f32.mrb[0].mxu0
    %4150 = vdwg.mxu0
    %4151 = vmatprep.subr.bf16.mxu0 %v1966
    %4152 = vmatpush1.bf16.xpose.msra.mxu0 %v1965
    %4153 = vmatprep.subr.bf16.mxu0 0
    %4154 = vmatpush1.bf16.xpose.msra.mxu0 0
    %4155 = vmatprep.subr.bf16.mxu0 0
    %4156 = vmatpush1.bf16.xpose.msra.mxu0 0
    %4157 = vmatprep.subr.bf16.mxu0 0
    %4158 = vmatpush1.bf16.xpose.msra.mxu0 0
    %4159 = vmatprep.subr.bf16.mxu0 0
    %4160 = vmatpush1.bf16.xpose.msra.mxu0 0
    %4161 = vmatprep.subr.bf16.mxu0 0
    %4162 = vmatpush1.bf16.xpose.msra.mxu0 0
    %4163 = vmatprep.subr.bf16.mxu0 0
    %4164 = vmatpush1.bf16.xpose.msra.mxu0 0
    %4165 = vmatprep.subr.bf16.mxu0 0
    %4166 = vmatpush1.bf16.xpose.msra.mxu0 0
    %4167 = vmatprep.subr.bf16.mxu0 0
    %4168 = vmatpush1.bf16.xpose.msra.mxu0 0
    %4169 = vmatprep.subr.bf16.mxu0 0
    %4170 = vmatpush1.bf16.xpose.msra.mxu0 0
    %4171 = vmatprep.subr.bf16.mxu0 0
    %4172 = vmatpush1.bf16.xpose.msra.mxu0 0
    %4173 = vmatprep.subr.bf16.mxu0 0
    %4174 = vmatpush1.bf16.xpose.msra.mxu0 0
    %4175 = vmatprep.subr.bf16.mxu0 0
    %4176 = vmatpush1.bf16.xpose.msra.mxu0 0
    %4177 = vmatprep.subr.bf16.mxu0 0
    %4178 = vmatpush1.bf16.xpose.msra.mxu0 0
    %4179 = vmatprep.subr.bf16.mxu0 0
    %4180 = vmatpush1.bf16.xpose.msra.mxu0 0
    %4181 = vmatprep.subr.bf16.mxu0 0
    %4182 = vmatpush1.bf16.xpose.msra.mxu0 0
    %4183 = vmatprep.mubr.bf16.mxu0 %v852
    %4184 = vmatmul.mubr.bf16.gmra.mrb[0].mxu0 %v850
    %v4185 = vpop.f32.mrb[0].mxu0
    %v4186 = vadd.f32 %v4146, %v4185
    %v4187 = vpop.f32.mrb[0].mxu0
    %v4188 = vpop.f32.mrb[0].mxu0
    %v4189 = vpop.f32.mrb[0].mxu0
    %4190 = vdwg.mxu0
    %4191 = vmatprep.subr.bf16.mxu0 %v1968
    %4192 = vmatpush1.bf16.xpose.msra.mxu0 %v1967
    %4193 = vmatprep.subr.bf16.mxu0 0
    %4194 = vmatpush1.bf16.xpose.msra.mxu0 0
    %4195 = vmatprep.subr.bf16.mxu0 0
    %4196 = vmatpush1.bf16.xpose.msra.mxu0 0
    %4197 = vmatprep.subr.bf16.mxu0 0
    %4198 = vmatpush1.bf16.xpose.msra.mxu0 0
    %4199 = vmatprep.subr.bf16.mxu0 0
    %4200 = vmatpush1.bf16.xpose.msra.mxu0 0
    %4201 = vmatprep.subr.bf16.mxu0 0
    %4202 = vmatpush1.bf16.xpose.msra.mxu0 0
    %4203 = vmatprep.subr.bf16.mxu0 0
    %4204 = vmatpush1.bf16.xpose.msra.mxu0 0
    %4205 = vmatprep.subr.bf16.mxu0 0
    %4206 = vmatpush1.bf16.xpose.msra.mxu0 0
    %4207 = vmatprep.subr.bf16.mxu0 0
    %4208 = vmatpush1.bf16.xpose.msra.mxu0 0
    %4209 = vmatprep.subr.bf16.mxu0 0
    %4210 = vmatpush1.bf16.xpose.msra.mxu0 0
    %4211 = vmatprep.subr.bf16.mxu0 0
    %4212 = vmatpush1.bf16.xpose.msra.mxu0 0
    %4213 = vmatprep.subr.bf16.mxu0 0
    %4214 = vmatpush1.bf16.xpose.msra.mxu0 0
    %4215 = vmatprep.subr.bf16.mxu0 0
    %4216 = vmatpush1.bf16.xpose.msra.mxu0 0
    %4217 = vmatprep.subr.bf16.mxu0 0
    %4218 = vmatpush1.bf16.xpose.msra.mxu0 0
    %4219 = vmatprep.subr.bf16.mxu0 0
    %4220 = vmatpush1.bf16.xpose.msra.mxu0 0
    %4221 = vmatprep.subr.bf16.mxu0 0
    %4222 = vmatpush1.bf16.xpose.msra.mxu0 0
    %4223 = vmatprep.mubr.bf16.mxu0 %v849
    %4224 = vmatmul.mubr.bf16.gmra.mrb[0].mxu0 %v835
    %v4225 = vpop.f32.mrb[0].mxu0
    %v4226 = vadd.f32 %v4186, %v4225
    %v4227 = vpop.f32.mrb[0].mxu0
    %v4228 = vpop.f32.mrb[0].mxu0
    %v4229 = vpop.f32.mrb[0].mxu0
    %4230 = vdwg.mxu0
    %4231 = vmatprep.subr.bf16.mxu0 %v1970
    %4232 = vmatpush1.bf16.xpose.msra.mxu0 %v1969
    %4233 = vmatprep.subr.bf16.mxu0 0
    %4234 = vmatpush1.bf16.xpose.msra.mxu0 0
    %4235 = vmatprep.subr.bf16.mxu0 0
    %4236 = vmatpush1.bf16.xpose.msra.mxu0 0
    %4237 = vmatprep.subr.bf16.mxu0 0
    %4238 = vmatpush1.bf16.xpose.msra.mxu0 0
    %4239 = vmatprep.subr.bf16.mxu0 0
    %4240 = vmatpush1.bf16.xpose.msra.mxu0 0
    %4241 = vmatprep.subr.bf16.mxu0 0
    %4242 = vmatpush1.bf16.xpose.msra.mxu0 0
    %4243 = vmatprep.subr.bf16.mxu0 0
    %4244 = vmatpush1.bf16.xpose.msra.mxu0 0
    %4245 = vmatprep.subr.bf16.mxu0 0
    %4246 = vmatpush1.bf16.xpose.msra.mxu0 0
    %4247 = vmatprep.subr.bf16.mxu0 0
    %4248 = vmatpush1.bf16.xpose.msra.mxu0 0
    %4249 = vmatprep.subr.bf16.mxu0 0
    %4250 = vmatpush1.bf16.xpose.msra.mxu0 0
    %4251 = vmatprep.subr.bf16.mxu0 0
    %4252 = vmatpush1.bf16.xpose.msra.mxu0 0
    %4253 = vmatprep.subr.bf16.mxu0 0
    %4254 = vmatpush1.bf16.xpose.msra.mxu0 0
    %4255 = vmatprep.subr.bf16.mxu0 0
    %4256 = vmatpush1.bf16.xpose.msra.mxu0 0
    %4257 = vmatprep.subr.bf16.mxu0 0
    %4258 = vmatpush1.bf16.xpose.msra.mxu0 0
    %4259 = vmatprep.subr.bf16.mxu0 0
    %4260 = vmatpush1.bf16.xpose.msra.mxu0 0
    %4261 = vmatprep.subr.bf16.mxu0 0
    %4262 = vmatpush1.bf16.xpose.msra.mxu0 0
    %4263 = vmatprep.mubr.bf16.mxu0 %v853
    %4264 = vmatmul.mubr.bf16.gmra.mrb[0].mxu0 %v851
    %v4265 = vpop.f32.mrb[0].mxu0
    %v4266 = vadd.f32 %v4226, %v4265
    %v4267 = vpop.f32.mrb[0].mxu0
    %v4268 = vpop.f32.mrb[0].mxu0
    %v4269 = vpop.f32.mrb[0].mxu0
    %4270 = vdwg.mxu0
    %4271 = vmatprep.subr.bf16.mxu0 %v1972
    %4272 = vmatpush1.bf16.xpose.msra.mxu0 %v1971
    %4273 = vmatprep.subr.bf16.mxu0 0
    %4274 = vmatpush1.bf16.xpose.msra.mxu0 0
    %4275 = vmatprep.subr.bf16.mxu0 0
    %4276 = vmatpush1.bf16.xpose.msra.mxu0 0
    %4277 = vmatprep.subr.bf16.mxu0 0
    %4278 = vmatpush1.bf16.xpose.msra.mxu0 0
    %4279 = vmatprep.subr.bf16.mxu0 0
    %4280 = vmatpush1.bf16.xpose.msra.mxu0 0
    %4281 = vmatprep.subr.bf16.mxu0 0
    %4282 = vmatpush1.bf16.xpose.msra.mxu0 0
    %4283 = vmatprep.subr.bf16.mxu0 0
    %4284 = vmatpush1.bf16.xpose.msra.mxu0 0
    %4285 = vmatprep.subr.bf16.mxu0 0
    %4286 = vmatpush1.bf16.xpose.msra.mxu0 0
    %4287 = vmatprep.subr.bf16.mxu0 0
    %4288 = vmatpush1.bf16.xpose.msra.mxu0 0
    %4289 = vmatprep.subr.bf16.mxu0 0
    %4290 = vmatpush1.bf16.xpose.msra.mxu0 0
    %4291 = vmatprep.subr.bf16.mxu0 0
    %4292 = vmatpush1.bf16.xpose.msra.mxu0 0
    %4293 = vmatprep.subr.bf16.mxu0 0
    %4294 = vmatpush1.bf16.xpose.msra.mxu0 0
    %4295 = vmatprep.subr.bf16.mxu0 0
    %4296 = vmatpush1.bf16.xpose.msra.mxu0 0
    %4297 = vmatprep.subr.bf16.mxu0 0
    %4298 = vmatpush1.bf16.xpose.msra.mxu0 0
    %4299 = vmatprep.subr.bf16.mxu0 0
    %4300 = vmatpush1.bf16.xpose.msra.mxu0 0
    %4301 = vmatprep.subr.bf16.mxu0 0
    %4302 = vmatpush1.bf16.xpose.msra.mxu0 0
    %4303 = vmatprep.mubr.bf16.mxu0 %v891
    %4304 = vmatmul.mubr.bf16.gmra.mrb[0].mxu0 %v877
    %v4305 = vpop.f32.mrb[0].mxu0
    %v4306 = vadd.f32 %v4266, %v4305
    %v4307 = vpop.f32.mrb[0].mxu0
    %v4308 = vpop.f32.mrb[0].mxu0
    %v4309 = vpop.f32.mrb[0].mxu0
    %4310 = vdwg.mxu0
    %4311 = vmatprep.subr.bf16.mxu0 %v1974
    %4312 = vmatpush1.bf16.xpose.msra.mxu0 %v1973
    %4313 = vmatprep.subr.bf16.mxu0 0
    %4314 = vmatpush1.bf16.xpose.msra.mxu0 0
    %4315 = vmatprep.subr.bf16.mxu0 0
    %4316 = vmatpush1.bf16.xpose.msra.mxu0 0
    %4317 = vmatprep.subr.bf16.mxu0 0
    %4318 = vmatpush1.bf16.xpose.msra.mxu0 0
    %4319 = vmatprep.subr.bf16.mxu0 0
    %4320 = vmatpush1.bf16.xpose.msra.mxu0 0
    %4321 = vmatprep.subr.bf16.mxu0 0
    %4322 = vmatpush1.bf16.xpose.msra.mxu0 0
    %4323 = vmatprep.subr.bf16.mxu0 0
    %4324 = vmatpush1.bf16.xpose.msra.mxu0 0
    %4325 = vmatprep.subr.bf16.mxu0 0
    %4326 = vmatpush1.bf16.xpose.msra.mxu0 0
    %4327 = vmatprep.subr.bf16.mxu0 0
    %4328 = vmatpush1.bf16.xpose.msra.mxu0 0
    %4329 = vmatprep.subr.bf16.mxu0 0
    %4330 = vmatpush1.bf16.xpose.msra.mxu0 0
    %4331 = vmatprep.subr.bf16.mxu0 0
    %4332 = vmatpush1.bf16.xpose.msra.mxu0 0
    %4333 = vmatprep.subr.bf16.mxu0 0
    %4334 = vmatpush1.bf16.xpose.msra.mxu0 0
    %4335 = vmatprep.subr.bf16.mxu0 0
    %4336 = vmatpush1.bf16.xpose.msra.mxu0 0
    %4337 = vmatprep.subr.bf16.mxu0 0
    %4338 = vmatpush1.bf16.xpose.msra.mxu0 0
    %4339 = vmatprep.subr.bf16.mxu0 0
    %4340 = vmatpush1.bf16.xpose.msra.mxu0 0
    %4341 = vmatprep.subr.bf16.mxu0 0
    %4342 = vmatpush1.bf16.xpose.msra.mxu0 0
    %4343 = vmatprep.mubr.bf16.mxu0 %v901
    %4344 = vmatmul.mubr.bf16.gmra.mrb[0].mxu0 %v899
    %v4345 = vpop.f32.mrb[0].mxu0
    %v4346 = vadd.f32 %v4306, %v4345
    %v4347 = vpop.f32.mrb[0].mxu0
    %v4348 = vpop.f32.mrb[0].mxu0
    %v4349 = vpop.f32.mrb[0].mxu0
    %4350 = vdwg.mxu0
    %4351 = vmatprep.subr.bf16.mxu0 %v1976
    %4352 = vmatpush1.bf16.xpose.msra.mxu0 %v1975
    %4353 = vmatprep.subr.bf16.mxu0 0
    %4354 = vmatpush1.bf16.xpose.msra.mxu0 0
    %4355 = vmatprep.subr.bf16.mxu0 0
    %4356 = vmatpush1.bf16.xpose.msra.mxu0 0
    %4357 = vmatprep.subr.bf16.mxu0 0
    %4358 = vmatpush1.bf16.xpose.msra.mxu0 0
    %4359 = vmatprep.subr.bf16.mxu0 0
    %4360 = vmatpush1.bf16.xpose.msra.mxu0 0
    %4361 = vmatprep.subr.bf16.mxu0 0
    %4362 = vmatpush1.bf16.xpose.msra.mxu0 0
    %4363 = vmatprep.subr.bf16.mxu0 0
    %4364 = vmatpush1.bf16.xpose.msra.mxu0 0
    %4365 = vmatprep.subr.bf16.mxu0 0
    %4366 = vmatpush1.bf16.xpose.msra.mxu0 0
    %4367 = vmatprep.subr.bf16.mxu0 0
    %4368 = vmatpush1.bf16.xpose.msra.mxu0 0
    %4369 = vmatprep.subr.bf16.mxu0 0
    %4370 = vmatpush1.bf16.xpose.msra.mxu0 0
    %4371 = vmatprep.subr.bf16.mxu0 0
    %4372 = vmatpush1.bf16.xpose.msra.mxu0 0
    %4373 = vmatprep.subr.bf16.mxu0 0
    %4374 = vmatpush1.bf16.xpose.msra.mxu0 0
    %4375 = vmatprep.subr.bf16.mxu0 0
    %4376 = vmatpush1.bf16.xpose.msra.mxu0 0
    %4377 = vmatprep.subr.bf16.mxu0 0
    %4378 = vmatpush1.bf16.xpose.msra.mxu0 0
    %4379 = vmatprep.subr.bf16.mxu0 0
    %4380 = vmatpush1.bf16.xpose.msra.mxu0 0
    %4381 = vmatprep.subr.bf16.mxu0 0
    %4382 = vmatpush1.bf16.xpose.msra.mxu0 0
    %4383 = vmatprep.mubr.bf16.mxu0 %v898
    %4384 = vmatmul.mubr.bf16.gmra.mrb[0].mxu0 %v884
    %v4385 = vpop.f32.mrb[0].mxu0
    %v4386 = vadd.f32 %v4346, %v4385
    %v4387 = vpop.f32.mrb[0].mxu0
    %v4388 = vpop.f32.mrb[0].mxu0
    %v4389 = vpop.f32.mrb[0].mxu0
    %4390 = vdwg.mxu0
    %4391 = vmatprep.subr.bf16.mxu0 %v1978
    %4392 = vmatpush1.bf16.xpose.msra.mxu0 %v1977
    %4393 = vmatprep.subr.bf16.mxu0 0
    %4394 = vmatpush1.bf16.xpose.msra.mxu0 0
    %4395 = vmatprep.subr.bf16.mxu0 0
    %4396 = vmatpush1.bf16.xpose.msra.mxu0 0
    %4397 = vmatprep.subr.bf16.mxu0 0
    %4398 = vmatpush1.bf16.xpose.msra.mxu0 0
    %4399 = vmatprep.subr.bf16.mxu0 0
    %4400 = vmatpush1.bf16.xpose.msra.mxu0 0
    %4401 = vmatprep.subr.bf16.mxu0 0
    %4402 = vmatpush1.bf16.xpose.msra.mxu0 0
    %4403 = vmatprep.subr.bf16.mxu0 0
    %4404 = vmatpush1.bf16.xpose.msra.mxu0 0
    %4405 = vmatprep.subr.bf16.mxu0 0
    %4406 = vmatpush1.bf16.xpose.msra.mxu0 0
    %4407 = vmatprep.subr.bf16.mxu0 0
    %4408 = vmatpush1.bf16.xpose.msra.mxu0 0
    %4409 = vmatprep.subr.bf16.mxu0 0
    %4410 = vmatpush1.bf16.xpose.msra.mxu0 0
    %4411 = vmatprep.subr.bf16.mxu0 0
    %4412 = vmatpush1.bf16.xpose.msra.mxu0 0
    %4413 = vmatprep.subr.bf16.mxu0 0
    %4414 = vmatpush1.bf16.xpose.msra.mxu0 0
    %4415 = vmatprep.subr.bf16.mxu0 0
    %4416 = vmatpush1.bf16.xpose.msra.mxu0 0
    %4417 = vmatprep.subr.bf16.mxu0 0
    %4418 = vmatpush1.bf16.xpose.msra.mxu0 0
    %4419 = vmatprep.subr.bf16.mxu0 0
    %4420 = vmatpush1.bf16.xpose.msra.mxu0 0
    %4421 = vmatprep.subr.bf16.mxu0 0
    %4422 = vmatpush1.bf16.xpose.msra.mxu0 0
    %4423 = vmatprep.mubr.bf16.mxu0 %v902
    %4424 = vmatmul.mubr.bf16.gmra.mrb[0].mxu0 %v900
    %v4425 = vpop.f32.mrb[0].mxu0
    %v4426 = vadd.f32 %v4386, %v4425
    %v4427 = vpop.f32.mrb[0].mxu0
    %v4428 = vpop.f32.mrb[0].mxu0
    %v4429 = vpop.f32.mrb[0].mxu0
    %4430 = vdwg.mxu0
    %4431 = vmatprep.subr.bf16.mxu0 %v1980
    %4432 = vmatpush1.bf16.xpose.msra.mxu0 %v1979
    %4433 = vmatprep.subr.bf16.mxu0 0
    %4434 = vmatpush1.bf16.xpose.msra.mxu0 0
    %4435 = vmatprep.subr.bf16.mxu0 0
    %4436 = vmatpush1.bf16.xpose.msra.mxu0 0
    %4437 = vmatprep.subr.bf16.mxu0 0
    %4438 = vmatpush1.bf16.xpose.msra.mxu0 0
    %4439 = vmatprep.subr.bf16.mxu0 0
    %4440 = vmatpush1.bf16.xpose.msra.mxu0 0
    %4441 = vmatprep.subr.bf16.mxu0 0
    %4442 = vmatpush1.bf16.xpose.msra.mxu0 0
    %4443 = vmatprep.subr.bf16.mxu0 0
    %4444 = vmatpush1.bf16.xpose.msra.mxu0 0
    %4445 = vmatprep.subr.bf16.mxu0 0
    %4446 = vmatpush1.bf16.xpose.msra.mxu0 0
    %4447 = vmatprep.subr.bf16.mxu0 0
    %4448 = vmatpush1.bf16.xpose.msra.mxu0 0
    %4449 = vmatprep.subr.bf16.mxu0 0
    %4450 = vmatpush1.bf16.xpose.msra.mxu0 0
    %4451 = vmatprep.subr.bf16.mxu0 0
    %4452 = vmatpush1.bf16.xpose.msra.mxu0 0
    %4453 = vmatprep.subr.bf16.mxu0 0
    %4454 = vmatpush1.bf16.xpose.msra.mxu0 0
    %4455 = vmatprep.subr.bf16.mxu0 0
    %4456 = vmatpush1.bf16.xpose.msra.mxu0 0
    %4457 = vmatprep.subr.bf16.mxu0 0
    %4458 = vmatpush1.bf16.xpose.msra.mxu0 0
    %4459 = vmatprep.subr.bf16.mxu0 0
    %4460 = vmatpush1.bf16.xpose.msra.mxu0 0
    %4461 = vmatprep.subr.bf16.mxu0 0
    %4462 = vmatpush1.bf16.xpose.msra.mxu0 0
    %4463 = vmatprep.mubr.bf16.mxu0 %v940
    %4464 = vmatmul.mubr.bf16.gmra.mrb[0].mxu0 %v926
    %v4465 = vpop.f32.mrb[0].mxu0
    %v4466 = vadd.f32 %v4426, %v4465
    %v4467 = vpop.f32.mrb[0].mxu0
    %v4468 = vpop.f32.mrb[0].mxu0
    %v4469 = vpop.f32.mrb[0].mxu0
    %4470 = vdwg.mxu0
    %4471 = vmatprep.subr.bf16.mxu0 %v1982
    %4472 = vmatpush1.bf16.xpose.msra.mxu0 %v1981
    %4473 = vmatprep.subr.bf16.mxu0 0
    %4474 = vmatpush1.bf16.xpose.msra.mxu0 0
    %4475 = vmatprep.subr.bf16.mxu0 0
    %4476 = vmatpush1.bf16.xpose.msra.mxu0 0
    %4477 = vmatprep.subr.bf16.mxu0 0
    %4478 = vmatpush1.bf16.xpose.msra.mxu0 0
    %4479 = vmatprep.subr.bf16.mxu0 0
    %4480 = vmatpush1.bf16.xpose.msra.mxu0 0
    %4481 = vmatprep.subr.bf16.mxu0 0
    %4482 = vmatpush1.bf16.xpose.msra.mxu0 0
    %4483 = vmatprep.subr.bf16.mxu0 0
    %4484 = vmatpush1.bf16.xpose.msra.mxu0 0
    %4485 = vmatprep.subr.bf16.mxu0 0
    %4486 = vmatpush1.bf16.xpose.msra.mxu0 0
    %4487 = vmatprep.subr.bf16.mxu0 0
    %4488 = vmatpush1.bf16.xpose.msra.mxu0 0
    %4489 = vmatprep.subr.bf16.mxu0 0
    %4490 = vmatpush1.bf16.xpose.msra.mxu0 0
    %4491 = vmatprep.subr.bf16.mxu0 0
    %4492 = vmatpush1.bf16.xpose.msra.mxu0 0
    %4493 = vmatprep.subr.bf16.mxu0 0
    %4494 = vmatpush1.bf16.xpose.msra.mxu0 0
    %4495 = vmatprep.subr.bf16.mxu0 0
    %4496 = vmatpush1.bf16.xpose.msra.mxu0 0
    %4497 = vmatprep.subr.bf16.mxu0 0
    %4498 = vmatpush1.bf16.xpose.msra.mxu0 0
    %4499 = vmatprep.subr.bf16.mxu0 0
    %4500 = vmatpush1.bf16.xpose.msra.mxu0 0
    %4501 = vmatprep.subr.bf16.mxu0 0
    %4502 = vmatpush1.bf16.xpose.msra.mxu0 0
    %4503 = vmatprep.mubr.bf16.mxu0 %v950
    %4504 = vmatmul.mubr.bf16.gmra.mrb[0].mxu0 %v948
    %v4505 = vpop.f32.mrb[0].mxu0
    %v4506 = vadd.f32 %v4466, %v4505
    %v4507 = vpop.f32.mrb[0].mxu0
    %v4508 = vpop.f32.mrb[0].mxu0
    %v4509 = vpop.f32.mrb[0].mxu0
    %4510 = vdwg.mxu0
    %4511 = vmatprep.subr.bf16.mxu0 %v1984
    %4512 = vmatpush1.bf16.xpose.msra.mxu0 %v1983
    %4513 = vmatprep.subr.bf16.mxu0 0
    %4514 = vmatpush1.bf16.xpose.msra.mxu0 0
    %4515 = vmatprep.subr.bf16.mxu0 0
    %4516 = vmatpush1.bf16.xpose.msra.mxu0 0
    %4517 = vmatprep.subr.bf16.mxu0 0
    %4518 = vmatpush1.bf16.xpose.msra.mxu0 0
    %4519 = vmatprep.subr.bf16.mxu0 0
    %4520 = vmatpush1.bf16.xpose.msra.mxu0 0
    %4521 = vmatprep.subr.bf16.mxu0 0
    %4522 = vmatpush1.bf16.xpose.msra.mxu0 0
    %4523 = vmatprep.subr.bf16.mxu0 0
    %4524 = vmatpush1.bf16.xpose.msra.mxu0 0
    %4525 = vmatprep.subr.bf16.mxu0 0
    %4526 = vmatpush1.bf16.xpose.msra.mxu0 0
    %4527 = vmatprep.subr.bf16.mxu0 0
    %4528 = vmatpush1.bf16.xpose.msra.mxu0 0
    %4529 = vmatprep.subr.bf16.mxu0 0
    %4530 = vmatpush1.bf16.xpose.msra.mxu0 0
    %4531 = vmatprep.subr.bf16.mxu0 0
    %4532 = vmatpush1.bf16.xpose.msra.mxu0 0
    %4533 = vmatprep.subr.bf16.mxu0 0
    %4534 = vmatpush1.bf16.xpose.msra.mxu0 0
    %4535 = vmatprep.subr.bf16.mxu0 0
    %4536 = vmatpush1.bf16.xpose.msra.mxu0 0
    %4537 = vmatprep.subr.bf16.mxu0 0
    %4538 = vmatpush1.bf16.xpose.msra.mxu0 0
    %4539 = vmatprep.subr.bf16.mxu0 0
    %4540 = vmatpush1.bf16.xpose.msra.mxu0 0
    %4541 = vmatprep.subr.bf16.mxu0 0
    %4542 = vmatpush1.bf16.xpose.msra.mxu0 0
    %4543 = vmatprep.mubr.bf16.mxu0 %v947
    %4544 = vmatmul.mubr.bf16.gmra.mrb[0].mxu0 %v933
    %v4545 = vpop.f32.mrb[0].mxu0
    %v4546 = vadd.f32 %v4506, %v4545
    %v4547 = vpop.f32.mrb[0].mxu0
    %v4548 = vpop.f32.mrb[0].mxu0
    %v4549 = vpop.f32.mrb[0].mxu0
    %4550 = vdwg.mxu0
    %4551 = vmatprep.subr.bf16.mxu0 %v1986
    %4552 = vmatpush1.bf16.xpose.msra.mxu0 %v1985
    %4553 = vmatprep.subr.bf16.mxu0 0
    %4554 = vmatpush1.bf16.xpose.msra.mxu0 0
    %4555 = vmatprep.subr.bf16.mxu0 0
    %4556 = vmatpush1.bf16.xpose.msra.mxu0 0
    %4557 = vmatprep.subr.bf16.mxu0 0
    %4558 = vmatpush1.bf16.xpose.msra.mxu0 0
    %4559 = vmatprep.subr.bf16.mxu0 0
    %4560 = vmatpush1.bf16.xpose.msra.mxu0 0
    %4561 = vmatprep.subr.bf16.mxu0 0
    %4562 = vmatpush1.bf16.xpose.msra.mxu0 0
    %4563 = vmatprep.subr.bf16.mxu0 0
    %4564 = vmatpush1.bf16.xpose.msra.mxu0 0
    %4565 = vmatprep.subr.bf16.mxu0 0
    %4566 = vmatpush1.bf16.xpose.msra.mxu0 0
    %4567 = vmatprep.subr.bf16.mxu0 0
    %4568 = vmatpush1.bf16.xpose.msra.mxu0 0
    %4569 = vmatprep.subr.bf16.mxu0 0
    %4570 = vmatpush1.bf16.xpose.msra.mxu0 0
    %4571 = vmatprep.subr.bf16.mxu0 0
    %4572 = vmatpush1.bf16.xpose.msra.mxu0 0
    %4573 = vmatprep.subr.bf16.mxu0 0
    %4574 = vmatpush1.bf16.xpose.msra.mxu0 0
    %4575 = vmatprep.subr.bf16.mxu0 0
    %4576 = vmatpush1.bf16.xpose.msra.mxu0 0
    %4577 = vmatprep.subr.bf16.mxu0 0
    %4578 = vmatpush1.bf16.xpose.msra.mxu0 0
    %4579 = vmatprep.subr.bf16.mxu0 0
    %4580 = vmatpush1.bf16.xpose.msra.mxu0 0
    %4581 = vmatprep.subr.bf16.mxu0 0
    %4582 = vmatpush1.bf16.xpose.msra.mxu0 0
    %4583 = vmatprep.mubr.bf16.mxu0 %v951
    %4584 = vmatmul.mubr.bf16.gmra.mrb[0].mxu0 %v949
    %v4585 = vpop.f32.mrb[0].mxu0
    %v4586 = vadd.f32 %v4546, %v4585
    %v4587 = vpop.f32.mrb[0].mxu0
    %v4588 = vpop.f32.mrb[0].mxu0
    %v4589 = vpop.f32.mrb[0].mxu0
    %4590 = vdwg.mxu0
    %4591 = vmatprep.subr.bf16.mxu0 %v1988
    %4592 = vmatpush1.bf16.xpose.msra.mxu0 %v1987
    %4593 = vmatprep.subr.bf16.mxu0 0
    %4594 = vmatpush1.bf16.xpose.msra.mxu0 0
    %4595 = vmatprep.subr.bf16.mxu0 0
    %4596 = vmatpush1.bf16.xpose.msra.mxu0 0
    %4597 = vmatprep.subr.bf16.mxu0 0
    %4598 = vmatpush1.bf16.xpose.msra.mxu0 0
    %4599 = vmatprep.subr.bf16.mxu0 0
    %4600 = vmatpush1.bf16.xpose.msra.mxu0 0
    %4601 = vmatprep.subr.bf16.mxu0 0
    %4602 = vmatpush1.bf16.xpose.msra.mxu0 0
    %4603 = vmatprep.subr.bf16.mxu0 0
    %4604 = vmatpush1.bf16.xpose.msra.mxu0 0
    %4605 = vmatprep.subr.bf16.mxu0 0
    %4606 = vmatpush1.bf16.xpose.msra.mxu0 0
    %4607 = vmatprep.subr.bf16.mxu0 0
    %4608 = vmatpush1.bf16.xpose.msra.mxu0 0
    %4609 = vmatprep.subr.bf16.mxu0 0
    %4610 = vmatpush1.bf16.xpose.msra.mxu0 0
    %4611 = vmatprep.subr.bf16.mxu0 0
    %4612 = vmatpush1.bf16.xpose.msra.mxu0 0
    %4613 = vmatprep.subr.bf16.mxu0 0
    %4614 = vmatpush1.bf16.xpose.msra.mxu0 0
    %4615 = vmatprep.subr.bf16.mxu0 0
    %4616 = vmatpush1.bf16.xpose.msra.mxu0 0
    %4617 = vmatprep.subr.bf16.mxu0 0
    %4618 = vmatpush1.bf16.xpose.msra.mxu0 0
    %4619 = vmatprep.subr.bf16.mxu0 0
    %4620 = vmatpush1.bf16.xpose.msra.mxu0 0
    %4621 = vmatprep.subr.bf16.mxu0 0
    %4622 = vmatpush1.bf16.xpose.msra.mxu0 0
    %4623 = vmatprep.mubr.bf16.mxu0 %v989
    %4624 = vmatmul.mubr.bf16.gmra.mrb[0].mxu0 %v975
    %v4625 = vpop.f32.mrb[0].mxu0
    %v4626 = vadd.f32 %v4586, %v4625
    %v4627 = vpop.f32.mrb[0].mxu0
    %v4628 = vpop.f32.mrb[0].mxu0
    %v4629 = vpop.f32.mrb[0].mxu0
    %4630 = vdwg.mxu0
    %4631 = vmatprep.subr.bf16.mxu0 %v1990
    %4632 = vmatpush1.bf16.xpose.msra.mxu0 %v1989
    %4633 = vmatprep.subr.bf16.mxu0 0
    %4634 = vmatpush1.bf16.xpose.msra.mxu0 0
    %4635 = vmatprep.subr.bf16.mxu0 0
    %4636 = vmatpush1.bf16.xpose.msra.mxu0 0
    %4637 = vmatprep.subr.bf16.mxu0 0
    %4638 = vmatpush1.bf16.xpose.msra.mxu0 0
    %4639 = vmatprep.subr.bf16.mxu0 0
    %4640 = vmatpush1.bf16.xpose.msra.mxu0 0
    %4641 = vmatprep.subr.bf16.mxu0 0
    %4642 = vmatpush1.bf16.xpose.msra.mxu0 0
    %4643 = vmatprep.subr.bf16.mxu0 0
    %4644 = vmatpush1.bf16.xpose.msra.mxu0 0
    %4645 = vmatprep.subr.bf16.mxu0 0
    %4646 = vmatpush1.bf16.xpose.msra.mxu0 0
    %4647 = vmatprep.subr.bf16.mxu0 0
    %4648 = vmatpush1.bf16.xpose.msra.mxu0 0
    %4649 = vmatprep.subr.bf16.mxu0 0
    %4650 = vmatpush1.bf16.xpose.msra.mxu0 0
    %4651 = vmatprep.subr.bf16.mxu0 0
    %4652 = vmatpush1.bf16.xpose.msra.mxu0 0
    %4653 = vmatprep.subr.bf16.mxu0 0
    %4654 = vmatpush1.bf16.xpose.msra.mxu0 0
    %4655 = vmatprep.subr.bf16.mxu0 0
    %4656 = vmatpush1.bf16.xpose.msra.mxu0 0
    %4657 = vmatprep.subr.bf16.mxu0 0
    %4658 = vmatpush1.bf16.xpose.msra.mxu0 0
    %4659 = vmatprep.subr.bf16.mxu0 0
    %4660 = vmatpush1.bf16.xpose.msra.mxu0 0
    %4661 = vmatprep.subr.bf16.mxu0 0
    %4662 = vmatpush1.bf16.xpose.msra.mxu0 0
    %4663 = vmatprep.mubr.bf16.mxu0 %v999
    %4664 = vmatmul.mubr.bf16.gmra.mrb[0].mxu0 %v997
    %v4665 = vpop.f32.mrb[0].mxu0
    %v4666 = vadd.f32 %v4626, %v4665
    %v4667 = vpop.f32.mrb[0].mxu0
    %v4668 = vpop.f32.mrb[0].mxu0
    %v4669 = vpop.f32.mrb[0].mxu0
    %4670 = vdwg.mxu0
    %4671 = vmatprep.subr.bf16.mxu0 %v1992
    %4672 = vmatpush1.bf16.xpose.msra.mxu0 %v1991
    %4673 = vmatprep.subr.bf16.mxu0 0
    %4674 = vmatpush1.bf16.xpose.msra.mxu0 0
    %4675 = vmatprep.subr.bf16.mxu0 0
    %4676 = vmatpush1.bf16.xpose.msra.mxu0 0
    %4677 = vmatprep.subr.bf16.mxu0 0
    %4678 = vmatpush1.bf16.xpose.msra.mxu0 0
    %4679 = vmatprep.subr.bf16.mxu0 0
    %4680 = vmatpush1.bf16.xpose.msra.mxu0 0
    %4681 = vmatprep.subr.bf16.mxu0 0
    %4682 = vmatpush1.bf16.xpose.msra.mxu0 0
    %4683 = vmatprep.subr.bf16.mxu0 0
    %4684 = vmatpush1.bf16.xpose.msra.mxu0 0
    %4685 = vmatprep.subr.bf16.mxu0 0
    %4686 = vmatpush1.bf16.xpose.msra.mxu0 0
    %4687 = vmatprep.subr.bf16.mxu0 0
    %4688 = vmatpush1.bf16.xpose.msra.mxu0 0
    %4689 = vmatprep.subr.bf16.mxu0 0
    %4690 = vmatpush1.bf16.xpose.msra.mxu0 0
    %4691 = vmatprep.subr.bf16.mxu0 0
    %4692 = vmatpush1.bf16.xpose.msra.mxu0 0
    %4693 = vmatprep.subr.bf16.mxu0 0
    %4694 = vmatpush1.bf16.xpose.msra.mxu0 0
    %4695 = vmatprep.subr.bf16.mxu0 0
    %4696 = vmatpush1.bf16.xpose.msra.mxu0 0
    %4697 = vmatprep.subr.bf16.mxu0 0
    %4698 = vmatpush1.bf16.xpose.msra.mxu0 0
    %4699 = vmatprep.subr.bf16.mxu0 0
    %4700 = vmatpush1.bf16.xpose.msra.mxu0 0
    %4701 = vmatprep.subr.bf16.mxu0 0
    %4702 = vmatpush1.bf16.xpose.msra.mxu0 0
    %4703 = vmatprep.mubr.bf16.mxu0 %v996
    %4704 = vmatmul.mubr.bf16.gmra.mrb[0].mxu0 %v982
    %v4705 = vpop.f32.mrb[0].mxu0
    %v4706 = vadd.f32 %v4666, %v4705
    %v4707 = vpop.f32.mrb[0].mxu0
    %v4708 = vpop.f32.mrb[0].mxu0
    %v4709 = vpop.f32.mrb[0].mxu0
    %4710 = vdwg.mxu0
    %4711 = vmatprep.subr.bf16.mxu0 %v1994
    %4712 = vmatpush1.bf16.xpose.msra.mxu0 %v1993
    %4713 = vmatprep.subr.bf16.mxu0 0
    %4714 = vmatpush1.bf16.xpose.msra.mxu0 0
    %4715 = vmatprep.subr.bf16.mxu0 0
    %4716 = vmatpush1.bf16.xpose.msra.mxu0 0
    %4717 = vmatprep.subr.bf16.mxu0 0
    %4718 = vmatpush1.bf16.xpose.msra.mxu0 0
    %4719 = vmatprep.subr.bf16.mxu0 0
    %4720 = vmatpush1.bf16.xpose.msra.mxu0 0
    %4721 = vmatprep.subr.bf16.mxu0 0
    %4722 = vmatpush1.bf16.xpose.msra.mxu0 0
    %4723 = vmatprep.subr.bf16.mxu0 0
    %4724 = vmatpush1.bf16.xpose.msra.mxu0 0
    %4725 = vmatprep.subr.bf16.mxu0 0
    %4726 = vmatpush1.bf16.xpose.msra.mxu0 0
    %4727 = vmatprep.subr.bf16.mxu0 0
    %4728 = vmatpush1.bf16.xpose.msra.mxu0 0
    %4729 = vmatprep.subr.bf16.mxu0 0
    %4730 = vmatpush1.bf16.xpose.msra.mxu0 0
    %4731 = vmatprep.subr.bf16.mxu0 0
    %4732 = vmatpush1.bf16.xpose.msra.mxu0 0
    %4733 = vmatprep.subr.bf16.mxu0 0
    %4734 = vmatpush1.bf16.xpose.msra.mxu0 0
    %4735 = vmatprep.subr.bf16.mxu0 0
    %4736 = vmatpush1.bf16.xpose.msra.mxu0 0
    %4737 = vmatprep.subr.bf16.mxu0 0
    %4738 = vmatpush1.bf16.xpose.msra.mxu0 0
    %4739 = vmatprep.subr.bf16.mxu0 0
    %4740 = vmatpush1.bf16.xpose.msra.mxu0 0
    %4741 = vmatprep.subr.bf16.mxu0 0
    %4742 = vmatpush1.bf16.xpose.msra.mxu0 0
    %4743 = vmatprep.mubr.bf16.mxu0 %v1000
    %4744 = vmatmul.mubr.bf16.gmra.mrb[0].mxu0 %v998
    %v4745 = vpop.f32.mrb[0].mxu0
    %v4746 = vadd.f32 %v4706, %v4745
    %v4747 = vpop.f32.mrb[0].mxu0
    %v4748 = vpop.f32.mrb[0].mxu0
    %v4749 = vpop.f32.mrb[0].mxu0
    %4750 = vdwg.mxu0
    %4751 = vmatprep.subr.bf16.mxu0 %v1996
    %4752 = vmatpush1.bf16.xpose.msra.mxu0 %v1995
    %4753 = vmatprep.subr.bf16.mxu0 0
    %4754 = vmatpush1.bf16.xpose.msra.mxu0 0
    %4755 = vmatprep.subr.bf16.mxu0 0
    %4756 = vmatpush1.bf16.xpose.msra.mxu0 0
    %4757 = vmatprep.subr.bf16.mxu0 0
    %4758 = vmatpush1.bf16.xpose.msra.mxu0 0
    %4759 = vmatprep.subr.bf16.mxu0 0
    %4760 = vmatpush1.bf16.xpose.msra.mxu0 0
    %4761 = vmatprep.subr.bf16.mxu0 0
    %4762 = vmatpush1.bf16.xpose.msra.mxu0 0
    %4763 = vmatprep.subr.bf16.mxu0 0
    %4764 = vmatpush1.bf16.xpose.msra.mxu0 0
    %4765 = vmatprep.subr.bf16.mxu0 0
    %4766 = vmatpush1.bf16.xpose.msra.mxu0 0
    %4767 = vmatprep.subr.bf16.mxu0 0
    %4768 = vmatpush1.bf16.xpose.msra.mxu0 0
    %4769 = vmatprep.subr.bf16.mxu0 0
    %4770 = vmatpush1.bf16.xpose.msra.mxu0 0
    %4771 = vmatprep.subr.bf16.mxu0 0
    %4772 = vmatpush1.bf16.xpose.msra.mxu0 0
    %4773 = vmatprep.subr.bf16.mxu0 0
    %4774 = vmatpush1.bf16.xpose.msra.mxu0 0
    %4775 = vmatprep.subr.bf16.mxu0 0
    %4776 = vmatpush1.bf16.xpose.msra.mxu0 0
    %4777 = vmatprep.subr.bf16.mxu0 0
    %4778 = vmatpush1.bf16.xpose.msra.mxu0 0
    %4779 = vmatprep.subr.bf16.mxu0 0
    %4780 = vmatpush1.bf16.xpose.msra.mxu0 0
    %4781 = vmatprep.subr.bf16.mxu0 0
    %4782 = vmatpush1.bf16.xpose.msra.mxu0 0
    %4783 = vmatprep.mubr.bf16.mxu0 %v1038
    %4784 = vmatmul.mubr.bf16.gmra.mrb[0].mxu0 %v1024
    %v4785 = vpop.f32.mrb[0].mxu0
    %v4786 = vadd.f32 %v4746, %v4785
    %v4787 = vpop.f32.mrb[0].mxu0
    %v4788 = vpop.f32.mrb[0].mxu0
    %v4789 = vpop.f32.mrb[0].mxu0
    %4790 = vdwg.mxu0
    %4791 = vmatprep.subr.bf16.mxu0 %v1998
    %4792 = vmatpush1.bf16.xpose.msra.mxu0 %v1997
    %4793 = vmatprep.subr.bf16.mxu0 0
    %4794 = vmatpush1.bf16.xpose.msra.mxu0 0
    %4795 = vmatprep.subr.bf16.mxu0 0
    %4796 = vmatpush1.bf16.xpose.msra.mxu0 0
    %4797 = vmatprep.subr.bf16.mxu0 0
    %4798 = vmatpush1.bf16.xpose.msra.mxu0 0
    %4799 = vmatprep.subr.bf16.mxu0 0
    %4800 = vmatpush1.bf16.xpose.msra.mxu0 0
    %4801 = vmatprep.subr.bf16.mxu0 0
    %4802 = vmatpush1.bf16.xpose.msra.mxu0 0
    %4803 = vmatprep.subr.bf16.mxu0 0
    %4804 = vmatpush1.bf16.xpose.msra.mxu0 0
    %4805 = vmatprep.subr.bf16.mxu0 0
    %4806 = vmatpush1.bf16.xpose.msra.mxu0 0
    %4807 = vmatprep.subr.bf16.mxu0 0
    %4808 = vmatpush1.bf16.xpose.msra.mxu0 0
    %4809 = vmatprep.subr.bf16.mxu0 0
    %4810 = vmatpush1.bf16.xpose.msra.mxu0 0
    %4811 = vmatprep.subr.bf16.mxu0 0
    %4812 = vmatpush1.bf16.xpose.msra.mxu0 0
    %4813 = vmatprep.subr.bf16.mxu0 0
    %4814 = vmatpush1.bf16.xpose.msra.mxu0 0
    %4815 = vmatprep.subr.bf16.mxu0 0
    %4816 = vmatpush1.bf16.xpose.msra.mxu0 0
    %4817 = vmatprep.subr.bf16.mxu0 0
    %4818 = vmatpush1.bf16.xpose.msra.mxu0 0
    %4819 = vmatprep.subr.bf16.mxu0 0
    %4820 = vmatpush1.bf16.xpose.msra.mxu0 0
    %4821 = vmatprep.subr.bf16.mxu0 0
    %4822 = vmatpush1.bf16.xpose.msra.mxu0 0
    %4823 = vmatprep.mubr.bf16.mxu0 %v1048
    %4824 = vmatmul.mubr.bf16.gmra.mrb[0].mxu0 %v1046
    %v4825 = vpop.f32.mrb[0].mxu0
    %v4826 = vadd.f32 %v4786, %v4825
    %v4827 = vpop.f32.mrb[0].mxu0
    %v4828 = vpop.f32.mrb[0].mxu0
    %v4829 = vpop.f32.mrb[0].mxu0
    %4830 = vdwg.mxu0
    %4831 = vmatprep.subr.bf16.mxu0 %v2000
    %4832 = vmatpush1.bf16.xpose.msra.mxu0 %v1999
    %4833 = vmatprep.subr.bf16.mxu0 0
    %4834 = vmatpush1.bf16.xpose.msra.mxu0 0
    %4835 = vmatprep.subr.bf16.mxu0 0
    %4836 = vmatpush1.bf16.xpose.msra.mxu0 0
    %4837 = vmatprep.subr.bf16.mxu0 0
    %4838 = vmatpush1.bf16.xpose.msra.mxu0 0
    %4839 = vmatprep.subr.bf16.mxu0 0
    %4840 = vmatpush1.bf16.xpose.msra.mxu0 0
    %4841 = vmatprep.subr.bf16.mxu0 0
    %4842 = vmatpush1.bf16.xpose.msra.mxu0 0
    %4843 = vmatprep.subr.bf16.mxu0 0
    %4844 = vmatpush1.bf16.xpose.msra.mxu0 0
    %4845 = vmatprep.subr.bf16.mxu0 0
    %4846 = vmatpush1.bf16.xpose.msra.mxu0 0
    %4847 = vmatprep.subr.bf16.mxu0 0
    %4848 = vmatpush1.bf16.xpose.msra.mxu0 0
    %4849 = vmatprep.subr.bf16.mxu0 0
    %4850 = vmatpush1.bf16.xpose.msra.mxu0 0
    %4851 = vmatprep.subr.bf16.mxu0 0
    %4852 = vmatpush1.bf16.xpose.msra.mxu0 0
    %4853 = vmatprep.subr.bf16.mxu0 0
    %4854 = vmatpush1.bf16.xpose.msra.mxu0 0
    %4855 = vmatprep.subr.bf16.mxu0 0
    %4856 = vmatpush1.bf16.xpose.msra.mxu0 0
    %4857 = vmatprep.subr.bf16.mxu0 0
    %4858 = vmatpush1.bf16.xpose.msra.mxu0 0
    %4859 = vmatprep.subr.bf16.mxu0 0
    %4860 = vmatpush1.bf16.xpose.msra.mxu0 0
    %4861 = vmatprep.subr.bf16.mxu0 0
    %4862 = vmatpush1.bf16.xpose.msra.mxu0 0
    %4863 = vmatprep.mubr.bf16.mxu0 %v1045
    %4864 = vmatmul.mubr.bf16.gmra.mrb[0].mxu0 %v1031
    %v4865 = vpop.f32.mrb[0].mxu0
    %v4866 = vadd.f32 %v4826, %v4865
    %v4867 = vpop.f32.mrb[0].mxu0
    %v4868 = vpop.f32.mrb[0].mxu0
    %v4869 = vpop.f32.mrb[0].mxu0
    %4870 = vdwg.mxu0
    %4871 = vmatprep.subr.bf16.mxu0 %v2002
    %4872 = vmatpush1.bf16.xpose.msra.mxu0 %v2001
    %4873 = vmatprep.subr.bf16.mxu0 0
    %4874 = vmatpush1.bf16.xpose.msra.mxu0 0
    %4875 = vmatprep.subr.bf16.mxu0 0
    %4876 = vmatpush1.bf16.xpose.msra.mxu0 0
    %4877 = vmatprep.subr.bf16.mxu0 0
    %4878 = vmatpush1.bf16.xpose.msra.mxu0 0
    %4879 = vmatprep.subr.bf16.mxu0 0
    %4880 = vmatpush1.bf16.xpose.msra.mxu0 0
    %4881 = vmatprep.subr.bf16.mxu0 0
    %4882 = vmatpush1.bf16.xpose.msra.mxu0 0
    %4883 = vmatprep.subr.bf16.mxu0 0
    %4884 = vmatpush1.bf16.xpose.msra.mxu0 0
    %4885 = vmatprep.subr.bf16.mxu0 0
    %4886 = vmatpush1.bf16.xpose.msra.mxu0 0
    %4887 = vmatprep.subr.bf16.mxu0 0
    %4888 = vmatpush1.bf16.xpose.msra.mxu0 0
    %4889 = vmatprep.subr.bf16.mxu0 0
    %4890 = vmatpush1.bf16.xpose.msra.mxu0 0
    %4891 = vmatprep.subr.bf16.mxu0 0
    %4892 = vmatpush1.bf16.xpose.msra.mxu0 0
    %4893 = vmatprep.subr.bf16.mxu0 0
    %4894 = vmatpush1.bf16.xpose.msra.mxu0 0
    %4895 = vmatprep.subr.bf16.mxu0 0
    %4896 = vmatpush1.bf16.xpose.msra.mxu0 0
    %4897 = vmatprep.subr.bf16.mxu0 0
    %4898 = vmatpush1.bf16.xpose.msra.mxu0 0
    %4899 = vmatprep.subr.bf16.mxu0 0
    %4900 = vmatpush1.bf16.xpose.msra.mxu0 0
    %4901 = vmatprep.subr.bf16.mxu0 0
    %4902 = vmatpush1.bf16.xpose.msra.mxu0 0
    %4903 = vmatprep.mubr.bf16.mxu0 %v1049
    %4904 = vmatmul.mubr.bf16.gmra.mrb[0].mxu0 %v1047
    %v4905 = vpop.f32.mrb[0].mxu0
    %v4906 = vadd.f32 %v4866, %v4905
    %v4907 = vpop.f32.mrb[0].mxu0
    %v4908 = vpop.f32.mrb[0].mxu0
    %v4909 = vpop.f32.mrb[0].mxu0
    %4910 = vdwg.mxu0
    %4911 = vmatprep.subr.bf16.mxu0 %v2004
    %4912 = vmatpush1.bf16.xpose.msra.mxu0 %v2003
    %4913 = vmatprep.subr.bf16.mxu0 0
    %4914 = vmatpush1.bf16.xpose.msra.mxu0 0
    %4915 = vmatprep.subr.bf16.mxu0 0
    %4916 = vmatpush1.bf16.xpose.msra.mxu0 0
    %4917 = vmatprep.subr.bf16.mxu0 0
    %4918 = vmatpush1.bf16.xpose.msra.mxu0 0
    %4919 = vmatprep.subr.bf16.mxu0 0
    %4920 = vmatpush1.bf16.xpose.msra.mxu0 0
    %4921 = vmatprep.subr.bf16.mxu0 0
    %4922 = vmatpush1.bf16.xpose.msra.mxu0 0
    %4923 = vmatprep.subr.bf16.mxu0 0
    %4924 = vmatpush1.bf16.xpose.msra.mxu0 0
    %4925 = vmatprep.subr.bf16.mxu0 0
    %4926 = vmatpush1.bf16.xpose.msra.mxu0 0
    %4927 = vmatprep.subr.bf16.mxu0 0
    %4928 = vmatpush1.bf16.xpose.msra.mxu0 0
    %4929 = vmatprep.subr.bf16.mxu0 0
    %4930 = vmatpush1.bf16.xpose.msra.mxu0 0
    %4931 = vmatprep.subr.bf16.mxu0 0
    %4932 = vmatpush1.bf16.xpose.msra.mxu0 0
    %4933 = vmatprep.subr.bf16.mxu0 0
    %4934 = vmatpush1.bf16.xpose.msra.mxu0 0
    %4935 = vmatprep.subr.bf16.mxu0 0
    %4936 = vmatpush1.bf16.xpose.msra.mxu0 0
    %4937 = vmatprep.subr.bf16.mxu0 0
    %4938 = vmatpush1.bf16.xpose.msra.mxu0 0
    %4939 = vmatprep.subr.bf16.mxu0 0
    %4940 = vmatpush1.bf16.xpose.msra.mxu0 0
    %4941 = vmatprep.subr.bf16.mxu0 0
    %4942 = vmatpush1.bf16.xpose.msra.mxu0 0
    %4943 = vmatprep.mubr.bf16.mxu0 %v1087
    %4944 = vmatmul.mubr.bf16.gmra.mrb[0].mxu0 %v1073
    %v4945 = vpop.f32.mrb[0].mxu0
    %v4946 = vadd.f32 %v4906, %v4945
    %v4947 = vpop.f32.mrb[0].mxu0
    %v4948 = vpop.f32.mrb[0].mxu0
    %v4949 = vpop.f32.mrb[0].mxu0
    %4950 = vdwg.mxu0
    %4951 = vmatprep.subr.bf16.mxu0 %v2006
    %4952 = vmatpush1.bf16.xpose.msra.mxu0 %v2005
    %4953 = vmatprep.subr.bf16.mxu0 0
    %4954 = vmatpush1.bf16.xpose.msra.mxu0 0
    %4955 = vmatprep.subr.bf16.mxu0 0
    %4956 = vmatpush1.bf16.xpose.msra.mxu0 0
    %4957 = vmatprep.subr.bf16.mxu0 0
    %4958 = vmatpush1.bf16.xpose.msra.mxu0 0
    %4959 = vmatprep.subr.bf16.mxu0 0
    %4960 = vmatpush1.bf16.xpose.msra.mxu0 0
    %4961 = vmatprep.subr.bf16.mxu0 0
    %4962 = vmatpush1.bf16.xpose.msra.mxu0 0
    %4963 = vmatprep.subr.bf16.mxu0 0
    %4964 = vmatpush1.bf16.xpose.msra.mxu0 0
    %4965 = vmatprep.subr.bf16.mxu0 0
    %4966 = vmatpush1.bf16.xpose.msra.mxu0 0
    %4967 = vmatprep.subr.bf16.mxu0 0
    %4968 = vmatpush1.bf16.xpose.msra.mxu0 0
    %4969 = vmatprep.subr.bf16.mxu0 0
    %4970 = vmatpush1.bf16.xpose.msra.mxu0 0
    %4971 = vmatprep.subr.bf16.mxu0 0
    %4972 = vmatpush1.bf16.xpose.msra.mxu0 0
    %4973 = vmatprep.subr.bf16.mxu0 0
    %4974 = vmatpush1.bf16.xpose.msra.mxu0 0
    %4975 = vmatprep.subr.bf16.mxu0 0
    %4976 = vmatpush1.bf16.xpose.msra.mxu0 0
    %4977 = vmatprep.subr.bf16.mxu0 0
    %4978 = vmatpush1.bf16.xpose.msra.mxu0 0
    %4979 = vmatprep.subr.bf16.mxu0 0
    %4980 = vmatpush1.bf16.xpose.msra.mxu0 0
    %4981 = vmatprep.subr.bf16.mxu0 0
    %4982 = vmatpush1.bf16.xpose.msra.mxu0 0
    %4983 = vmatprep.mubr.bf16.mxu0 %v1097
    %4984 = vmatmul.mubr.bf16.gmra.mrb[0].mxu0 %v1095
    %v4985 = vpop.f32.mrb[0].mxu0
    %v4986 = vadd.f32 %v4946, %v4985
    %v4987 = vpop.f32.mrb[0].mxu0
    %v4988 = vpop.f32.mrb[0].mxu0
    %v4989 = vpop.f32.mrb[0].mxu0
    %4990 = vdwg.mxu0
    %4991 = vmatprep.subr.bf16.mxu0 %v2008
    %4992 = vmatpush1.bf16.xpose.msra.mxu0 %v2007
    %4993 = vmatprep.subr.bf16.mxu0 0
    %4994 = vmatpush1.bf16.xpose.msra.mxu0 0
    %4995 = vmatprep.subr.bf16.mxu0 0
    %4996 = vmatpush1.bf16.xpose.msra.mxu0 0
    %4997 = vmatprep.subr.bf16.mxu0 0
    %4998 = vmatpush1.bf16.xpose.msra.mxu0 0
    %4999 = vmatprep.subr.bf16.mxu0 0
    %5000 = vmatpush1.bf16.xpose.msra.mxu0 0
    %5001 = vmatprep.subr.bf16.mxu0 0
    %5002 = vmatpush1.bf16.xpose.msra.mxu0 0
    %5003 = vmatprep.subr.bf16.mxu0 0
    %5004 = vmatpush1.bf16.xpose.msra.mxu0 0
    %5005 = vmatprep.subr.bf16.mxu0 0
    %5006 = vmatpush1.bf16.xpose.msra.mxu0 0
    %5007 = vmatprep.subr.bf16.mxu0 0
    %5008 = vmatpush1.bf16.xpose.msra.mxu0 0
    %5009 = vmatprep.subr.bf16.mxu0 0
    %5010 = vmatpush1.bf16.xpose.msra.mxu0 0
    %5011 = vmatprep.subr.bf16.mxu0 0
    %5012 = vmatpush1.bf16.xpose.msra.mxu0 0
    %5013 = vmatprep.subr.bf16.mxu0 0
    %5014 = vmatpush1.bf16.xpose.msra.mxu0 0
    %5015 = vmatprep.subr.bf16.mxu0 0
    %5016 = vmatpush1.bf16.xpose.msra.mxu0 0
    %5017 = vmatprep.subr.bf16.mxu0 0
    %5018 = vmatpush1.bf16.xpose.msra.mxu0 0
    %5019 = vmatprep.subr.bf16.mxu0 0
    %5020 = vmatpush1.bf16.xpose.msra.mxu0 0
    %5021 = vmatprep.subr.bf16.mxu0 0
    %5022 = vmatpush1.bf16.xpose.msra.mxu0 0
    %5023 = vmatprep.mubr.bf16.mxu0 %v1094
    %5024 = vmatmul.mubr.bf16.gmra.mrb[0].mxu0 %v1080
    %v5025 = vpop.f32.mrb[0].mxu0
    %v5026 = vadd.f32 %v4986, %v5025
    %v5027 = vpop.f32.mrb[0].mxu0
    %v5028 = vpop.f32.mrb[0].mxu0
    %v5029 = vpop.f32.mrb[0].mxu0
    %5030 = vdwg.mxu0
    %5031 = vmatprep.subr.bf16.mxu0 %v2010
    %5032 = vmatpush1.bf16.xpose.msra.mxu0 %v2009
    %5033 = vmatprep.subr.bf16.mxu0 0
    %5034 = vmatpush1.bf16.xpose.msra.mxu0 0
    %5035 = vmatprep.subr.bf16.mxu0 0
    %5036 = vmatpush1.bf16.xpose.msra.mxu0 0
    %5037 = vmatprep.subr.bf16.mxu0 0
    %5038 = vmatpush1.bf16.xpose.msra.mxu0 0
    %5039 = vmatprep.subr.bf16.mxu0 0
    %5040 = vmatpush1.bf16.xpose.msra.mxu0 0
    %5041 = vmatprep.subr.bf16.mxu0 0
    %5042 = vmatpush1.bf16.xpose.msra.mxu0 0
    %5043 = vmatprep.subr.bf16.mxu0 0
    %5044 = vmatpush1.bf16.xpose.msra.mxu0 0
    %5045 = vmatprep.subr.bf16.mxu0 0
    %5046 = vmatpush1.bf16.xpose.msra.mxu0 0
    %5047 = vmatprep.subr.bf16.mxu0 0
    %5048 = vmatpush1.bf16.xpose.msra.mxu0 0
    %5049 = vmatprep.subr.bf16.mxu0 0
    %5050 = vmatpush1.bf16.xpose.msra.mxu0 0
    %5051 = vmatprep.subr.bf16.mxu0 0
    %5052 = vmatpush1.bf16.xpose.msra.mxu0 0
    %5053 = vmatprep.subr.bf16.mxu0 0
    %5054 = vmatpush1.bf16.xpose.msra.mxu0 0
    %5055 = vmatprep.subr.bf16.mxu0 0
    %5056 = vmatpush1.bf16.xpose.msra.mxu0 0
    %5057 = vmatprep.subr.bf16.mxu0 0
    %5058 = vmatpush1.bf16.xpose.msra.mxu0 0
    %5059 = vmatprep.subr.bf16.mxu0 0
    %5060 = vmatpush1.bf16.xpose.msra.mxu0 0
    %5061 = vmatprep.subr.bf16.mxu0 0
    %5062 = vmatpush1.bf16.xpose.msra.mxu0 0
    %5063 = vmatprep.mubr.bf16.mxu0 %v1098
    %5064 = vmatmul.mubr.bf16.gmra.mrb[0].mxu0 %v1096
    %v5065 = vpop.f32.mrb[0].mxu0
    %v5066 = vadd.f32 %v5026, %v5065
    %v5067 = vpop.f32.mrb[0].mxu0
    %v5068 = vpop.f32.mrb[0].mxu0
    %v5069 = vpop.f32.mrb[0].mxu0
    %5070 = vdwg.mxu0
    %5071 = vmatprep.subr.bf16.mxu0 %v2012
    %5072 = vmatpush1.bf16.xpose.msra.mxu0 %v2011
    %5073 = vmatprep.subr.bf16.mxu0 0
    %5074 = vmatpush1.bf16.xpose.msra.mxu0 0
    %5075 = vmatprep.subr.bf16.mxu0 0
    %5076 = vmatpush1.bf16.xpose.msra.mxu0 0
    %5077 = vmatprep.subr.bf16.mxu0 0
    %5078 = vmatpush1.bf16.xpose.msra.mxu0 0
    %5079 = vmatprep.subr.bf16.mxu0 0
    %5080 = vmatpush1.bf16.xpose.msra.mxu0 0
    %5081 = vmatprep.subr.bf16.mxu0 0
    %5082 = vmatpush1.bf16.xpose.msra.mxu0 0
    %5083 = vmatprep.subr.bf16.mxu0 0
    %5084 = vmatpush1.bf16.xpose.msra.mxu0 0
    %5085 = vmatprep.subr.bf16.mxu0 0
    %5086 = vmatpush1.bf16.xpose.msra.mxu0 0
    %5087 = vmatprep.subr.bf16.mxu0 0
    %5088 = vmatpush1.bf16.xpose.msra.mxu0 0
    %5089 = vmatprep.subr.bf16.mxu0 0
    %5090 = vmatpush1.bf16.xpose.msra.mxu0 0
    %5091 = vmatprep.subr.bf16.mxu0 0
    %5092 = vmatpush1.bf16.xpose.msra.mxu0 0
    %5093 = vmatprep.subr.bf16.mxu0 0
    %5094 = vmatpush1.bf16.xpose.msra.mxu0 0
    %5095 = vmatprep.subr.bf16.mxu0 0
    %5096 = vmatpush1.bf16.xpose.msra.mxu0 0
    %5097 = vmatprep.subr.bf16.mxu0 0
    %5098 = vmatpush1.bf16.xpose.msra.mxu0 0
    %5099 = vmatprep.subr.bf16.mxu0 0
    %5100 = vmatpush1.bf16.xpose.msra.mxu0 0
    %5101 = vmatprep.subr.bf16.mxu0 0
    %5102 = vmatpush1.bf16.xpose.msra.mxu0 0
    %5103 = vmatprep.mubr.bf16.mxu0 %v1136
    %5104 = vmatmul.mubr.bf16.gmra.mrb[0].mxu0 %v1122
    %v5105 = vpop.f32.mrb[0].mxu0
    %v5106 = vadd.f32 %v5066, %v5105
    %v5107 = vpop.f32.mrb[0].mxu0
    %v5108 = vpop.f32.mrb[0].mxu0
    %v5109 = vpop.f32.mrb[0].mxu0
    %5110 = vdwg.mxu0
    %5111 = vmatprep.subr.bf16.mxu0 %v2014
    %5112 = vmatpush1.bf16.xpose.msra.mxu0 %v2013
    %5113 = vmatprep.subr.bf16.mxu0 0
    %5114 = vmatpush1.bf16.xpose.msra.mxu0 0
    %5115 = vmatprep.subr.bf16.mxu0 0
    %5116 = vmatpush1.bf16.xpose.msra.mxu0 0
    %5117 = vmatprep.subr.bf16.mxu0 0
    %5118 = vmatpush1.bf16.xpose.msra.mxu0 0
    %5119 = vmatprep.subr.bf16.mxu0 0
    %5120 = vmatpush1.bf16.xpose.msra.mxu0 0
    %5121 = vmatprep.subr.bf16.mxu0 0
    %5122 = vmatpush1.bf16.xpose.msra.mxu0 0
    %5123 = vmatprep.subr.bf16.mxu0 0
    %5124 = vmatpush1.bf16.xpose.msra.mxu0 0
    %5125 = vmatprep.subr.bf16.mxu0 0
    %5126 = vmatpush1.bf16.xpose.msra.mxu0 0
    %5127 = vmatprep.subr.bf16.mxu0 0
    %5128 = vmatpush1.bf16.xpose.msra.mxu0 0
    %5129 = vmatprep.subr.bf16.mxu0 0
    %5130 = vmatpush1.bf16.xpose.msra.mxu0 0
    %5131 = vmatprep.subr.bf16.mxu0 0
    %5132 = vmatpush1.bf16.xpose.msra.mxu0 0
    %5133 = vmatprep.subr.bf16.mxu0 0
    %5134 = vmatpush1.bf16.xpose.msra.mxu0 0
    %5135 = vmatprep.subr.bf16.mxu0 0
    %5136 = vmatpush1.bf16.xpose.msra.mxu0 0
    %5137 = vmatprep.subr.bf16.mxu0 0
    %5138 = vmatpush1.bf16.xpose.msra.mxu0 0
    %5139 = vmatprep.subr.bf16.mxu0 0
    %5140 = vmatpush1.bf16.xpose.msra.mxu0 0
    %5141 = vmatprep.subr.bf16.mxu0 0
    %5142 = vmatpush1.bf16.xpose.msra.mxu0 0
    %5143 = vmatprep.mubr.bf16.mxu0 %v1146
    %5144 = vmatmul.mubr.bf16.gmra.mrb[0].mxu0 %v1144
    %v5145 = vpop.f32.mrb[0].mxu0
    %v5146 = vadd.f32 %v5106, %v5145
    %v5147 = vpop.f32.mrb[0].mxu0
    %v5148 = vpop.f32.mrb[0].mxu0
    %v5149 = vpop.f32.mrb[0].mxu0
    %5150 = vdwg.mxu0
    %5151 = vmatprep.subr.bf16.mxu0 %v2016
    %5152 = vmatpush1.bf16.xpose.msra.mxu0 %v2015
    %5153 = vmatprep.subr.bf16.mxu0 0
    %5154 = vmatpush1.bf16.xpose.msra.mxu0 0
    %5155 = vmatprep.subr.bf16.mxu0 0
    %5156 = vmatpush1.bf16.xpose.msra.mxu0 0
    %5157 = vmatprep.subr.bf16.mxu0 0
    %5158 = vmatpush1.bf16.xpose.msra.mxu0 0
    %5159 = vmatprep.subr.bf16.mxu0 0
    %5160 = vmatpush1.bf16.xpose.msra.mxu0 0
    %5161 = vmatprep.subr.bf16.mxu0 0
    %5162 = vmatpush1.bf16.xpose.msra.mxu0 0
    %5163 = vmatprep.subr.bf16.mxu0 0
    %5164 = vmatpush1.bf16.xpose.msra.mxu0 0
    %5165 = vmatprep.subr.bf16.mxu0 0
    %5166 = vmatpush1.bf16.xpose.msra.mxu0 0
    %5167 = vmatprep.subr.bf16.mxu0 0
    %5168 = vmatpush1.bf16.xpose.msra.mxu0 0
    %5169 = vmatprep.subr.bf16.mxu0 0
    %5170 = vmatpush1.bf16.xpose.msra.mxu0 0
    %5171 = vmatprep.subr.bf16.mxu0 0
    %5172 = vmatpush1.bf16.xpose.msra.mxu0 0
    %5173 = vmatprep.subr.bf16.mxu0 0
    %5174 = vmatpush1.bf16.xpose.msra.mxu0 0
    %5175 = vmatprep.subr.bf16.mxu0 0
    %5176 = vmatpush1.bf16.xpose.msra.mxu0 0
    %5177 = vmatprep.subr.bf16.mxu0 0
    %5178 = vmatpush1.bf16.xpose.msra.mxu0 0
    %5179 = vmatprep.subr.bf16.mxu0 0
    %5180 = vmatpush1.bf16.xpose.msra.mxu0 0
    %5181 = vmatprep.subr.bf16.mxu0 0
    %5182 = vmatpush1.bf16.xpose.msra.mxu0 0
    %5183 = vmatprep.mubr.bf16.mxu0 %v1143
    %5184 = vmatmul.mubr.bf16.gmra.mrb[0].mxu0 %v1129
    %v5185 = vpop.f32.mrb[0].mxu0
    %v5186 = vadd.f32 %v5146, %v5185
    %v5187 = vpop.f32.mrb[0].mxu0
    %v5188 = vpop.f32.mrb[0].mxu0
    %v5189 = vpop.f32.mrb[0].mxu0
    %5190 = vdwg.mxu0
    %5191 = vmatprep.subr.bf16.mxu0 %v2018
    %5192 = vmatpush1.bf16.xpose.msra.mxu0 %v2017
    %5193 = vmatprep.subr.bf16.mxu0 0
    %5194 = vmatpush1.bf16.xpose.msra.mxu0 0
    %5195 = vmatprep.subr.bf16.mxu0 0
    %5196 = vmatpush1.bf16.xpose.msra.mxu0 0
    %5197 = vmatprep.subr.bf16.mxu0 0
    %5198 = vmatpush1.bf16.xpose.msra.mxu0 0
    %5199 = vmatprep.subr.bf16.mxu0 0
    %5200 = vmatpush1.bf16.xpose.msra.mxu0 0
    %5201 = vmatprep.subr.bf16.mxu0 0
    %5202 = vmatpush1.bf16.xpose.msra.mxu0 0
    %5203 = vmatprep.subr.bf16.mxu0 0
    %5204 = vmatpush1.bf16.xpose.msra.mxu0 0
    %5205 = vmatprep.subr.bf16.mxu0 0
    %5206 = vmatpush1.bf16.xpose.msra.mxu0 0
    %5207 = vmatprep.subr.bf16.mxu0 0
    %5208 = vmatpush1.bf16.xpose.msra.mxu0 0
    %5209 = vmatprep.subr.bf16.mxu0 0
    %5210 = vmatpush1.bf16.xpose.msra.mxu0 0
    %5211 = vmatprep.subr.bf16.mxu0 0
    %5212 = vmatpush1.bf16.xpose.msra.mxu0 0
    %5213 = vmatprep.subr.bf16.mxu0 0
    %5214 = vmatpush1.bf16.xpose.msra.mxu0 0
    %5215 = vmatprep.subr.bf16.mxu0 0
    %5216 = vmatpush1.bf16.xpose.msra.mxu0 0
    %5217 = vmatprep.subr.bf16.mxu0 0
    %5218 = vmatpush1.bf16.xpose.msra.mxu0 0
    %5219 = vmatprep.subr.bf16.mxu0 0
    %5220 = vmatpush1.bf16.xpose.msra.mxu0 0
    %5221 = vmatprep.subr.bf16.mxu0 0
    %5222 = vmatpush1.bf16.xpose.msra.mxu0 0
    %5223 = vmatprep.mubr.bf16.mxu0 %v1147
    %5224 = vmatmul.mubr.bf16.gmra.mrb[0].mxu0 %v1145
    %v5225 = vpop.f32.mrb[0].mxu0
    %v5226 = vadd.f32 %v5186, %v5225
    %v5227 = vpop.f32.mrb[0].mxu0
    %v5228 = vpop.f32.mrb[0].mxu0
    %v5229 = vpop.f32.mrb[0].mxu0
    %5230 = vdwg.mxu0
    %5231 = vmatprep.subr.bf16.mxu0 %v2020
    %5232 = vmatpush1.bf16.xpose.msra.mxu0 %v2019
    %5233 = vmatprep.subr.bf16.mxu0 0
    %5234 = vmatpush1.bf16.xpose.msra.mxu0 0
    %5235 = vmatprep.subr.bf16.mxu0 0
    %5236 = vmatpush1.bf16.xpose.msra.mxu0 0
    %5237 = vmatprep.subr.bf16.mxu0 0
    %5238 = vmatpush1.bf16.xpose.msra.mxu0 0
    %5239 = vmatprep.subr.bf16.mxu0 0
    %5240 = vmatpush1.bf16.xpose.msra.mxu0 0
    %5241 = vmatprep.subr.bf16.mxu0 0
    %5242 = vmatpush1.bf16.xpose.msra.mxu0 0
    %5243 = vmatprep.subr.bf16.mxu0 0
    %5244 = vmatpush1.bf16.xpose.msra.mxu0 0
    %5245 = vmatprep.subr.bf16.mxu0 0
    %5246 = vmatpush1.bf16.xpose.msra.mxu0 0
    %5247 = vmatprep.subr.bf16.mxu0 0
    %5248 = vmatpush1.bf16.xpose.msra.mxu0 0
    %5249 = vmatprep.subr.bf16.mxu0 0
    %5250 = vmatpush1.bf16.xpose.msra.mxu0 0
    %5251 = vmatprep.subr.bf16.mxu0 0
    %5252 = vmatpush1.bf16.xpose.msra.mxu0 0
    %5253 = vmatprep.subr.bf16.mxu0 0
    %5254 = vmatpush1.bf16.xpose.msra.mxu0 0
    %5255 = vmatprep.subr.bf16.mxu0 0
    %5256 = vmatpush1.bf16.xpose.msra.mxu0 0
    %5257 = vmatprep.subr.bf16.mxu0 0
    %5258 = vmatpush1.bf16.xpose.msra.mxu0 0
    %5259 = vmatprep.subr.bf16.mxu0 0
    %5260 = vmatpush1.bf16.xpose.msra.mxu0 0
    %5261 = vmatprep.subr.bf16.mxu0 0
    %5262 = vmatpush1.bf16.xpose.msra.mxu0 0
    %5263 = vmatprep.mubr.bf16.mxu0 %v1185
    %5264 = vmatmul.mubr.bf16.gmra.mrb[0].mxu0 %v1171
    %v5265 = vpop.f32.mrb[0].mxu0
    %v5266 = vadd.f32 %v5226, %v5265
    %v5267 = vpop.f32.mrb[0].mxu0
    %v5268 = vpop.f32.mrb[0].mxu0
    %v5269 = vpop.f32.mrb[0].mxu0
    %5270 = vdwg.mxu0
    %5271 = vmatprep.subr.bf16.mxu0 %v2022
    %5272 = vmatpush1.bf16.xpose.msra.mxu0 %v2021
    %5273 = vmatprep.subr.bf16.mxu0 0
    %5274 = vmatpush1.bf16.xpose.msra.mxu0 0
    %5275 = vmatprep.subr.bf16.mxu0 0
    %5276 = vmatpush1.bf16.xpose.msra.mxu0 0
    %5277 = vmatprep.subr.bf16.mxu0 0
    %5278 = vmatpush1.bf16.xpose.msra.mxu0 0
    %5279 = vmatprep.subr.bf16.mxu0 0
    %5280 = vmatpush1.bf16.xpose.msra.mxu0 0
    %5281 = vmatprep.subr.bf16.mxu0 0
    %5282 = vmatpush1.bf16.xpose.msra.mxu0 0
    %5283 = vmatprep.subr.bf16.mxu0 0
    %5284 = vmatpush1.bf16.xpose.msra.mxu0 0
    %5285 = vmatprep.subr.bf16.mxu0 0
    %5286 = vmatpush1.bf16.xpose.msra.mxu0 0
    %5287 = vmatprep.subr.bf16.mxu0 0
    %5288 = vmatpush1.bf16.xpose.msra.mxu0 0
    %5289 = vmatprep.subr.bf16.mxu0 0
    %5290 = vmatpush1.bf16.xpose.msra.mxu0 0
    %5291 = vmatprep.subr.bf16.mxu0 0
    %5292 = vmatpush1.bf16.xpose.msra.mxu0 0
    %5293 = vmatprep.subr.bf16.mxu0 0
    %5294 = vmatpush1.bf16.xpose.msra.mxu0 0
    %5295 = vmatprep.subr.bf16.mxu0 0
    %5296 = vmatpush1.bf16.xpose.msra.mxu0 0
    %5297 = vmatprep.subr.bf16.mxu0 0
    %5298 = vmatpush1.bf16.xpose.msra.mxu0 0
    %5299 = vmatprep.subr.bf16.mxu0 0
    %5300 = vmatpush1.bf16.xpose.msra.mxu0 0
    %5301 = vmatprep.subr.bf16.mxu0 0
    %5302 = vmatpush1.bf16.xpose.msra.mxu0 0
    %5303 = vmatprep.mubr.bf16.mxu0 %v1195
    %5304 = vmatmul.mubr.bf16.gmra.mrb[0].mxu0 %v1193
    %v5305 = vpop.f32.mrb[0].mxu0
    %v5306 = vadd.f32 %v5266, %v5305
    %v5307 = vpop.f32.mrb[0].mxu0
    %v5308 = vpop.f32.mrb[0].mxu0
    %v5309 = vpop.f32.mrb[0].mxu0
    %5310 = vdwg.mxu0
    %5311 = vmatprep.subr.bf16.mxu0 %v2024
    %5312 = vmatpush1.bf16.xpose.msra.mxu0 %v2023
    %5313 = vmatprep.subr.bf16.mxu0 0
    %5314 = vmatpush1.bf16.xpose.msra.mxu0 0
    %5315 = vmatprep.subr.bf16.mxu0 0
    %5316 = vmatpush1.bf16.xpose.msra.mxu0 0
    %5317 = vmatprep.subr.bf16.mxu0 0
    %5318 = vmatpush1.bf16.xpose.msra.mxu0 0
    %5319 = vmatprep.subr.bf16.mxu0 0
    %5320 = vmatpush1.bf16.xpose.msra.mxu0 0
    %5321 = vmatprep.subr.bf16.mxu0 0
    %5322 = vmatpush1.bf16.xpose.msra.mxu0 0
    %5323 = vmatprep.subr.bf16.mxu0 0
    %5324 = vmatpush1.bf16.xpose.msra.mxu0 0
    %5325 = vmatprep.subr.bf16.mxu0 0
    %5326 = vmatpush1.bf16.xpose.msra.mxu0 0
    %5327 = vmatprep.subr.bf16.mxu0 0
    %5328 = vmatpush1.bf16.xpose.msra.mxu0 0
    %5329 = vmatprep.subr.bf16.mxu0 0
    %5330 = vmatpush1.bf16.xpose.msra.mxu0 0
    %5331 = vmatprep.subr.bf16.mxu0 0
    %5332 = vmatpush1.bf16.xpose.msra.mxu0 0
    %5333 = vmatprep.subr.bf16.mxu0 0
    %5334 = vmatpush1.bf16.xpose.msra.mxu0 0
    %5335 = vmatprep.subr.bf16.mxu0 0
    %5336 = vmatpush1.bf16.xpose.msra.mxu0 0
    %5337 = vmatprep.subr.bf16.mxu0 0
    %5338 = vmatpush1.bf16.xpose.msra.mxu0 0
    %5339 = vmatprep.subr.bf16.mxu0 0
    %5340 = vmatpush1.bf16.xpose.msra.mxu0 0
    %5341 = vmatprep.subr.bf16.mxu0 0
    %5342 = vmatpush1.bf16.xpose.msra.mxu0 0
    %5343 = vmatprep.mubr.bf16.mxu0 %v1192
    %5344 = vmatmul.mubr.bf16.gmra.mrb[0].mxu0 %v1178
    %v5345 = vpop.f32.mrb[0].mxu0
    %v5346 = vadd.f32 %v5306, %v5345
    %v5347 = vpop.f32.mrb[0].mxu0
    %v5348 = vpop.f32.mrb[0].mxu0
    %v5349 = vpop.f32.mrb[0].mxu0
    %5350 = vdwg.mxu0
    %5351 = vmatprep.subr.bf16.mxu0 %v2026
    %5352 = vmatpush1.bf16.xpose.msra.mxu0 %v2025
    %5353 = vmatprep.subr.bf16.mxu0 0
    %5354 = vmatpush1.bf16.xpose.msra.mxu0 0
    %5355 = vmatprep.subr.bf16.mxu0 0
    %5356 = vmatpush1.bf16.xpose.msra.mxu0 0
    %5357 = vmatprep.subr.bf16.mxu0 0
    %5358 = vmatpush1.bf16.xpose.msra.mxu0 0
    %5359 = vmatprep.subr.bf16.mxu0 0
    %5360 = vmatpush1.bf16.xpose.msra.mxu0 0
    %5361 = vmatprep.subr.bf16.mxu0 0
    %5362 = vmatpush1.bf16.xpose.msra.mxu0 0
    %5363 = vmatprep.subr.bf16.mxu0 0
    %5364 = vmatpush1.bf16.xpose.msra.mxu0 0
    %5365 = vmatprep.subr.bf16.mxu0 0
    %5366 = vmatpush1.bf16.xpose.msra.mxu0 0
    %5367 = vmatprep.subr.bf16.mxu0 0
    %5368 = vmatpush1.bf16.xpose.msra.mxu0 0
    %5369 = vmatprep.subr.bf16.mxu0 0
    %5370 = vmatpush1.bf16.xpose.msra.mxu0 0
    %5371 = vmatprep.subr.bf16.mxu0 0
    %5372 = vmatpush1.bf16.xpose.msra.mxu0 0
    %5373 = vmatprep.subr.bf16.mxu0 0
    %5374 = vmatpush1.bf16.xpose.msra.mxu0 0
    %5375 = vmatprep.subr.bf16.mxu0 0
    %5376 = vmatpush1.bf16.xpose.msra.mxu0 0
    %5377 = vmatprep.subr.bf16.mxu0 0
    %5378 = vmatpush1.bf16.xpose.msra.mxu0 0
    %5379 = vmatprep.subr.bf16.mxu0 0
    %5380 = vmatpush1.bf16.xpose.msra.mxu0 0
    %5381 = vmatprep.subr.bf16.mxu0 0
    %5382 = vmatpush1.bf16.xpose.msra.mxu0 0
    %5383 = vmatprep.mubr.bf16.mxu0 %v1196
    %5384 = vmatmul.mubr.bf16.gmra.mrb[0].mxu0 %v1194
    %v5385 = vpop.f32.mrb[0].mxu0
    %v5386 = vadd.f32 %v5346, %v5385
    %v5387 = vpop.f32.mrb[0].mxu0
    %v5388 = vpop.f32.mrb[0].mxu0
    %v5389 = vpop.f32.mrb[0].mxu0
    %5390 = vdwg.mxu0
    %5391 = vmatprep.subr.bf16.mxu0 %v2028
    %5392 = vmatpush1.bf16.xpose.msra.mxu0 %v2027
    %5393 = vmatprep.subr.bf16.mxu0 0
    %5394 = vmatpush1.bf16.xpose.msra.mxu0 0
    %5395 = vmatprep.subr.bf16.mxu0 0
    %5396 = vmatpush1.bf16.xpose.msra.mxu0 0
    %5397 = vmatprep.subr.bf16.mxu0 0
    %5398 = vmatpush1.bf16.xpose.msra.mxu0 0
    %5399 = vmatprep.subr.bf16.mxu0 0
    %5400 = vmatpush1.bf16.xpose.msra.mxu0 0
    %5401 = vmatprep.subr.bf16.mxu0 0
    %5402 = vmatpush1.bf16.xpose.msra.mxu0 0
    %5403 = vmatprep.subr.bf16.mxu0 0
    %5404 = vmatpush1.bf16.xpose.msra.mxu0 0
    %5405 = vmatprep.subr.bf16.mxu0 0
    %5406 = vmatpush1.bf16.xpose.msra.mxu0 0
    %5407 = vmatprep.subr.bf16.mxu0 0
    %5408 = vmatpush1.bf16.xpose.msra.mxu0 0
    %5409 = vmatprep.subr.bf16.mxu0 0
    %5410 = vmatpush1.bf16.xpose.msra.mxu0 0
    %5411 = vmatprep.subr.bf16.mxu0 0
    %5412 = vmatpush1.bf16.xpose.msra.mxu0 0
    %5413 = vmatprep.subr.bf16.mxu0 0
    %5414 = vmatpush1.bf16.xpose.msra.mxu0 0
    %5415 = vmatprep.subr.bf16.mxu0 0
    %5416 = vmatpush1.bf16.xpose.msra.mxu0 0
    %5417 = vmatprep.subr.bf16.mxu0 0
    %5418 = vmatpush1.bf16.xpose.msra.mxu0 0
    %5419 = vmatprep.subr.bf16.mxu0 0
    %5420 = vmatpush1.bf16.xpose.msra.mxu0 0
    %5421 = vmatprep.subr.bf16.mxu0 0
    %5422 = vmatpush1.bf16.xpose.msra.mxu0 0
    %5423 = vmatprep.mubr.bf16.mxu0 %v1218
    %5424 = vmatmul.mubr.bf16.gmra.mrb[0].mxu0 %v1211
    %v5425 = vpop.f32.mrb[0].mxu0
    %v5426 = vadd.f32 %v5386, %v5425
    %v5427 = vpop.f32.mrb[0].mxu0
    %v5428 = vpop.f32.mrb[0].mxu0
    %v5429 = vpop.f32.mrb[0].mxu0
    %5430 = vdwg.mxu0
    %vm5431 = vcmask 74752
    %5432 = vst.msk [vmem:[#allocation2] sm:$0x3] %vm5431, %v5426
    // Predicated region
    $region10: #{cnn_2layer_fc_forward.3} parent=1 // pred_check
      _
    $region11: #{cnn_2layer_fc_forward.3} parent=1 // pred_check_branch
      %5434 = sbr.rel (0) target = $region13
    $region12: #{cnn_2layer_fc_forward.3} parent=1 // pred_region
      %s5436 = ssub.s32 32, 32
      %5437 = vsyncadd [#allocation3], %s5436
      %s5439 = sshll.u32 [#allocation2], 4
      %s5440 = int_to_ptr.vmem [resolvable:$true] %s5439
      %5442 = dma.vmem_to_hbm [thread:$0]  %s5440, 32, %s2, [#allocation3]
    $region13: #{cnn_2layer_fc_forward.3} parent=1 // pred_fallthru
      _
    // Predicated region
    $region14: #{cnn_2layer_fc_forward.3} parent=1 // pred_check
      _
    $region15: #{cnn_2layer_fc_forward.3} parent=1 // pred_check_branch
      %5444 = sbr.rel (0) target = $region17
    $region16: #{cnn_2layer_fc_forward.3} parent=1 // pred_region
      %5445 = dma.done [#allocation3], 32
    $region17: #{cnn_2layer_fc_forward.3} parent=1 // pred_fallthru
      _
    %5446 = vsyncpa [#allocation3], 1

// kernel: cnn_2layer_fc_forward.2
$region0: #{cnn_2layer_fc_forward.2}
  #allocation0 [shape = 'u32[]', space=smem, size = 0x4, offset = 0x4, fixed_abs, tag = 'smem constant byte address 0x4 - core index']
  #allocation1 [shape = 'u32[144,128]{1,0:T(1,128)}', space=vmem, size = 0x12000, scoped, tag = 'internal scratch']
  %s0 = inlined_call_operand.vmem [shape: bf16[2,256,9], index: 0, kind: input, shape index: {}]
  %s1 = inlined_call_operand.vmem [shape: bf16[9,128], index: 1, kind: input, shape index: {}]
  %s2 = inlined_call_operand.vmem [shape: f32[1,128], index: 2, kind: input, shape index: {}]
  %s3 = inlined_call_operand.hbm [shape: bf16[9,128,256], index: 3, kind: input, shape index: {}]
  %s4 = inlined_call_operand.vmem [shape: f32[1,256], index: 4, kind: input, shape index: {}]
  %s5 = inlined_call_operand.vmem [shape: bf16[2,81,256], index: 5, kind: output, shape index: {}]
  %s6 = sld [smem:[#allocation0]]
  $region57: #{cnn_2layer_fc_forward.2} parent=0
    _
  %s8 = ssub.s32 1, %s6
  %s9 = scalar_select 0, %s8, %s6
  $region1: #{cnn_2layer_fc_forward.2} parent=0
    #allocation2 [shape = 'u8[589824]{0}', space=vmem, size = 0x90000, scoped, tag = 'input window, operand 3, single buffered']
    #allocation3 [shape = 's32[2]{0}', space=sflag, size = 0x8, scoped, tag = 'scoped memory for cnn_2layer_fc_forward.2']
    %10 = vsyncpa [#allocation3], 0
    loop: start=0, step=1, limit=4
    $region2: #{cnn_2layer_fc_forward.2} parent=1 // loop_pre_header
      _
    $region3: #{cnn_2layer_fc_forward.2} parent=1 // loop_header
      %s12 = sphi 0, %s16
      %p13 = scmp.ge.s32.totalorder %s12, 4
      %s22 = sphi 0, %s24
      %s25 = sphi 0, %s22
      %s26 = sphi 0, %s25
      %s42 = sphi 0, %s26
      %s46 = sphi 0, %s46
      %s48 = sphi 0, %s46
      %s49 = sphi 0, %s48
      %s63 = sphi 0, %s49
      %s67 = sphi 0, %s67
      %s69 = sphi 0, %s67
      %s70 = sphi 0, %s69
      %s84 = sphi 0, %s70
      %s88 = sphi 0, %s88
      %s90 = sphi 0, %s88
      %s91 = sphi 0, %s90
      %s105 = sphi 0, %s91
      %s109 = sphi 0, %s109
      %s111 = sphi 0, %s109
      %s112 = sphi 0, %s111
      %s126 = sphi 0, %s112
      %s132 = sphi 0, %s134
      %s135 = sphi 0, %s132
      %s136 = sphi 0, %s135
      %s152 = sphi 0, %s136
    $region4: #{cnn_2layer_fc_forward.2} parent=1 // loop_header_branch
      %15 = sbr.rel (%p13) target = $region8
    $region5: #{cnn_2layer_fc_forward.2} parent=1 // loop_body
      %s17 = ssub.s32 %s12, 1
      %s18 = ssub.s32 %s12, 2
      %s19 = sadd.s32 %s12, 1
      %s20 = ssub.s32 %s12, %s19
      %p21 = scmp.eq.s32.totalorder %s20, 0
      %s23 = sadd.s32 %s22, 1
      %s24 = scalar_select %p21, %s22, %s23
      %p27 = pneg %p21
      %p28 = scmp.eq.s32.totalorder %s12, 1
      %p29 = por %p27, %p28
      %p30 = scmp.ne.s32.totalorder %s22, %s25
      %p31 = scmp.eq.s32.totalorder %s12, 0
      %p32 = por %p30, %p31
      %p33 = scmp.ne.s32.totalorder %s22, %s25
      %p34 = scmp.eq.s32.totalorder %s17, 1
      %p35 = por %p33, %p34
      %p36 = scmp.ne.s32.totalorder %s25, %s26
      %p37 = scmp.eq.s32.totalorder %s17, 0
      %p38 = por %p36, %p37
      %p39 = scmp.ne.s32.totalorder %s25, %s26
      %p40 = scmp.eq.s32.totalorder %s18, 1
      %p41 = por %p39, %p40
      %p43 = scmp.ne.s32.totalorder %s26, %s42
      %p44 = scmp.eq.s32.totalorder %s18, 0
      %p45 = por %p43, %p44
      %s47 = sadd.s32 %s46, 1
      %p50 = scmp.eq.s32.totalorder %s12, 1
      %p51 = scmp.ne.s32.totalorder %s46, %s48
      %p52 = scmp.eq.s32.totalorder %s12, 0
      %p53 = por %p51, %p52
      %p54 = scmp.ne.s32.totalorder %s46, %s48
      %p55 = scmp.eq.s32.totalorder %s17, 1
      %p56 = por %p54, %p55
      %p57 = scmp.ne.s32.totalorder %s48, %s49
      %p58 = scmp.eq.s32.totalorder %s17, 0
      %p59 = por %p57, %p58
      %p60 = scmp.ne.s32.totalorder %s48, %s49
      %p61 = scmp.eq.s32.totalorder %s18, 1
      %p62 = por %p60, %p61
      %p64 = scmp.ne.s32.totalorder %s49, %s63
      %p65 = scmp.eq.s32.totalorder %s18, 0
      %p66 = por %p64, %p65
      %s68 = sadd.s32 %s67, 1
      %p71 = scmp.eq.s32.totalorder %s12, 1
      %p72 = scmp.ne.s32.totalorder %s67, %s69
      %p73 = scmp.eq.s32.totalorder %s12, 0
      %p74 = por %p72, %p73
      %p75 = scmp.ne.s32.totalorder %s67, %s69
      %p76 = scmp.eq.s32.totalorder %s17, 1
      %p77 = por %p75, %p76
      %p78 = scmp.ne.s32.totalorder %s69, %s70
      %p79 = scmp.eq.s32.totalorder %s17, 0
      %p80 = por %p78, %p79
      %p81 = scmp.ne.s32.totalorder %s69, %s70
      %p82 = scmp.eq.s32.totalorder %s18, 1
      %p83 = por %p81, %p82
      %p85 = scmp.ne.s32.totalorder %s70, %s84
      %p86 = scmp.eq.s32.totalorder %s18, 0
      %p87 = por %p85, %p86
      %s89 = sadd.s32 %s88, 1
      %p92 = scmp.eq.s32.totalorder %s12, 1
      %p93 = scmp.ne.s32.totalorder %s88, %s90
      %p94 = scmp.eq.s32.totalorder %s12, 0
      %p95 = por %p93, %p94
      %p96 = scmp.ne.s32.totalorder %s88, %s90
      %p97 = scmp.eq.s32.totalorder %s17, 1
      %p98 = por %p96, %p97
      %p99 = scmp.ne.s32.totalorder %s90, %s91
      %p100 = scmp.eq.s32.totalorder %s17, 0
      %p101 = por %p99, %p100
      %p102 = scmp.ne.s32.totalorder %s90, %s91
      %p103 = scmp.eq.s32.totalorder %s18, 1
      %p104 = por %p102, %p103
      %p106 = scmp.ne.s32.totalorder %s91, %s105
      %p107 = scmp.eq.s32.totalorder %s18, 0
      %p108 = por %p106, %p107
      %s110 = sadd.s32 %s109, 1
      %p113 = scmp.eq.s32.totalorder %s12, 1
      %p114 = scmp.ne.s32.totalorder %s109, %s111
      %p115 = scmp.eq.s32.totalorder %s12, 0
      %p116 = por %p114, %p115
      %p117 = scmp.ne.s32.totalorder %s109, %s111
      %p118 = scmp.eq.s32.totalorder %s17, 1
      %p119 = por %p117, %p118
      %p120 = scmp.ne.s32.totalorder %s111, %s112
      %p121 = scmp.eq.s32.totalorder %s17, 0
      %p122 = por %p120, %p121
      %p123 = scmp.ne.s32.totalorder %s111, %s112
      %p124 = scmp.eq.s32.totalorder %s18, 1
      %p125 = por %p123, %p124
      %p127 = scmp.ne.s32.totalorder %s112, %s126
      %p128 = scmp.eq.s32.totalorder %s18, 0
      %p129 = por %p127, %p128
      %s130 = ssub.s32 %s12, %s19
      %p131 = scmp.eq.s32.totalorder %s130, 0
      %s133 = sadd.s32 %s132, 1
      %s134 = scalar_select %p131, %s132, %s133
      %p137 = pneg %p131
      %p138 = scmp.eq.s32.totalorder %s12, 1
      %p139 = por %p137, %p138
      %p140 = scmp.ne.s32.totalorder %s132, %s135
      %p141 = scmp.eq.s32.totalorder %s12, 0
      %p142 = por %p140, %p141
      %p143 = scmp.ne.s32.totalorder %s132, %s135
      %p144 = scmp.eq.s32.totalorder %s17, 1
      %p145 = por %p143, %p144
      %p146 = scmp.ne.s32.totalorder %s135, %s136
      %p147 = scmp.eq.s32.totalorder %s17, 0
      %p148 = por %p146, %p147
      %p149 = scmp.ne.s32.totalorder %s135, %s136
      %p150 = scmp.eq.s32.totalorder %s18, 1
      %p151 = por %p149, %p150
      %p153 = scmp.ne.s32.totalorder %s136, %s152
      %p154 = scmp.eq.s32.totalorder %s18, 0
      %p155 = por %p153, %p154
      %p156 = scmp.le.s32.totalorder 1, %s12
      %p157 = scmp.lt.s32.totalorder %s12, 3
      %p158 = pnand %p156, %p157
      %p159 = pneg %p158
      // Predicated region
      $region9: #{cnn_2layer_fc_forward.2} parent=5 // pred_check
        _
      $region10: #{cnn_2layer_fc_forward.2} parent=5 // pred_check_branch
        %161 = sbr.rel (%p158) target = $region12
      $region11: #{cnn_2layer_fc_forward.2} parent=5 // pred_region
        %s162 = ssub.s32 %s12, 1
        // Predicated region
        $region13: #{cnn_2layer_fc_forward.2} parent=11 // pred_check
          %p163 = pneg %p59
        $region14: #{cnn_2layer_fc_forward.2} parent=11 // pred_check_branch
          %165 = sbr.rel (%p163) target = $region16
        $region15: #{cnn_2layer_fc_forward.2} parent=11 // pred_region
          _
        $region16: #{cnn_2layer_fc_forward.2} parent=11 // pred_fallthru
          _
        // Predicated region
        $region17: #{cnn_2layer_fc_forward.2} parent=11 // pred_check
          %p166 = pneg %p80
        $region18: #{cnn_2layer_fc_forward.2} parent=11 // pred_check_branch
          %168 = sbr.rel (%p166) target = $region20
        $region19: #{cnn_2layer_fc_forward.2} parent=11 // pred_region
          _
        $region20: #{cnn_2layer_fc_forward.2} parent=11 // pred_fallthru
          _
        // Predicated region
        $region21: #{cnn_2layer_fc_forward.2} parent=11 // pred_check
          %p169 = pneg %p101
        $region22: #{cnn_2layer_fc_forward.2} parent=11 // pred_check_branch
          %171 = sbr.rel (%p169) target = $region24
        $region23: #{cnn_2layer_fc_forward.2} parent=11 // pred_region
          %s173 = ssub.s32 18432, 18432
          %174 = vsyncadd [#allocation3], %s173
          %s175 = sshll.u32 [#allocation2], 4
          %s176 = int_to_ptr.vmem [resolvable:$true] %s175
          %181 = dma.hbm_to_vmem [thread:$0]  %s3, 18432, %s176, [#allocation3], 128, 128, 8
        $region24: #{cnn_2layer_fc_forward.2} parent=11 // pred_fallthru
          _
        // Predicated region
        $region25: #{cnn_2layer_fc_forward.2} parent=11 // pred_check
          %p182 = pneg %p122
        $region26: #{cnn_2layer_fc_forward.2} parent=11 // pred_check_branch
          %184 = sbr.rel (%p182) target = $region28
        $region27: #{cnn_2layer_fc_forward.2} parent=11 // pred_region
          _
        $region28: #{cnn_2layer_fc_forward.2} parent=11 // pred_fallthru
          _
      $region12: #{cnn_2layer_fc_forward.2} parent=5 // pred_fallthru
        _
      %p185 = scmp.lt.s32.totalorder %s12, 2
      // Predicated region
      $region29: #{cnn_2layer_fc_forward.2} parent=5 // pred_check
        %p186 = pneg %p185
      $region30: #{cnn_2layer_fc_forward.2} parent=5 // pred_check_branch
        %188 = sbr.rel (%p186) target = $region32
      $region31: #{cnn_2layer_fc_forward.2} parent=5 // pred_region
        // Predicated region
        $region33: #{cnn_2layer_fc_forward.2} parent=31 // pred_check
          %p189 = pneg %p32
        $region34: #{cnn_2layer_fc_forward.2} parent=31 // pred_check_branch
          %191 = sbr.rel (%p189) target = $region36
        $region35: #{cnn_2layer_fc_forward.2} parent=31 // pred_region
          %p192 = scmp.lt.s32.totalorder %s12, 1
          %s193 = scalar_select %p192, %s12, 1
          %s194 = smul.addr %s193, 32
          %s195 = smul.addr %s194, 4
          %s196 = scalar_lea.vmem %s0, %s195
        $region36: #{cnn_2layer_fc_forward.2} parent=31 // pred_fallthru
          _
      $region32: #{cnn_2layer_fc_forward.2} parent=5 // pred_fallthru
        _
      %p197 = scmp.le.s32.totalorder 1, %s12
      %p198 = scmp.lt.s32.totalorder %s12, 3
      %p199 = pnand %p197, %p198
      %p200 = pneg %p199
      // Predicated region
      $region37: #{cnn_2layer_fc_forward.2} parent=5 // pred_check
        _
      $region38: #{cnn_2layer_fc_forward.2} parent=5 // pred_check_branch
        %202 = sbr.rel (%p199) target = $region40
      $region39: #{cnn_2layer_fc_forward.2} parent=5 // pred_region
        %s203 = ssub.s32 %s12, 1
        // Predicated region
        $region41: #{cnn_2layer_fc_forward.2} parent=39 // pred_check
          %p204 = pneg %p101
        $region42: #{cnn_2layer_fc_forward.2} parent=39 // pred_check_branch
          %206 = sbr.rel (%p204) target = $region44
        $region43: #{cnn_2layer_fc_forward.2} parent=39 // pred_region
          %207 = dma.done [#allocation3], 18432
        $region44: #{cnn_2layer_fc_forward.2} parent=39 // pred_fallthru
          _
        %p208 = scmp.lt.s32.totalorder %s17, 1
        %s209 = scalar_select %p208, %s17, 1
        %s210 = smul.addr %s209, 32
        %s211 = smul.addr %s210, 4
        %s212 = scalar_lea.vmem %s0, %s211
        %p213 = pneg %p38
        %p214 = pneg %p35
        %p215 = pneg %p59
        %p216 = pneg %p56
        %p217 = pneg %p80
        %p218 = pneg %p77
        %p219 = pneg %p101
        %p220 = pneg %p98
        %p221 = pneg %p122
        %p222 = pneg %p119
        %p223 = pneg %p148
        %p224 = pneg %p145
        %p225 = scmp.lt.s32.totalorder %s17, 1
        %s226 = scalar_select %p225, %s17, 1
        %s227 = smul.addr %s226, 22
        %s228 = smul.addr %s227, 4
        %s229 = scalar_lea.vmem %s5, %s228
        %p230 = scmp.lt.s32.totalorder %s17, 1
        %s231 = scalar_select %p230, %s17, 1
        %s232 = smul.addr %s231, 32
        %s233 = smul.addr %s232, 4
        %s234 = scalar_lea.vmem %s0, %s233
        %p235 = scmp.lt.s32.totalorder %s17, 1
        %s236 = scalar_select %p235, %s17, 1
        %s237 = smul.addr %s236, 22
        %s238 = smul.addr %s237, 4
        %s239 = scalar_lea.vmem %s5, %s238
        %v241 = vld [vmem:[%s234] sm:$0xf]
        %v242 = vld [vmem:[%s234 + $0x4] sm:$0xf]
        %v243 = vld [vmem:[%s234 + $0x8] sm:$0xf]
        %v244 = vld [vmem:[%s234 + $0xc] sm:$0xf]
        %v245 = vld [vmem:[%s234 + $0x10] sm:$0xf]
        %v246 = vld [vmem:[%s234 + $0x14] sm:$0xf]
        %v247 = vld [vmem:[%s234 + $0x18] sm:$0xf]
        %v248 = vld [vmem:[%s234 + $0x1c] sm:$0xf]
        %v249 = vld [vmem:[%s234 + $0x20] sm:$0xf]
        %v250 = vld [vmem:[%s234 + $0x24] sm:$0xf]
        %v251 = vld [vmem:[%s234 + $0x28] sm:$0xf]
        %v252 = vld [vmem:[%s234 + $0x2c] sm:$0xf]
        %v253 = vld [vmem:[%s234 + $0x30] sm:$0xf]
        %v254 = vld [vmem:[%s234 + $0x34] sm:$0xf]
        %v255 = vld [vmem:[%s234 + $0x38] sm:$0xf]
        %v256 = vld [vmem:[%s234 + $0x3c] sm:$0xf]
        %v257 = vld [vmem:[%s234 + $0x40] sm:$0xf]
        %v258 = vld [vmem:[%s234 + $0x44] sm:$0xf]
        %v259 = vld [vmem:[%s234 + $0x48] sm:$0xf]
        %v260 = vld [vmem:[%s234 + $0x4c] sm:$0xf]
        %v261 = vld [vmem:[%s234 + $0x50] sm:$0xf]
        %v262 = vld [vmem:[%s234 + $0x54] sm:$0xf]
        %v263 = vld [vmem:[%s234 + $0x58] sm:$0xf]
        %v264 = vld [vmem:[%s234 + $0x5c] sm:$0xf]
        %v265 = vld [vmem:[%s234 + $0x60] sm:$0xf]
        %v266 = vld [vmem:[%s234 + $0x64] sm:$0xf]
        %v267 = vld [vmem:[%s234 + $0x68] sm:$0xf]
        %v268 = vld [vmem:[%s234 + $0x6c] sm:$0xf]
        %v269 = vld [vmem:[%s234 + $0x70] sm:$0xf]
        %v270 = vld [vmem:[%s234 + $0x74] sm:$0xf]
        %v271 = vld [vmem:[%s234 + $0x78] sm:$0xf]
        %v272 = vld [vmem:[%s234 + $0x7c] sm:$0xf]
        %v273 = vld [vmem:[%s1] sm:$0xf]
        %v274 = vld [vmem:[%s1 + $0x4] sm:$0x1]
        %v275 = vld [vmem:[%s2] sm:$0x1]
        %v277 = vlaneseq
        %v278 = vshrl.u32 %v277, 7
        %v279 = vsub.s32 0, %v278
        %v280 = vrot.slane %v275, %v279
        %v314 = vunpack.c.l.b16 %v241
        %v315 = vunpack.c.l.b16 %v242
        %v316 = vunpack.c.l.b16 %v243
        %v317 = vunpack.c.l.b16 %v244
        %v318 = vunpack.c.l.b16 %v245
        %v319 = vunpack.c.l.b16 %v246
        %v320 = vunpack.c.l.b16 %v247
        %v321 = vunpack.c.l.b16 %v248
        %v322 = vunpack.c.l.b16 %v249
        %v323 = vunpack.c.l.b16 %v250
        %v324 = vunpack.c.l.b16 %v251
        %v325 = vunpack.c.l.b16 %v252
        %v326 = vunpack.c.l.b16 %v253
        %v327 = vunpack.c.l.b16 %v254
        %v328 = vunpack.c.l.b16 %v255
        %v329 = vunpack.c.l.b16 %v256
        %v330 = vunpack.c.l.b16 %v257
        %v331 = vunpack.c.l.b16 %v258
        %v332 = vunpack.c.l.b16 %v259
        %v333 = vunpack.c.l.b16 %v260
        %v334 = vunpack.c.l.b16 %v261
        %v335 = vunpack.c.l.b16 %v262
        %v336 = vunpack.c.l.b16 %v263
        %v337 = vunpack.c.l.b16 %v264
        %v338 = vunpack.c.l.b16 %v265
        %v339 = vunpack.c.l.b16 %v266
        %v340 = vunpack.c.l.b16 %v267
        %v341 = vunpack.c.l.b16 %v268
        %v342 = vunpack.c.l.b16 %v269
        %v343 = vunpack.c.l.b16 %v270
        %v344 = vunpack.c.l.b16 %v271
        %v345 = vunpack.c.l.b16 %v272
        %v346 = vpack.c.b16 %v315, %v314
        %v347 = vpack.c.b16 %v317, %v316
        %v348 = vpack.c.b16 %v319, %v318
        %v349 = vpack.c.b16 %v321, %v320
        %v350 = vpack.c.b16 %v323, %v322
        %v351 = vpack.c.b16 %v325, %v324
        %v352 = vpack.c.b16 %v327, %v326
        %v353 = vpack.c.b16 %v329, %v328
        %v354 = vpack.c.b16 %v331, %v330
        %v355 = vpack.c.b16 %v333, %v332
        %v356 = vpack.c.b16 %v335, %v334
        %v357 = vpack.c.b16 %v337, %v336
        %v358 = vpack.c.b16 %v339, %v338
        %v359 = vpack.c.b16 %v341, %v340
        %v360 = vpack.c.b16 %v343, %v342
        %v361 = vpack.c.b16 %v345, %v344
        %v364 = vunpack.c.l.b16 %v273
        %v365 = vunpack.c.l.b16 %v274
        %v366 = vpack.c.b16 %v365, %v364
        %vm367 = vcmask 72704
        %v369 = vsel %vm367, %v346, 0
        %v372 = vsel %vm367, %v347, 0
        %v375 = vsel %vm367, %v348, 0
        %v378 = vsel %vm367, %v349, 0
        %v381 = vsel %vm367, %v350, 0
        %v384 = vsel %vm367, %v351, 0
        %v387 = vsel %vm367, %v352, 0
        %v390 = vsel %vm367, %v353, 0
        %v393 = vsel %vm367, %v354, 0
        %v396 = vsel %vm367, %v355, 0
        %v399 = vsel %vm367, %v356, 0
        %v402 = vsel %vm367, %v357, 0
        %v405 = vsel %vm367, %v358, 0
        %v408 = vsel %vm367, %v359, 0
        %v411 = vsel %vm367, %v360, 0
        %v414 = vsel %vm367, %v361, 0
        %vm416 = vcmask 1043456
        %vm417 = vcmask 1044480
        %v418 = vsel %vm416, 4294967295, 65535
        %v419 = vsel %vm417, %v418, 0
        %v421 = vand.u32 %v366, %v419
        %423 = vmatprep.subr.bf16.mxu0 0
        %424 = vmatpush1.bf16.msra.mxu0 %v421
        %425 = vmatprep.subr.bf16.mxu0 0
        %426 = vmatpush1.bf16.msra.mxu0 0
        %427 = vmatprep.subr.bf16.mxu0 0
        %428 = vmatpush1.bf16.msra.mxu0 0
        %429 = vmatprep.subr.bf16.mxu0 0
        %430 = vmatpush1.bf16.msra.mxu0 0
        %431 = vmatprep.subr.bf16.mxu0 0
        %432 = vmatpush1.bf16.msra.mxu0 0
        %433 = vmatprep.subr.bf16.mxu0 0
        %434 = vmatpush1.bf16.msra.mxu0 0
        %435 = vmatprep.subr.bf16.mxu0 0
        %436 = vmatpush1.bf16.msra.mxu0 0
        %437 = vmatprep.subr.bf16.mxu0 0
        %438 = vmatpush1.bf16.msra.mxu0 0
        %439 = vmatprep.subr.bf16.mxu0 0
        %440 = vmatpush1.bf16.msra.mxu0 0
        %441 = vmatprep.subr.bf16.mxu0 0
        %442 = vmatpush1.bf16.msra.mxu0 0
        %443 = vmatprep.subr.bf16.mxu0 0
        %444 = vmatpush1.bf16.msra.mxu0 0
        %445 = vmatprep.subr.bf16.mxu0 0
        %446 = vmatpush1.bf16.msra.mxu0 0
        %447 = vmatprep.subr.bf16.mxu0 0
        %448 = vmatpush1.bf16.msra.mxu0 0
        %449 = vmatprep.subr.bf16.mxu0 0
        %450 = vmatpush1.bf16.msra.mxu0 0
        %451 = vmatprep.subr.bf16.mxu0 0
        %452 = vmatpush1.bf16.msra.mxu0 0
        %453 = vmatprep.subr.bf16.mxu0 0
        %454 = vmatpush1.bf16.msra.mxu0 0
        %455 = vmatprep.mubr.bf16.mxu0 0
        %456 = vmatmul.mubr.bf16.gmra.mrb[0].mxu0 %v369
        %v457 = vpop.f32.mrb[0].mxu0
        %v458 = vadd.f32 %v280, %v457
        %v459 = vpop.f32.mrb[0].mxu0
        %v460 = vpop.f32.mrb[0].mxu0
        %v461 = vadd.f32 %v280, %v460
        %v462 = vpop.f32.mrb[0].mxu0
        %463 = vmatprep.mubr.bf16.mxu0 0
        %464 = vmatmul.mubr.bf16.gmra.mrb[0].mxu0 %v372
        %v465 = vpop.f32.mrb[0].mxu0
        %v466 = vadd.f32 %v280, %v465
        %v467 = vpop.f32.mrb[0].mxu0
        %v468 = vpop.f32.mrb[0].mxu0
        %v469 = vadd.f32 %v280, %v468
        %v470 = vpop.f32.mrb[0].mxu0
        %471 = vmatprep.mubr.bf16.mxu0 0
        %472 = vmatmul.mubr.bf16.gmra.mrb[0].mxu0 %v375
        %v473 = vpop.f32.mrb[0].mxu0
        %v474 = vadd.f32 %v280, %v473
        %v475 = vpop.f32.mrb[0].mxu0
        %v476 = vpop.f32.mrb[0].mxu0
        %v477 = vadd.f32 %v280, %v476
        %v478 = vpop.f32.mrb[0].mxu0
        %479 = vmatprep.mubr.bf16.mxu0 0
        %480 = vmatmul.mubr.bf16.gmra.mrb[0].mxu0 %v378
        %v481 = vpop.f32.mrb[0].mxu0
        %v482 = vadd.f32 %v280, %v481
        %v483 = vpop.f32.mrb[0].mxu0
        %v484 = vpop.f32.mrb[0].mxu0
        %v485 = vadd.f32 %v280, %v484
        %v486 = vpop.f32.mrb[0].mxu0
        %487 = vmatprep.mubr.bf16.mxu0 0
        %488 = vmatmul.mubr.bf16.gmra.mrb[0].mxu0 %v381
        %v489 = vpop.f32.mrb[0].mxu0
        %v490 = vadd.f32 %v280, %v489
        %v491 = vpop.f32.mrb[0].mxu0
        %v492 = vpop.f32.mrb[0].mxu0
        %v493 = vadd.f32 %v280, %v492
        %v494 = vpop.f32.mrb[0].mxu0
        %495 = vmatprep.mubr.bf16.mxu0 0
        %496 = vmatmul.mubr.bf16.gmra.mrb[0].mxu0 %v384
        %v497 = vpop.f32.mrb[0].mxu0
        %v498 = vadd.f32 %v280, %v497
        %v499 = vpop.f32.mrb[0].mxu0
        %v500 = vpop.f32.mrb[0].mxu0
        %v501 = vadd.f32 %v280, %v500
        %v502 = vpop.f32.mrb[0].mxu0
        %503 = vmatprep.mubr.bf16.mxu0 0
        %504 = vmatmul.mubr.bf16.gmra.mrb[0].mxu0 %v387
        %v505 = vpop.f32.mrb[0].mxu0
        %v506 = vadd.f32 %v280, %v505
        %v507 = vpop.f32.mrb[0].mxu0
        %v508 = vpop.f32.mrb[0].mxu0
        %v509 = vadd.f32 %v280, %v508
        %v510 = vpop.f32.mrb[0].mxu0
        %511 = vmatprep.mubr.bf16.mxu0 0
        %512 = vmatmul.mubr.bf16.gmra.mrb[0].mxu0 %v390
        %v513 = vpop.f32.mrb[0].mxu0
        %v514 = vadd.f32 %v280, %v513
        %v515 = vpop.f32.mrb[0].mxu0
        %v516 = vpop.f32.mrb[0].mxu0
        %v517 = vadd.f32 %v280, %v516
        %v518 = vpop.f32.mrb[0].mxu0
        %519 = vmatprep.mubr.bf16.mxu0 0
        %520 = vmatmul.mubr.bf16.gmra.mrb[0].mxu0 %v393
        %v521 = vpop.f32.mrb[0].mxu0
        %v522 = vadd.f32 %v280, %v521
        %v523 = vpop.f32.mrb[0].mxu0
        %v524 = vpop.f32.mrb[0].mxu0
        %v525 = vadd.f32 %v280, %v524
        %v526 = vpop.f32.mrb[0].mxu0
        %527 = vmatprep.mubr.bf16.mxu0 0
        %528 = vmatmul.mubr.bf16.gmra.mrb[0].mxu0 %v396
        %v529 = vpop.f32.mrb[0].mxu0
        %v530 = vadd.f32 %v280, %v529
        %v531 = vpop.f32.mrb[0].mxu0
        %v532 = vpop.f32.mrb[0].mxu0
        %v533 = vadd.f32 %v280, %v532
        %v534 = vpop.f32.mrb[0].mxu0
        %535 = vmatprep.mubr.bf16.mxu0 0
        %536 = vmatmul.mubr.bf16.gmra.mrb[0].mxu0 %v399
        %v537 = vpop.f32.mrb[0].mxu0
        %v538 = vadd.f32 %v280, %v537
        %v539 = vpop.f32.mrb[0].mxu0
        %v540 = vpop.f32.mrb[0].mxu0
        %v541 = vadd.f32 %v280, %v540
        %v542 = vpop.f32.mrb[0].mxu0
        %543 = vmatprep.mubr.bf16.mxu0 0
        %544 = vmatmul.mubr.bf16.gmra.mrb[0].mxu0 %v402
        %v545 = vpop.f32.mrb[0].mxu0
        %v546 = vadd.f32 %v280, %v545
        %v547 = vpop.f32.mrb[0].mxu0
        %v548 = vpop.f32.mrb[0].mxu0
        %v549 = vadd.f32 %v280, %v548
        %v550 = vpop.f32.mrb[0].mxu0
        %551 = vmatprep.mubr.bf16.mxu0 0
        %552 = vmatmul.mubr.bf16.gmra.mrb[0].mxu0 %v405
        %v553 = vpop.f32.mrb[0].mxu0
        %v554 = vadd.f32 %v280, %v553
        %v555 = vpop.f32.mrb[0].mxu0
        %v556 = vpop.f32.mrb[0].mxu0
        %v557 = vadd.f32 %v280, %v556
        %v558 = vpop.f32.mrb[0].mxu0
        %559 = vmatprep.mubr.bf16.mxu0 0
        %560 = vmatmul.mubr.bf16.gmra.mrb[0].mxu0 %v408
        %v561 = vpop.f32.mrb[0].mxu0
        %v562 = vadd.f32 %v280, %v561
        %v563 = vpop.f32.mrb[0].mxu0
        %v564 = vpop.f32.mrb[0].mxu0
        %v565 = vadd.f32 %v280, %v564
        %v566 = vpop.f32.mrb[0].mxu0
        %567 = vmatprep.mubr.bf16.mxu0 0
        %568 = vmatmul.mubr.bf16.gmra.mrb[0].mxu0 %v411
        %v569 = vpop.f32.mrb[0].mxu0
        %v570 = vadd.f32 %v280, %v569
        %v571 = vpop.f32.mrb[0].mxu0
        %v572 = vpop.f32.mrb[0].mxu0
        %v573 = vadd.f32 %v280, %v572
        %v574 = vpop.f32.mrb[0].mxu0
        %575 = vmatprep.mubr.bf16.mxu0 0
        %576 = vmatmul.mubr.bf16.gmra.mrb[0].mxu0 %v414
        %v577 = vpop.f32.mrb[0].mxu0
        %v578 = vadd.f32 %v280, %v577
        %v579 = vpop.f32.mrb[0].mxu0
        %v580 = vpop.f32.mrb[0].mxu0
        %v581 = vadd.f32 %v280, %v580
        %v582 = vpop.f32.mrb[0].mxu0
        %583 = vdwg.mxu0
        %v584 = vmax.f32 %v458, 0.0
        %v585 = vmax.f32 %v461, 0.0
        %v586 = vmax.f32 %v466, 0.0
        %v587 = vmax.f32 %v469, 0.0
        %v588 = vmax.f32 %v474, 0.0
        %v589 = vmax.f32 %v477, 0.0
        %v590 = vmax.f32 %v482, 0.0
        %v591 = vmax.f32 %v485, 0.0
        %v592 = vmax.f32 %v490, 0.0
        %v593 = vmax.f32 %v493, 0.0
        %v594 = vmax.f32 %v498, 0.0
        %v595 = vmax.f32 %v501, 0.0
        %v596 = vmax.f32 %v506, 0.0
        %v597 = vmax.f32 %v509, 0.0
        %v598 = vmax.f32 %v514, 0.0
        %v599 = vmax.f32 %v517, 0.0
        %v600 = vmax.f32 %v522, 0.0
        %v601 = vmax.f32 %v525, 0.0
        %v602 = vmax.f32 %v530, 0.0
        %v603 = vmax.f32 %v533, 0.0
        %v604 = vmax.f32 %v538, 0.0
        %v605 = vmax.f32 %v541, 0.0
        %v606 = vmax.f32 %v546, 0.0
        %v607 = vmax.f32 %v549, 0.0
        %v608 = vmax.f32 %v554, 0.0
        %v609 = vmax.f32 %v557, 0.0
        %v610 = vmax.f32 %v562, 0.0
        %v611 = vmax.f32 %v565, 0.0
        %v612 = vmax.f32 %v570, 0.0
        %v613 = vmax.f32 %v573, 0.0
        %v614 = vmax.f32 %v578, 0.0
        %v615 = vmax.f32 %v581, 0.0
        %v616 = vadd.f32 %v584, 0.0
        %v617 = vadd.f32 %v585, 0.0
        %v618 = vadd.f32 %v584, %v586
        %v619 = vadd.f32 %v585, %v587
        %v620 = vadd.f32 %v586, %v588
        %v621 = vadd.f32 %v587, %v589
        %v622 = vadd.f32 %v588, %v590
        %v623 = vadd.f32 %v589, %v591
        %v624 = vadd.f32 %v590, %v592
        %v625 = vadd.f32 %v591, %v593
        %v626 = vadd.f32 %v592, %v594
        %v627 = vadd.f32 %v593, %v595
        %v628 = vadd.f32 %v594, %v596
        %v629 = vadd.f32 %v595, %v597
        %v630 = vadd.f32 %v596, %v598
        %v631 = vadd.f32 %v597, %v599
        %v632 = vadd.f32 %v598, %v600
        %v633 = vadd.f32 %v599, %v601
        %v634 = vadd.f32 %v600, %v602
        %v635 = vadd.f32 %v601, %v603
        %v636 = vadd.f32 %v602, %v604
        %v637 = vadd.f32 %v603, %v605
        %v638 = vadd.f32 %v604, %v606
        %v639 = vadd.f32 %v605, %v607
        %v640 = vadd.f32 %v606, %v608
        %v641 = vadd.f32 %v607, %v609
        %v642 = vadd.f32 %v608, %v610
        %v643 = vadd.f32 %v609, %v611
        %v644 = vadd.f32 %v610, %v612
        %v645 = vadd.f32 %v611, %v613
        %v646 = vadd.f32 %v612, %v614
        %v647 = vadd.f32 %v613, %v615
        %v648 = vadd.f32 %v614, 0.0
        %v649 = vadd.f32 %v615, 0.0
        %vm685 = vcmask 1041408
        %v686 = vrot.slane 0.0, 6
        %v687 = vsel %vm685, %v686, %v686
        %v688 = vrot.slane %v616, 6
        %v689 = vrot.slane %v617, 6
        %v690 = vsel %vm685, %v688, %v689
        %v691 = vrot.slane %v618, 6
        %v692 = vrot.slane %v619, 6
        %v693 = vsel %vm685, %v691, %v692
        %v694 = vrot.slane %v620, 6
        %v695 = vrot.slane %v621, 6
        %v696 = vsel %vm685, %v694, %v695
        %v697 = vrot.slane %v622, 6
        %v698 = vrot.slane %v623, 6
        %v699 = vsel %vm685, %v697, %v698
        %v700 = vrot.slane %v624, 6
        %v701 = vrot.slane %v625, 6
        %v702 = vsel %vm685, %v700, %v701
        %v703 = vrot.slane %v626, 6
        %v704 = vrot.slane %v627, 6
        %v705 = vsel %vm685, %v703, %v704
        %v706 = vrot.slane %v628, 6
        %v707 = vrot.slane %v629, 6
        %v708 = vsel %vm685, %v706, %v707
        %v709 = vrot.slane %v630, 6
        %v710 = vrot.slane %v631, 6
        %v711 = vsel %vm685, %v709, %v710
        %v712 = vrot.slane %v632, 6
        %v713 = vrot.slane %v633, 6
        %v714 = vsel %vm685, %v712, %v713
        %v715 = vrot.slane %v634, 6
        %v716 = vrot.slane %v635, 6
        %v717 = vsel %vm685, %v715, %v716
        %v718 = vrot.slane %v636, 6
        %v719 = vrot.slane %v637, 6
        %v720 = vsel %vm685, %v718, %v719
        %v721 = vrot.slane %v638, 6
        %v722 = vrot.slane %v639, 6
        %v723 = vsel %vm685, %v721, %v722
        %v724 = vrot.slane %v640, 6
        %v725 = vrot.slane %v641, 6
        %v726 = vsel %vm685, %v724, %v725
        %v727 = vrot.slane %v642, 6
        %v728 = vrot.slane %v643, 6
        %v729 = vsel %vm685, %v727, %v728
        %v730 = vrot.slane %v644, 6
        %v731 = vrot.slane %v645, 6
        %v732 = vsel %vm685, %v730, %v731
        %v733 = vrot.slane %v646, 6
        %v734 = vrot.slane %v647, 6
        %v735 = vsel %vm685, %v733, %v734
        %v736 = vrot.slane %v648, 6
        %v737 = vrot.slane %v649, 6
        %v738 = vsel %vm685, %v736, %v737
        %v792 = vsel %vm685, 0.0, %v686
        %v793 = vsel %vm685, 0.0, %v688
        %v794 = vsel %vm685, 0.0, %v691
        %v795 = vsel %vm685, 0.0, %v694
        %v796 = vsel %vm685, 0.0, %v697
        %v797 = vsel %vm685, 0.0, %v700
        %v798 = vsel %vm685, 0.0, %v703
        %v799 = vsel %vm685, 0.0, %v706
        %v800 = vsel %vm685, 0.0, %v709
        %v801 = vsel %vm685, 0.0, %v712
        %v802 = vsel %vm685, 0.0, %v715
        %v803 = vsel %vm685, 0.0, %v718
        %v804 = vsel %vm685, 0.0, %v721
        %v805 = vsel %vm685, 0.0, %v724
        %v806 = vsel %vm685, 0.0, %v727
        %v807 = vsel %vm685, 0.0, %v730
        %v808 = vsel %vm685, 0.0, %v733
        %v809 = vsel %vm685, 0.0, %v736
        %v810 = vsel %vm685, %v686, 0.0
        %v811 = vsel %vm685, %v689, 0.0
        %v812 = vsel %vm685, %v692, 0.0
        %v813 = vsel %vm685, %v695, 0.0
        %v814 = vsel %vm685, %v698, 0.0
        %v815 = vsel %vm685, %v701, 0.0
        %v816 = vsel %vm685, %v704, 0.0
        %v817 = vsel %vm685, %v707, 0.0
        %v818 = vsel %vm685, %v710, 0.0
        %v819 = vsel %vm685, %v713, 0.0
        %v820 = vsel %vm685, %v716, 0.0
        %v821 = vsel %vm685, %v719, 0.0
        %v822 = vsel %vm685, %v722, 0.0
        %v823 = vsel %vm685, %v725, 0.0
        %v824 = vsel %vm685, %v728, 0.0
        %v825 = vsel %vm685, %v731, 0.0
        %v826 = vsel %vm685, %v734, 0.0
        %v827 = vsel %vm685, %v737, 0.0
        %vm864 = vcmask 1046528
        %v865 = vrot.slane %v792, 1
        %v866 = vrot.slane %v687, 1
        %v867 = vsel %vm864, %v865, %v866
        %v868 = vrot.slane %v810, 1
        %v869 = vsel %vm864, %v866, %v868
        %v870 = vrot.slane %v793, 1
        %v871 = vrot.slane %v690, 1
        %v872 = vsel %vm864, %v870, %v871
        %v873 = vrot.slane %v811, 1
        %v874 = vsel %vm864, %v871, %v873
        %v875 = vrot.slane %v794, 1
        %v876 = vrot.slane %v693, 1
        %v877 = vsel %vm864, %v875, %v876
        %v878 = vrot.slane %v812, 1
        %v879 = vsel %vm864, %v876, %v878
        %v880 = vrot.slane %v795, 1
        %v881 = vrot.slane %v696, 1
        %v882 = vsel %vm864, %v880, %v881
        %v883 = vrot.slane %v813, 1
        %v884 = vsel %vm864, %v881, %v883
        %v885 = vrot.slane %v796, 1
        %v886 = vrot.slane %v699, 1
        %v887 = vsel %vm864, %v885, %v886
        %v888 = vrot.slane %v814, 1
        %v889 = vsel %vm864, %v886, %v888
        %v890 = vrot.slane %v797, 1
        %v891 = vrot.slane %v702, 1
        %v892 = vsel %vm864, %v890, %v891
        %v893 = vrot.slane %v815, 1
        %v894 = vsel %vm864, %v891, %v893
        %v895 = vrot.slane %v798, 1
        %v896 = vrot.slane %v705, 1
        %v897 = vsel %vm864, %v895, %v896
        %v898 = vrot.slane %v816, 1
        %v899 = vsel %vm864, %v896, %v898
        %v900 = vrot.slane %v799, 1
        %v901 = vrot.slane %v708, 1
        %v902 = vsel %vm864, %v900, %v901
        %v903 = vrot.slane %v817, 1
        %v904 = vsel %vm864, %v901, %v903
        %v905 = vrot.slane %v800, 1
        %v906 = vrot.slane %v711, 1
        %v907 = vsel %vm864, %v905, %v906
        %v908 = vrot.slane %v818, 1
        %v909 = vsel %vm864, %v906, %v908
        %v910 = vrot.slane %v801, 1
        %v911 = vrot.slane %v714, 1
        %v912 = vsel %vm864, %v910, %v911
        %v913 = vrot.slane %v819, 1
        %v914 = vsel %vm864, %v911, %v913
        %v915 = vrot.slane %v802, 1
        %v916 = vrot.slane %v717, 1
        %v917 = vsel %vm864, %v915, %v916
        %v918 = vrot.slane %v820, 1
        %v919 = vsel %vm864, %v916, %v918
        %v920 = vrot.slane %v803, 1
        %v921 = vrot.slane %v720, 1
        %v922 = vsel %vm864, %v920, %v921
        %v923 = vrot.slane %v821, 1
        %v924 = vsel %vm864, %v921, %v923
        %v925 = vrot.slane %v804, 1
        %v926 = vrot.slane %v723, 1
        %v927 = vsel %vm864, %v925, %v926
        %v928 = vrot.slane %v822, 1
        %v929 = vsel %vm864, %v926, %v928
        %v930 = vrot.slane %v805, 1
        %v931 = vrot.slane %v726, 1
        %v932 = vsel %vm864, %v930, %v931
        %v933 = vrot.slane %v823, 1
        %v934 = vsel %vm864, %v931, %v933
        %v935 = vrot.slane %v806, 1
        %v936 = vrot.slane %v729, 1
        %v937 = vsel %vm864, %v935, %v936
        %v938 = vrot.slane %v824, 1
        %v939 = vsel %vm864, %v936, %v938
        %v940 = vrot.slane %v807, 1
        %v941 = vrot.slane %v732, 1
        %v942 = vsel %vm864, %v940, %v941
        %v943 = vrot.slane %v825, 1
        %v944 = vsel %vm864, %v941, %v943
        %v945 = vrot.slane %v808, 1
        %v946 = vrot.slane %v735, 1
        %v947 = vsel %vm864, %v945, %v946
        %v948 = vrot.slane %v826, 1
        %v949 = vsel %vm864, %v946, %v948
        %v950 = vrot.slane %v809, 1
        %v951 = vrot.slane %v738, 1
        %v952 = vsel %vm864, %v950, %v951
        %v953 = vrot.slane %v827, 1
        %v954 = vsel %vm864, %v951, %v953
        %v1009 = vadd.f32 %v792, %v867
        %v1010 = vadd.f32 %v687, %v869
        %v1011 = vadd.f32 %v810, %v868
        %v1012 = vadd.f32 %v793, %v872
        %v1013 = vadd.f32 %v690, %v874
        %v1014 = vadd.f32 %v811, %v873
        %v1015 = vadd.f32 %v794, %v877
        %v1016 = vadd.f32 %v693, %v879
        %v1017 = vadd.f32 %v812, %v878
        %v1018 = vadd.f32 %v795, %v882
        %v1019 = vadd.f32 %v696, %v884
        %v1020 = vadd.f32 %v813, %v883
        %v1021 = vadd.f32 %v796, %v887
        %v1022 = vadd.f32 %v699, %v889
        %v1023 = vadd.f32 %v814, %v888
        %v1024 = vadd.f32 %v797, %v892
        %v1025 = vadd.f32 %v702, %v894
        %v1026 = vadd.f32 %v815, %v893
        %v1027 = vadd.f32 %v798, %v897
        %v1028 = vadd.f32 %v705, %v899
        %v1029 = vadd.f32 %v816, %v898
        %v1030 = vadd.f32 %v799, %v902
        %v1031 = vadd.f32 %v708, %v904
        %v1032 = vadd.f32 %v817, %v903
        %v1033 = vadd.f32 %v800, %v907
        %v1034 = vadd.f32 %v711, %v909
        %v1035 = vadd.f32 %v818, %v908
        %v1036 = vadd.f32 %v801, %v912
        %v1037 = vadd.f32 %v714, %v914
        %v1038 = vadd.f32 %v819, %v913
        %v1039 = vadd.f32 %v802, %v917
        %v1040 = vadd.f32 %v717, %v919
        %v1041 = vadd.f32 %v820, %v918
        %v1042 = vadd.f32 %v803, %v922
        %v1043 = vadd.f32 %v720, %v924
        %v1044 = vadd.f32 %v821, %v923
        %v1045 = vadd.f32 %v804, %v927
        %v1046 = vadd.f32 %v723, %v929
        %v1047 = vadd.f32 %v822, %v928
        %v1048 = vadd.f32 %v805, %v932
        %v1049 = vadd.f32 %v726, %v934
        %v1050 = vadd.f32 %v823, %v933
        %v1051 = vadd.f32 %v806, %v937
        %v1052 = vadd.f32 %v729, %v939
        %v1053 = vadd.f32 %v824, %v938
        %v1054 = vadd.f32 %v807, %v942
        %v1055 = vadd.f32 %v732, %v944
        %v1056 = vadd.f32 %v825, %v943
        %v1057 = vadd.f32 %v808, %v947
        %v1058 = vadd.f32 %v735, %v949
        %v1059 = vadd.f32 %v826, %v948
        %v1060 = vadd.f32 %v809, %v952
        %v1061 = vadd.f32 %v738, %v954
        %v1062 = vadd.f32 %v827, %v953
        %v1063 = vmul.f32 %v1009, 0.25
        %v1064 = vmul.f32 %v1010, 0.25
        %v1065 = vmul.f32 %v1011, 0.25
        %v1066 = vmul.f32 %v1012, 0.25
        %v1067 = vmul.f32 %v1013, 0.25
        %v1068 = vmul.f32 %v1014, 0.25
        %v1069 = vmul.f32 %v1015, 0.25
        %v1070 = vmul.f32 %v1016, 0.25
        %v1071 = vmul.f32 %v1017, 0.25
        %v1072 = vmul.f32 %v1018, 0.25
        %v1073 = vmul.f32 %v1019, 0.25
        %v1074 = vmul.f32 %v1020, 0.25
        %v1075 = vmul.f32 %v1021, 0.25
        %v1076 = vmul.f32 %v1022, 0.25
        %v1077 = vmul.f32 %v1023, 0.25
        %v1078 = vmul.f32 %v1024, 0.25
        %v1079 = vmul.f32 %v1025, 0.25
        %v1080 = vmul.f32 %v1026, 0.25
        %v1081 = vmul.f32 %v1027, 0.25
        %v1082 = vmul.f32 %v1028, 0.25
        %v1083 = vmul.f32 %v1029, 0.25
        %v1084 = vmul.f32 %v1030, 0.25
        %v1085 = vmul.f32 %v1031, 0.25
        %v1086 = vmul.f32 %v1032, 0.25
        %v1087 = vmul.f32 %v1033, 0.25
        %v1088 = vmul.f32 %v1034, 0.25
        %v1089 = vmul.f32 %v1035, 0.25
        %v1090 = vmul.f32 %v1036, 0.25
        %v1091 = vmul.f32 %v1037, 0.25
        %v1092 = vmul.f32 %v1038, 0.25
        %v1093 = vmul.f32 %v1039, 0.25
        %v1094 = vmul.f32 %v1040, 0.25
        %v1095 = vmul.f32 %v1041, 0.25
        %v1096 = vmul.f32 %v1042, 0.25
        %v1097 = vmul.f32 %v1043, 0.25
        %v1098 = vmul.f32 %v1044, 0.25
        %v1099 = vmul.f32 %v1045, 0.25
        %v1100 = vmul.f32 %v1046, 0.25
        %v1101 = vmul.f32 %v1047, 0.25
        %v1102 = vmul.f32 %v1048, 0.25
        %v1103 = vmul.f32 %v1049, 0.25
        %v1104 = vmul.f32 %v1050, 0.25
        %v1105 = vmul.f32 %v1051, 0.25
        %v1106 = vmul.f32 %v1052, 0.25
        %v1107 = vmul.f32 %v1053, 0.25
        %v1108 = vmul.f32 %v1054, 0.25
        %v1109 = vmul.f32 %v1055, 0.25
        %v1110 = vmul.f32 %v1056, 0.25
        %v1111 = vmul.f32 %v1057, 0.25
        %v1112 = vmul.f32 %v1058, 0.25
        %v1113 = vmul.f32 %v1059, 0.25
        %v1114 = vmul.f32 %v1060, 0.25
        %v1115 = vmul.f32 %v1061, 0.25
        %v1116 = vmul.f32 %v1062, 0.25
        %v1135 = vrot.slane %v1063, 1
        %v1136 = vrot.slane %v1066, 1
        %v1137 = vrot.slane %v1069, 1
        %v1138 = vrot.slane %v1072, 1
        %v1139 = vrot.slane %v1075, 1
        %v1140 = vrot.slane %v1078, 1
        %v1141 = vrot.slane %v1081, 1
        %v1142 = vrot.slane %v1084, 1
        %v1143 = vrot.slane %v1087, 1
        %v1144 = vrot.slane %v1090, 1
        %v1145 = vrot.slane %v1093, 1
        %v1146 = vrot.slane %v1096, 1
        %v1147 = vrot.slane %v1099, 1
        %v1148 = vrot.slane %v1102, 1
        %v1149 = vrot.slane %v1105, 1
        %v1150 = vrot.slane %v1108, 1
        %v1151 = vrot.slane %v1111, 1
        %v1152 = vrot.slane %v1114, 1
        %v1171 = vrot.slane %v1063, 2
        %v1172 = vrot.slane %v1066, 2
        %v1173 = vrot.slane %v1069, 2
        %v1174 = vrot.slane %v1072, 2
        %v1175 = vrot.slane %v1075, 2
        %v1176 = vrot.slane %v1078, 2
        %v1177 = vrot.slane %v1081, 2
        %v1178 = vrot.slane %v1084, 2
        %v1179 = vrot.slane %v1087, 2
        %v1180 = vrot.slane %v1090, 2
        %v1181 = vrot.slane %v1093, 2
        %v1182 = vrot.slane %v1096, 2
        %v1183 = vrot.slane %v1099, 2
        %v1184 = vrot.slane %v1102, 2
        %v1185 = vrot.slane %v1105, 2
        %v1186 = vrot.slane %v1108, 2
        %v1187 = vrot.slane %v1111, 2
        %v1188 = vrot.slane %v1114, 2
        %v1207 = vrot.slane %v1063, 3
        %v1208 = vrot.slane %v1066, 3
        %v1209 = vrot.slane %v1069, 3
        %v1210 = vrot.slane %v1072, 3
        %v1211 = vrot.slane %v1075, 3
        %v1212 = vrot.slane %v1078, 3
        %v1213 = vrot.slane %v1081, 3
        %v1214 = vrot.slane %v1084, 3
        %v1215 = vrot.slane %v1087, 3
        %v1216 = vrot.slane %v1090, 3
        %v1217 = vrot.slane %v1093, 3
        %v1218 = vrot.slane %v1096, 3
        %v1219 = vrot.slane %v1099, 3
        %v1220 = vrot.slane %v1102, 3
        %v1221 = vrot.slane %v1105, 3
        %v1222 = vrot.slane %v1108, 3
        %v1223 = vrot.slane %v1111, 3
        %v1224 = vrot.slane %v1114, 3
        %v1261 = vrot.slane %v1064, 4
        %v1262 = vrot.slane %v1067, 4
        %v1263 = vrot.slane %v1070, 4
        %v1264 = vrot.slane %v1073, 4
        %v1265 = vrot.slane %v1076, 4
        %v1266 = vrot.slane %v1079, 4
        %v1267 = vrot.slane %v1082, 4
        %v1268 = vrot.slane %v1085, 4
        %v1269 = vrot.slane %v1088, 4
        %v1270 = vrot.slane %v1091, 4
        %v1271 = vrot.slane %v1094, 4
        %v1272 = vrot.slane %v1097, 4
        %v1273 = vrot.slane %v1100, 4
        %v1274 = vrot.slane %v1103, 4
        %v1275 = vrot.slane %v1106, 4
        %v1276 = vrot.slane %v1109, 4
        %v1277 = vrot.slane %v1112, 4
        %v1278 = vrot.slane %v1115, 4
        %v1297 = vrot.slane %v1064, 5
        %v1298 = vrot.slane %v1067, 5
        %v1299 = vrot.slane %v1070, 5
        %v1300 = vrot.slane %v1073, 5
        %v1301 = vrot.slane %v1076, 5
        %v1302 = vrot.slane %v1079, 5
        %v1303 = vrot.slane %v1082, 5
        %v1304 = vrot.slane %v1085, 5
        %v1305 = vrot.slane %v1088, 5
        %v1306 = vrot.slane %v1091, 5
        %v1307 = vrot.slane %v1094, 5
        %v1308 = vrot.slane %v1097, 5
        %v1309 = vrot.slane %v1100, 5
        %v1310 = vrot.slane %v1103, 5
        %v1311 = vrot.slane %v1106, 5
        %v1312 = vrot.slane %v1109, 5
        %v1313 = vrot.slane %v1112, 5
        %v1314 = vrot.slane %v1115, 5
        %v1333 = vrot.slane %v1064, 6
        %v1334 = vrot.slane %v1067, 6
        %v1335 = vrot.slane %v1070, 6
        %v1336 = vrot.slane %v1073, 6
        %v1337 = vrot.slane %v1076, 6
        %v1338 = vrot.slane %v1079, 6
        %v1339 = vrot.slane %v1082, 6
        %v1340 = vrot.slane %v1085, 6
        %v1341 = vrot.slane %v1088, 6
        %v1342 = vrot.slane %v1091, 6
        %v1343 = vrot.slane %v1094, 6
        %v1344 = vrot.slane %v1097, 6
        %v1345 = vrot.slane %v1100, 6
        %v1346 = vrot.slane %v1103, 6
        %v1347 = vrot.slane %v1106, 6
        %v1348 = vrot.slane %v1109, 6
        %v1349 = vrot.slane %v1112, 6
        %v1350 = vrot.slane %v1115, 6
        %v1369 = vrot.slane %v1064, 7
        %v1370 = vrot.slane %v1067, 7
        %v1371 = vrot.slane %v1070, 7
        %v1372 = vrot.slane %v1073, 7
        %v1373 = vrot.slane %v1076, 7
        %v1374 = vrot.slane %v1079, 7
        %v1375 = vrot.slane %v1082, 7
        %v1376 = vrot.slane %v1085, 7
        %v1377 = vrot.slane %v1088, 7
        %v1378 = vrot.slane %v1091, 7
        %v1379 = vrot.slane %v1094, 7
        %v1380 = vrot.slane %v1097, 7
        %v1381 = vrot.slane %v1100, 7
        %v1382 = vrot.slane %v1103, 7
        %v1383 = vrot.slane %v1106, 7
        %v1384 = vrot.slane %v1109, 7
        %v1385 = vrot.slane %v1112, 7
        %v1386 = vrot.slane %v1115, 7
        %vm1405 = vcmask 1040384
        %v1406 = vsel %vm1405, %v1063, %v1135
        %v1407 = vsel %vm1405, %v1066, %v1136
        %v1408 = vsel %vm1405, %v1069, %v1137
        %v1409 = vsel %vm1405, %v1072, %v1138
        %v1410 = vsel %vm1405, %v1075, %v1139
        %v1411 = vsel %vm1405, %v1078, %v1140
        %v1412 = vsel %vm1405, %v1081, %v1141
        %v1413 = vsel %vm1405, %v1084, %v1142
        %v1414 = vsel %vm1405, %v1087, %v1143
        %v1415 = vsel %vm1405, %v1090, %v1144
        %v1416 = vsel %vm1405, %v1093, %v1145
        %v1417 = vsel %vm1405, %v1096, %v1146
        %v1418 = vsel %vm1405, %v1099, %v1147
        %v1419 = vsel %vm1405, %v1102, %v1148
        %v1420 = vsel %vm1405, %v1105, %v1149
        %v1421 = vsel %vm1405, %v1108, %v1150
        %v1422 = vsel %vm1405, %v1111, %v1151
        %v1423 = vsel %vm1405, %v1114, %v1152
        %v1424 = vsel %vm685, %v1406, %v1171
        %v1425 = vsel %vm685, %v1407, %v1172
        %v1426 = vsel %vm685, %v1408, %v1173
        %v1427 = vsel %vm685, %v1409, %v1174
        %v1428 = vsel %vm685, %v1410, %v1175
        %v1429 = vsel %vm685, %v1411, %v1176
        %v1430 = vsel %vm685, %v1412, %v1177
        %v1431 = vsel %vm685, %v1413, %v1178
        %v1432 = vsel %vm685, %v1414, %v1179
        %v1433 = vsel %vm685, %v1415, %v1180
        %v1434 = vsel %vm685, %v1416, %v1181
        %v1435 = vsel %vm685, %v1417, %v1182
        %v1436 = vsel %vm685, %v1418, %v1183
        %v1437 = vsel %vm685, %v1419, %v1184
        %v1438 = vsel %vm685, %v1420, %v1185
        %v1439 = vsel %vm685, %v1421, %v1186
        %v1440 = vsel %vm685, %v1422, %v1187
        %v1441 = vsel %vm685, %v1423, %v1188
        %vm1442 = vcmask 1042432
        %v1443 = vsel %vm1442, %v1424, %v1207
        %v1444 = vsel %vm1442, %v1425, %v1208
        %v1445 = vsel %vm1442, %v1426, %v1209
        %v1446 = vsel %vm1442, %v1427, %v1210
        %v1447 = vsel %vm1442, %v1428, %v1211
        %v1448 = vsel %vm1442, %v1429, %v1212
        %v1449 = vsel %vm1442, %v1430, %v1213
        %v1450 = vsel %vm1442, %v1431, %v1214
        %v1451 = vsel %vm1442, %v1432, %v1215
        %v1452 = vsel %vm1442, %v1433, %v1216
        %v1453 = vsel %vm1442, %v1434, %v1217
        %v1454 = vsel %vm1442, %v1435, %v1218
        %v1455 = vsel %vm1442, %v1436, %v1219
        %v1456 = vsel %vm1442, %v1437, %v1220
        %v1457 = vsel %vm1442, %v1438, %v1221
        %v1458 = vsel %vm1442, %v1439, %v1222
        %v1459 = vsel %vm1442, %v1440, %v1223
        %v1460 = vsel %vm1442, %v1441, %v1224
        %v1461 = vsel %vm416, %v1443, %v1261
        %v1462 = vsel %vm416, %v1444, %v1262
        %v1463 = vsel %vm416, %v1445, %v1263
        %v1464 = vsel %vm416, %v1446, %v1264
        %v1465 = vsel %vm416, %v1447, %v1265
        %v1466 = vsel %vm416, %v1448, %v1266
        %v1467 = vsel %vm416, %v1449, %v1267
        %v1468 = vsel %vm416, %v1450, %v1268
        %v1469 = vsel %vm416, %v1451, %v1269
        %v1470 = vsel %vm416, %v1452, %v1270
        %v1471 = vsel %vm416, %v1453, %v1271
        %v1472 = vsel %vm416, %v1454, %v1272
        %v1473 = vsel %vm416, %v1455, %v1273
        %v1474 = vsel %vm416, %v1456, %v1274
        %v1475 = vsel %vm416, %v1457, %v1275
        %v1476 = vsel %vm416, %v1458, %v1276
        %v1477 = vsel %vm416, %v1459, %v1277
        %v1478 = vsel %vm416, %v1460, %v1278
        %v1479 = vsel %vm417, %v1461, %v1297
        %v1480 = vsel %vm417, %v1462, %v1298
        %v1481 = vsel %vm417, %v1463, %v1299
        %v1482 = vsel %vm417, %v1464, %v1300
        %v1483 = vsel %vm417, %v1465, %v1301
        %v1484 = vsel %vm417, %v1466, %v1302
        %v1485 = vsel %vm417, %v1467, %v1303
        %v1486 = vsel %vm417, %v1468, %v1304
        %v1487 = vsel %vm417, %v1469, %v1305
        %v1488 = vsel %vm417, %v1470, %v1306
        %v1489 = vsel %vm417, %v1471, %v1307
        %v1490 = vsel %vm417, %v1472, %v1308
        %v1491 = vsel %vm417, %v1473, %v1309
        %v1492 = vsel %vm417, %v1474, %v1310
        %v1493 = vsel %vm417, %v1475, %v1311
        %v1494 = vsel %vm417, %v1476, %v1312
        %v1495 = vsel %vm417, %v1477, %v1313
        %v1496 = vsel %vm417, %v1478, %v1314
        %vm1497 = vcmask 1045504
        %v1498 = vsel %vm1497, %v1479, %v1333
        %v1499 = vsel %vm1497, %v1480, %v1334
        %v1500 = vsel %vm1497, %v1481, %v1335
        %v1501 = vsel %vm1497, %v1482, %v1336
        %v1502 = vsel %vm1497, %v1483, %v1337
        %v1503 = vsel %vm1497, %v1484, %v1338
        %v1504 = vsel %vm1497, %v1485, %v1339
        %v1505 = vsel %vm1497, %v1486, %v1340
        %v1506 = vsel %vm1497, %v1487, %v1341
        %v1507 = vsel %vm1497, %v1488, %v1342
        %v1508 = vsel %vm1497, %v1489, %v1343
        %v1509 = vsel %vm1497, %v1490, %v1344
        %v1510 = vsel %vm1497, %v1491, %v1345
        %v1511 = vsel %vm1497, %v1492, %v1346
        %v1512 = vsel %vm1497, %v1493, %v1347
        %v1513 = vsel %vm1497, %v1494, %v1348
        %v1514 = vsel %vm1497, %v1495, %v1349
        %v1515 = vsel %vm1497, %v1496, %v1350
        %v1516 = vsel %vm864, %v1498, %v1369
        %v1517 = vsel %vm864, %v1499, %v1370
        %v1518 = vsel %vm864, %v1500, %v1371
        %v1519 = vsel %vm864, %v1501, %v1372
        %v1520 = vsel %vm864, %v1502, %v1373
        %v1521 = vsel %vm864, %v1503, %v1374
        %v1522 = vsel %vm864, %v1504, %v1375
        %v1523 = vsel %vm864, %v1505, %v1376
        %v1524 = vsel %vm864, %v1506, %v1377
        %v1525 = vsel %vm864, %v1507, %v1378
        %v1526 = vsel %vm864, %v1508, %v1379
        %v1527 = vsel %vm864, %v1509, %v1380
        %v1528 = vsel %vm864, %v1510, %v1381
        %v1529 = vsel %vm864, %v1511, %v1382
        %v1530 = vsel %vm864, %v1512, %v1383
        %v1531 = vsel %vm864, %v1513, %v1384
        %v1532 = vsel %vm864, %v1514, %v1385
        %v1533 = vsel %vm864, %v1515, %v1386
        %v1536 = vrot.slane %v1518, 7
        %v1537 = vrot.slane %v1071, 7
        %v1538 = vsel %vm1405, %v1536, %v1537
        %v1543 = vrot.slane %v1520, 6
        %v1544 = vrot.slane %v1077, 6
        %v1545 = vsel %vm685, %v1543, %v1544
        %v1550 = vrot.slane %v1522, 5
        %v1551 = vrot.slane %v1083, 5
        %v1552 = vsel %vm1442, %v1550, %v1551
        %v1557 = vrot.slane %v1524, 4
        %v1558 = vrot.slane %v1089, 4
        %v1559 = vsel %vm416, %v1557, %v1558
        %v1564 = vrot.slane %v1526, 3
        %v1565 = vrot.slane %v1095, 3
        %v1566 = vsel %vm417, %v1564, %v1565
        %v1571 = vrot.slane %v1528, 2
        %v1572 = vrot.slane %v1101, 2
        %v1573 = vsel %vm1497, %v1571, %v1572
        %v1578 = vrot.slane %v1530, 1
        %v1579 = vrot.slane %v1107, 1
        %v1580 = vsel %vm864, %v1578, %v1579
        %v1583 = vsel %vm1405, %v1065, %v1536
        %v1584 = vsel %vm685, %v1538, %v1543
        %v1585 = vsel %vm1442, %v1545, %v1550
        %v1586 = vsel %vm416, %v1552, %v1557
        %v1587 = vsel %vm417, %v1559, %v1564
        %v1588 = vsel %vm1497, %v1566, %v1571
        %v1589 = vsel %vm864, %v1573, %v1578
        %v1590 = vpack.c.bf16 %v1583, %v1516
        %v1591 = vpack.c.bf16 %v1585, %v1584
        %v1592 = vpack.c.bf16 %v1587, %v1586
        %v1593 = vpack.c.bf16 %v1589, %v1588
        %v1594 = vpack.c.bf16 %v1532, %v1580
        %v1595 = vpack.c.bf16 %v1113, %v1113
        %v1596 = vld [vmem:[#allocation2] sm:$0xff]
        %v1597 = vld [vmem:[#allocation2 + $0x8] sm:$0xff]
        %v1598 = vld [vmem:[#allocation2 + $0x10] sm:$0xff]
        %v1599 = vld [vmem:[#allocation2 + $0x18] sm:$0xff]
        %v1600 = vld [vmem:[#allocation2 + $0x20] sm:$0xff]
        %v1601 = vld [vmem:[#allocation2 + $0x28] sm:$0xff]
        %v1602 = vld [vmem:[#allocation2 + $0x30] sm:$0xff]
        %v1603 = vld [vmem:[#allocation2 + $0x38] sm:$0xff]
        %v1604 = vld [vmem:[#allocation2 + $0x40] sm:$0xff]
        %v1605 = vld [vmem:[#allocation2 + $0x48] sm:$0xff]
        %v1606 = vld [vmem:[#allocation2 + $0x50] sm:$0xff]
        %v1607 = vld [vmem:[#allocation2 + $0x58] sm:$0xff]
        %v1608 = vld [vmem:[#allocation2 + $0x60] sm:$0xff]
        %v1609 = vld [vmem:[#allocation2 + $0x68] sm:$0xff]
        %v1610 = vld [vmem:[#allocation2 + $0x70] sm:$0xff]
        %v1611 = vld [vmem:[#allocation2 + $0x78] sm:$0xff]
        %v1614 = vrot.slane %v1519, 7
        %v1615 = vrot.slane %v1074, 7
        %v1616 = vsel %vm1405, %v1614, %v1615
        %v1621 = vrot.slane %v1521, 6
        %v1622 = vrot.slane %v1080, 6
        %v1623 = vsel %vm685, %v1621, %v1622
        %v1628 = vrot.slane %v1523, 5
        %v1629 = vrot.slane %v1086, 5
        %v1630 = vsel %vm1442, %v1628, %v1629
        %v1635 = vrot.slane %v1525, 4
        %v1636 = vrot.slane %v1092, 4
        %v1637 = vsel %vm416, %v1635, %v1636
        %v1642 = vrot.slane %v1527, 3
        %v1643 = vrot.slane %v1098, 3
        %v1644 = vsel %vm417, %v1642, %v1643
        %v1649 = vrot.slane %v1529, 2
        %v1650 = vrot.slane %v1104, 2
        %v1651 = vsel %vm1497, %v1649, %v1650
        %v1656 = vrot.slane %v1531, 1
        %v1657 = vrot.slane %v1110, 1
        %v1658 = vsel %vm864, %v1656, %v1657
        %v1661 = vsel %vm1405, %v1068, %v1614
        %v1662 = vsel %vm685, %v1616, %v1621
        %v1663 = vsel %vm1442, %v1623, %v1628
        %v1664 = vsel %vm416, %v1630, %v1635
        %v1665 = vsel %vm417, %v1637, %v1642
        %v1666 = vsel %vm1497, %v1644, %v1649
        %v1667 = vsel %vm864, %v1651, %v1656
        %v1668 = vpack.c.bf16 %v1661, %v1517
        %v1669 = vpack.c.bf16 %v1663, %v1662
        %v1670 = vpack.c.bf16 %v1665, %v1664
        %v1671 = vpack.c.bf16 %v1667, %v1666
        %v1672 = vpack.c.bf16 %v1533, %v1658
        %v1673 = vpack.c.bf16 %v1116, %v1116
        %s1674 = scalar_lea.vmem [#allocation2], 384
        %v1675 = vld [vmem:[%s1674] sm:$0xff]
        %v1676 = vld [vmem:[%s1674 + $0x8] sm:$0xff]
        %v1677 = vld [vmem:[%s1674 + $0x10] sm:$0xff]
        %v1678 = vld [vmem:[%s1674 + $0x18] sm:$0xff]
        %v1679 = vld [vmem:[%s1674 + $0x20] sm:$0xff]
        %v1680 = vld [vmem:[%s1674 + $0x28] sm:$0xff]
        %v1681 = vld [vmem:[%s1674 + $0x30] sm:$0xff]
        %v1682 = vld [vmem:[%s1674 + $0x38] sm:$0xff]
        %v1683 = vld [vmem:[%s1674 + $0x40] sm:$0xff]
        %v1684 = vld [vmem:[%s1674 + $0x48] sm:$0xff]
        %v1685 = vld [vmem:[%s1674 + $0x50] sm:$0xff]
        %v1686 = vld [vmem:[%s1674 + $0x58] sm:$0xff]
        %v1687 = vld [vmem:[%s1674 + $0x60] sm:$0xff]
        %v1688 = vld [vmem:[%s1674 + $0x68] sm:$0xff]
        %v1689 = vld [vmem:[%s1674 + $0x70] sm:$0xff]
        %v1690 = vld [vmem:[%s1674 + $0x78] sm:$0xff]
        %v1707 = vunpack.c.l.b16 %v1675
        %v1708 = vunpack.c.h.b16 %v1675
        %v1709 = vunpack.c.l.b16 %v1676
        %v1710 = vunpack.c.h.b16 %v1676
        %v1711 = vunpack.c.l.b16 %v1677
        %v1712 = vunpack.c.h.b16 %v1677
        %v1713 = vunpack.c.l.b16 %v1678
        %v1714 = vunpack.c.h.b16 %v1678
        %v1715 = vunpack.c.l.b16 %v1679
        %v1716 = vunpack.c.h.b16 %v1679
        %v1717 = vunpack.c.l.b16 %v1680
        %v1718 = vunpack.c.h.b16 %v1680
        %v1719 = vunpack.c.l.b16 %v1681
        %v1720 = vunpack.c.h.b16 %v1681
        %v1721 = vunpack.c.l.b16 %v1682
        %v1722 = vunpack.c.h.b16 %v1682
        %v1723 = vunpack.c.l.b16 %v1683
        %v1724 = vunpack.c.h.b16 %v1683
        %v1725 = vunpack.c.l.b16 %v1684
        %v1726 = vunpack.c.h.b16 %v1684
        %v1727 = vunpack.c.l.b16 %v1685
        %v1728 = vunpack.c.h.b16 %v1685
        %v1729 = vunpack.c.l.b16 %v1686
        %v1730 = vunpack.c.h.b16 %v1686
        %v1731 = vunpack.c.l.b16 %v1687
        %v1732 = vunpack.c.h.b16 %v1687
        %v1733 = vunpack.c.l.b16 %v1688
        %v1734 = vunpack.c.h.b16 %v1688
        %v1735 = vunpack.c.l.b16 %v1689
        %v1736 = vunpack.c.h.b16 %v1689
        %v1737 = vunpack.c.l.b16 %v1690
        %v1738 = vunpack.c.h.b16 %v1690
        %v1739 = vpack.c.b16 %v1709, %v1707
        %v1740 = vpack.c.b16 %v1710, %v1708
        %v1741 = vpack.c.b16 %v1713, %v1711
        %v1742 = vpack.c.b16 %v1714, %v1712
        %v1743 = vpack.c.b16 %v1717, %v1715
        %v1744 = vpack.c.b16 %v1718, %v1716
        %v1745 = vpack.c.b16 %v1721, %v1719
        %v1746 = vpack.c.b16 %v1722, %v1720
        %v1747 = vpack.c.b16 %v1725, %v1723
        %v1748 = vpack.c.b16 %v1726, %v1724
        %v1749 = vpack.c.b16 %v1729, %v1727
        %v1750 = vpack.c.b16 %v1730, %v1728
        %v1751 = vpack.c.b16 %v1733, %v1731
        %v1752 = vpack.c.b16 %v1734, %v1732
        %v1753 = vpack.c.b16 %v1737, %v1735
        %v1754 = vpack.c.b16 %v1738, %v1736
        %1771 = vmatprep.subr.bf16.mxu0 %v1740
        %1772 = vmatpush1.bf16.msra.mxu0 %v1739
        %1773 = vmatprep.subr.bf16.mxu0 %v1742
        %1774 = vmatpush1.bf16.msra.mxu0 %v1741
        %1775 = vmatprep.subr.bf16.mxu0 %v1744
        %1776 = vmatpush1.bf16.msra.mxu0 %v1743
        %1777 = vmatprep.subr.bf16.mxu0 %v1746
        %1778 = vmatpush1.bf16.msra.mxu0 %v1745
        %1779 = vmatprep.subr.bf16.mxu0 %v1748
        %1780 = vmatpush1.bf16.msra.mxu0 %v1747
        %1781 = vmatprep.subr.bf16.mxu0 %v1750
        %1782 = vmatpush1.bf16.msra.mxu0 %v1749
        %1783 = vmatprep.subr.bf16.mxu0 %v1752
        %1784 = vmatpush1.bf16.msra.mxu0 %v1751
        %1785 = vmatprep.subr.bf16.mxu0 %v1754
        %1786 = vmatpush1.bf16.msra.mxu0 %v1753
        %1787 = vmatprep.subr.bf16.mxu0 0
        %1788 = vmatpush1.bf16.msra.mxu0 0
        %1789 = vmatprep.subr.bf16.mxu0 0
        %1790 = vmatpush1.bf16.msra.mxu0 0
        %1791 = vmatprep.subr.bf16.mxu0 0
        %1792 = vmatpush1.bf16.msra.mxu0 0
        %1793 = vmatprep.subr.bf16.mxu0 0
        %1794 = vmatpush1.bf16.msra.mxu0 0
        %1795 = vmatprep.subr.bf16.mxu0 0
        %1796 = vmatpush1.bf16.msra.mxu0 0
        %1797 = vmatprep.subr.bf16.mxu0 0
        %1798 = vmatpush1.bf16.msra.mxu0 0
        %1799 = vmatprep.subr.bf16.mxu0 0
        %1800 = vmatpush1.bf16.msra.mxu0 0
        %1801 = vmatprep.subr.bf16.mxu0 0
        %1802 = vmatpush1.bf16.msra.mxu0 0
        %1803 = vmatprep.mubr.bf16.mxu0 0
        %1804 = vmatmul.mubr.bf16.gmra.mrb[0].mxu0 %v1668
        %v1805 = vpop.f32.mrb[0].mxu0
        %v1806 = vadd.f32 0.0, %v1805
        %v1807 = vpop.f32.mrb[0].mxu0
        %v1808 = vadd.f32 0.0, %v1807
        %v1809 = vpop.f32.mrb[0].mxu0
        %v1810 = vadd.f32 0.0, %v1809
        %v1811 = vpop.f32.mrb[0].mxu0
        %v1812 = vadd.f32 0.0, %v1811
        %1813 = vmatprep.mubr.bf16.mxu0 0
        %1814 = vmatmul.mubr.bf16.gmra.mrb[0].mxu0 %v1669
        %v1815 = vpop.f32.mrb[0].mxu0
        %v1816 = vadd.f32 0.0, %v1815
        %v1817 = vpop.f32.mrb[0].mxu0
        %v1818 = vadd.f32 0.0, %v1817
        %v1819 = vpop.f32.mrb[0].mxu0
        %v1820 = vadd.f32 0.0, %v1819
        %v1821 = vpop.f32.mrb[0].mxu0
        %v1822 = vadd.f32 0.0, %v1821
        %1823 = vmatprep.mubr.bf16.mxu0 0
        %1824 = vmatmul.mubr.bf16.gmra.mrb[0].mxu0 %v1670
        %v1825 = vpop.f32.mrb[0].mxu0
        %v1826 = vadd.f32 0.0, %v1825
        %v1827 = vpop.f32.mrb[0].mxu0
        %v1828 = vadd.f32 0.0, %v1827
        %v1829 = vpop.f32.mrb[0].mxu0
        %v1830 = vadd.f32 0.0, %v1829
        %v1831 = vpop.f32.mrb[0].mxu0
        %v1832 = vadd.f32 0.0, %v1831
        %1833 = vmatprep.mubr.bf16.mxu0 0
        %1834 = vmatmul.mubr.bf16.gmra.mrb[0].mxu0 %v1671
        %v1835 = vpop.f32.mrb[0].mxu0
        %v1836 = vadd.f32 0.0, %v1835
        %v1837 = vpop.f32.mrb[0].mxu0
        %v1838 = vadd.f32 0.0, %v1837
        %v1839 = vpop.f32.mrb[0].mxu0
        %v1840 = vadd.f32 0.0, %v1839
        %v1841 = vpop.f32.mrb[0].mxu0
        %v1842 = vadd.f32 0.0, %v1841
        %1843 = vmatprep.mubr.bf16.mxu0 0
        %1844 = vmatmul.mubr.bf16.gmra.mrb[0].mxu0 %v1672
        %v1845 = vpop.f32.mrb[0].mxu0
        %v1846 = vadd.f32 0.0, %v1845
        %v1847 = vpop.f32.mrb[0].mxu0
        %v1848 = vadd.f32 0.0, %v1847
        %v1849 = vpop.f32.mrb[0].mxu0
        %v1850 = vadd.f32 0.0, %v1849
        %v1851 = vpop.f32.mrb[0].mxu0
        %v1852 = vadd.f32 0.0, %v1851
        %1853 = vmatprep.mubr.bf16.mxu0 0
        %1854 = vmatmul.mubr.bf16.gmra.mrb[0].mxu0 %v1673
        %v1855 = vpop.f32.mrb[0].mxu0
        %v1856 = vadd.f32 0.0, %v1855
        %v1857 = vpop.f32.mrb[0].mxu0
        %v1858 = vadd.f32 0.0, %v1857
        %v1859 = vpop.f32.mrb[0].mxu0
        %v1860 = vpop.f32.mrb[0].mxu0
        %1861 = vdwg.mxu0
        %v1878 = vunpack.c.l.b16 %v1596
        %v1879 = vunpack.c.h.b16 %v1596
        %v1880 = vunpack.c.l.b16 %v1597
        %v1881 = vunpack.c.h.b16 %v1597
        %v1882 = vunpack.c.l.b16 %v1598
        %v1883 = vunpack.c.h.b16 %v1598
        %v1884 = vunpack.c.l.b16 %v1599
        %v1885 = vunpack.c.h.b16 %v1599
        %v1886 = vunpack.c.l.b16 %v1600
        %v1887 = vunpack.c.h.b16 %v1600
        %v1888 = vunpack.c.l.b16 %v1601
        %v1889 = vunpack.c.h.b16 %v1601
        %v1890 = vunpack.c.l.b16 %v1602
        %v1891 = vunpack.c.h.b16 %v1602
        %v1892 = vunpack.c.l.b16 %v1603
        %v1893 = vunpack.c.h.b16 %v1603
        %v1894 = vunpack.c.l.b16 %v1604
        %v1895 = vunpack.c.h.b16 %v1604
        %v1896 = vunpack.c.l.b16 %v1605
        %v1897 = vunpack.c.h.b16 %v1605
        %v1898 = vunpack.c.l.b16 %v1606
        %v1899 = vunpack.c.h.b16 %v1606
        %v1900 = vunpack.c.l.b16 %v1607
        %v1901 = vunpack.c.h.b16 %v1607
        %v1902 = vunpack.c.l.b16 %v1608
        %v1903 = vunpack.c.h.b16 %v1608
        %v1904 = vunpack.c.l.b16 %v1609
        %v1905 = vunpack.c.h.b16 %v1609
        %v1906 = vunpack.c.l.b16 %v1610
        %v1907 = vunpack.c.h.b16 %v1610
        %v1908 = vunpack.c.l.b16 %v1611
        %v1909 = vunpack.c.h.b16 %v1611
        %v1910 = vpack.c.b16 %v1880, %v1878
        %v1911 = vpack.c.b16 %v1881, %v1879
        %v1912 = vpack.c.b16 %v1884, %v1882
        %v1913 = vpack.c.b16 %v1885, %v1883
        %v1914 = vpack.c.b16 %v1888, %v1886
        %v1915 = vpack.c.b16 %v1889, %v1887
        %v1916 = vpack.c.b16 %v1892, %v1890
        %v1917 = vpack.c.b16 %v1893, %v1891
        %v1918 = vpack.c.b16 %v1896, %v1894
        %v1919 = vpack.c.b16 %v1897, %v1895
        %v1920 = vpack.c.b16 %v1900, %v1898
        %v1921 = vpack.c.b16 %v1901, %v1899
        %v1922 = vpack.c.b16 %v1904, %v1902
        %v1923 = vpack.c.b16 %v1905, %v1903
        %v1924 = vpack.c.b16 %v1908, %v1906
        %v1925 = vpack.c.b16 %v1909, %v1907
        %1942 = vmatprep.subr.bf16.mxu0 %v1911
        %1943 = vmatpush1.bf16.msra.mxu0 %v1910
        %1944 = vmatprep.subr.bf16.mxu0 %v1913
        %1945 = vmatpush1.bf16.msra.mxu0 %v1912
        %1946 = vmatprep.subr.bf16.mxu0 %v1915
        %1947 = vmatpush1.bf16.msra.mxu0 %v1914
        %1948 = vmatprep.subr.bf16.mxu0 %v1917
        %1949 = vmatpush1.bf16.msra.mxu0 %v1916
        %1950 = vmatprep.subr.bf16.mxu0 %v1919
        %1951 = vmatpush1.bf16.msra.mxu0 %v1918
        %1952 = vmatprep.subr.bf16.mxu0 %v1921
        %1953 = vmatpush1.bf16.msra.mxu0 %v1920
        %1954 = vmatprep.subr.bf16.mxu0 %v1923
        %1955 = vmatpush1.bf16.msra.mxu0 %v1922
        %1956 = vmatprep.subr.bf16.mxu0 %v1925
        %1957 = vmatpush1.bf16.msra.mxu0 %v1924
        %1958 = vmatprep.subr.bf16.mxu0 0
        %1959 = vmatpush1.bf16.msra.mxu0 0
        %1960 = vmatprep.subr.bf16.mxu0 0
        %1961 = vmatpush1.bf16.msra.mxu0 0
        %1962 = vmatprep.subr.bf16.mxu0 0
        %1963 = vmatpush1.bf16.msra.mxu0 0
        %1964 = vmatprep.subr.bf16.mxu0 0
        %1965 = vmatpush1.bf16.msra.mxu0 0
        %1966 = vmatprep.subr.bf16.mxu0 0
        %1967 = vmatpush1.bf16.msra.mxu0 0
        %1968 = vmatprep.subr.bf16.mxu0 0
        %1969 = vmatpush1.bf16.msra.mxu0 0
        %1970 = vmatprep.subr.bf16.mxu0 0
        %1971 = vmatpush1.bf16.msra.mxu0 0
        %1972 = vmatprep.subr.bf16.mxu0 0
        %1973 = vmatpush1.bf16.msra.mxu0 0
        %1974 = vmatprep.mubr.bf16.mxu0 0
        %1975 = vmatmul.mubr.bf16.gmra.mrb[0].mxu0 %v1590
        %v1976 = vpop.f32.mrb[0].mxu0
        %v1977 = vadd.f32 %v1806, %v1976
        %v1978 = vpop.f32.mrb[0].mxu0
        %v1979 = vadd.f32 %v1808, %v1978
        %v1980 = vpop.f32.mrb[0].mxu0
        %v1981 = vadd.f32 %v1810, %v1980
        %v1982 = vpop.f32.mrb[0].mxu0
        %v1983 = vadd.f32 %v1812, %v1982
        %1984 = vmatprep.mubr.bf16.mxu0 0
        %1985 = vmatmul.mubr.bf16.gmra.mrb[0].mxu0 %v1591
        %v1986 = vpop.f32.mrb[0].mxu0
        %v1987 = vadd.f32 %v1816, %v1986
        %v1988 = vpop.f32.mrb[0].mxu0
        %v1989 = vadd.f32 %v1818, %v1988
        %v1990 = vpop.f32.mrb[0].mxu0
        %v1991 = vadd.f32 %v1820, %v1990
        %v1992 = vpop.f32.mrb[0].mxu0
        %v1993 = vadd.f32 %v1822, %v1992
        %1994 = vmatprep.mubr.bf16.mxu0 0
        %1995 = vmatmul.mubr.bf16.gmra.mrb[0].mxu0 %v1592
        %v1996 = vpop.f32.mrb[0].mxu0
        %v1997 = vadd.f32 %v1826, %v1996
        %v1998 = vpop.f32.mrb[0].mxu0
        %v1999 = vadd.f32 %v1828, %v1998
        %v2000 = vpop.f32.mrb[0].mxu0
        %v2001 = vadd.f32 %v1830, %v2000
        %v2002 = vpop.f32.mrb[0].mxu0
        %v2003 = vadd.f32 %v1832, %v2002
        %2004 = vmatprep.mubr.bf16.mxu0 0
        %2005 = vmatmul.mubr.bf16.gmra.mrb[0].mxu0 %v1593
        %v2006 = vpop.f32.mrb[0].mxu0
        %v2007 = vadd.f32 %v1836, %v2006
        %v2008 = vpop.f32.mrb[0].mxu0
        %v2009 = vadd.f32 %v1838, %v2008
        %v2010 = vpop.f32.mrb[0].mxu0
        %v2011 = vadd.f32 %v1840, %v2010
        %v2012 = vpop.f32.mrb[0].mxu0
        %v2013 = vadd.f32 %v1842, %v2012
        %2014 = vmatprep.mubr.bf16.mxu0 0
        %2015 = vmatmul.mubr.bf16.gmra.mrb[0].mxu0 %v1594
        %v2016 = vpop.f32.mrb[0].mxu0
        %v2017 = vadd.f32 %v1846, %v2016
        %v2018 = vpop.f32.mrb[0].mxu0
        %v2019 = vadd.f32 %v1848, %v2018
        %v2020 = vpop.f32.mrb[0].mxu0
        %v2021 = vadd.f32 %v1850, %v2020
        %v2022 = vpop.f32.mrb[0].mxu0
        %v2023 = vadd.f32 %v1852, %v2022
        %2024 = vmatprep.mubr.bf16.mxu0 0
        %2025 = vmatmul.mubr.bf16.gmra.mrb[0].mxu0 %v1595
        %v2026 = vpop.f32.mrb[0].mxu0
        %v2027 = vadd.f32 %v1856, %v2026
        %v2028 = vpop.f32.mrb[0].mxu0
        %v2029 = vadd.f32 %v1858, %v2028
        %v2030 = vpop.f32.mrb[0].mxu0
        %v2031 = vpop.f32.mrb[0].mxu0
        %2032 = vdwg.mxu0
        %v2033 = vrot.slane %v1520, 7
        %v2034 = vrot.slane %v1077, 7
        %v2035 = vsel %vm1405, %v2033, %v2034
        %v2038 = vrot.slane %v1522, 6
        %v2039 = vrot.slane %v1083, 6
        %v2040 = vsel %vm685, %v2038, %v2039
        %v2043 = vrot.slane %v1524, 5
        %v2044 = vrot.slane %v1089, 5
        %v2045 = vsel %vm1442, %v2043, %v2044
        %v2048 = vrot.slane %v1526, 4
        %v2049 = vrot.slane %v1095, 4
        %v2050 = vsel %vm416, %v2048, %v2049
        %v2053 = vrot.slane %v1528, 3
        %v2054 = vrot.slane %v1101, 3
        %v2055 = vsel %vm417, %v2053, %v2054
        %v2058 = vrot.slane %v1530, 2
        %v2059 = vrot.slane %v1107, 2
        %v2060 = vsel %vm1497, %v2058, %v2059
        %v2065 = vrot.slane %v1532, 1
        %v2066 = vrot.slane %v1113, 1
        %v2067 = vsel %vm864, %v2065, %v2066
        %v2070 = vsel %vm1405, %v1071, %v2033
        %v2071 = vsel %vm685, %v2035, %v2038
        %v2072 = vsel %vm1442, %v2040, %v2043
        %v2073 = vsel %vm416, %v2045, %v2048
        %v2074 = vsel %vm417, %v2050, %v2053
        %v2075 = vsel %vm1497, %v2055, %v2058
        %v2076 = vsel %vm864, %v2060, %v2065
        %v2077 = vpack.c.bf16 %v2070, %v1518
        %v2078 = vpack.c.bf16 %v2072, %v2071
        %v2079 = vpack.c.bf16 %v2074, %v2073
        %v2080 = vpack.c.bf16 %v2076, %v2075
        %v2081 = vpack.c.bf16 %v1516, %v2067
        %v2082 = vpack.c.bf16 %v1065, %v1065
        %s2083 = scalar_lea.vmem [#allocation2], 768
        %v2084 = vld [vmem:[%s2083] sm:$0xff]
        %v2085 = vld [vmem:[%s2083 + $0x8] sm:$0xff]
        %v2086 = vld [vmem:[%s2083 + $0x10] sm:$0xff]
        %v2087 = vld [vmem:[%s2083 + $0x18] sm:$0xff]
        %v2088 = vld [vmem:[%s2083 + $0x20] sm:$0xff]
        %v2089 = vld [vmem:[%s2083 + $0x28] sm:$0xff]
        %v2090 = vld [vmem:[%s2083 + $0x30] sm:$0xff]
        %v2091 = vld [vmem:[%s2083 + $0x38] sm:$0xff]
        %v2092 = vld [vmem:[%s2083 + $0x40] sm:$0xff]
        %v2093 = vld [vmem:[%s2083 + $0x48] sm:$0xff]
        %v2094 = vld [vmem:[%s2083 + $0x50] sm:$0xff]
        %v2095 = vld [vmem:[%s2083 + $0x58] sm:$0xff]
        %v2096 = vld [vmem:[%s2083 + $0x60] sm:$0xff]
        %v2097 = vld [vmem:[%s2083 + $0x68] sm:$0xff]
        %v2098 = vld [vmem:[%s2083 + $0x70] sm:$0xff]
        %v2099 = vld [vmem:[%s2083 + $0x78] sm:$0xff]
        %v2116 = vunpack.c.l.b16 %v2084
        %v2117 = vunpack.c.h.b16 %v2084
        %v2118 = vunpack.c.l.b16 %v2085
        %v2119 = vunpack.c.h.b16 %v2085
        %v2120 = vunpack.c.l.b16 %v2086
        %v2121 = vunpack.c.h.b16 %v2086
        %v2122 = vunpack.c.l.b16 %v2087
        %v2123 = vunpack.c.h.b16 %v2087
        %v2124 = vunpack.c.l.b16 %v2088
        %v2125 = vunpack.c.h.b16 %v2088
        %v2126 = vunpack.c.l.b16 %v2089
        %v2127 = vunpack.c.h.b16 %v2089
        %v2128 = vunpack.c.l.b16 %v2090
        %v2129 = vunpack.c.h.b16 %v2090
        %v2130 = vunpack.c.l.b16 %v2091
        %v2131 = vunpack.c.h.b16 %v2091
        %v2132 = vunpack.c.l.b16 %v2092
        %v2133 = vunpack.c.h.b16 %v2092
        %v2134 = vunpack.c.l.b16 %v2093
        %v2135 = vunpack.c.h.b16 %v2093
        %v2136 = vunpack.c.l.b16 %v2094
        %v2137 = vunpack.c.h.b16 %v2094
        %v2138 = vunpack.c.l.b16 %v2095
        %v2139 = vunpack.c.h.b16 %v2095
        %v2140 = vunpack.c.l.b16 %v2096
        %v2141 = vunpack.c.h.b16 %v2096
        %v2142 = vunpack.c.l.b16 %v2097
        %v2143 = vunpack.c.h.b16 %v2097
        %v2144 = vunpack.c.l.b16 %v2098
        %v2145 = vunpack.c.h.b16 %v2098
        %v2146 = vunpack.c.l.b16 %v2099
        %v2147 = vunpack.c.h.b16 %v2099
        %v2148 = vpack.c.b16 %v2118, %v2116
        %v2149 = vpack.c.b16 %v2119, %v2117
        %v2150 = vpack.c.b16 %v2122, %v2120
        %v2151 = vpack.c.b16 %v2123, %v2121
        %v2152 = vpack.c.b16 %v2126, %v2124
        %v2153 = vpack.c.b16 %v2127, %v2125
        %v2154 = vpack.c.b16 %v2130, %v2128
        %v2155 = vpack.c.b16 %v2131, %v2129
        %v2156 = vpack.c.b16 %v2134, %v2132
        %v2157 = vpack.c.b16 %v2135, %v2133
        %v2158 = vpack.c.b16 %v2138, %v2136
        %v2159 = vpack.c.b16 %v2139, %v2137
        %v2160 = vpack.c.b16 %v2142, %v2140
        %v2161 = vpack.c.b16 %v2143, %v2141
        %v2162 = vpack.c.b16 %v2146, %v2144
        %v2163 = vpack.c.b16 %v2147, %v2145
        %2180 = vmatprep.subr.bf16.mxu0 %v2149
        %2181 = vmatpush1.bf16.msra.mxu0 %v2148
        %2182 = vmatprep.subr.bf16.mxu0 %v2151
        %2183 = vmatpush1.bf16.msra.mxu0 %v2150
        %2184 = vmatprep.subr.bf16.mxu0 %v2153
        %2185 = vmatpush1.bf16.msra.mxu0 %v2152
        %2186 = vmatprep.subr.bf16.mxu0 %v2155
        %2187 = vmatpush1.bf16.msra.mxu0 %v2154
        %2188 = vmatprep.subr.bf16.mxu0 %v2157
        %2189 = vmatpush1.bf16.msra.mxu0 %v2156
        %2190 = vmatprep.subr.bf16.mxu0 %v2159
        %2191 = vmatpush1.bf16.msra.mxu0 %v2158
        %2192 = vmatprep.subr.bf16.mxu0 %v2161
        %2193 = vmatpush1.bf16.msra.mxu0 %v2160
        %2194 = vmatprep.subr.bf16.mxu0 %v2163
        %2195 = vmatpush1.bf16.msra.mxu0 %v2162
        %2196 = vmatprep.subr.bf16.mxu0 0
        %2197 = vmatpush1.bf16.msra.mxu0 0
        %2198 = vmatprep.subr.bf16.mxu0 0
        %2199 = vmatpush1.bf16.msra.mxu0 0
        %2200 = vmatprep.subr.bf16.mxu0 0
        %2201 = vmatpush1.bf16.msra.mxu0 0
        %2202 = vmatprep.subr.bf16.mxu0 0
        %2203 = vmatpush1.bf16.msra.mxu0 0
        %2204 = vmatprep.subr.bf16.mxu0 0
        %2205 = vmatpush1.bf16.msra.mxu0 0
        %2206 = vmatprep.subr.bf16.mxu0 0
        %2207 = vmatpush1.bf16.msra.mxu0 0
        %2208 = vmatprep.subr.bf16.mxu0 0
        %2209 = vmatpush1.bf16.msra.mxu0 0
        %2210 = vmatprep.subr.bf16.mxu0 0
        %2211 = vmatpush1.bf16.msra.mxu0 0
        %2212 = vmatprep.mubr.bf16.mxu0 0
        %2213 = vmatmul.mubr.bf16.gmra.mrb[0].mxu0 %v2077
        %v2214 = vpop.f32.mrb[0].mxu0
        %v2215 = vadd.f32 0.0, %v2214
        %v2216 = vpop.f32.mrb[0].mxu0
        %v2217 = vadd.f32 0.0, %v2216
        %v2218 = vpop.f32.mrb[0].mxu0
        %v2219 = vadd.f32 0.0, %v2218
        %v2220 = vpop.f32.mrb[0].mxu0
        %v2221 = vadd.f32 0.0, %v2220
        %2222 = vmatprep.mubr.bf16.mxu0 0
        %2223 = vmatmul.mubr.bf16.gmra.mrb[0].mxu0 %v2078
        %v2224 = vpop.f32.mrb[0].mxu0
        %v2225 = vadd.f32 0.0, %v2224
        %v2226 = vpop.f32.mrb[0].mxu0
        %v2227 = vadd.f32 0.0, %v2226
        %v2228 = vpop.f32.mrb[0].mxu0
        %v2229 = vadd.f32 0.0, %v2228
        %v2230 = vpop.f32.mrb[0].mxu0
        %v2231 = vadd.f32 0.0, %v2230
        %2232 = vmatprep.mubr.bf16.mxu0 0
        %2233 = vmatmul.mubr.bf16.gmra.mrb[0].mxu0 %v2079
        %v2234 = vpop.f32.mrb[0].mxu0
        %v2235 = vadd.f32 0.0, %v2234
        %v2236 = vpop.f32.mrb[0].mxu0
        %v2237 = vadd.f32 0.0, %v2236
        %v2238 = vpop.f32.mrb[0].mxu0
        %v2239 = vadd.f32 0.0, %v2238
        %v2240 = vpop.f32.mrb[0].mxu0
        %v2241 = vadd.f32 0.0, %v2240
        %2242 = vmatprep.mubr.bf16.mxu0 0
        %2243 = vmatmul.mubr.bf16.gmra.mrb[0].mxu0 %v2080
        %v2244 = vpop.f32.mrb[0].mxu0
        %v2245 = vadd.f32 0.0, %v2244
        %v2246 = vpop.f32.mrb[0].mxu0
        %v2247 = vadd.f32 0.0, %v2246
        %v2248 = vpop.f32.mrb[0].mxu0
        %v2249 = vadd.f32 0.0, %v2248
        %v2250 = vpop.f32.mrb[0].mxu0
        %v2251 = vadd.f32 0.0, %v2250
        %2252 = vmatprep.mubr.bf16.mxu0 0
        %2253 = vmatmul.mubr.bf16.gmra.mrb[0].mxu0 %v2081
        %v2254 = vpop.f32.mrb[0].mxu0
        %v2255 = vadd.f32 0.0, %v2254
        %v2256 = vpop.f32.mrb[0].mxu0
        %v2257 = vadd.f32 0.0, %v2256
        %v2258 = vpop.f32.mrb[0].mxu0
        %v2259 = vadd.f32 0.0, %v2258
        %v2260 = vpop.f32.mrb[0].mxu0
        %v2261 = vadd.f32 0.0, %v2260
        %2262 = vmatprep.mubr.bf16.mxu0 0
        %2263 = vmatmul.mubr.bf16.gmra.mrb[0].mxu0 %v2082
        %v2264 = vpop.f32.mrb[0].mxu0
        %v2265 = vadd.f32 0.0, %v2264
        %v2266 = vpop.f32.mrb[0].mxu0
        %v2267 = vadd.f32 0.0, %v2266
        %v2268 = vpop.f32.mrb[0].mxu0
        %v2269 = vpop.f32.mrb[0].mxu0
        %2270 = vdwg.mxu0
        %v2271 = vadd.f32 %v1977, %v2215
        %v2272 = vadd.f32 %v1979, %v2217
        %v2273 = vadd.f32 %v1981, %v2219
        %v2274 = vadd.f32 %v1983, %v2221
        %v2275 = vadd.f32 %v1987, %v2225
        %v2276 = vadd.f32 %v1989, %v2227
        %v2277 = vadd.f32 %v1991, %v2229
        %v2278 = vadd.f32 %v1993, %v2231
        %v2279 = vadd.f32 %v1997, %v2235
        %v2280 = vadd.f32 %v1999, %v2237
        %v2281 = vadd.f32 %v2001, %v2239
        %v2282 = vadd.f32 %v2003, %v2241
        %v2283 = vadd.f32 %v2007, %v2245
        %v2284 = vadd.f32 %v2009, %v2247
        %v2285 = vadd.f32 %v2011, %v2249
        %v2286 = vadd.f32 %v2013, %v2251
        %v2287 = vadd.f32 %v2017, %v2255
        %v2288 = vadd.f32 %v2019, %v2257
        %v2289 = vadd.f32 %v2021, %v2259
        %v2290 = vadd.f32 %v2023, %v2261
        %v2291 = vadd.f32 %v2027, %v2265
        %v2292 = vadd.f32 %v2029, %v2267
        %v2293 = vrot.slane %v1063, 4
        %v2294 = vrot.slane %v1066, 4
        %v2295 = vrot.slane %v1069, 4
        %v2296 = vrot.slane %v1072, 4
        %v2297 = vrot.slane %v1075, 4
        %v2298 = vrot.slane %v1078, 4
        %v2299 = vrot.slane %v1081, 4
        %v2300 = vrot.slane %v1084, 4
        %v2301 = vrot.slane %v1087, 4
        %v2302 = vrot.slane %v1090, 4
        %v2303 = vrot.slane %v1093, 4
        %v2304 = vrot.slane %v1096, 4
        %v2305 = vrot.slane %v1099, 4
        %v2306 = vrot.slane %v1102, 4
        %v2307 = vrot.slane %v1105, 4
        %v2308 = vrot.slane %v1108, 4
        %v2309 = vrot.slane %v1111, 4
        %v2310 = vrot.slane %v1114, 4
        %v2332 = vrot.slane %v1065, 1
        %v2333 = vrot.slane %v1068, 1
        %v2334 = vrot.slane %v1071, 1
        %v2335 = vrot.slane %v1074, 1
        %v2336 = vrot.slane %v1077, 1
        %v2337 = vrot.slane %v1080, 1
        %v2338 = vrot.slane %v1083, 1
        %v2339 = vrot.slane %v1086, 1
        %v2340 = vrot.slane %v1089, 1
        %v2341 = vrot.slane %v1092, 1
        %v2342 = vrot.slane %v1095, 1
        %v2343 = vrot.slane %v1098, 1
        %v2344 = vrot.slane %v1101, 1
        %v2345 = vrot.slane %v1104, 1
        %v2346 = vrot.slane %v1116, 1
        %v2352 = vsel %vm1405, %v1135, %v1171
        %v2353 = vsel %vm1405, %v1136, %v1172
        %v2354 = vsel %vm1405, %v1137, %v1173
        %v2355 = vsel %vm1405, %v1138, %v1174
        %v2356 = vsel %vm1405, %v1139, %v1175
        %v2357 = vsel %vm1405, %v1140, %v1176
        %v2358 = vsel %vm1405, %v1141, %v1177
        %v2359 = vsel %vm1405, %v1142, %v1178
        %v2360 = vsel %vm1405, %v1143, %v1179
        %v2361 = vsel %vm1405, %v1144, %v1180
        %v2362 = vsel %vm1405, %v1145, %v1181
        %v2363 = vsel %vm1405, %v1146, %v1182
        %v2364 = vsel %vm1405, %v1147, %v1183
        %v2365 = vsel %vm1405, %v1148, %v1184
        %v2366 = vsel %vm1405, %v1149, %v1185
        %v2367 = vsel %vm1405, %v1150, %v1186
        %v2368 = vsel %vm1405, %v1151, %v1187
        %v2369 = vsel %vm1405, %v1152, %v1188
        %v2370 = vsel %vm685, %v2352, %v1207
        %v2371 = vsel %vm685, %v2353, %v1208
        %v2372 = vsel %vm685, %v2354, %v1209
        %v2373 = vsel %vm685, %v2355, %v1210
        %v2374 = vsel %vm685, %v2356, %v1211
        %v2375 = vsel %vm685, %v2357, %v1212
        %v2376 = vsel %vm685, %v2358, %v1213
        %v2377 = vsel %vm685, %v2359, %v1214
        %v2378 = vsel %vm685, %v2360, %v1215
        %v2379 = vsel %vm685, %v2361, %v1216
        %v2380 = vsel %vm685, %v2362, %v1217
        %v2381 = vsel %vm685, %v2363, %v1218
        %v2382 = vsel %vm685, %v2364, %v1219
        %v2383 = vsel %vm685, %v2365, %v1220
        %v2384 = vsel %vm685, %v2366, %v1221
        %v2385 = vsel %vm685, %v2367, %v1222
        %v2386 = vsel %vm685, %v2368, %v1223
        %v2387 = vsel %vm685, %v2369, %v1224
        %v2388 = vsel %vm1442, %v2370, %v2293
        %v2389 = vsel %vm1442, %v2371, %v2294
        %v2390 = vsel %vm1442, %v2372, %v2295
        %v2391 = vsel %vm1442, %v2373, %v2296
        %v2392 = vsel %vm1442, %v2374, %v2297
        %v2393 = vsel %vm1442, %v2375, %v2298
        %v2394 = vsel %vm1442, %v2376, %v2299
        %v2395 = vsel %vm1442, %v2377, %v2300
        %v2396 = vsel %vm1442, %v2378, %v2301
        %v2397 = vsel %vm1442, %v2379, %v2302
        %v2398 = vsel %vm1442, %v2380, %v2303
        %v2399 = vsel %vm1442, %v2381, %v2304
        %v2400 = vsel %vm1442, %v2382, %v2305
        %v2401 = vsel %vm1442, %v2383, %v2306
        %v2402 = vsel %vm1442, %v2384, %v2307
        %v2403 = vsel %vm1442, %v2385, %v2308
        %v2404 = vsel %vm1442, %v2386, %v2309
        %v2405 = vsel %vm1442, %v2387, %v2310
        %v2406 = vsel %vm416, %v2388, %v1297
        %v2407 = vsel %vm416, %v2389, %v1298
        %v2408 = vsel %vm416, %v2390, %v1299
        %v2409 = vsel %vm416, %v2391, %v1300
        %v2410 = vsel %vm416, %v2392, %v1301
        %v2411 = vsel %vm416, %v2393, %v1302
        %v2412 = vsel %vm416, %v2394, %v1303
        %v2413 = vsel %vm416, %v2395, %v1304
        %v2414 = vsel %vm416, %v2396, %v1305
        %v2415 = vsel %vm416, %v2397, %v1306
        %v2416 = vsel %vm416, %v2398, %v1307
        %v2417 = vsel %vm416, %v2399, %v1308
        %v2418 = vsel %vm416, %v2400, %v1309
        %v2419 = vsel %vm416, %v2401, %v1310
        %v2420 = vsel %vm416, %v2402, %v1311
        %v2421 = vsel %vm416, %v2403, %v1312
        %v2422 = vsel %vm416, %v2404, %v1313
        %v2423 = vsel %vm416, %v2405, %v1314
        %v2424 = vsel %vm417, %v2406, %v1333
        %v2425 = vsel %vm417, %v2407, %v1334
        %v2426 = vsel %vm417, %v2408, %v1335
        %v2427 = vsel %vm417, %v2409, %v1336
        %v2428 = vsel %vm417, %v2410, %v1337
        %v2429 = vsel %vm417, %v2411, %v1338
        %v2430 = vsel %vm417, %v2412, %v1339
        %v2431 = vsel %vm417, %v2413, %v1340
        %v2432 = vsel %vm417, %v2414, %v1341
        %v2433 = vsel %vm417, %v2415, %v1342
        %v2434 = vsel %vm417, %v2416, %v1343
        %v2435 = vsel %vm417, %v2417, %v1344
        %v2436 = vsel %vm417, %v2418, %v1345
        %v2437 = vsel %vm417, %v2419, %v1346
        %v2438 = vsel %vm417, %v2420, %v1347
        %v2439 = vsel %vm417, %v2421, %v1348
        %v2440 = vsel %vm417, %v2422, %v1349
        %v2441 = vsel %vm417, %v2423, %v1350
        %v2442 = vsel %vm1497, %v2424, %v1369
        %v2443 = vsel %vm1497, %v2425, %v1370
        %v2444 = vsel %vm1497, %v2426, %v1371
        %v2445 = vsel %vm1497, %v2427, %v1372
        %v2446 = vsel %vm1497, %v2428, %v1373
        %v2447 = vsel %vm1497, %v2429, %v1374
        %v2448 = vsel %vm1497, %v2430, %v1375
        %v2449 = vsel %vm1497, %v2431, %v1376
        %v2450 = vsel %vm1497, %v2432, %v1377
        %v2451 = vsel %vm1497, %v2433, %v1378
        %v2452 = vsel %vm1497, %v2434, %v1379
        %v2453 = vsel %vm1497, %v2435, %v1380
        %v2454 = vsel %vm1497, %v2436, %v1381
        %v2455 = vsel %vm1497, %v2437, %v1382
        %v2456 = vsel %vm1497, %v2438, %v1383
        %v2457 = vsel %vm1497, %v2439, %v1384
        %v2458 = vsel %vm1497, %v2440, %v1385
        %v2459 = vsel %vm1497, %v2441, %v1386
        %v2460 = vsel %vm864, %v2442, %v1064
        %v2461 = vsel %vm864, %v2443, %v1067
        %v2462 = vsel %vm864, %v2444, %v1070
        %v2463 = vsel %vm864, %v2445, %v1073
        %v2464 = vsel %vm864, %v2446, %v1076
        %v2465 = vsel %vm864, %v2447, %v1079
        %v2466 = vsel %vm864, %v2448, %v1082
        %v2467 = vsel %vm864, %v2449, %v1085
        %v2468 = vsel %vm864, %v2450, %v1088
        %v2469 = vsel %vm864, %v2451, %v1091
        %v2470 = vsel %vm864, %v2452, %v1094
        %v2471 = vsel %vm864, %v2453, %v1097
        %v2472 = vsel %vm864, %v2454, %v1100
        %v2473 = vsel %vm864, %v2455, %v1103
        %v2474 = vsel %vm864, %v2456, %v1106
        %v2475 = vsel %vm864, %v2457, %v1109
        %v2476 = vsel %vm864, %v2458, %v1112
        %v2477 = vsel %vm864, %v2459, %v1115
        %v2479 = vrot.slane %v2462, 7
        %v2480 = vrot.slane %v2334, 7
        %v2481 = vsel %vm1405, %v2479, %v2480
        %v2485 = vrot.slane %v2464, 6
        %v2486 = vrot.slane %v2336, 6
        %v2487 = vsel %vm685, %v2485, %v2486
        %v2491 = vrot.slane %v2466, 5
        %v2492 = vrot.slane %v2338, 5
        %v2493 = vsel %vm1442, %v2491, %v2492
        %v2497 = vrot.slane %v2468, 4
        %v2498 = vrot.slane %v2340, 4
        %v2499 = vsel %vm416, %v2497, %v2498
        %v2503 = vrot.slane %v2470, 3
        %v2504 = vrot.slane %v2342, 3
        %v2505 = vsel %vm417, %v2503, %v2504
        %v2509 = vrot.slane %v2472, 2
        %v2510 = vrot.slane %v2344, 2
        %v2511 = vsel %vm1497, %v2509, %v2510
        %v2515 = vrot.slane %v2474, 1
        %v2516 = vrot.slane %v1579, 1
        %v2517 = vsel %vm864, %v2515, %v2516
        %v2520 = vsel %vm1405, %v2332, %v2479
        %v2521 = vsel %vm685, %v2481, %v2485
        %v2522 = vsel %vm1442, %v2487, %v2491
        %v2523 = vsel %vm416, %v2493, %v2497
        %v2524 = vsel %vm417, %v2499, %v2503
        %v2525 = vsel %vm1497, %v2505, %v2509
        %v2526 = vsel %vm864, %v2511, %v2515
        %v2527 = vpack.c.bf16 %v2520, %v2460
        %v2528 = vpack.c.bf16 %v2522, %v2521
        %v2529 = vpack.c.bf16 %v2524, %v2523
        %v2530 = vpack.c.bf16 %v2526, %v2525
        %v2531 = vpack.c.bf16 %v2476, %v2517
        %v2532 = vpack.c.bf16 %v2066, %v2066
        %s2533 = scalar_lea.vmem [#allocation2], 128
        %v2534 = vld [vmem:[%s2533] sm:$0xff]
        %v2535 = vld [vmem:[%s2533 + $0x8] sm:$0xff]
        %v2536 = vld [vmem:[%s2533 + $0x10] sm:$0xff]
        %v2537 = vld [vmem:[%s2533 + $0x18] sm:$0xff]
        %v2538 = vld [vmem:[%s2533 + $0x20] sm:$0xff]
        %v2539 = vld [vmem:[%s2533 + $0x28] sm:$0xff]
        %v2540 = vld [vmem:[%s2533 + $0x30] sm:$0xff]
        %v2541 = vld [vmem:[%s2533 + $0x38] sm:$0xff]
        %v2542 = vld [vmem:[%s2533 + $0x40] sm:$0xff]
        %v2543 = vld [vmem:[%s2533 + $0x48] sm:$0xff]
        %v2544 = vld [vmem:[%s2533 + $0x50] sm:$0xff]
        %v2545 = vld [vmem:[%s2533 + $0x58] sm:$0xff]
        %v2546 = vld [vmem:[%s2533 + $0x60] sm:$0xff]
        %v2547 = vld [vmem:[%s2533 + $0x68] sm:$0xff]
        %v2548 = vld [vmem:[%s2533 + $0x70] sm:$0xff]
        %v2549 = vld [vmem:[%s2533 + $0x78] sm:$0xff]
        %v2566 = vunpack.c.l.b16 %v2534
        %v2567 = vunpack.c.h.b16 %v2534
        %v2568 = vunpack.c.l.b16 %v2535
        %v2569 = vunpack.c.h.b16 %v2535
        %v2570 = vunpack.c.l.b16 %v2536
        %v2571 = vunpack.c.h.b16 %v2536
        %v2572 = vunpack.c.l.b16 %v2537
        %v2573 = vunpack.c.h.b16 %v2537
        %v2574 = vunpack.c.l.b16 %v2538
        %v2575 = vunpack.c.h.b16 %v2538
        %v2576 = vunpack.c.l.b16 %v2539
        %v2577 = vunpack.c.h.b16 %v2539
        %v2578 = vunpack.c.l.b16 %v2540
        %v2579 = vunpack.c.h.b16 %v2540
        %v2580 = vunpack.c.l.b16 %v2541
        %v2581 = vunpack.c.h.b16 %v2541
        %v2582 = vunpack.c.l.b16 %v2542
        %v2583 = vunpack.c.h.b16 %v2542
        %v2584 = vunpack.c.l.b16 %v2543
        %v2585 = vunpack.c.h.b16 %v2543
        %v2586 = vunpack.c.l.b16 %v2544
        %v2587 = vunpack.c.h.b16 %v2544
        %v2588 = vunpack.c.l.b16 %v2545
        %v2589 = vunpack.c.h.b16 %v2545
        %v2590 = vunpack.c.l.b16 %v2546
        %v2591 = vunpack.c.h.b16 %v2546
        %v2592 = vunpack.c.l.b16 %v2547
        %v2593 = vunpack.c.h.b16 %v2547
        %v2594 = vunpack.c.l.b16 %v2548
        %v2595 = vunpack.c.h.b16 %v2548
        %v2596 = vunpack.c.l.b16 %v2549
        %v2597 = vunpack.c.h.b16 %v2549
        %v2598 = vpack.c.b16 %v2568, %v2566
        %v2599 = vpack.c.b16 %v2569, %v2567
        %v2600 = vpack.c.b16 %v2572, %v2570
        %v2601 = vpack.c.b16 %v2573, %v2571
        %v2602 = vpack.c.b16 %v2576, %v2574
        %v2603 = vpack.c.b16 %v2577, %v2575
        %v2604 = vpack.c.b16 %v2580, %v2578
        %v2605 = vpack.c.b16 %v2581, %v2579
        %v2606 = vpack.c.b16 %v2584, %v2582
        %v2607 = vpack.c.b16 %v2585, %v2583
        %v2608 = vpack.c.b16 %v2588, %v2586
        %v2609 = vpack.c.b16 %v2589, %v2587
        %v2610 = vpack.c.b16 %v2592, %v2590
        %v2611 = vpack.c.b16 %v2593, %v2591
        %v2612 = vpack.c.b16 %v2596, %v2594
        %v2613 = vpack.c.b16 %v2597, %v2595
        %2630 = vmatprep.subr.bf16.mxu0 %v2599
        %2631 = vmatpush1.bf16.msra.mxu0 %v2598
        %2632 = vmatprep.subr.bf16.mxu0 %v2601
        %2633 = vmatpush1.bf16.msra.mxu0 %v2600
        %2634 = vmatprep.subr.bf16.mxu0 %v2603
        %2635 = vmatpush1.bf16.msra.mxu0 %v2602
        %2636 = vmatprep.subr.bf16.mxu0 %v2605
        %2637 = vmatpush1.bf16.msra.mxu0 %v2604
        %2638 = vmatprep.subr.bf16.mxu0 %v2607
        %2639 = vmatpush1.bf16.msra.mxu0 %v2606
        %2640 = vmatprep.subr.bf16.mxu0 %v2609
        %2641 = vmatpush1.bf16.msra.mxu0 %v2608
        %2642 = vmatprep.subr.bf16.mxu0 %v2611
        %2643 = vmatpush1.bf16.msra.mxu0 %v2610
        %2644 = vmatprep.subr.bf16.mxu0 %v2613
        %2645 = vmatpush1.bf16.msra.mxu0 %v2612
        %2646 = vmatprep.subr.bf16.mxu0 0
        %2647 = vmatpush1.bf16.msra.mxu0 0
        %2648 = vmatprep.subr.bf16.mxu0 0
        %2649 = vmatpush1.bf16.msra.mxu0 0
        %2650 = vmatprep.subr.bf16.mxu0 0
        %2651 = vmatpush1.bf16.msra.mxu0 0
        %2652 = vmatprep.subr.bf16.mxu0 0
        %2653 = vmatpush1.bf16.msra.mxu0 0
        %2654 = vmatprep.subr.bf16.mxu0 0
        %2655 = vmatpush1.bf16.msra.mxu0 0
        %2656 = vmatprep.subr.bf16.mxu0 0
        %2657 = vmatpush1.bf16.msra.mxu0 0
        %2658 = vmatprep.subr.bf16.mxu0 0
        %2659 = vmatpush1.bf16.msra.mxu0 0
        %2660 = vmatprep.subr.bf16.mxu0 0
        %2661 = vmatpush1.bf16.msra.mxu0 0
        %2662 = vmatprep.mubr.bf16.mxu0 0
        %2663 = vmatmul.mubr.bf16.gmra.mrb[0].mxu0 %v2527
        %v2664 = vpop.f32.mrb[0].mxu0
        %v2665 = vadd.f32 0.0, %v2664
        %v2666 = vpop.f32.mrb[0].mxu0
        %v2667 = vadd.f32 0.0, %v2666
        %v2668 = vpop.f32.mrb[0].mxu0
        %v2669 = vadd.f32 0.0, %v2668
        %v2670 = vpop.f32.mrb[0].mxu0
        %v2671 = vadd.f32 0.0, %v2670
        %2672 = vmatprep.mubr.bf16.mxu0 0
        %2673 = vmatmul.mubr.bf16.gmra.mrb[0].mxu0 %v2528
        %v2674 = vpop.f32.mrb[0].mxu0
        %v2675 = vadd.f32 0.0, %v2674
        %v2676 = vpop.f32.mrb[0].mxu0
        %v2677 = vadd.f32 0.0, %v2676
        %v2678 = vpop.f32.mrb[0].mxu0
        %v2679 = vadd.f32 0.0, %v2678
        %v2680 = vpop.f32.mrb[0].mxu0
        %v2681 = vadd.f32 0.0, %v2680
        %2682 = vmatprep.mubr.bf16.mxu0 0
        %2683 = vmatmul.mubr.bf16.gmra.mrb[0].mxu0 %v2529
        %v2684 = vpop.f32.mrb[0].mxu0
        %v2685 = vadd.f32 0.0, %v2684
        %v2686 = vpop.f32.mrb[0].mxu0
        %v2687 = vadd.f32 0.0, %v2686
        %v2688 = vpop.f32.mrb[0].mxu0
        %v2689 = vadd.f32 0.0, %v2688
        %v2690 = vpop.f32.mrb[0].mxu0
        %v2691 = vadd.f32 0.0, %v2690
        %2692 = vmatprep.mubr.bf16.mxu0 0
        %2693 = vmatmul.mubr.bf16.gmra.mrb[0].mxu0 %v2530
        %v2694 = vpop.f32.mrb[0].mxu0
        %v2695 = vadd.f32 0.0, %v2694
        %v2696 = vpop.f32.mrb[0].mxu0
        %v2697 = vadd.f32 0.0, %v2696
        %v2698 = vpop.f32.mrb[0].mxu0
        %v2699 = vadd.f32 0.0, %v2698
        %v2700 = vpop.f32.mrb[0].mxu0
        %v2701 = vadd.f32 0.0, %v2700
        %2702 = vmatprep.mubr.bf16.mxu0 0
        %2703 = vmatmul.mubr.bf16.gmra.mrb[0].mxu0 %v2531
        %v2704 = vpop.f32.mrb[0].mxu0
        %v2705 = vadd.f32 0.0, %v2704
        %v2706 = vpop.f32.mrb[0].mxu0
        %v2707 = vadd.f32 0.0, %v2706
        %v2708 = vpop.f32.mrb[0].mxu0
        %v2709 = vadd.f32 0.0, %v2708
        %v2710 = vpop.f32.mrb[0].mxu0
        %v2711 = vadd.f32 0.0, %v2710
        %2712 = vmatprep.mubr.bf16.mxu0 0
        %2713 = vmatmul.mubr.bf16.gmra.mrb[0].mxu0 %v2532
        %v2714 = vpop.f32.mrb[0].mxu0
        %v2715 = vadd.f32 0.0, %v2714
        %v2716 = vpop.f32.mrb[0].mxu0
        %v2717 = vadd.f32 0.0, %v2716
        %v2718 = vpop.f32.mrb[0].mxu0
        %v2719 = vpop.f32.mrb[0].mxu0
        %2720 = vdwg.mxu0
        %v2721 = vadd.f32 %v2271, %v2665
        %v2722 = vadd.f32 %v2272, %v2667
        %v2723 = vadd.f32 %v2273, %v2669
        %v2724 = vadd.f32 %v2274, %v2671
        %v2725 = vadd.f32 %v2275, %v2675
        %v2726 = vadd.f32 %v2276, %v2677
        %v2727 = vadd.f32 %v2277, %v2679
        %v2728 = vadd.f32 %v2278, %v2681
        %v2729 = vadd.f32 %v2279, %v2685
        %v2730 = vadd.f32 %v2280, %v2687
        %v2731 = vadd.f32 %v2281, %v2689
        %v2732 = vadd.f32 %v2282, %v2691
        %v2733 = vadd.f32 %v2283, %v2695
        %v2734 = vadd.f32 %v2284, %v2697
        %v2735 = vadd.f32 %v2285, %v2699
        %v2736 = vadd.f32 %v2286, %v2701
        %v2737 = vadd.f32 %v2287, %v2705
        %v2738 = vadd.f32 %v2288, %v2707
        %v2739 = vadd.f32 %v2289, %v2709
        %v2740 = vadd.f32 %v2290, %v2711
        %v2741 = vadd.f32 %v2291, %v2715
        %v2742 = vadd.f32 %v2292, %v2717
        %v2744 = vrot.slane %v2463, 7
        %v2745 = vrot.slane %v2335, 7
        %v2746 = vsel %vm1405, %v2744, %v2745
        %v2750 = vrot.slane %v2465, 6
        %v2751 = vrot.slane %v2337, 6
        %v2752 = vsel %vm685, %v2750, %v2751
        %v2756 = vrot.slane %v2467, 5
        %v2757 = vrot.slane %v2339, 5
        %v2758 = vsel %vm1442, %v2756, %v2757
        %v2762 = vrot.slane %v2469, 4
        %v2763 = vrot.slane %v2341, 4
        %v2764 = vsel %vm416, %v2762, %v2763
        %v2768 = vrot.slane %v2471, 3
        %v2769 = vrot.slane %v2343, 3
        %v2770 = vsel %vm417, %v2768, %v2769
        %v2774 = vrot.slane %v2473, 2
        %v2775 = vrot.slane %v2345, 2
        %v2776 = vsel %vm1497, %v2774, %v2775
        %v2780 = vrot.slane %v2475, 1
        %v2781 = vrot.slane %v1657, 1
        %v2782 = vsel %vm864, %v2780, %v2781
        %v2785 = vsel %vm1405, %v2333, %v2744
        %v2786 = vsel %vm685, %v2746, %v2750
        %v2787 = vsel %vm1442, %v2752, %v2756
        %v2788 = vsel %vm416, %v2758, %v2762
        %v2789 = vsel %vm417, %v2764, %v2768
        %v2790 = vsel %vm1497, %v2770, %v2774
        %v2791 = vsel %vm864, %v2776, %v2780
        %v2792 = vpack.c.bf16 %v2785, %v2461
        %v2793 = vpack.c.bf16 %v2787, %v2786
        %v2794 = vpack.c.bf16 %v2789, %v2788
        %v2795 = vpack.c.bf16 %v2791, %v2790
        %v2796 = vpack.c.bf16 %v2477, %v2782
        %v2797 = vpack.c.bf16 %v2346, %v2346
        %s2798 = scalar_lea.vmem [#allocation2], 512
        %v2799 = vld [vmem:[%s2798] sm:$0xff]
        %v2800 = vld [vmem:[%s2798 + $0x8] sm:$0xff]
        %v2801 = vld [vmem:[%s2798 + $0x10] sm:$0xff]
        %v2802 = vld [vmem:[%s2798 + $0x18] sm:$0xff]
        %v2803 = vld [vmem:[%s2798 + $0x20] sm:$0xff]
        %v2804 = vld [vmem:[%s2798 + $0x28] sm:$0xff]
        %v2805 = vld [vmem:[%s2798 + $0x30] sm:$0xff]
        %v2806 = vld [vmem:[%s2798 + $0x38] sm:$0xff]
        %v2807 = vld [vmem:[%s2798 + $0x40] sm:$0xff]
        %v2808 = vld [vmem:[%s2798 + $0x48] sm:$0xff]
        %v2809 = vld [vmem:[%s2798 + $0x50] sm:$0xff]
        %v2810 = vld [vmem:[%s2798 + $0x58] sm:$0xff]
        %v2811 = vld [vmem:[%s2798 + $0x60] sm:$0xff]
        %v2812 = vld [vmem:[%s2798 + $0x68] sm:$0xff]
        %v2813 = vld [vmem:[%s2798 + $0x70] sm:$0xff]
        %v2814 = vld [vmem:[%s2798 + $0x78] sm:$0xff]
        %v2831 = vunpack.c.l.b16 %v2799
        %v2832 = vunpack.c.h.b16 %v2799
        %v2833 = vunpack.c.l.b16 %v2800
        %v2834 = vunpack.c.h.b16 %v2800
        %v2835 = vunpack.c.l.b16 %v2801
        %v2836 = vunpack.c.h.b16 %v2801
        %v2837 = vunpack.c.l.b16 %v2802
        %v2838 = vunpack.c.h.b16 %v2802
        %v2839 = vunpack.c.l.b16 %v2803
        %v2840 = vunpack.c.h.b16 %v2803
        %v2841 = vunpack.c.l.b16 %v2804
        %v2842 = vunpack.c.h.b16 %v2804
        %v2843 = vunpack.c.l.b16 %v2805
        %v2844 = vunpack.c.h.b16 %v2805
        %v2845 = vunpack.c.l.b16 %v2806
        %v2846 = vunpack.c.h.b16 %v2806
        %v2847 = vunpack.c.l.b16 %v2807
        %v2848 = vunpack.c.h.b16 %v2807
        %v2849 = vunpack.c.l.b16 %v2808
        %v2850 = vunpack.c.h.b16 %v2808
        %v2851 = vunpack.c.l.b16 %v2809
        %v2852 = vunpack.c.h.b16 %v2809
        %v2853 = vunpack.c.l.b16 %v2810
        %v2854 = vunpack.c.h.b16 %v2810
        %v2855 = vunpack.c.l.b16 %v2811
        %v2856 = vunpack.c.h.b16 %v2811
        %v2857 = vunpack.c.l.b16 %v2812
        %v2858 = vunpack.c.h.b16 %v2812
        %v2859 = vunpack.c.l.b16 %v2813
        %v2860 = vunpack.c.h.b16 %v2813
        %v2861 = vunpack.c.l.b16 %v2814
        %v2862 = vunpack.c.h.b16 %v2814
        %v2863 = vpack.c.b16 %v2833, %v2831
        %v2864 = vpack.c.b16 %v2834, %v2832
        %v2865 = vpack.c.b16 %v2837, %v2835
        %v2866 = vpack.c.b16 %v2838, %v2836
        %v2867 = vpack.c.b16 %v2841, %v2839
        %v2868 = vpack.c.b16 %v2842, %v2840
        %v2869 = vpack.c.b16 %v2845, %v2843
        %v2870 = vpack.c.b16 %v2846, %v2844
        %v2871 = vpack.c.b16 %v2849, %v2847
        %v2872 = vpack.c.b16 %v2850, %v2848
        %v2873 = vpack.c.b16 %v2853, %v2851
        %v2874 = vpack.c.b16 %v2854, %v2852
        %v2875 = vpack.c.b16 %v2857, %v2855
        %v2876 = vpack.c.b16 %v2858, %v2856
        %v2877 = vpack.c.b16 %v2861, %v2859
        %v2878 = vpack.c.b16 %v2862, %v2860
        %2895 = vmatprep.subr.bf16.mxu0 %v2864
        %2896 = vmatpush1.bf16.msra.mxu0 %v2863
        %2897 = vmatprep.subr.bf16.mxu0 %v2866
        %2898 = vmatpush1.bf16.msra.mxu0 %v2865
        %2899 = vmatprep.subr.bf16.mxu0 %v2868
        %2900 = vmatpush1.bf16.msra.mxu0 %v2867
        %2901 = vmatprep.subr.bf16.mxu0 %v2870
        %2902 = vmatpush1.bf16.msra.mxu0 %v2869
        %2903 = vmatprep.subr.bf16.mxu0 %v2872
        %2904 = vmatpush1.bf16.msra.mxu0 %v2871
        %2905 = vmatprep.subr.bf16.mxu0 %v2874
        %2906 = vmatpush1.bf16.msra.mxu0 %v2873
        %2907 = vmatprep.subr.bf16.mxu0 %v2876
        %2908 = vmatpush1.bf16.msra.mxu0 %v2875
        %2909 = vmatprep.subr.bf16.mxu0 %v2878
        %2910 = vmatpush1.bf16.msra.mxu0 %v2877
        %2911 = vmatprep.subr.bf16.mxu0 0
        %2912 = vmatpush1.bf16.msra.mxu0 0
        %2913 = vmatprep.subr.bf16.mxu0 0
        %2914 = vmatpush1.bf16.msra.mxu0 0
        %2915 = vmatprep.subr.bf16.mxu0 0
        %2916 = vmatpush1.bf16.msra.mxu0 0
        %2917 = vmatprep.subr.bf16.mxu0 0
        %2918 = vmatpush1.bf16.msra.mxu0 0
        %2919 = vmatprep.subr.bf16.mxu0 0
        %2920 = vmatpush1.bf16.msra.mxu0 0
        %2921 = vmatprep.subr.bf16.mxu0 0
        %2922 = vmatpush1.bf16.msra.mxu0 0
        %2923 = vmatprep.subr.bf16.mxu0 0
        %2924 = vmatpush1.bf16.msra.mxu0 0
        %2925 = vmatprep.subr.bf16.mxu0 0
        %2926 = vmatpush1.bf16.msra.mxu0 0
        %2927 = vmatprep.mubr.bf16.mxu0 0
        %2928 = vmatmul.mubr.bf16.gmra.mrb[0].mxu0 %v2792
        %v2929 = vpop.f32.mrb[0].mxu0
        %v2930 = vadd.f32 0.0, %v2929
        %v2931 = vpop.f32.mrb[0].mxu0
        %v2932 = vadd.f32 0.0, %v2931
        %v2933 = vpop.f32.mrb[0].mxu0
        %v2934 = vadd.f32 0.0, %v2933
        %v2935 = vpop.f32.mrb[0].mxu0
        %v2936 = vadd.f32 0.0, %v2935
        %2937 = vmatprep.mubr.bf16.mxu0 0
        %2938 = vmatmul.mubr.bf16.gmra.mrb[0].mxu0 %v2793
        %v2939 = vpop.f32.mrb[0].mxu0
        %v2940 = vadd.f32 0.0, %v2939
        %v2941 = vpop.f32.mrb[0].mxu0
        %v2942 = vadd.f32 0.0, %v2941
        %v2943 = vpop.f32.mrb[0].mxu0
        %v2944 = vadd.f32 0.0, %v2943
        %v2945 = vpop.f32.mrb[0].mxu0
        %v2946 = vadd.f32 0.0, %v2945
        %2947 = vmatprep.mubr.bf16.mxu0 0
        %2948 = vmatmul.mubr.bf16.gmra.mrb[0].mxu0 %v2794
        %v2949 = vpop.f32.mrb[0].mxu0
        %v2950 = vadd.f32 0.0, %v2949
        %v2951 = vpop.f32.mrb[0].mxu0
        %v2952 = vadd.f32 0.0, %v2951
        %v2953 = vpop.f32.mrb[0].mxu0
        %v2954 = vadd.f32 0.0, %v2953
        %v2955 = vpop.f32.mrb[0].mxu0
        %v2956 = vadd.f32 0.0, %v2955
        %2957 = vmatprep.mubr.bf16.mxu0 0
        %2958 = vmatmul.mubr.bf16.gmra.mrb[0].mxu0 %v2795
        %v2959 = vpop.f32.mrb[0].mxu0
        %v2960 = vadd.f32 0.0, %v2959
        %v2961 = vpop.f32.mrb[0].mxu0
        %v2962 = vadd.f32 0.0, %v2961
        %v2963 = vpop.f32.mrb[0].mxu0
        %v2964 = vadd.f32 0.0, %v2963
        %v2965 = vpop.f32.mrb[0].mxu0
        %v2966 = vadd.f32 0.0, %v2965
        %2967 = vmatprep.mubr.bf16.mxu0 0
        %2968 = vmatmul.mubr.bf16.gmra.mrb[0].mxu0 %v2796
        %v2969 = vpop.f32.mrb[0].mxu0
        %v2970 = vadd.f32 0.0, %v2969
        %v2971 = vpop.f32.mrb[0].mxu0
        %v2972 = vadd.f32 0.0, %v2971
        %v2973 = vpop.f32.mrb[0].mxu0
        %v2974 = vadd.f32 0.0, %v2973
        %v2975 = vpop.f32.mrb[0].mxu0
        %v2976 = vadd.f32 0.0, %v2975
        %2977 = vmatprep.mubr.bf16.mxu0 0
        %2978 = vmatmul.mubr.bf16.gmra.mrb[0].mxu0 %v2797
        %v2979 = vpop.f32.mrb[0].mxu0
        %v2980 = vadd.f32 0.0, %v2979
        %v2981 = vpop.f32.mrb[0].mxu0
        %v2982 = vadd.f32 0.0, %v2981
        %v2983 = vpop.f32.mrb[0].mxu0
        %v2984 = vpop.f32.mrb[0].mxu0
        %2985 = vdwg.mxu0
        %v2986 = vadd.f32 %v2721, %v2930
        %v2987 = vadd.f32 %v2722, %v2932
        %v2988 = vadd.f32 %v2723, %v2934
        %v2989 = vadd.f32 %v2724, %v2936
        %v2990 = vadd.f32 %v2725, %v2940
        %v2991 = vadd.f32 %v2726, %v2942
        %v2992 = vadd.f32 %v2727, %v2944
        %v2993 = vadd.f32 %v2728, %v2946
        %v2994 = vadd.f32 %v2729, %v2950
        %v2995 = vadd.f32 %v2730, %v2952
        %v2996 = vadd.f32 %v2731, %v2954
        %v2997 = vadd.f32 %v2732, %v2956
        %v2998 = vadd.f32 %v2733, %v2960
        %v2999 = vadd.f32 %v2734, %v2962
        %v3000 = vadd.f32 %v2735, %v2964
        %v3001 = vadd.f32 %v2736, %v2966
        %v3002 = vadd.f32 %v2737, %v2970
        %v3003 = vadd.f32 %v2738, %v2972
        %v3004 = vadd.f32 %v2739, %v2974
        %v3005 = vadd.f32 %v2740, %v2976
        %v3006 = vadd.f32 %v2741, %v2980
        %v3007 = vadd.f32 %v2742, %v2982
        %v3008 = vrot.slane %v2464, 7
        %v3009 = vrot.slane %v2336, 7
        %v3010 = vsel %vm1405, %v3008, %v3009
        %v3013 = vrot.slane %v2466, 6
        %v3014 = vrot.slane %v2338, 6
        %v3015 = vsel %vm685, %v3013, %v3014
        %v3018 = vrot.slane %v2468, 5
        %v3019 = vrot.slane %v2340, 5
        %v3020 = vsel %vm1442, %v3018, %v3019
        %v3023 = vrot.slane %v2470, 4
        %v3024 = vrot.slane %v2342, 4
        %v3025 = vsel %vm416, %v3023, %v3024
        %v3028 = vrot.slane %v2472, 3
        %v3029 = vrot.slane %v2344, 3
        %v3030 = vsel %vm417, %v3028, %v3029
        %v3033 = vrot.slane %v2474, 2
        %v3034 = vrot.slane %v1579, 2
        %v3035 = vsel %vm1497, %v3033, %v3034
        %v3039 = vrot.slane %v2476, 1
        %v3040 = vrot.slane %v2066, 1
        %v3041 = vsel %vm864, %v3039, %v3040
        %v3044 = vsel %vm1405, %v2334, %v3008
        %v3045 = vsel %vm685, %v3010, %v3013
        %v3046 = vsel %vm1442, %v3015, %v3018
        %v3047 = vsel %vm416, %v3020, %v3023
        %v3048 = vsel %vm417, %v3025, %v3028
        %v3049 = vsel %vm1497, %v3030, %v3033
        %v3050 = vsel %vm864, %v3035, %v3039
        %v3051 = vpack.c.bf16 %v3044, %v2462
        %v3052 = vpack.c.bf16 %v3046, %v3045
        %v3053 = vpack.c.bf16 %v3048, %v3047
        %v3054 = vpack.c.bf16 %v3050, %v3049
        %v3055 = vpack.c.bf16 %v2460, %v3041
        %v3056 = vpack.c.bf16 %v2332, %v2332
        %s3057 = scalar_lea.vmem [#allocation2], 896
        %v3058 = vld [vmem:[%s3057] sm:$0xff]
        %v3059 = vld [vmem:[%s3057 + $0x8] sm:$0xff]
        %v3060 = vld [vmem:[%s3057 + $0x10] sm:$0xff]
        %v3061 = vld [vmem:[%s3057 + $0x18] sm:$0xff]
        %v3062 = vld [vmem:[%s3057 + $0x20] sm:$0xff]
        %v3063 = vld [vmem:[%s3057 + $0x28] sm:$0xff]
        %v3064 = vld [vmem:[%s3057 + $0x30] sm:$0xff]
        %v3065 = vld [vmem:[%s3057 + $0x38] sm:$0xff]
        %v3066 = vld [vmem:[%s3057 + $0x40] sm:$0xff]
        %v3067 = vld [vmem:[%s3057 + $0x48] sm:$0xff]
        %v3068 = vld [vmem:[%s3057 + $0x50] sm:$0xff]
        %v3069 = vld [vmem:[%s3057 + $0x58] sm:$0xff]
        %v3070 = vld [vmem:[%s3057 + $0x60] sm:$0xff]
        %v3071 = vld [vmem:[%s3057 + $0x68] sm:$0xff]
        %v3072 = vld [vmem:[%s3057 + $0x70] sm:$0xff]
        %v3073 = vld [vmem:[%s3057 + $0x78] sm:$0xff]
        %v3090 = vunpack.c.l.b16 %v3058
        %v3091 = vunpack.c.h.b16 %v3058
        %v3092 = vunpack.c.l.b16 %v3059
        %v3093 = vunpack.c.h.b16 %v3059
        %v3094 = vunpack.c.l.b16 %v3060
        %v3095 = vunpack.c.h.b16 %v3060
        %v3096 = vunpack.c.l.b16 %v3061
        %v3097 = vunpack.c.h.b16 %v3061
        %v3098 = vunpack.c.l.b16 %v3062
        %v3099 = vunpack.c.h.b16 %v3062
        %v3100 = vunpack.c.l.b16 %v3063
        %v3101 = vunpack.c.h.b16 %v3063
        %v3102 = vunpack.c.l.b16 %v3064
        %v3103 = vunpack.c.h.b16 %v3064
        %v3104 = vunpack.c.l.b16 %v3065
        %v3105 = vunpack.c.h.b16 %v3065
        %v3106 = vunpack.c.l.b16 %v3066
        %v3107 = vunpack.c.h.b16 %v3066
        %v3108 = vunpack.c.l.b16 %v3067
        %v3109 = vunpack.c.h.b16 %v3067
        %v3110 = vunpack.c.l.b16 %v3068
        %v3111 = vunpack.c.h.b16 %v3068
        %v3112 = vunpack.c.l.b16 %v3069
        %v3113 = vunpack.c.h.b16 %v3069
        %v3114 = vunpack.c.l.b16 %v3070
        %v3115 = vunpack.c.h.b16 %v3070
        %v3116 = vunpack.c.l.b16 %v3071
        %v3117 = vunpack.c.h.b16 %v3071
        %v3118 = vunpack.c.l.b16 %v3072
        %v3119 = vunpack.c.h.b16 %v3072
        %v3120 = vunpack.c.l.b16 %v3073
        %v3121 = vunpack.c.h.b16 %v3073
        %v3122 = vpack.c.b16 %v3092, %v3090
        %v3123 = vpack.c.b16 %v3093, %v3091
        %v3124 = vpack.c.b16 %v3096, %v3094
        %v3125 = vpack.c.b16 %v3097, %v3095
        %v3126 = vpack.c.b16 %v3100, %v3098
        %v3127 = vpack.c.b16 %v3101, %v3099
        %v3128 = vpack.c.b16 %v3104, %v3102
        %v3129 = vpack.c.b16 %v3105, %v3103
        %v3130 = vpack.c.b16 %v3108, %v3106
        %v3131 = vpack.c.b16 %v3109, %v3107
        %v3132 = vpack.c.b16 %v3112, %v3110
        %v3133 = vpack.c.b16 %v3113, %v3111
        %v3134 = vpack.c.b16 %v3116, %v3114
        %v3135 = vpack.c.b16 %v3117, %v3115
        %v3136 = vpack.c.b16 %v3120, %v3118
        %v3137 = vpack.c.b16 %v3121, %v3119
        %3154 = vmatprep.subr.bf16.mxu0 %v3123
        %3155 = vmatpush1.bf16.msra.mxu0 %v3122
        %3156 = vmatprep.subr.bf16.mxu0 %v3125
        %3157 = vmatpush1.bf16.msra.mxu0 %v3124
        %3158 = vmatprep.subr.bf16.mxu0 %v3127
        %3159 = vmatpush1.bf16.msra.mxu0 %v3126
        %3160 = vmatprep.subr.bf16.mxu0 %v3129
        %3161 = vmatpush1.bf16.msra.mxu0 %v3128
        %3162 = vmatprep.subr.bf16.mxu0 %v3131
        %3163 = vmatpush1.bf16.msra.mxu0 %v3130
        %3164 = vmatprep.subr.bf16.mxu0 %v3133
        %3165 = vmatpush1.bf16.msra.mxu0 %v3132
        %3166 = vmatprep.subr.bf16.mxu0 %v3135
        %3167 = vmatpush1.bf16.msra.mxu0 %v3134
        %3168 = vmatprep.subr.bf16.mxu0 %v3137
        %3169 = vmatpush1.bf16.msra.mxu0 %v3136
        %3170 = vmatprep.subr.bf16.mxu0 0
        %3171 = vmatpush1.bf16.msra.mxu0 0
        %3172 = vmatprep.subr.bf16.mxu0 0
        %3173 = vmatpush1.bf16.msra.mxu0 0
        %3174 = vmatprep.subr.bf16.mxu0 0
        %3175 = vmatpush1.bf16.msra.mxu0 0
        %3176 = vmatprep.subr.bf16.mxu0 0
        %3177 = vmatpush1.bf16.msra.mxu0 0
        %3178 = vmatprep.subr.bf16.mxu0 0
        %3179 = vmatpush1.bf16.msra.mxu0 0
        %3180 = vmatprep.subr.bf16.mxu0 0
        %3181 = vmatpush1.bf16.msra.mxu0 0
        %3182 = vmatprep.subr.bf16.mxu0 0
        %3183 = vmatpush1.bf16.msra.mxu0 0
        %3184 = vmatprep.subr.bf16.mxu0 0
        %3185 = vmatpush1.bf16.msra.mxu0 0
        %3186 = vmatprep.mubr.bf16.mxu0 0
        %3187 = vmatmul.mubr.bf16.gmra.mrb[0].mxu0 %v3051
        %v3188 = vpop.f32.mrb[0].mxu0
        %v3189 = vadd.f32 0.0, %v3188
        %v3190 = vpop.f32.mrb[0].mxu0
        %v3191 = vadd.f32 0.0, %v3190
        %v3192 = vpop.f32.mrb[0].mxu0
        %v3193 = vadd.f32 0.0, %v3192
        %v3194 = vpop.f32.mrb[0].mxu0
        %v3195 = vadd.f32 0.0, %v3194
        %3196 = vmatprep.mubr.bf16.mxu0 0
        %3197 = vmatmul.mubr.bf16.gmra.mrb[0].mxu0 %v3052
        %v3198 = vpop.f32.mrb[0].mxu0
        %v3199 = vadd.f32 0.0, %v3198
        %v3200 = vpop.f32.mrb[0].mxu0
        %v3201 = vadd.f32 0.0, %v3200
        %v3202 = vpop.f32.mrb[0].mxu0
        %v3203 = vadd.f32 0.0, %v3202
        %v3204 = vpop.f32.mrb[0].mxu0
        %v3205 = vadd.f32 0.0, %v3204
        %3206 = vmatprep.mubr.bf16.mxu0 0
        %3207 = vmatmul.mubr.bf16.gmra.mrb[0].mxu0 %v3053
        %v3208 = vpop.f32.mrb[0].mxu0
        %v3209 = vadd.f32 0.0, %v3208
        %v3210 = vpop.f32.mrb[0].mxu0
        %v3211 = vadd.f32 0.0, %v3210
        %v3212 = vpop.f32.mrb[0].mxu0
        %v3213 = vadd.f32 0.0, %v3212
        %v3214 = vpop.f32.mrb[0].mxu0
        %v3215 = vadd.f32 0.0, %v3214
        %3216 = vmatprep.mubr.bf16.mxu0 0
        %3217 = vmatmul.mubr.bf16.gmra.mrb[0].mxu0 %v3054
        %v3218 = vpop.f32.mrb[0].mxu0
        %v3219 = vadd.f32 0.0, %v3218
        %v3220 = vpop.f32.mrb[0].mxu0
        %v3221 = vadd.f32 0.0, %v3220
        %v3222 = vpop.f32.mrb[0].mxu0
        %v3223 = vadd.f32 0.0, %v3222
        %v3224 = vpop.f32.mrb[0].mxu0
        %v3225 = vadd.f32 0.0, %v3224
        %3226 = vmatprep.mubr.bf16.mxu0 0
        %3227 = vmatmul.mubr.bf16.gmra.mrb[0].mxu0 %v3055
        %v3228 = vpop.f32.mrb[0].mxu0
        %v3229 = vadd.f32 0.0, %v3228
        %v3230 = vpop.f32.mrb[0].mxu0
        %v3231 = vadd.f32 0.0, %v3230
        %v3232 = vpop.f32.mrb[0].mxu0
        %v3233 = vadd.f32 0.0, %v3232
        %v3234 = vpop.f32.mrb[0].mxu0
        %v3235 = vadd.f32 0.0, %v3234
        %3236 = vmatprep.mubr.bf16.mxu0 0
        %3237 = vmatmul.mubr.bf16.gmra.mrb[0].mxu0 %v3056
        %v3238 = vpop.f32.mrb[0].mxu0
        %v3239 = vadd.f32 0.0, %v3238
        %v3240 = vpop.f32.mrb[0].mxu0
        %v3241 = vadd.f32 0.0, %v3240
        %v3242 = vpop.f32.mrb[0].mxu0
        %v3243 = vpop.f32.mrb[0].mxu0
        %3244 = vdwg.mxu0
        %v3245 = vadd.f32 %v2986, %v3189
        %v3246 = vadd.f32 %v2987, %v3191
        %v3247 = vadd.f32 %v2988, %v3193
        %v3248 = vadd.f32 %v2989, %v3195
        %v3249 = vadd.f32 %v2990, %v3199
        %v3250 = vadd.f32 %v2991, %v3201
        %v3251 = vadd.f32 %v2992, %v3203
        %v3252 = vadd.f32 %v2993, %v3205
        %v3253 = vadd.f32 %v2994, %v3209
        %v3254 = vadd.f32 %v2995, %v3211
        %v3255 = vadd.f32 %v2996, %v3213
        %v3256 = vadd.f32 %v2997, %v3215
        %v3257 = vadd.f32 %v2998, %v3219
        %v3258 = vadd.f32 %v2999, %v3221
        %v3259 = vadd.f32 %v3000, %v3223
        %v3260 = vadd.f32 %v3001, %v3225
        %v3261 = vadd.f32 %v3002, %v3229
        %v3262 = vadd.f32 %v3003, %v3231
        %v3263 = vadd.f32 %v3004, %v3233
        %v3264 = vadd.f32 %v3005, %v3235
        %v3265 = vadd.f32 %v3006, %v3239
        %v3266 = vadd.f32 %v3007, %v3241
        %v3280 = vrot.slane %v1065, 2
        %v3281 = vrot.slane %v1068, 2
        %v3282 = vrot.slane %v1071, 2
        %v3283 = vrot.slane %v1074, 2
        %v3284 = vrot.slane %v1077, 2
        %v3285 = vrot.slane %v1080, 2
        %v3286 = vrot.slane %v1083, 2
        %v3287 = vrot.slane %v1086, 2
        %v3288 = vrot.slane %v1089, 2
        %v3289 = vrot.slane %v1092, 2
        %v3290 = vrot.slane %v1095, 2
        %v3291 = vrot.slane %v1098, 2
        %v3292 = vrot.slane %v1110, 2
        %v3293 = vrot.slane %v1113, 2
        %v3294 = vrot.slane %v1116, 2
        %v3300 = vsel %vm1405, %v1171, %v1207
        %v3301 = vsel %vm1405, %v1172, %v1208
        %v3302 = vsel %vm1405, %v1173, %v1209
        %v3303 = vsel %vm1405, %v1174, %v1210
        %v3304 = vsel %vm1405, %v1175, %v1211
        %v3305 = vsel %vm1405, %v1176, %v1212
        %v3306 = vsel %vm1405, %v1177, %v1213
        %v3307 = vsel %vm1405, %v1178, %v1214
        %v3308 = vsel %vm1405, %v1179, %v1215
        %v3309 = vsel %vm1405, %v1180, %v1216
        %v3310 = vsel %vm1405, %v1181, %v1217
        %v3311 = vsel %vm1405, %v1182, %v1218
        %v3312 = vsel %vm1405, %v1183, %v1219
        %v3313 = vsel %vm1405, %v1184, %v1220
        %v3314 = vsel %vm1405, %v1185, %v1221
        %v3315 = vsel %vm1405, %v1186, %v1222
        %v3316 = vsel %vm1405, %v1187, %v1223
        %v3317 = vsel %vm1405, %v1188, %v1224
        %v3318 = vsel %vm685, %v3300, %v2293
        %v3319 = vsel %vm685, %v3301, %v2294
        %v3320 = vsel %vm685, %v3302, %v2295
        %v3321 = vsel %vm685, %v3303, %v2296
        %v3322 = vsel %vm685, %v3304, %v2297
        %v3323 = vsel %vm685, %v3305, %v2298
        %v3324 = vsel %vm685, %v3306, %v2299
        %v3325 = vsel %vm685, %v3307, %v2300
        %v3326 = vsel %vm685, %v3308, %v2301
        %v3327 = vsel %vm685, %v3309, %v2302
        %v3328 = vsel %vm685, %v3310, %v2303
        %v3329 = vsel %vm685, %v3311, %v2304
        %v3330 = vsel %vm685, %v3312, %v2305
        %v3331 = vsel %vm685, %v3313, %v2306
        %v3332 = vsel %vm685, %v3314, %v2307
        %v3333 = vsel %vm685, %v3315, %v2308
        %v3334 = vsel %vm685, %v3316, %v2309
        %v3335 = vsel %vm685, %v3317, %v2310
        %v3336 = vsel %vm1442, %v3318, %v1297
        %v3337 = vsel %vm1442, %v3319, %v1298
        %v3338 = vsel %vm1442, %v3320, %v1299
        %v3339 = vsel %vm1442, %v3321, %v1300
        %v3340 = vsel %vm1442, %v3322, %v1301
        %v3341 = vsel %vm1442, %v3323, %v1302
        %v3342 = vsel %vm1442, %v3324, %v1303
        %v3343 = vsel %vm1442, %v3325, %v1304
        %v3344 = vsel %vm1442, %v3326, %v1305
        %v3345 = vsel %vm1442, %v3327, %v1306
        %v3346 = vsel %vm1442, %v3328, %v1307
        %v3347 = vsel %vm1442, %v3329, %v1308
        %v3348 = vsel %vm1442, %v3330, %v1309
        %v3349 = vsel %vm1442, %v3331, %v1310
        %v3350 = vsel %vm1442, %v3332, %v1311
        %v3351 = vsel %vm1442, %v3333, %v1312
        %v3352 = vsel %vm1442, %v3334, %v1313
        %v3353 = vsel %vm1442, %v3335, %v1314
        %v3354 = vsel %vm416, %v3336, %v1333
        %v3355 = vsel %vm416, %v3337, %v1334
        %v3356 = vsel %vm416, %v3338, %v1335
        %v3357 = vsel %vm416, %v3339, %v1336
        %v3358 = vsel %vm416, %v3340, %v1337
        %v3359 = vsel %vm416, %v3341, %v1338
        %v3360 = vsel %vm416, %v3342, %v1339
        %v3361 = vsel %vm416, %v3343, %v1340
        %v3362 = vsel %vm416, %v3344, %v1341
        %v3363 = vsel %vm416, %v3345, %v1342
        %v3364 = vsel %vm416, %v3346, %v1343
        %v3365 = vsel %vm416, %v3347, %v1344
        %v3366 = vsel %vm416, %v3348, %v1345
        %v3367 = vsel %vm416, %v3349, %v1346
        %v3368 = vsel %vm416, %v3350, %v1347
        %v3369 = vsel %vm416, %v3351, %v1348
        %v3370 = vsel %vm416, %v3352, %v1349
        %v3371 = vsel %vm416, %v3353, %v1350
        %v3372 = vsel %vm417, %v3354, %v1369
        %v3373 = vsel %vm417, %v3355, %v1370
        %v3374 = vsel %vm417, %v3356, %v1371
        %v3375 = vsel %vm417, %v3357, %v1372
        %v3376 = vsel %vm417, %v3358, %v1373
        %v3377 = vsel %vm417, %v3359, %v1374
        %v3378 = vsel %vm417, %v3360, %v1375
        %v3379 = vsel %vm417, %v3361, %v1376
        %v3380 = vsel %vm417, %v3362, %v1377
        %v3381 = vsel %vm417, %v3363, %v1378
        %v3382 = vsel %vm417, %v3364, %v1379
        %v3383 = vsel %vm417, %v3365, %v1380
        %v3384 = vsel %vm417, %v3366, %v1381
        %v3385 = vsel %vm417, %v3367, %v1382
        %v3386 = vsel %vm417, %v3368, %v1383
        %v3387 = vsel %vm417, %v3369, %v1384
        %v3388 = vsel %vm417, %v3370, %v1385
        %v3389 = vsel %vm417, %v3371, %v1386
        %v3390 = vsel %vm1497, %v3372, %v1064
        %v3391 = vsel %vm1497, %v3373, %v1067
        %v3392 = vsel %vm1497, %v3374, %v1070
        %v3393 = vsel %vm1497, %v3375, %v1073
        %v3394 = vsel %vm1497, %v3376, %v1076
        %v3395 = vsel %vm1497, %v3377, %v1079
        %v3396 = vsel %vm1497, %v3378, %v1082
        %v3397 = vsel %vm1497, %v3379, %v1085
        %v3398 = vsel %vm1497, %v3380, %v1088
        %v3399 = vsel %vm1497, %v3381, %v1091
        %v3400 = vsel %vm1497, %v3382, %v1094
        %v3401 = vsel %vm1497, %v3383, %v1097
        %v3402 = vsel %vm1497, %v3384, %v1100
        %v3403 = vsel %vm1497, %v3385, %v1103
        %v3404 = vsel %vm1497, %v3386, %v1106
        %v3405 = vsel %vm1497, %v3387, %v1109
        %v3406 = vsel %vm1497, %v3388, %v1112
        %v3407 = vsel %vm1497, %v3389, %v1115
        %v3408 = vsel %vm864, %v3390, %v2332
        %v3409 = vsel %vm864, %v3391, %v2333
        %v3410 = vsel %vm864, %v3392, %v2334
        %v3411 = vsel %vm864, %v3393, %v2335
        %v3412 = vsel %vm864, %v3394, %v2336
        %v3413 = vsel %vm864, %v3395, %v2337
        %v3414 = vsel %vm864, %v3396, %v2338
        %v3415 = vsel %vm864, %v3397, %v2339
        %v3416 = vsel %vm864, %v3398, %v2340
        %v3417 = vsel %vm864, %v3399, %v2341
        %v3418 = vsel %vm864, %v3400, %v2342
        %v3419 = vsel %vm864, %v3401, %v2343
        %v3420 = vsel %vm864, %v3402, %v2344
        %v3421 = vsel %vm864, %v3403, %v2345
        %v3422 = vsel %vm864, %v3404, %v1579
        %v3423 = vsel %vm864, %v3405, %v1657
        %v3424 = vsel %vm864, %v3406, %v2066
        %v3425 = vsel %vm864, %v3407, %v2346
        %v3427 = vrot.slane %v3410, 7
        %v3428 = vrot.slane %v3282, 7
        %v3429 = vsel %vm1405, %v3427, %v3428
        %v3433 = vrot.slane %v3412, 6
        %v3434 = vrot.slane %v3284, 6
        %v3435 = vsel %vm685, %v3433, %v3434
        %v3439 = vrot.slane %v3414, 5
        %v3440 = vrot.slane %v3286, 5
        %v3441 = vsel %vm1442, %v3439, %v3440
        %v3445 = vrot.slane %v3416, 4
        %v3446 = vrot.slane %v3288, 4
        %v3447 = vsel %vm416, %v3445, %v3446
        %v3451 = vrot.slane %v3418, 3
        %v3452 = vrot.slane %v3290, 3
        %v3453 = vsel %vm417, %v3451, %v3452
        %v3457 = vrot.slane %v3420, 2
        %v3458 = vrot.slane %v1572, 2
        %v3459 = vsel %vm1497, %v3457, %v3458
        %v3463 = vrot.slane %v3422, 1
        %v3464 = vrot.slane %v2059, 1
        %v3465 = vsel %vm864, %v3463, %v3464
        %v3468 = vsel %vm1405, %v3280, %v3427
        %v3469 = vsel %vm685, %v3429, %v3433
        %v3470 = vsel %vm1442, %v3435, %v3439
        %v3471 = vsel %vm416, %v3441, %v3445
        %v3472 = vsel %vm417, %v3447, %v3451
        %v3473 = vsel %vm1497, %v3453, %v3457
        %v3474 = vsel %vm864, %v3459, %v3463
        %v3475 = vpack.c.bf16 %v3468, %v3408
        %v3476 = vpack.c.bf16 %v3470, %v3469
        %v3477 = vpack.c.bf16 %v3472, %v3471
        %v3478 = vpack.c.bf16 %v3474, %v3473
        %v3479 = vpack.c.bf16 %v3424, %v3465
        %v3480 = vpack.c.bf16 %v3293, %v3293
        %s3481 = scalar_lea.vmem [#allocation2], 256
        %v3482 = vld [vmem:[%s3481] sm:$0xff]
        %v3483 = vld [vmem:[%s3481 + $0x8] sm:$0xff]
        %v3484 = vld [vmem:[%s3481 + $0x10] sm:$0xff]
        %v3485 = vld [vmem:[%s3481 + $0x18] sm:$0xff]
        %v3486 = vld [vmem:[%s3481 + $0x20] sm:$0xff]
        %v3487 = vld [vmem:[%s3481 + $0x28] sm:$0xff]
        %v3488 = vld [vmem:[%s3481 + $0x30] sm:$0xff]
        %v3489 = vld [vmem:[%s3481 + $0x38] sm:$0xff]
        %v3490 = vld [vmem:[%s3481 + $0x40] sm:$0xff]
        %v3491 = vld [vmem:[%s3481 + $0x48] sm:$0xff]
        %v3492 = vld [vmem:[%s3481 + $0x50] sm:$0xff]
        %v3493 = vld [vmem:[%s3481 + $0x58] sm:$0xff]
        %v3494 = vld [vmem:[%s3481 + $0x60] sm:$0xff]
        %v3495 = vld [vmem:[%s3481 + $0x68] sm:$0xff]
        %v3496 = vld [vmem:[%s3481 + $0x70] sm:$0xff]
        %v3497 = vld [vmem:[%s3481 + $0x78] sm:$0xff]
        %v3514 = vunpack.c.l.b16 %v3482
        %v3515 = vunpack.c.h.b16 %v3482
        %v3516 = vunpack.c.l.b16 %v3483
        %v3517 = vunpack.c.h.b16 %v3483
        %v3518 = vunpack.c.l.b16 %v3484
        %v3519 = vunpack.c.h.b16 %v3484
        %v3520 = vunpack.c.l.b16 %v3485
        %v3521 = vunpack.c.h.b16 %v3485
        %v3522 = vunpack.c.l.b16 %v3486
        %v3523 = vunpack.c.h.b16 %v3486
        %v3524 = vunpack.c.l.b16 %v3487
        %v3525 = vunpack.c.h.b16 %v3487
        %v3526 = vunpack.c.l.b16 %v3488
        %v3527 = vunpack.c.h.b16 %v3488
        %v3528 = vunpack.c.l.b16 %v3489
        %v3529 = vunpack.c.h.b16 %v3489
        %v3530 = vunpack.c.l.b16 %v3490
        %v3531 = vunpack.c.h.b16 %v3490
        %v3532 = vunpack.c.l.b16 %v3491
        %v3533 = vunpack.c.h.b16 %v3491
        %v3534 = vunpack.c.l.b16 %v3492
        %v3535 = vunpack.c.h.b16 %v3492
        %v3536 = vunpack.c.l.b16 %v3493
        %v3537 = vunpack.c.h.b16 %v3493
        %v3538 = vunpack.c.l.b16 %v3494
        %v3539 = vunpack.c.h.b16 %v3494
        %v3540 = vunpack.c.l.b16 %v3495
        %v3541 = vunpack.c.h.b16 %v3495
        %v3542 = vunpack.c.l.b16 %v3496
        %v3543 = vunpack.c.h.b16 %v3496
        %v3544 = vunpack.c.l.b16 %v3497
        %v3545 = vunpack.c.h.b16 %v3497
        %v3546 = vpack.c.b16 %v3516, %v3514
        %v3547 = vpack.c.b16 %v3517, %v3515
        %v3548 = vpack.c.b16 %v3520, %v3518
        %v3549 = vpack.c.b16 %v3521, %v3519
        %v3550 = vpack.c.b16 %v3524, %v3522
        %v3551 = vpack.c.b16 %v3525, %v3523
        %v3552 = vpack.c.b16 %v3528, %v3526
        %v3553 = vpack.c.b16 %v3529, %v3527
        %v3554 = vpack.c.b16 %v3532, %v3530
        %v3555 = vpack.c.b16 %v3533, %v3531
        %v3556 = vpack.c.b16 %v3536, %v3534
        %v3557 = vpack.c.b16 %v3537, %v3535
        %v3558 = vpack.c.b16 %v3540, %v3538
        %v3559 = vpack.c.b16 %v3541, %v3539
        %v3560 = vpack.c.b16 %v3544, %v3542
        %v3561 = vpack.c.b16 %v3545, %v3543
        %3578 = vmatprep.subr.bf16.mxu0 %v3547
        %3579 = vmatpush1.bf16.msra.mxu0 %v3546
        %3580 = vmatprep.subr.bf16.mxu0 %v3549
        %3581 = vmatpush1.bf16.msra.mxu0 %v3548
        %3582 = vmatprep.subr.bf16.mxu0 %v3551
        %3583 = vmatpush1.bf16.msra.mxu0 %v3550
        %3584 = vmatprep.subr.bf16.mxu0 %v3553
        %3585 = vmatpush1.bf16.msra.mxu0 %v3552
        %3586 = vmatprep.subr.bf16.mxu0 %v3555
        %3587 = vmatpush1.bf16.msra.mxu0 %v3554
        %3588 = vmatprep.subr.bf16.mxu0 %v3557
        %3589 = vmatpush1.bf16.msra.mxu0 %v3556
        %3590 = vmatprep.subr.bf16.mxu0 %v3559
        %3591 = vmatpush1.bf16.msra.mxu0 %v3558
        %3592 = vmatprep.subr.bf16.mxu0 %v3561
        %3593 = vmatpush1.bf16.msra.mxu0 %v3560
        %3594 = vmatprep.subr.bf16.mxu0 0
        %3595 = vmatpush1.bf16.msra.mxu0 0
        %3596 = vmatprep.subr.bf16.mxu0 0
        %3597 = vmatpush1.bf16.msra.mxu0 0
        %3598 = vmatprep.subr.bf16.mxu0 0
        %3599 = vmatpush1.bf16.msra.mxu0 0
        %3600 = vmatprep.subr.bf16.mxu0 0
        %3601 = vmatpush1.bf16.msra.mxu0 0
        %3602 = vmatprep.subr.bf16.mxu0 0
        %3603 = vmatpush1.bf16.msra.mxu0 0
        %3604 = vmatprep.subr.bf16.mxu0 0
        %3605 = vmatpush1.bf16.msra.mxu0 0
        %3606 = vmatprep.subr.bf16.mxu0 0
        %3607 = vmatpush1.bf16.msra.mxu0 0
        %3608 = vmatprep.subr.bf16.mxu0 0
        %3609 = vmatpush1.bf16.msra.mxu0 0
        %3610 = vmatprep.mubr.bf16.mxu0 0
        %3611 = vmatmul.mubr.bf16.gmra.mrb[0].mxu0 %v3475
        %v3612 = vpop.f32.mrb[0].mxu0
        %v3613 = vadd.f32 0.0, %v3612
        %v3614 = vpop.f32.mrb[0].mxu0
        %v3615 = vadd.f32 0.0, %v3614
        %v3616 = vpop.f32.mrb[0].mxu0
        %v3617 = vadd.f32 0.0, %v3616
        %v3618 = vpop.f32.mrb[0].mxu0
        %v3619 = vadd.f32 0.0, %v3618
        %3620 = vmatprep.mubr.bf16.mxu0 0
        %3621 = vmatmul.mubr.bf16.gmra.mrb[0].mxu0 %v3476
        %v3622 = vpop.f32.mrb[0].mxu0
        %v3623 = vadd.f32 0.0, %v3622
        %v3624 = vpop.f32.mrb[0].mxu0
        %v3625 = vadd.f32 0.0, %v3624
        %v3626 = vpop.f32.mrb[0].mxu0
        %v3627 = vadd.f32 0.0, %v3626
        %v3628 = vpop.f32.mrb[0].mxu0
        %v3629 = vadd.f32 0.0, %v3628
        %3630 = vmatprep.mubr.bf16.mxu0 0
        %3631 = vmatmul.mubr.bf16.gmra.mrb[0].mxu0 %v3477
        %v3632 = vpop.f32.mrb[0].mxu0
        %v3633 = vadd.f32 0.0, %v3632
        %v3634 = vpop.f32.mrb[0].mxu0
        %v3635 = vadd.f32 0.0, %v3634
        %v3636 = vpop.f32.mrb[0].mxu0
        %v3637 = vadd.f32 0.0, %v3636
        %v3638 = vpop.f32.mrb[0].mxu0
        %v3639 = vadd.f32 0.0, %v3638
        %3640 = vmatprep.mubr.bf16.mxu0 0
        %3641 = vmatmul.mubr.bf16.gmra.mrb[0].mxu0 %v3478
        %v3642 = vpop.f32.mrb[0].mxu0
        %v3643 = vadd.f32 0.0, %v3642
        %v3644 = vpop.f32.mrb[0].mxu0
        %v3645 = vadd.f32 0.0, %v3644
        %v3646 = vpop.f32.mrb[0].mxu0
        %v3647 = vadd.f32 0.0, %v3646
        %v3648 = vpop.f32.mrb[0].mxu0
        %v3649 = vadd.f32 0.0, %v3648
        %3650 = vmatprep.mubr.bf16.mxu0 0
        %3651 = vmatmul.mubr.bf16.gmra.mrb[0].mxu0 %v3479
        %v3652 = vpop.f32.mrb[0].mxu0
        %v3653 = vadd.f32 0.0, %v3652
        %v3654 = vpop.f32.mrb[0].mxu0
        %v3655 = vadd.f32 0.0, %v3654
        %v3656 = vpop.f32.mrb[0].mxu0
        %v3657 = vadd.f32 0.0, %v3656
        %v3658 = vpop.f32.mrb[0].mxu0
        %v3659 = vadd.f32 0.0, %v3658
        %3660 = vmatprep.mubr.bf16.mxu0 0
        %3661 = vmatmul.mubr.bf16.gmra.mrb[0].mxu0 %v3480
        %v3662 = vpop.f32.mrb[0].mxu0
        %v3663 = vadd.f32 0.0, %v3662
        %v3664 = vpop.f32.mrb[0].mxu0
        %v3665 = vadd.f32 0.0, %v3664
        %v3666 = vpop.f32.mrb[0].mxu0
        %v3667 = vpop.f32.mrb[0].mxu0
        %3668 = vdwg.mxu0
        %v3669 = vadd.f32 %v3245, %v3613
        %v3670 = vadd.f32 %v3246, %v3615
        %v3671 = vadd.f32 %v3247, %v3617
        %v3672 = vadd.f32 %v3248, %v3619
        %v3673 = vadd.f32 %v3249, %v3623
        %v3674 = vadd.f32 %v3250, %v3625
        %v3675 = vadd.f32 %v3251, %v3627
        %v3676 = vadd.f32 %v3252, %v3629
        %v3677 = vadd.f32 %v3253, %v3633
        %v3678 = vadd.f32 %v3254, %v3635
        %v3679 = vadd.f32 %v3255, %v3637
        %v3680 = vadd.f32 %v3256, %v3639
        %v3681 = vadd.f32 %v3257, %v3643
        %v3682 = vadd.f32 %v3258, %v3645
        %v3683 = vadd.f32 %v3259, %v3647
        %v3684 = vadd.f32 %v3260, %v3649
        %v3685 = vadd.f32 %v3261, %v3653
        %v3686 = vadd.f32 %v3262, %v3655
        %v3687 = vadd.f32 %v3263, %v3657
        %v3688 = vadd.f32 %v3264, %v3659
        %v3689 = vadd.f32 %v3265, %v3663
        %v3690 = vadd.f32 %v3266, %v3665
        %v3692 = vrot.slane %v3411, 7
        %v3693 = vrot.slane %v3283, 7
        %v3694 = vsel %vm1405, %v3692, %v3693
        %v3698 = vrot.slane %v3413, 6
        %v3699 = vrot.slane %v3285, 6
        %v3700 = vsel %vm685, %v3698, %v3699
        %v3704 = vrot.slane %v3415, 5
        %v3705 = vrot.slane %v3287, 5
        %v3706 = vsel %vm1442, %v3704, %v3705
        %v3710 = vrot.slane %v3417, 4
        %v3711 = vrot.slane %v3289, 4
        %v3712 = vsel %vm416, %v3710, %v3711
        %v3716 = vrot.slane %v3419, 3
        %v3717 = vrot.slane %v3291, 3
        %v3718 = vsel %vm417, %v3716, %v3717
        %v3722 = vrot.slane %v3421, 2
        %v3723 = vrot.slane %v1650, 2
        %v3724 = vsel %vm1497, %v3722, %v3723
        %v3728 = vrot.slane %v3423, 1
        %v3729 = vrot.slane %v3292, 1
        %v3730 = vsel %vm864, %v3728, %v3729
        %v3733 = vsel %vm1405, %v3281, %v3692
        %v3734 = vsel %vm685, %v3694, %v3698
        %v3735 = vsel %vm1442, %v3700, %v3704
        %v3736 = vsel %vm416, %v3706, %v3710
        %v3737 = vsel %vm417, %v3712, %v3716
        %v3738 = vsel %vm1497, %v3718, %v3722
        %v3739 = vsel %vm864, %v3724, %v3728
        %v3740 = vpack.c.bf16 %v3733, %v3409
        %v3741 = vpack.c.bf16 %v3735, %v3734
        %v3742 = vpack.c.bf16 %v3737, %v3736
        %v3743 = vpack.c.bf16 %v3739, %v3738
        %v3744 = vpack.c.bf16 %v3425, %v3730
        %v3745 = vpack.c.bf16 %v3294, %v3294
        %s3746 = scalar_lea.vmem [#allocation2], 640
        %v3747 = vld [vmem:[%s3746] sm:$0xff]
        %v3748 = vld [vmem:[%s3746 + $0x8] sm:$0xff]
        %v3749 = vld [vmem:[%s3746 + $0x10] sm:$0xff]
        %v3750 = vld [vmem:[%s3746 + $0x18] sm:$0xff]
        %v3751 = vld [vmem:[%s3746 + $0x20] sm:$0xff]
        %v3752 = vld [vmem:[%s3746 + $0x28] sm:$0xff]
        %v3753 = vld [vmem:[%s3746 + $0x30] sm:$0xff]
        %v3754 = vld [vmem:[%s3746 + $0x38] sm:$0xff]
        %v3755 = vld [vmem:[%s3746 + $0x40] sm:$0xff]
        %v3756 = vld [vmem:[%s3746 + $0x48] sm:$0xff]
        %v3757 = vld [vmem:[%s3746 + $0x50] sm:$0xff]
        %v3758 = vld [vmem:[%s3746 + $0x58] sm:$0xff]
        %v3759 = vld [vmem:[%s3746 + $0x60] sm:$0xff]
        %v3760 = vld [vmem:[%s3746 + $0x68] sm:$0xff]
        %v3761 = vld [vmem:[%s3746 + $0x70] sm:$0xff]
        %v3762 = vld [vmem:[%s3746 + $0x78] sm:$0xff]
        %v3779 = vunpack.c.l.b16 %v3747
        %v3780 = vunpack.c.h.b16 %v3747
        %v3781 = vunpack.c.l.b16 %v3748
        %v3782 = vunpack.c.h.b16 %v3748
        %v3783 = vunpack.c.l.b16 %v3749
        %v3784 = vunpack.c.h.b16 %v3749
        %v3785 = vunpack.c.l.b16 %v3750
        %v3786 = vunpack.c.h.b16 %v3750
        %v3787 = vunpack.c.l.b16 %v3751
        %v3788 = vunpack.c.h.b16 %v3751
        %v3789 = vunpack.c.l.b16 %v3752
        %v3790 = vunpack.c.h.b16 %v3752
        %v3791 = vunpack.c.l.b16 %v3753
        %v3792 = vunpack.c.h.b16 %v3753
        %v3793 = vunpack.c.l.b16 %v3754
        %v3794 = vunpack.c.h.b16 %v3754
        %v3795 = vunpack.c.l.b16 %v3755
        %v3796 = vunpack.c.h.b16 %v3755
        %v3797 = vunpack.c.l.b16 %v3756
        %v3798 = vunpack.c.h.b16 %v3756
        %v3799 = vunpack.c.l.b16 %v3757
        %v3800 = vunpack.c.h.b16 %v3757
        %v3801 = vunpack.c.l.b16 %v3758
        %v3802 = vunpack.c.h.b16 %v3758
        %v3803 = vunpack.c.l.b16 %v3759
        %v3804 = vunpack.c.h.b16 %v3759
        %v3805 = vunpack.c.l.b16 %v3760
        %v3806 = vunpack.c.h.b16 %v3760
        %v3807 = vunpack.c.l.b16 %v3761
        %v3808 = vunpack.c.h.b16 %v3761
        %v3809 = vunpack.c.l.b16 %v3762
        %v3810 = vunpack.c.h.b16 %v3762
        %v3811 = vpack.c.b16 %v3781, %v3779
        %v3812 = vpack.c.b16 %v3782, %v3780
        %v3813 = vpack.c.b16 %v3785, %v3783
        %v3814 = vpack.c.b16 %v3786, %v3784
        %v3815 = vpack.c.b16 %v3789, %v3787
        %v3816 = vpack.c.b16 %v3790, %v3788
        %v3817 = vpack.c.b16 %v3793, %v3791
        %v3818 = vpack.c.b16 %v3794, %v3792
        %v3819 = vpack.c.b16 %v3797, %v3795
        %v3820 = vpack.c.b16 %v3798, %v3796
        %v3821 = vpack.c.b16 %v3801, %v3799
        %v3822 = vpack.c.b16 %v3802, %v3800
        %v3823 = vpack.c.b16 %v3805, %v3803
        %v3824 = vpack.c.b16 %v3806, %v3804
        %v3825 = vpack.c.b16 %v3809, %v3807
        %v3826 = vpack.c.b16 %v3810, %v3808
        %3843 = vmatprep.subr.bf16.mxu0 %v3812
        %3844 = vmatpush1.bf16.msra.mxu0 %v3811
        %3845 = vmatprep.subr.bf16.mxu0 %v3814
        %3846 = vmatpush1.bf16.msra.mxu0 %v3813
        %3847 = vmatprep.subr.bf16.mxu0 %v3816
        %3848 = vmatpush1.bf16.msra.mxu0 %v3815
        %3849 = vmatprep.subr.bf16.mxu0 %v3818
        %3850 = vmatpush1.bf16.msra.mxu0 %v3817
        %3851 = vmatprep.subr.bf16.mxu0 %v3820
        %3852 = vmatpush1.bf16.msra.mxu0 %v3819
        %3853 = vmatprep.subr.bf16.mxu0 %v3822
        %3854 = vmatpush1.bf16.msra.mxu0 %v3821
        %3855 = vmatprep.subr.bf16.mxu0 %v3824
        %3856 = vmatpush1.bf16.msra.mxu0 %v3823
        %3857 = vmatprep.subr.bf16.mxu0 %v3826
        %3858 = vmatpush1.bf16.msra.mxu0 %v3825
        %3859 = vmatprep.subr.bf16.mxu0 0
        %3860 = vmatpush1.bf16.msra.mxu0 0
        %3861 = vmatprep.subr.bf16.mxu0 0
        %3862 = vmatpush1.bf16.msra.mxu0 0
        %3863 = vmatprep.subr.bf16.mxu0 0
        %3864 = vmatpush1.bf16.msra.mxu0 0
        %3865 = vmatprep.subr.bf16.mxu0 0
        %3866 = vmatpush1.bf16.msra.mxu0 0
        %3867 = vmatprep.subr.bf16.mxu0 0
        %3868 = vmatpush1.bf16.msra.mxu0 0
        %3869 = vmatprep.subr.bf16.mxu0 0
        %3870 = vmatpush1.bf16.msra.mxu0 0
        %3871 = vmatprep.subr.bf16.mxu0 0
        %3872 = vmatpush1.bf16.msra.mxu0 0
        %3873 = vmatprep.subr.bf16.mxu0 0
        %3874 = vmatpush1.bf16.msra.mxu0 0
        %3875 = vmatprep.mubr.bf16.mxu0 0
        %3876 = vmatmul.mubr.bf16.gmra.mrb[0].mxu0 %v3740
        %v3877 = vpop.f32.mrb[0].mxu0
        %v3878 = vadd.f32 0.0, %v3877
        %v3879 = vpop.f32.mrb[0].mxu0
        %v3880 = vadd.f32 0.0, %v3879
        %v3881 = vpop.f32.mrb[0].mxu0
        %v3882 = vadd.f32 0.0, %v3881
        %v3883 = vpop.f32.mrb[0].mxu0
        %v3884 = vadd.f32 0.0, %v3883
        %3885 = vmatprep.mubr.bf16.mxu0 0
        %3886 = vmatmul.mubr.bf16.gmra.mrb[0].mxu0 %v3741
        %v3887 = vpop.f32.mrb[0].mxu0
        %v3888 = vadd.f32 0.0, %v3887
        %v3889 = vpop.f32.mrb[0].mxu0
        %v3890 = vadd.f32 0.0, %v3889
        %v3891 = vpop.f32.mrb[0].mxu0
        %v3892 = vadd.f32 0.0, %v3891
        %v3893 = vpop.f32.mrb[0].mxu0
        %v3894 = vadd.f32 0.0, %v3893
        %3895 = vmatprep.mubr.bf16.mxu0 0
        %3896 = vmatmul.mubr.bf16.gmra.mrb[0].mxu0 %v3742
        %v3897 = vpop.f32.mrb[0].mxu0
        %v3898 = vadd.f32 0.0, %v3897
        %v3899 = vpop.f32.mrb[0].mxu0
        %v3900 = vadd.f32 0.0, %v3899
        %v3901 = vpop.f32.mrb[0].mxu0
        %v3902 = vadd.f32 0.0, %v3901
        %v3903 = vpop.f32.mrb[0].mxu0
        %v3904 = vadd.f32 0.0, %v3903
        %3905 = vmatprep.mubr.bf16.mxu0 0
        %3906 = vmatmul.mubr.bf16.gmra.mrb[0].mxu0 %v3743
        %v3907 = vpop.f32.mrb[0].mxu0
        %v3908 = vadd.f32 0.0, %v3907
        %v3909 = vpop.f32.mrb[0].mxu0
        %v3910 = vadd.f32 0.0, %v3909
        %v3911 = vpop.f32.mrb[0].mxu0
        %v3912 = vadd.f32 0.0, %v3911
        %v3913 = vpop.f32.mrb[0].mxu0
        %v3914 = vadd.f32 0.0, %v3913
        %3915 = vmatprep.mubr.bf16.mxu0 0
        %3916 = vmatmul.mubr.bf16.gmra.mrb[0].mxu0 %v3744
        %v3917 = vpop.f32.mrb[0].mxu0
        %v3918 = vadd.f32 0.0, %v3917
        %v3919 = vpop.f32.mrb[0].mxu0
        %v3920 = vadd.f32 0.0, %v3919
        %v3921 = vpop.f32.mrb[0].mxu0
        %v3922 = vadd.f32 0.0, %v3921
        %v3923 = vpop.f32.mrb[0].mxu0
        %v3924 = vadd.f32 0.0, %v3923
        %3925 = vmatprep.mubr.bf16.mxu0 0
        %3926 = vmatmul.mubr.bf16.gmra.mrb[0].mxu0 %v3745
        %v3927 = vpop.f32.mrb[0].mxu0
        %v3928 = vadd.f32 0.0, %v3927
        %v3929 = vpop.f32.mrb[0].mxu0
        %v3930 = vadd.f32 0.0, %v3929
        %v3931 = vpop.f32.mrb[0].mxu0
        %v3932 = vpop.f32.mrb[0].mxu0
        %3933 = vdwg.mxu0
        %v3934 = vadd.f32 %v3669, %v3878
        %v3935 = vadd.f32 %v3670, %v3880
        %v3936 = vadd.f32 %v3671, %v3882
        %v3937 = vadd.f32 %v3672, %v3884
        %v3938 = vadd.f32 %v3673, %v3888
        %v3939 = vadd.f32 %v3674, %v3890
        %v3940 = vadd.f32 %v3675, %v3892
        %v3941 = vadd.f32 %v3676, %v3894
        %v3942 = vadd.f32 %v3677, %v3898
        %v3943 = vadd.f32 %v3678, %v3900
        %v3944 = vadd.f32 %v3679, %v3902
        %v3945 = vadd.f32 %v3680, %v3904
        %v3946 = vadd.f32 %v3681, %v3908
        %v3947 = vadd.f32 %v3682, %v3910
        %v3948 = vadd.f32 %v3683, %v3912
        %v3949 = vadd.f32 %v3684, %v3914
        %v3950 = vadd.f32 %v3685, %v3918
        %v3951 = vadd.f32 %v3686, %v3920
        %v3952 = vadd.f32 %v3687, %v3922
        %v3953 = vadd.f32 %v3688, %v3924
        %v3954 = vadd.f32 %v3689, %v3928
        %v3955 = vadd.f32 %v3690, %v3930
        %v3956 = vrot.slane %v3412, 7
        %v3957 = vrot.slane %v3284, 7
        %v3958 = vsel %vm1405, %v3956, %v3957
        %v3961 = vrot.slane %v3414, 6
        %v3962 = vrot.slane %v3286, 6
        %v3963 = vsel %vm685, %v3961, %v3962
        %v3966 = vrot.slane %v3416, 5
        %v3967 = vrot.slane %v3288, 5
        %v3968 = vsel %vm1442, %v3966, %v3967
        %v3971 = vrot.slane %v3418, 4
        %v3972 = vrot.slane %v3290, 4
        %v3973 = vsel %vm416, %v3971, %v3972
        %v3976 = vrot.slane %v3420, 3
        %v3977 = vrot.slane %v1572, 3
        %v3978 = vsel %vm417, %v3976, %v3977
        %v3981 = vrot.slane %v3422, 2
        %v3982 = vrot.slane %v2059, 2
        %v3983 = vsel %vm1497, %v3981, %v3982
        %v3987 = vrot.slane %v3424, 1
        %v3988 = vrot.slane %v3293, 1
        %v3989 = vsel %vm864, %v3987, %v3988
        %v3992 = vsel %vm1405, %v3282, %v3956
        %v3993 = vsel %vm685, %v3958, %v3961
        %v3994 = vsel %vm1442, %v3963, %v3966
        %v3995 = vsel %vm416, %v3968, %v3971
        %v3996 = vsel %vm417, %v3973, %v3976
        %v3997 = vsel %vm1497, %v3978, %v3981
        %v3998 = vsel %vm864, %v3983, %v3987
        %v3999 = vpack.c.bf16 %v3992, %v3410
        %v4000 = vpack.c.bf16 %v3994, %v3993
        %v4001 = vpack.c.bf16 %v3996, %v3995
        %v4002 = vpack.c.bf16 %v3998, %v3997
        %v4003 = vpack.c.bf16 %v3408, %v3989
        %v4004 = vpack.c.bf16 %v3280, %v3280
        %s4005 = scalar_lea.vmem [#allocation2], 1024
        %v4006 = vld [vmem:[%s4005] sm:$0xff]
        %v4007 = vld [vmem:[%s4005 + $0x8] sm:$0xff]
        %v4008 = vld [vmem:[%s4005 + $0x10] sm:$0xff]
        %v4009 = vld [vmem:[%s4005 + $0x18] sm:$0xff]
        %v4010 = vld [vmem:[%s4005 + $0x20] sm:$0xff]
        %v4011 = vld [vmem:[%s4005 + $0x28] sm:$0xff]
        %v4012 = vld [vmem:[%s4005 + $0x30] sm:$0xff]
        %v4013 = vld [vmem:[%s4005 + $0x38] sm:$0xff]
        %v4014 = vld [vmem:[%s4005 + $0x40] sm:$0xff]
        %v4015 = vld [vmem:[%s4005 + $0x48] sm:$0xff]
        %v4016 = vld [vmem:[%s4005 + $0x50] sm:$0xff]
        %v4017 = vld [vmem:[%s4005 + $0x58] sm:$0xff]
        %v4018 = vld [vmem:[%s4005 + $0x60] sm:$0xff]
        %v4019 = vld [vmem:[%s4005 + $0x68] sm:$0xff]
        %v4020 = vld [vmem:[%s4005 + $0x70] sm:$0xff]
        %v4021 = vld [vmem:[%s4005 + $0x78] sm:$0xff]
        %v4038 = vunpack.c.l.b16 %v4006
        %v4039 = vunpack.c.h.b16 %v4006
        %v4040 = vunpack.c.l.b16 %v4007
        %v4041 = vunpack.c.h.b16 %v4007
        %v4042 = vunpack.c.l.b16 %v4008
        %v4043 = vunpack.c.h.b16 %v4008
        %v4044 = vunpack.c.l.b16 %v4009
        %v4045 = vunpack.c.h.b16 %v4009
        %v4046 = vunpack.c.l.b16 %v4010
        %v4047 = vunpack.c.h.b16 %v4010
        %v4048 = vunpack.c.l.b16 %v4011
        %v4049 = vunpack.c.h.b16 %v4011
        %v4050 = vunpack.c.l.b16 %v4012
        %v4051 = vunpack.c.h.b16 %v4012
        %v4052 = vunpack.c.l.b16 %v4013
        %v4053 = vunpack.c.h.b16 %v4013
        %v4054 = vunpack.c.l.b16 %v4014
        %v4055 = vunpack.c.h.b16 %v4014
        %v4056 = vunpack.c.l.b16 %v4015
        %v4057 = vunpack.c.h.b16 %v4015
        %v4058 = vunpack.c.l.b16 %v4016
        %v4059 = vunpack.c.h.b16 %v4016
        %v4060 = vunpack.c.l.b16 %v4017
        %v4061 = vunpack.c.h.b16 %v4017
        %v4062 = vunpack.c.l.b16 %v4018
        %v4063 = vunpack.c.h.b16 %v4018
        %v4064 = vunpack.c.l.b16 %v4019
        %v4065 = vunpack.c.h.b16 %v4019
        %v4066 = vunpack.c.l.b16 %v4020
        %v4067 = vunpack.c.h.b16 %v4020
        %v4068 = vunpack.c.l.b16 %v4021
        %v4069 = vunpack.c.h.b16 %v4021
        %v4070 = vpack.c.b16 %v4040, %v4038
        %v4071 = vpack.c.b16 %v4041, %v4039
        %v4072 = vpack.c.b16 %v4044, %v4042
        %v4073 = vpack.c.b16 %v4045, %v4043
        %v4074 = vpack.c.b16 %v4048, %v4046
        %v4075 = vpack.c.b16 %v4049, %v4047
        %v4076 = vpack.c.b16 %v4052, %v4050
        %v4077 = vpack.c.b16 %v4053, %v4051
        %v4078 = vpack.c.b16 %v4056, %v4054
        %v4079 = vpack.c.b16 %v4057, %v4055
        %v4080 = vpack.c.b16 %v4060, %v4058
        %v4081 = vpack.c.b16 %v4061, %v4059
        %v4082 = vpack.c.b16 %v4064, %v4062
        %v4083 = vpack.c.b16 %v4065, %v4063
        %v4084 = vpack.c.b16 %v4068, %v4066
        %v4085 = vpack.c.b16 %v4069, %v4067
        %4102 = vmatprep.subr.bf16.mxu0 %v4071
        %4103 = vmatpush1.bf16.msra.mxu0 %v4070
        %4104 = vmatprep.subr.bf16.mxu0 %v4073
        %4105 = vmatpush1.bf16.msra.mxu0 %v4072
        %4106 = vmatprep.subr.bf16.mxu0 %v4075
        %4107 = vmatpush1.bf16.msra.mxu0 %v4074
        %4108 = vmatprep.subr.bf16.mxu0 %v4077
        %4109 = vmatpush1.bf16.msra.mxu0 %v4076
        %4110 = vmatprep.subr.bf16.mxu0 %v4079
        %4111 = vmatpush1.bf16.msra.mxu0 %v4078
        %4112 = vmatprep.subr.bf16.mxu0 %v4081
        %4113 = vmatpush1.bf16.msra.mxu0 %v4080
        %4114 = vmatprep.subr.bf16.mxu0 %v4083
        %4115 = vmatpush1.bf16.msra.mxu0 %v4082
        %4116 = vmatprep.subr.bf16.mxu0 %v4085
        %4117 = vmatpush1.bf16.msra.mxu0 %v4084
        %4118 = vmatprep.subr.bf16.mxu0 0
        %4119 = vmatpush1.bf16.msra.mxu0 0
        %4120 = vmatprep.subr.bf16.mxu0 0
        %4121 = vmatpush1.bf16.msra.mxu0 0
        %4122 = vmatprep.subr.bf16.mxu0 0
        %4123 = vmatpush1.bf16.msra.mxu0 0
        %4124 = vmatprep.subr.bf16.mxu0 0
        %4125 = vmatpush1.bf16.msra.mxu0 0
        %4126 = vmatprep.subr.bf16.mxu0 0
        %4127 = vmatpush1.bf16.msra.mxu0 0
        %4128 = vmatprep.subr.bf16.mxu0 0
        %4129 = vmatpush1.bf16.msra.mxu0 0
        %4130 = vmatprep.subr.bf16.mxu0 0
        %4131 = vmatpush1.bf16.msra.mxu0 0
        %4132 = vmatprep.subr.bf16.mxu0 0
        %4133 = vmatpush1.bf16.msra.mxu0 0
        %4134 = vmatprep.mubr.bf16.mxu0 0
        %4135 = vmatmul.mubr.bf16.gmra.mrb[0].mxu0 %v3999
        %v4136 = vpop.f32.mrb[0].mxu0
        %v4137 = vadd.f32 0.0, %v4136
        %v4138 = vpop.f32.mrb[0].mxu0
        %v4139 = vadd.f32 0.0, %v4138
        %v4140 = vpop.f32.mrb[0].mxu0
        %v4141 = vadd.f32 0.0, %v4140
        %v4142 = vpop.f32.mrb[0].mxu0
        %v4143 = vadd.f32 0.0, %v4142
        %4144 = vmatprep.mubr.bf16.mxu0 0
        %4145 = vmatmul.mubr.bf16.gmra.mrb[0].mxu0 %v4000
        %v4146 = vpop.f32.mrb[0].mxu0
        %v4147 = vadd.f32 0.0, %v4146
        %v4148 = vpop.f32.mrb[0].mxu0
        %v4149 = vadd.f32 0.0, %v4148
        %v4150 = vpop.f32.mrb[0].mxu0
        %v4151 = vadd.f32 0.0, %v4150
        %v4152 = vpop.f32.mrb[0].mxu0
        %v4153 = vadd.f32 0.0, %v4152
        %4154 = vmatprep.mubr.bf16.mxu0 0
        %4155 = vmatmul.mubr.bf16.gmra.mrb[0].mxu0 %v4001
        %v4156 = vpop.f32.mrb[0].mxu0
        %v4157 = vadd.f32 0.0, %v4156
        %v4158 = vpop.f32.mrb[0].mxu0
        %v4159 = vadd.f32 0.0, %v4158
        %v4160 = vpop.f32.mrb[0].mxu0
        %v4161 = vadd.f32 0.0, %v4160
        %v4162 = vpop.f32.mrb[0].mxu0
        %v4163 = vadd.f32 0.0, %v4162
        %4164 = vmatprep.mubr.bf16.mxu0 0
        %4165 = vmatmul.mubr.bf16.gmra.mrb[0].mxu0 %v4002
        %v4166 = vpop.f32.mrb[0].mxu0
        %v4167 = vadd.f32 0.0, %v4166
        %v4168 = vpop.f32.mrb[0].mxu0
        %v4169 = vadd.f32 0.0, %v4168
        %v4170 = vpop.f32.mrb[0].mxu0
        %v4171 = vadd.f32 0.0, %v4170
        %v4172 = vpop.f32.mrb[0].mxu0
        %v4173 = vadd.f32 0.0, %v4172
        %4174 = vmatprep.mubr.bf16.mxu0 0
        %4175 = vmatmul.mubr.bf16.gmra.mrb[0].mxu0 %v4003
        %v4176 = vpop.f32.mrb[0].mxu0
        %v4177 = vadd.f32 0.0, %v4176
        %v4178 = vpop.f32.mrb[0].mxu0
        %v4179 = vadd.f32 0.0, %v4178
        %v4180 = vpop.f32.mrb[0].mxu0
        %v4181 = vadd.f32 0.0, %v4180
        %v4182 = vpop.f32.mrb[0].mxu0
        %v4183 = vadd.f32 0.0, %v4182
        %4184 = vmatprep.mubr.bf16.mxu0 0
        %4185 = vmatmul.mubr.bf16.gmra.mrb[0].mxu0 %v4004
        %v4186 = vpop.f32.mrb[0].mxu0
        %v4187 = vadd.f32 0.0, %v4186
        %v4188 = vpop.f32.mrb[0].mxu0
        %v4189 = vadd.f32 0.0, %v4188
        %v4190 = vpop.f32.mrb[0].mxu0
        %v4191 = vpop.f32.mrb[0].mxu0
        %4192 = vdwg.mxu0
        %v4193 = vadd.f32 %v3934, %v4137
        %v4194 = vadd.f32 %v3935, %v4139
        %v4195 = vadd.f32 %v3936, %v4141
        %v4196 = vadd.f32 %v3937, %v4143
        %v4197 = vadd.f32 %v3938, %v4147
        %v4198 = vadd.f32 %v3939, %v4149
        %v4199 = vadd.f32 %v3940, %v4151
        %v4200 = vadd.f32 %v3941, %v4153
        %v4201 = vadd.f32 %v3942, %v4157
        %v4202 = vadd.f32 %v3943, %v4159
        %v4203 = vadd.f32 %v3944, %v4161
        %v4204 = vadd.f32 %v3945, %v4163
        %v4205 = vadd.f32 %v3946, %v4167
        %v4206 = vadd.f32 %v3947, %v4169
        %v4207 = vadd.f32 %v3948, %v4171
        %v4208 = vadd.f32 %v3949, %v4173
        %v4209 = vadd.f32 %v3950, %v4177
        %v4210 = vadd.f32 %v3951, %v4179
        %v4211 = vadd.f32 %v3952, %v4181
        %v4212 = vadd.f32 %v3953, %v4183
        %v4213 = vadd.f32 %v3954, %v4187
        %v4214 = vadd.f32 %v3955, %v4189
        %v4215 = vld [vmem:[%s4] sm:$0x3]
        %v4217 = vlaneseq
        %v4218 = vshrl.u32 %v4217, 7
        %v4219 = vsub.s32 0, %v4218
        %v4220 = vrot.slane %v4215, %v4219
        %v4221 = vlaneseq
        %v4222 = vshrl.u32 %v4221, 7
        %v4223 = vsub.s32 1, %v4222
        %v4224 = vrot.slane %v4215, %v4223
        %v4227 = vadd.f32 %v4193, %v4220
        %v4228 = vadd.f32 %v4194, %v4224
        %v4229 = vadd.f32 %v4195, %v4220
        %v4230 = vadd.f32 %v4196, %v4224
        %v4231 = vadd.f32 %v4197, %v4220
        %v4232 = vadd.f32 %v4198, %v4224
        %v4233 = vadd.f32 %v4199, %v4220
        %v4234 = vadd.f32 %v4200, %v4224
        %v4235 = vadd.f32 %v4201, %v4220
        %v4236 = vadd.f32 %v4202, %v4224
        %v4237 = vadd.f32 %v4203, %v4220
        %v4238 = vadd.f32 %v4204, %v4224
        %v4239 = vadd.f32 %v4205, %v4220
        %v4240 = vadd.f32 %v4206, %v4224
        %v4241 = vadd.f32 %v4207, %v4220
        %v4242 = vadd.f32 %v4208, %v4224
        %v4243 = vadd.f32 %v4209, %v4220
        %v4244 = vadd.f32 %v4210, %v4224
        %v4245 = vadd.f32 %v4211, %v4220
        %v4246 = vadd.f32 %v4212, %v4224
        %v4247 = vadd.f32 %v4213, %v4220
        %v4248 = vadd.f32 %v4214, %v4224
        %v4249 = vmax.f32 %v4227, 0.0
        %v4250 = vmax.f32 %v4228, 0.0
        %v4251 = vmax.f32 %v4229, 0.0
        %v4252 = vmax.f32 %v4230, 0.0
        %v4253 = vmax.f32 %v4231, 0.0
        %v4254 = vmax.f32 %v4232, 0.0
        %v4255 = vmax.f32 %v4233, 0.0
        %v4256 = vmax.f32 %v4234, 0.0
        %v4257 = vmax.f32 %v4235, 0.0
        %v4258 = vmax.f32 %v4236, 0.0
        %v4259 = vmax.f32 %v4237, 0.0
        %v4260 = vmax.f32 %v4238, 0.0
        %v4261 = vmax.f32 %v4239, 0.0
        %v4262 = vmax.f32 %v4240, 0.0
        %v4263 = vmax.f32 %v4241, 0.0
        %v4264 = vmax.f32 %v4242, 0.0
        %v4265 = vmax.f32 %v4243, 0.0
        %v4266 = vmax.f32 %v4244, 0.0
        %v4267 = vmax.f32 %v4245, 0.0
        %v4268 = vmax.f32 %v4246, 0.0
        %v4269 = vmax.f32 %v4247, 0.0
        %v4270 = vmax.f32 %v4248, 0.0
        %v4271 = vpack.c.bf16 %v4251, %v4249
        %v4272 = vpack.c.bf16 %v4252, %v4250
        %v4273 = vpack.c.bf16 %v4255, %v4253
        %v4274 = vpack.c.bf16 %v4256, %v4254
        %v4275 = vpack.c.bf16 %v4259, %v4257
        %v4276 = vpack.c.bf16 %v4260, %v4258
        %v4277 = vpack.c.bf16 %v4263, %v4261
        %v4278 = vpack.c.bf16 %v4264, %v4262
        %v4279 = vpack.c.bf16 %v4267, %v4265
        %v4280 = vpack.c.bf16 %v4268, %v4266
        %v4281 = vpack.c.bf16 %v4269, %v4269
        %v4282 = vpack.c.bf16 %v4270, %v4270
        %v4295 = vunpack.c.l.b16 %v4271
        %v4296 = vunpack.c.l.b16 %v4272
        %v4297 = vunpack.c.h.b16 %v4271
        %v4298 = vunpack.c.h.b16 %v4272
        %v4299 = vunpack.c.l.b16 %v4273
        %v4300 = vunpack.c.l.b16 %v4274
        %v4301 = vunpack.c.h.b16 %v4273
        %v4302 = vunpack.c.h.b16 %v4274
        %v4303 = vunpack.c.l.b16 %v4275
        %v4304 = vunpack.c.l.b16 %v4276
        %v4305 = vunpack.c.h.b16 %v4275
        %v4306 = vunpack.c.h.b16 %v4276
        %v4307 = vunpack.c.l.b16 %v4277
        %v4308 = vunpack.c.l.b16 %v4278
        %v4309 = vunpack.c.h.b16 %v4277
        %v4310 = vunpack.c.h.b16 %v4278
        %v4311 = vunpack.c.l.b16 %v4279
        %v4312 = vunpack.c.l.b16 %v4280
        %v4313 = vunpack.c.h.b16 %v4279
        %v4314 = vunpack.c.h.b16 %v4280
        %v4315 = vunpack.c.l.b16 %v4281
        %v4316 = vunpack.c.l.b16 %v4282
        %v4317 = vpack.c.b16 %v4296, %v4295
        %v4318 = vpack.c.b16 %v4298, %v4297
        %v4319 = vpack.c.b16 %v4300, %v4299
        %v4320 = vpack.c.b16 %v4302, %v4301
        %v4321 = vpack.c.b16 %v4304, %v4303
        %v4322 = vpack.c.b16 %v4306, %v4305
        %v4323 = vpack.c.b16 %v4308, %v4307
        %v4324 = vpack.c.b16 %v4310, %v4309
        %v4325 = vpack.c.b16 %v4312, %v4311
        %v4326 = vpack.c.b16 %v4314, %v4313
        %v4327 = vpack.c.b16 %v4316, %v4315
        %4339 = vst [vmem:[%s239] sm:$0xff] %v4317
        %4340 = vst [vmem:[%s239 + $0x8] sm:$0xff] %v4318
        %4341 = vst [vmem:[%s239 + $0x10] sm:$0xff] %v4319
        %4342 = vst [vmem:[%s239 + $0x18] sm:$0xff] %v4320
        %4343 = vst [vmem:[%s239 + $0x20] sm:$0xff] %v4321
        %4344 = vst [vmem:[%s239 + $0x28] sm:$0xff] %v4322
        %4345 = vst [vmem:[%s239 + $0x30] sm:$0xff] %v4323
        %4346 = vst [vmem:[%s239 + $0x38] sm:$0xff] %v4324
        %4347 = vst [vmem:[%s239 + $0x40] sm:$0xff] %v4325
        %4348 = vst [vmem:[%s239 + $0x48] sm:$0xff] %v4326
        %vm4349 = vcmask 1040384
        %vm4350 = vsmask.f32 256
        %vm4351 = vmand %vm4349, %vm4350
        %vm4352 = vcmask 1044484
        %vm4353 = vsmask.f32 4352
        %vm4354 = vmand %vm4352, %vm4353
        %vm4355 = vmor %vm4354, %vm4351
        %v4356 = vld [vmem:[%s239 + $0x50] sm:$0x11]
        %v4357 = vsel %vm4355, %v4327, %v4356
        %4358 = vst [vmem:[%s239 + $0x50] sm:$0x11] %v4357
        %p4359 = scmp.lt.s32.totalorder %s17, 1
        %s4360 = scalar_select %p4359, %s17, 1
        %s4361 = smul.addr %s4360, 22
        %s4362 = smul.addr %s4361, 4
        %s4363 = scalar_lea.vmem %s5, %s4362
        // Predicated region
        $region45: #{cnn_2layer_fc_forward.2} parent=39 // pred_check
          %p4364 = pneg %p145
        $region46: #{cnn_2layer_fc_forward.2} parent=39 // pred_check_branch
          %4366 = sbr.rel (%p4364) target = $region48
        $region47: #{cnn_2layer_fc_forward.2} parent=39 // pred_region
          _
        $region48: #{cnn_2layer_fc_forward.2} parent=39 // pred_fallthru
          _
      $region40: #{cnn_2layer_fc_forward.2} parent=5 // pred_fallthru
        _
      %p4367 = scmp.le.s32.totalorder 2, %s12
      // Predicated region
      $region49: #{cnn_2layer_fc_forward.2} parent=5 // pred_check
        %p4368 = pneg %p4367
      $region50: #{cnn_2layer_fc_forward.2} parent=5 // pred_check_branch
        %4370 = sbr.rel (%p4368) target = $region52
      $region51: #{cnn_2layer_fc_forward.2} parent=5 // pred_region
        %s4371 = ssub.s32 %s12, 2
        // Predicated region
        $region53: #{cnn_2layer_fc_forward.2} parent=51 // pred_check
          %p4372 = pneg %p151
        $region54: #{cnn_2layer_fc_forward.2} parent=51 // pred_check_branch
          %4374 = sbr.rel (%p4372) target = $region56
        $region55: #{cnn_2layer_fc_forward.2} parent=51 // pred_region
          %p4375 = scmp.lt.s32.totalorder %s18, 1
          %s4376 = scalar_select %p4375, %s18, 1
          %s4377 = smul.addr %s4376, 22
          %s4378 = smul.addr %s4377, 4
          %s4379 = scalar_lea.vmem %s5, %s4378
        $region56: #{cnn_2layer_fc_forward.2} parent=51 // pred_fallthru
          _
      $region52: #{cnn_2layer_fc_forward.2} parent=5 // pred_fallthru
        _
    $region6: #{cnn_2layer_fc_forward.2} parent=1 // loop_footer
      %s16 = sadd.s32 1, %s12
    $region7: #{cnn_2layer_fc_forward.2} parent=1 // loop_footer_branch
      %11 = sbr.rel target = $region3
    $region8: #{cnn_2layer_fc_forward.2} parent=1 // loop_exit
      _
    %4380 = vsyncpa [#allocation3], 1
    %s4381 = scalar_lea.sflag [#allocation3], 1
    %4382 = vsyncpa %s4381, 1

</llo_original>
